<compile_context>
chip_gen: v7x
topology: tpu7x:2x2x1
jax: 0.10.0
libtpu: 0.0.40
codegen_flags: <defaults>
</compile_context>

<pallas_src>
import functools

import jax
import jax.numpy as jnp
from jax.experimental import pallas as pl
from jax.experimental.pallas import tpu as pltpu

_K_CHANNELS = [64, 128, 256]
_KSIZE = 5
_PAD = 2


def _round_up(x, m):
    return (x + m - 1) // m * m


# -----------------------------------------------------------------------------
# In-kernel helpers.
# -----------------------------------------------------------------------------
def _pool_lrelu(y, B, H, W, C):
    """2x2 max-pool then LeakyReLU(0.2).

    y: (B*H*W, C) f32 with rows ordered (b, h, w); H, W even.
    Pool-then-activation == activation-then-pool because LeakyReLU(0.2) is
    monotone increasing -- do not change the slope sign without revisiting.
    Returns (B, H//2, W//2, C) f32.
    """
    yv = y.reshape(B * H * (W // 2), 2, C)
    yw = jnp.maximum(yv[:, 0, :], yv[:, 1, :])            # pool along W
    yh = yw.reshape(B * (H // 2), 2, W // 2, C)
    m = jnp.maximum(yh[:, 0], yh[:, 1])                   # pool along H
    m = jnp.maximum(m, 0.2 * m)                           # LeakyReLU(0.2)
    return m.reshape(B, H // 2, W // 2, C)


def _disc_kernel(*args, layers, B, n_pos, w_f):
    """Fused Conv/BN/Pool/LeakyReLU x3 + classifier for one batch block.

    Ref order: x_im2col, (conv_w, conv_shift) x nl, fc1_w, fc1_b, fc2_w, fc2_b,
               out, then per-layer (padded-act scratch, patch scratch) for
               layers 1..nl-1.
    """
    nl = len(layers)
    idx = 0
    x_ref = args[idx]; idx += 1
    conv_w, conv_s = [], []
    for _ in range(nl):
        conv_w.append(args[idx])
        conv_s.append(args[idx + 1])
        idx += 2
    f1w_ref, f1b_ref, f2w_ref, f2b_ref = args[idx:idx + 4]; idx += 4
    o_ref = args[idx]; idx += 1
    scr = args[idx:]

    # ---- Layer 0: im2col pre-packed in the wrapper (lane-density fix) -------
    H0, W0, C0, Cout0 = layers[0]
    patch0 = x_ref[...].reshape(B * H0 * W0, _KSIZE * _KSIZE * C0)
    y = jnp.dot(patch0, conv_w[0][...], preferred_element_type=jnp.float32)
    y = y + conv_s[0][...]
    a = _pool_lrelu(y, B, H0, W0, Cout0)                  # (B, H0/2, W0/2, C)

    # ---- Layers 1..: pad in VMEM, build the deep-K patch, ONE matmul --------
    for i in range(1, nl):
        H, W, Cin, Cout = layers[i]
        xp_ref = scr[2 * (i - 1)]
        patch_ref = scr[2 * (i - 1) + 1]
        xp_ref[...] = jnp.zeros_like(xp_ref)              # halo stays zero
        xp_ref[:, _PAD:_PAD + H, _PAD:_PAD + W, :] = a.astype(xp_ref.dtype)
        for t in range(_KSIZE * _KSIZE):
            dy, dx = t // _KSIZE, t % _KSIZE
            slab = xp_ref[:, dy:dy + H, dx:dx + W, :].reshape(B * H * W, Cin)
            patch_ref[:, t * Cin:(t + 1) * Cin] = slab
        y = jnp.dot(patch_ref[...], conv_w[i][...],
                    preferred_element_type=jnp.float32)
        y = y + conv_s[i][...]
        a = _pool_lrelu(y, B, H, W, Cout)

    # ---- Classifier: Linear -> ReLU -> Dropout(eval id) -> Linear -----------
    # fc1 is consumed position-by-position (pre-split weight blocks) so the
    # feature map never needs a lane-merging flatten inside the kernel.
    a = a.astype(jnp.bfloat16)                            # (B, h_f, w_f, C)
    h = jnp.dot(a[:, 0, 0, :], f1w_ref[0], preferred_element_type=jnp.float32)
    for p in range(1, n_pos):
        hh, ww = p // w_f, p % w_f
        h = h + jnp.dot(a[:, hh, ww, :], f1w_ref[p],
                        preferred_element_type=jnp.float32)
    h = jnp.maximum(h + f1b_ref[...], 0.0)                # Linear -> ReLU
    # TODO(synk): Dropout(0.2) is eval-mode identity here (no stochastic mask).
    yq = jnp.dot(h.astype(f2w_ref.dtype), f2w_ref[...],
                 preferred_element_type=jnp.float32)
    o_ref[0] = (yq + f2b_ref[...]).astype(o_ref.dtype)


# -----------------------------------------------------------------------------
# Wrapper-side layer-0 im2col (one tiny XLA op; keeps Cin=4 off the lanes).
# -----------------------------------------------------------------------------
def _im2col_l0(x_nhwc):
    N, H, W, C = x_nhwc.shape
    xp = jnp.pad(x_nhwc, ((0, 0), (_PAD, _PAD), (_PAD, _PAD), (0, 0)))
    cols = [xp[:, dy:dy + H, dx:dx + W, :].reshape(N, H * W, C)
            for dy in range(_KSIZE) for dx in range(_KSIZE)]
    return jnp.concatenate(cols, axis=-1)                 # (N, H*W, 25*C)


# -----------------------------------------------------------------------------
# Parameters: torch-layout init + one-time (load-time) preparation.
# -----------------------------------------------------------------------------
def init_params(in_size, key):
    """Parameters with the same layouts as the PyTorch module."""
    C, H, W = in_size
    ds = 2 ** len(_K_CHANNELS)
    h_ds, w_ds = H // ds, W // ds
    fc_in = h_ds * w_ds * _K_CHANNELS[-1]
    fc_hidden = h_ds * w_ds // 4

    keys = jax.random.split(key, 16)
    p = {}
    cin = C
    for i, cout in enumerate(_K_CHANNELS):
        p[f"conv{i}_w"] = 0.05 * jax.random.normal(keys[4 * i + 0],
                                                   (cout, cin, 5, 5), jnp.float32)
        p[f"conv{i}_b"] = 0.05 * jax.random.normal(keys[4 * i + 1], (cout,), jnp.float32)
        p[f"bn{i}_gamma"] = 1.0 + 0.05 * jax.random.normal(keys[4 * i + 2],
                                                           (cout,), jnp.float32)
        p[f"bn{i}_beta"] = 0.05 * jax.random.normal(keys[4 * i + 3], (cout,), jnp.float32)
        p[f"bn{i}_rmean"] = jnp.zeros((cout,), jnp.float32)
        p[f"bn{i}_rvar"] = jnp.ones((cout,), jnp.float32)
        cin = cout

    p["fc1_w"] = 0.05 * jax.random.normal(keys[12], (fc_hidden, fc_in), jnp.float32)
    p["fc1_b"] = 0.05 * jax.random.normal(keys[13], (fc_hidden,), jnp.float32)
    p["fc2_w"] = 0.05 * jax.random.normal(keys[14], (1, fc_hidden), jnp.float32)
    p["fc2_b"] = 0.05 * jax.random.normal(keys[15], (1,), jnp.float32)
    return p


def prepare_params(params, in_size, eps=1e-5):
    """One-time transforms: fold eval-mode BN into the conv weights, reshape
    conv weights to the (25*Cin, Cout) im2col layout, permute / split / pad the
    fc weights so the forward pass does no per-call weight work."""
    C, H, W = in_size
    prep = {}
    cin, hf, wf = C, H, W
    for i, cout in enumerate(_K_CHANNELS):
        w = params[f"conv{i}_w"]                                 # (cout, cin, 5, 5)
        inv_std = 1.0 / jnp.sqrt(params[f"bn{i}_rvar"] + eps)
        scale = params[f"bn{i}_gamma"] * inv_std                 # (cout,)
        shift = ((params[f"conv{i}_b"] - params[f"bn{i}_rmean"]) * scale
                 + params[f"bn{i}_beta"])
        # rows ordered (ky, kx, cin): matches the patch column order in-kernel.
        wt = jnp.transpose(w, (2, 3, 1, 0)).reshape(_KSIZE * _KSIZE * cin, cout)
        prep[f"conv{i}_w"] = (wt * scale[None, :]).astype(jnp.bfloat16)
        prep[f"conv{i}_shift"] = shift.reshape(1, cout).astype(jnp.float32)
        cin, hf, wf = cout, hf // 2, wf // 2

    cf = _K_CHANNELS[-1]
    fc_hidden, fc_in = params["fc1_w"].shape
    hid_pad = _round_up(fc_hidden, 128)
    out_pad = 128
    # torch flattens NCHW -> fc1 input columns ordered (c, h, w).  The kernel
    # consumes the feature map per spatial position with channels last, so
    # permute once and split into per-position (C_last, hidden) blocks.
    w1 = params["fc1_w"].reshape(fc_hidden, cf, hf, wf)
    w1 = jnp.transpose(w1, (2, 3, 1, 0))                         # (h, w, c, hid)
    w1 = w1.reshape(hf * wf, cf, fc_hidden)
    prep["fc1_w"] = jnp.pad(
        w1, ((0, 0), (0, 0), (0, hid_pad - fc_hidden))).astype(jnp.bfloat16)
    prep["fc1_b"] = jnp.pad(params["fc1_b"].reshape(1, -1),
                            ((0, 0), (0, hid_pad - fc_hidden))).astype(jnp.float32)
    w2 = params["fc2_w"].T                                       # (hidden, 1)
    prep["fc2_w"] = jnp.pad(w2, ((0, hid_pad - fc_hidden),
                                 (0, out_pad - 1))).astype(jnp.bfloat16)
    prep["fc2_b"] = jnp.pad(params["fc2_b"].reshape(1, -1),
                            ((0, 0), (0, out_pad - 1))).astype(jnp.float32)
    return prep


# -----------------------------------------------------------------------------
# Full forward pass: one fused pallas_call.
# -----------------------------------------------------------------------------
def discriminator_forward(x_nchw, prep):
    """x_nchw: (N, C, H, W) like the PyTorch module.  Returns logits (N, 1)."""
    N, C, H, W = x_nchw.shape
    assert H % 8 == 0 and W % 8 == 0, "spatial dims must stay even through 3 pools"

    # Layer geometry (matches the PyTorch module).
    layers = []
    cin, hf, wf = C, H, W
    for cout in _K_CHANNELS:
        layers.append((hf, wf, cin, cout))
        cin, hf, wf = cout, hf // 2, wf // 2
    n_pos = hf * wf                          # final spatial positions (fc1 blocks)
    hid_pad = prep["fc1_b"].shape[-1]
    out_pad = prep["fc2_b"].shape[-1]
    del hid_pad

    # NCHW -> NHWC bf16, then pre-pack layer 0's im2col once in the wrapper
    # (its Cin=4 would otherwise occupy 4/128 lanes inside the kernel).
    x = jnp.transpose(x_nchw, (0, 2, 3, 1)).astype(jnp.bfloat16)
    x = _im2col_l0(x)                        # (N, H*W, 25*C)

    # Batch blocking: fold images into the matmul M dim; keep >= 2 grid blocks
    # when the batch allows it so both v7x TensorCores get work.
    if N >= 16:
        b_blk = 8
    elif N >= 2:
        b_blk = max(1, N // 2)
    else:
        b_blk = 1
    n_blocks = pl.cdiv(N, b_blk)
    n_pad = n_blocks * b_blk
    if n_pad != N:
        x = jnp.pad(x, ((0, n_pad - N), (0, 0), (0, 0)))

    kernel = functools.partial(_disc_kernel, layers=tuple(layers), B=b_blk,
                               n_pos=n_pos, w_f=wf)

    flat_in = [x]
    in_specs = [pl.BlockSpec((b_blk,) + x.shape[1:], lambda n: (n, 0, 0))]
    for i in range(len(layers)):
        w = prep[f"conv{i}_w"]
        s = prep[f"conv{i}_shift"]
        flat_in += [w, s]
        in_specs += [pl.BlockSpec(w.shape, lambda n: (0, 0)),
                     pl.BlockSpec(s.shape, lambda n: (0, 0))]
    flat_in += [prep["fc1_w"], prep["fc1_b"], prep["fc2_w"], prep["fc2_b"]]
    in_specs += [pl.BlockSpec(prep["fc1_w"].shape, lambda n: (0, 0, 0)),
                 pl.BlockSpec(prep["fc1_b"].shape, lambda n: (0, 0)),
                 pl.BlockSpec(prep["fc2_w"].shape, lambda n: (0, 0)),
                 pl.BlockSpec(prep["fc2_b"].shape, lambda n: (0, 0))]

    # Per-layer scratch (layers >= 1): halo-padded activations + im2col patch.
    scratch = []
    for (Hh, Ww, Ci, _Co) in layers[1:]:
        scratch.append(pltpu.VMEM((b_blk, Hh + 2 * _PAD, Ww + 2 * _PAD, Ci),
                                  jnp.bfloat16))
        scratch.append(pltpu.VMEM((b_blk * Hh * Ww, _KSIZE * _KSIZE * Ci),
                                  jnp.bfloat16))

    out = pl.pallas_call(
        kernel,
        out_shape=jax.ShapeDtypeStruct((n_blocks, b_blk, out_pad), jnp.float32),
        grid_spec=pltpu.PrefetchScalarGridSpec(
            num_scalar_prefetch=0,
            grid=(n_blocks,),
            in_specs=in_specs,
            out_specs=pl.BlockSpec((1, b_blk, out_pad), lambda n: (n, 0, 0)),
            scratch_shapes=scratch),
        compiler_params=pltpu.CompilerParams(
            dimension_semantics=("parallel",),
            # VMEM budget at the largest block we pick (b_blk=8):
            #   double-buffered inputs: x block ~1.0 MiB, conv weights ~4.0 MiB,
            #   fc weights ~0.6 MiB; scratch: padded acts ~0.7 MiB, patch
            #   buffers ~2.5 MiB; live f32 matmul outputs ~1.5 MiB.
            #   Total ~10 MiB << 32 MiB scoped (and << v7x's 64 MiB physical).
            vmem_limit_bytes=32 * 1024 * 1024),
    )(*flat_in)
    return out.reshape(n_pad, out_pad)[:N, :1]


if __name__ == "__main__":
    key = jax.random.PRNGKey(0)
    k_x, k_p = jax.random.split(key)

    in_size = (4, 16, 16)      # (C, H, W)
    batch = 2
    x = jax.random.normal(k_x, (batch,) + in_size, dtype=jnp.float32)  # NCHW

    params = init_params(in_size, k_p)
    prep = prepare_params(params, in_size)        # one-time weight preparation

    fwd = jax.jit(discriminator_forward)
    y = jax.block_until_ready(fwd(x, prep))

    assert y.shape == (batch, 1), y.shape
    assert bool(jnp.all(jnp.isfinite(y)))
    print("KERNEL_OK")
</pallas_src>

<mosaic_0001>
module attributes {stable_mosaic.version = 11 : i64} {
  func.func @_disc_kernel(%arg0: i32, %arg1: memref<1x256x100xbf16, #tpu.memory_space<vmem>>, %arg2: memref<100x64xbf16, #tpu.memory_space<vmem>>, %arg3: memref<1x64xf32, #tpu.memory_space<vmem>>, %arg4: memref<1600x128xbf16, #tpu.memory_space<vmem>>, %arg5: memref<1x128xf32, #tpu.memory_space<vmem>>, %arg6: memref<3200x256xbf16, #tpu.memory_space<vmem>>, %arg7: memref<1x256xf32, #tpu.memory_space<vmem>>, %arg8: memref<4x256x128xbf16, #tpu.memory_space<vmem>>, %arg9: memref<1x128xf32, #tpu.memory_space<vmem>>, %arg10: memref<128x128xbf16, #tpu.memory_space<vmem>>, %arg11: memref<1x128xf32, #tpu.memory_space<vmem>>, %arg12: memref<1x1x128xf32, #tpu.memory_space<vmem>>, %arg13: memref<1x12x12x64xbf16, #tpu.memory_space<vmem>>, %arg14: memref<64x1600xbf16, #tpu.memory_space<vmem>>, %arg15: memref<1x8x8x128xbf16, #tpu.memory_space<vmem>>, %arg16: memref<16x3200xbf16, #tpu.memory_space<vmem>>) attributes {dimension_semantics = [#tpu.dimension_semantics<parallel>], iteration_bounds = array<i64: 2>, scalar_prefetch = 0 : i64, scratch_operands = 4 : i64, tpu.core_type = #tpu.core_type<tc>, window_params = [{transform_indices = @transform_0, window_bounds = array<i64: 1, 256, 100>}, {pipeline_mode = #tpu.pipeline_mode<synchronous>, transform_indices = @transform_1, window_bounds = array<i64: 100, 64>}, {pipeline_mode = #tpu.pipeline_mode<synchronous>, transform_indices = @transform_2, window_bounds = array<i64: 1, 64>}, {pipeline_mode = #tpu.pipeline_mode<synchronous>, transform_indices = @transform_3, window_bounds = array<i64: 1600, 128>}, {pipeline_mode = #tpu.pipeline_mode<synchronous>, transform_indices = @transform_4, window_bounds = array<i64: 1, 128>}, {pipeline_mode = #tpu.pipeline_mode<synchronous>, transform_indices = @transform_5, window_bounds = array<i64: 3200, 256>}, {pipeline_mode = #tpu.pipeline_mode<synchronous>, transform_indices = @transform_6, window_bounds = array<i64: 1, 256>}, {pipeline_mode = #tpu.pipeline_mode<synchronous>, transform_indices = @transform_7, window_bounds = array<i64: 4, 256, 128>}, {pipeline_mode = #tpu.pipeline_mode<synchronous>, transform_indices = @transform_8, window_bounds = array<i64: 1, 128>}, {pipeline_mode = #tpu.pipeline_mode<synchronous>, transform_indices = @transform_9, window_bounds = array<i64: 128, 128>}, {pipeline_mode = #tpu.pipeline_mode<synchronous>, transform_indices = @transform_10, window_bounds = array<i64: 1, 128>}, {transform_indices = @transform_11, window_bounds = array<i64: 1, 1, 128>}]} {
    %c0 = arith.constant 0 : index
    %c0_0 = arith.constant 0 : index
    %c0_1 = arith.constant 0 : index
    %0 = vector.load %arg1[%c0, %c0_0, %c0_1] : memref<1x256x100xbf16, #tpu.memory_space<vmem>>, vector<1x256x100xbf16>
    %1 = vector.shape_cast %0 : vector<1x256x100xbf16> to vector<256x100xbf16>
    %c0_2 = arith.constant 0 : index
    %c0_3 = arith.constant 0 : index
    %2 = vector.load %arg2[%c0_2, %c0_3] : memref<100x64xbf16, #tpu.memory_space<vmem>>, vector<100x64xbf16>
    %cst = arith.constant dense<0.000000e+00> : vector<256x64xf32>
    %3 = tpu.matmul %1, %2, %cst {dimension_numbers = #tpu.dot_dimension_numbers<[1], [0], [0], [1], [0, 0, 1, 1], [], []>} : vector<256x100xbf16>, vector<100x64xbf16>, vector<256x64xf32> -> vector<256x64xf32>
    %c0_4 = arith.constant 0 : index
    %c0_5 = arith.constant 0 : index
    %4 = vector.load %arg3[%c0_4, %c0_5] : memref<1x64xf32, #tpu.memory_space<vmem>>, vector<1x64xf32>
    %5 = vector.broadcast %4 : vector<1x64xf32> to vector<256x64xf32>
    %6 = arith.addf %3, %5 : vector<256x64xf32>
    %7 = vector.shape_cast %6 : vector<256x64xf32> to vector<128x2x64xf32>
    %8 = vector.extract_strided_slice %7 {offsets = [0, 0, 0], sizes = [128, 1, 64], strides = [1, 1, 1]} : vector<128x2x64xf32> to vector<128x1x64xf32>
    %9 = vector.shape_cast %8 : vector<128x1x64xf32> to vector<128x64xf32>
    %10 = vector.extract_strided_slice %7 {offsets = [0, 1, 0], sizes = [128, 1, 64], strides = [1, 1, 1]} : vector<128x2x64xf32> to vector<128x1x64xf32>
    %11 = vector.shape_cast %10 : vector<128x1x64xf32> to vector<128x64xf32>
    %12 = arith.maximumf %9, %11 : vector<128x64xf32>
    %13 = vector.shape_cast %12 : vector<128x64xf32> to vector<8x2x8x64xf32>
    %14 = vector.extract_strided_slice %13 {offsets = [0, 0, 0, 0], sizes = [8, 1, 8, 64], strides = [1, 1, 1, 1]} : vector<8x2x8x64xf32> to vector<8x1x8x64xf32>
    %15 = vector.shape_cast %14 : vector<8x1x8x64xf32> to vector<8x8x64xf32>
    %16 = vector.extract_strided_slice %13 {offsets = [0, 1, 0, 0], sizes = [8, 1, 8, 64], strides = [1, 1, 1, 1]} : vector<8x2x8x64xf32> to vector<8x1x8x64xf32>
    %17 = vector.shape_cast %16 : vector<8x1x8x64xf32> to vector<8x8x64xf32>
    %18 = arith.maximumf %15, %17 : vector<8x8x64xf32>
    %cst_6 = arith.constant 2.000000e-01 : f32
    %19 = vector.broadcast %cst_6 : f32 to vector<8x8x64xf32>
    %20 = arith.mulf %19, %18 : vector<8x8x64xf32>
    %21 = arith.maximumf %18, %20 : vector<8x8x64xf32>
    %22 = vector.shape_cast %21 : vector<8x8x64xf32> to vector<1x8x8x64xf32>
    %cst_7 = arith.constant 0.000000e+00 : bf16
    %23 = vector.broadcast %cst_7 : bf16 to vector<1x12x12x64xbf16>
    %c0_8 = arith.constant 0 : index
    %c0_9 = arith.constant 0 : index
    %c0_10 = arith.constant 0 : index
    %c0_11 = arith.constant 0 : index
    %24 = vector.load %arg13[%c0_8, %c0_9, %c0_10, %c0_11] : memref<1x12x12x64xbf16, #tpu.memory_space<vmem>>, vector<1x12x12x64xbf16>
    tpu.vector_store %arg13[%c0_8, %c0_9, %c0_10, %c0_11], %23 {strides = array<i32>} : memref<1x12x12x64xbf16, #tpu.memory_space<vmem>>, vector<1x12x12x64xbf16>,
    %25 = arith.truncf %22 : vector<1x8x8x64xf32> to vector<1x8x8x64xbf16>
    %c0_12 = arith.constant 0 : index
    %c2 = arith.constant 2 : index
    %c2_13 = arith.constant 2 : index
    %c0_14 = arith.constant 0 : index
    %26 = vector.load %arg13[%c0_12, %c2, %c2_13, %c0_14] : memref<1x12x12x64xbf16, #tpu.memory_space<vmem>>, vector<1x8x8x64xbf16>
    tpu.vector_store %arg13[%c0_12, %c2, %c2_13, %c0_14], %25 {strides = array<i32>} : memref<1x12x12x64xbf16, #tpu.memory_space<vmem>>, vector<1x8x8x64xbf16>,
    %c0_15 = arith.constant 0 : index
    %c0_16 = arith.constant 0 : index
    %c0_17 = arith.constant 0 : index
    %c0_18 = arith.constant 0 : index
    %27 = vector.load %arg13[%c0_15, %c0_16, %c0_17, %c0_18] : memref<1x12x12x64xbf16, #tpu.memory_space<vmem>>, vector<1x8x8x64xbf16>
    %28 = vector.shape_cast %27 : vector<1x8x8x64xbf16> to vector<64x64xbf16>
    %c0_19 = arith.constant 0 : index
    %c0_20 = arith.constant 0 : index
    %29 = vector.load %arg14[%c0_19, %c0_20] : memref<64x1600xbf16, #tpu.memory_space<vmem>>, vector<64x64xbf16>
    tpu.vector_store %arg14[%c0_19, %c0_20], %28 {strides = array<i32>} : memref<64x1600xbf16, #tpu.memory_space<vmem>>, vector<64x64xbf16>,
    %c0_21 = arith.constant 0 : index
    %c0_22 = arith.constant 0 : index
    %c1 = arith.constant 1 : index
    %c0_23 = arith.constant 0 : index
    %30 = vector.load %arg13[%c0_21, %c0_22, %c1, %c0_23] : memref<1x12x12x64xbf16, #tpu.memory_space<vmem>>, vector<1x8x8x64xbf16>
    %31 = vector.shape_cast %30 : vector<1x8x8x64xbf16> to vector<64x64xbf16>
    %c0_24 = arith.constant 0 : index
    %c64 = arith.constant 64 : index
    %32 = vector.load %arg14[%c0_24, %c64] : memref<64x1600xbf16, #tpu.memory_space<vmem>>, vector<64x64xbf16>
    tpu.vector_store %arg14[%c0_24, %c64], %31 {strides = array<i32>} : memref<64x1600xbf16, #tpu.memory_space<vmem>>, vector<64x64xbf16>,
    %c0_25 = arith.constant 0 : index
    %c0_26 = arith.constant 0 : index
    %c2_27 = arith.constant 2 : index
    %c0_28 = arith.constant 0 : index
    %33 = vector.load %arg13[%c0_25, %c0_26, %c2_27, %c0_28] : memref<1x12x12x64xbf16, #tpu.memory_space<vmem>>, vector<1x8x8x64xbf16>
    %34 = vector.shape_cast %33 : vector<1x8x8x64xbf16> to vector<64x64xbf16>
    %c0_29 = arith.constant 0 : index
    %c128 = arith.constant 128 : index
    %35 = vector.load %arg14[%c0_29, %c128] : memref<64x1600xbf16, #tpu.memory_space<vmem>>, vector<64x64xbf16>
    tpu.vector_store %arg14[%c0_29, %c128], %34 {strides = array<i32>} : memref<64x1600xbf16, #tpu.memory_space<vmem>>, vector<64x64xbf16>,
    %c0_30 = arith.constant 0 : index
    %c0_31 = arith.constant 0 : index
    %c3 = arith.constant 3 : index
    %c0_32 = arith.constant 0 : index
    %36 = vector.load %arg13[%c0_30, %c0_31, %c3, %c0_32] : memref<1x12x12x64xbf16, #tpu.memory_space<vmem>>, vector<1x8x8x64xbf16>
    %37 = vector.shape_cast %36 : vector<1x8x8x64xbf16> to vector<64x64xbf16>
    %c0_33 = arith.constant 0 : index
    %c192 = arith.constant 192 : index
    %38 = vector.load %arg14[%c0_33, %c192] : memref<64x1600xbf16, #tpu.memory_space<vmem>>, vector<64x64xbf16>
    tpu.vector_store %arg14[%c0_33, %c192], %37 {strides = array<i32>} : memref<64x1600xbf16, #tpu.memory_space<vmem>>, vector<64x64xbf16>,
    %c0_34 = arith.constant 0 : index
    %c0_35 = arith.constant 0 : index
    %c4 = arith.constant 4 : index
    %c0_36 = arith.constant 0 : index
    %39 = vector.load %arg13[%c0_34, %c0_35, %c4, %c0_36] : memref<1x12x12x64xbf16, #tpu.memory_space<vmem>>, vector<1x8x8x64xbf16>
    %40 = vector.shape_cast %39 : vector<1x8x8x64xbf16> to vector<64x64xbf16>
    %c0_37 = arith.constant 0 : index
    %c256 = arith.constant 256 : index
    %41 = vector.load %arg14[%c0_37, %c256] : memref<64x1600xbf16, #tpu.memory_space<vmem>>, vector<64x64xbf16>
    tpu.vector_store %arg14[%c0_37, %c256], %40 {strides = array<i32>} : memref<64x1600xbf16, #tpu.memory_space<vmem>>, vector<64x64xbf16>,
    %c0_38 = arith.constant 0 : index
    %c1_39 = arith.constant 1 : index
    %c0_40 = arith.constant 0 : index
    %c0_41 = arith.constant 0 : index
    %42 = vector.load %arg13[%c0_38, %c1_39, %c0_40, %c0_41] : memref<1x12x12x64xbf16, #tpu.memory_space<vmem>>, vector<1x8x8x64xbf16>
    %43 = vector.shape_cast %42 : vector<1x8x8x64xbf16> to vector<64x64xbf16>
    %c0_42 = arith.constant 0 : index
    %c320 = arith.constant 320 : index
    %44 = vector.load %arg14[%c0_42, %c320] : memref<64x1600xbf16, #tpu.memory_space<vmem>>, vector<64x64xbf16>
    tpu.vector_store %arg14[%c0_42, %c320], %43 {strides = array<i32>} : memref<64x1600xbf16, #tpu.memory_space<vmem>>, vector<64x64xbf16>,
    %c0_43 = arith.constant 0 : index
    %c1_44 = arith.constant 1 : index
    %c1_45 = arith.constant 1 : index
    %c0_46 = arith.constant 0 : index
    %45 = vector.load %arg13[%c0_43, %c1_44, %c1_45, %c0_46] : memref<1x12x12x64xbf16, #tpu.memory_space<vmem>>, vector<1x8x8x64xbf16>
    %46 = vector.shape_cast %45 : vector<1x8x8x64xbf16> to vector<64x64xbf16>
    %c0_47 = arith.constant 0 : index
    %c384 = arith.constant 384 : index
    %47 = vector.load %arg14[%c0_47, %c384] : memref<64x1600xbf16, #tpu.memory_space<vmem>>, vector<64x64xbf16>
    tpu.vector_store %arg14[%c0_47, %c384], %46 {strides = array<i32>} : memref<64x1600xbf16, #tpu.memory_space<vmem>>, vector<64x64xbf16>,
    %c0_48 = arith.constant 0 : index
    %c1_49 = arith.constant 1 : index
    %c2_50 = arith.constant 2 : index
    %c0_51 = arith.constant 0 : index
    %48 = vector.load %arg13[%c0_48, %c1_49, %c2_50, %c0_51] : memref<1x12x12x64xbf16, #tpu.memory_space<vmem>>, vector<1x8x8x64xbf16>
    %49 = vector.shape_cast %48 : vector<1x8x8x64xbf16> to vector<64x64xbf16>
    %c0_52 = arith.constant 0 : index
    %c448 = arith.constant 448 : index
    %50 = vector.load %arg14[%c0_52, %c448] : memref<64x1600xbf16, #tpu.memory_space<vmem>>, vector<64x64xbf16>
    tpu.vector_store %arg14[%c0_52, %c448], %49 {strides = array<i32>} : memref<64x1600xbf16, #tpu.memory_space<vmem>>, vector<64x64xbf16>,
    %c0_53 = arith.constant 0 : index
    %c1_54 = arith.constant 1 : index
    %c3_55 = arith.constant 3 : index
    %c0_56 = arith.constant 0 : index
    %51 = vector.load %arg13[%c0_53, %c1_54, %c3_55, %c0_56] : memref<1x12x12x64xbf16, #tpu.memory_space<vmem>>, vector<1x8x8x64xbf16>
    %52 = vector.shape_cast %51 : vector<1x8x8x64xbf16> to vector<64x64xbf16>
    %c0_57 = arith.constant 0 : index
    %c512 = arith.constant 512 : index
    %53 = vector.load %arg14[%c0_57, %c512] : memref<64x1600xbf16, #tpu.memory_space<vmem>>, vector<64x64xbf16>
    tpu.vector_store %arg14[%c0_57, %c512], %52 {strides = array<i32>} : memref<64x1600xbf16, #tpu.memory_space<vmem>>, vector<64x64xbf16>,
    %c0_58 = arith.constant 0 : index
    %c1_59 = arith.constant 1 : index
    %c4_60 = arith.constant 4 : index
    %c0_61 = arith.constant 0 : index
    %54 = vector.load %arg13[%c0_58, %c1_59, %c4_60, %c0_61] : memref<1x12x12x64xbf16, #tpu.memory_space<vmem>>, vector<1x8x8x64xbf16>
    %55 = vector.shape_cast %54 : vector<1x8x8x64xbf16> to vector<64x64xbf16>
    %c0_62 = arith.constant 0 : index
    %c576 = arith.constant 576 : index
    %56 = vector.load %arg14[%c0_62, %c576] : memref<64x1600xbf16, #tpu.memory_space<vmem>>, vector<64x64xbf16>
    tpu.vector_store %arg14[%c0_62, %c576], %55 {strides = array<i32>} : memref<64x1600xbf16, #tpu.memory_space<vmem>>, vector<64x64xbf16>,
    %c0_63 = arith.constant 0 : index
    %c2_64 = arith.constant 2 : index
    %c0_65 = arith.constant 0 : index
    %c0_66 = arith.constant 0 : index
    %57 = vector.load %arg13[%c0_63, %c2_64, %c0_65, %c0_66] : memref<1x12x12x64xbf16, #tpu.memory_space<vmem>>, vector<1x8x8x64xbf16>
    %58 = vector.shape_cast %57 : vector<1x8x8x64xbf16> to vector<64x64xbf16>
    %c0_67 = arith.constant 0 : index
    %c640 = arith.constant 640 : index
    %59 = vector.load %arg14[%c0_67, %c640] : memref<64x1600xbf16, #tpu.memory_space<vmem>>, vector<64x64xbf16>
    tpu.vector_store %arg14[%c0_67, %c640], %58 {strides = array<i32>} : memref<64x1600xbf16, #tpu.memory_space<vmem>>, vector<64x64xbf16>,
    %c0_68 = arith.constant 0 : index
    %c2_69 = arith.constant 2 : index
    %c1_70 = arith.constant 1 : index
    %c0_71 = arith.constant 0 : index
    %60 = vector.load %arg13[%c0_68, %c2_69, %c1_70, %c0_71] : memref<1x12x12x64xbf16, #tpu.memory_space<vmem>>, vector<1x8x8x64xbf16>
    %61 = vector.shape_cast %60 : vector<1x8x8x64xbf16> to vector<64x64xbf16>
    %c0_72 = arith.constant 0 : index
    %c704 = arith.constant 704 : index
    %62 = vector.load %arg14[%c0_72, %c704] : memref<64x1600xbf16, #tpu.memory_space<vmem>>, vector<64x64xbf16>
    tpu.vector_store %arg14[%c0_72, %c704], %61 {strides = array<i32>} : memref<64x1600xbf16, #tpu.memory_space<vmem>>, vector<64x64xbf16>,
    %c0_73 = arith.constant 0 : index
    %c2_74 = arith.constant 2 : index
    %c2_75 = arith.constant 2 : index
    %c0_76 = arith.constant 0 : index
    %63 = vector.load %arg13[%c0_73, %c2_74, %c2_75, %c0_76] : memref<1x12x12x64xbf16, #tpu.memory_space<vmem>>, vector<1x8x8x64xbf16>
    %64 = vector.shape_cast %63 : vector<1x8x8x64xbf16> to vector<64x64xbf16>
    %c0_77 = arith.constant 0 : index
    %c768 = arith.constant 768 : index
    %65 = vector.load %arg14[%c0_77, %c768] : memref<64x1600xbf16, #tpu.memory_space<vmem>>, vector<64x64xbf16>
    tpu.vector_store %arg14[%c0_77, %c768], %64 {strides = array<i32>} : memref<64x1600xbf16, #tpu.memory_space<vmem>>, vector<64x64xbf16>,
    %c0_78 = arith.constant 0 : index
    %c2_79 = arith.constant 2 : index
    %c3_80 = arith.constant 3 : index
    %c0_81 = arith.constant 0 : index
    %66 = vector.load %arg13[%c0_78, %c2_79, %c3_80, %c0_81] : memref<1x12x12x64xbf16, #tpu.memory_space<vmem>>, vector<1x8x8x64xbf16>
    %67 = vector.shape_cast %66 : vector<1x8x8x64xbf16> to vector<64x64xbf16>
    %c0_82 = arith.constant 0 : index
    %c832 = arith.constant 832 : index
    %68 = vector.load %arg14[%c0_82, %c832] : memref<64x1600xbf16, #tpu.memory_space<vmem>>, vector<64x64xbf16>
    tpu.vector_store %arg14[%c0_82, %c832], %67 {strides = array<i32>} : memref<64x1600xbf16, #tpu.memory_space<vmem>>, vector<64x64xbf16>,
    %c0_83 = arith.constant 0 : index
    %c2_84 = arith.constant 2 : index
    %c4_85 = arith.constant 4 : index
    %c0_86 = arith.constant 0 : index
    %69 = vector.load %arg13[%c0_83, %c2_84, %c4_85, %c0_86] : memref<1x12x12x64xbf16, #tpu.memory_space<vmem>>, vector<1x8x8x64xbf16>
    %70 = vector.shape_cast %69 : vector<1x8x8x64xbf16> to vector<64x64xbf16>
    %c0_87 = arith.constant 0 : index
    %c896 = arith.constant 896 : index
    %71 = vector.load %arg14[%c0_87, %c896] : memref<64x1600xbf16, #tpu.memory_space<vmem>>, vector<64x64xbf16>
    tpu.vector_store %arg14[%c0_87, %c896], %70 {strides = array<i32>} : memref<64x1600xbf16, #tpu.memory_space<vmem>>, vector<64x64xbf16>,
    %c0_88 = arith.constant 0 : index
    %c3_89 = arith.constant 3 : index
    %c0_90 = arith.constant 0 : index
    %c0_91 = arith.constant 0 : index
    %72 = vector.load %arg13[%c0_88, %c3_89, %c0_90, %c0_91] : memref<1x12x12x64xbf16, #tpu.memory_space<vmem>>, vector<1x8x8x64xbf16>
    %73 = vector.shape_cast %72 : vector<1x8x8x64xbf16> to vector<64x64xbf16>
    %c0_92 = arith.constant 0 : index
    %c960 = arith.constant 960 : index
    %74 = vector.load %arg14[%c0_92, %c960] : memref<64x1600xbf16, #tpu.memory_space<vmem>>, vector<64x64xbf16>
    tpu.vector_store %arg14[%c0_92, %c960], %73 {strides = array<i32>} : memref<64x1600xbf16, #tpu.memory_space<vmem>>, vector<64x64xbf16>,
    %c0_93 = arith.constant 0 : index
    %c3_94 = arith.constant 3 : index
    %c1_95 = arith.constant 1 : index
    %c0_96 = arith.constant 0 : index
    %75 = vector.load %arg13[%c0_93, %c3_94, %c1_95, %c0_96] : memref<1x12x12x64xbf16, #tpu.memory_space<vmem>>, vector<1x8x8x64xbf16>
    %76 = vector.shape_cast %75 : vector<1x8x8x64xbf16> to vector<64x64xbf16>
    %c0_97 = arith.constant 0 : index
    %c1024 = arith.constant 1024 : index
    %77 = vector.load %arg14[%c0_97, %c1024] : memref<64x1600xbf16, #tpu.memory_space<vmem>>, vector<64x64xbf16>
    tpu.vector_store %arg14[%c0_97, %c1024], %76 {strides = array<i32>} : memref<64x1600xbf16, #tpu.memory_space<vmem>>, vector<64x64xbf16>,
    %c0_98 = arith.constant 0 : index
    %c3_99 = arith.constant 3 : index
    %c2_100 = arith.constant 2 : index
    %c0_101 = arith.constant 0 : index
    %78 = vector.load %arg13[%c0_98, %c3_99, %c2_100, %c0_101] : memref<1x12x12x64xbf16, #tpu.memory_space<vmem>>, vector<1x8x8x64xbf16>
    %79 = vector.shape_cast %78 : vector<1x8x8x64xbf16> to vector<64x64xbf16>
    %c0_102 = arith.constant 0 : index
    %c1088 = arith.constant 1088 : index
    %80 = vector.load %arg14[%c0_102, %c1088] : memref<64x1600xbf16, #tpu.memory_space<vmem>>, vector<64x64xbf16>
    tpu.vector_store %arg14[%c0_102, %c1088], %79 {strides = array<i32>} : memref<64x1600xbf16, #tpu.memory_space<vmem>>, vector<64x64xbf16>,
    %c0_103 = arith.constant 0 : index
    %c3_104 = arith.constant 3 : index
    %c3_105 = arith.constant 3 : index
    %c0_106 = arith.constant 0 : index
    %81 = vector.load %arg13[%c0_103, %c3_104, %c3_105, %c0_106] : memref<1x12x12x64xbf16, #tpu.memory_space<vmem>>, vector<1x8x8x64xbf16>
    %82 = vector.shape_cast %81 : vector<1x8x8x64xbf16> to vector<64x64xbf16>
    %c0_107 = arith.constant 0 : index
    %c1152 = arith.constant 1152 : index
    %83 = vector.load %arg14[%c0_107, %c1152] : memref<64x1600xbf16, #tpu.memory_space<vmem>>, vector<64x64xbf16>
    tpu.vector_store %arg14[%c0_107, %c1152], %82 {strides = array<i32>} : memref<64x1600xbf16, #tpu.memory_space<vmem>>, vector<64x64xbf16>,
    %c0_108 = arith.constant 0 : index
    %c3_109 = arith.constant 3 : index
    %c4_110 = arith.constant 4 : index
    %c0_111 = arith.constant 0 : index
    %84 = vector.load %arg13[%c0_108, %c3_109, %c4_110, %c0_111] : memref<1x12x12x64xbf16, #tpu.memory_space<vmem>>, vector<1x8x8x64xbf16>
    %85 = vector.shape_cast %84 : vector<1x8x8x64xbf16> to vector<64x64xbf16>
    %c0_112 = arith.constant 0 : index
    %c1216 = arith.constant 1216 : index
    %86 = vector.load %arg14[%c0_112, %c1216] : memref<64x1600xbf16, #tpu.memory_space<vmem>>, vector<64x64xbf16>
    tpu.vector_store %arg14[%c0_112, %c1216], %85 {strides = array<i32>} : memref<64x1600xbf16, #tpu.memory_space<vmem>>, vector<64x64xbf16>,
    %c0_113 = arith.constant 0 : index
    %c4_114 = arith.constant 4 : index
    %c0_115 = arith.constant 0 : index
    %c0_116 = arith.constant 0 : index
    %87 = vector.load %arg13[%c0_113, %c4_114, %c0_115, %c0_116] : memref<1x12x12x64xbf16, #tpu.memory_space<vmem>>, vector<1x8x8x64xbf16>
    %88 = vector.shape_cast %87 : vector<1x8x8x64xbf16> to vector<64x64xbf16>
    %c0_117 = arith.constant 0 : index
    %c1280 = arith.constant 1280 : index
    %89 = vector.load %arg14[%c0_117, %c1280] : memref<64x1600xbf16, #tpu.memory_space<vmem>>, vector<64x64xbf16>
    tpu.vector_store %arg14[%c0_117, %c1280], %88 {strides = array<i32>} : memref<64x1600xbf16, #tpu.memory_space<vmem>>, vector<64x64xbf16>,
    %c0_118 = arith.constant 0 : index
    %c4_119 = arith.constant 4 : index
    %c1_120 = arith.constant 1 : index
    %c0_121 = arith.constant 0 : index
    %90 = vector.load %arg13[%c0_118, %c4_119, %c1_120, %c0_121] : memref<1x12x12x64xbf16, #tpu.memory_space<vmem>>, vector<1x8x8x64xbf16>
    %91 = vector.shape_cast %90 : vector<1x8x8x64xbf16> to vector<64x64xbf16>
    %c0_122 = arith.constant 0 : index
    %c1344 = arith.constant 1344 : index
    %92 = vector.load %arg14[%c0_122, %c1344] : memref<64x1600xbf16, #tpu.memory_space<vmem>>, vector<64x64xbf16>
    tpu.vector_store %arg14[%c0_122, %c1344], %91 {strides = array<i32>} : memref<64x1600xbf16, #tpu.memory_space<vmem>>, vector<64x64xbf16>,
    %c0_123 = arith.constant 0 : index
    %c4_124 = arith.constant 4 : index
    %c2_125 = arith.constant 2 : index
    %c0_126 = arith.constant 0 : index
    %93 = vector.load %arg13[%c0_123, %c4_124, %c2_125, %c0_126] : memref<1x12x12x64xbf16, #tpu.memory_space<vmem>>, vector<1x8x8x64xbf16>
    %94 = vector.shape_cast %93 : vector<1x8x8x64xbf16> to vector<64x64xbf16>
    %c0_127 = arith.constant 0 : index
    %c1408 = arith.constant 1408 : index
    %95 = vector.load %arg14[%c0_127, %c1408] : memref<64x1600xbf16, #tpu.memory_space<vmem>>, vector<64x64xbf16>
    tpu.vector_store %arg14[%c0_127, %c1408], %94 {strides = array<i32>} : memref<64x1600xbf16, #tpu.memory_space<vmem>>, vector<64x64xbf16>,
    %c0_128 = arith.constant 0 : index
    %c4_129 = arith.constant 4 : index
    %c3_130 = arith.constant 3 : index
    %c0_131 = arith.constant 0 : index
    %96 = vector.load %arg13[%c0_128, %c4_129, %c3_130, %c0_131] : memref<1x12x12x64xbf16, #tpu.memory_space<vmem>>, vector<1x8x8x64xbf16>
    %97 = vector.shape_cast %96 : vector<1x8x8x64xbf16> to vector<64x64xbf16>
    %c0_132 = arith.constant 0 : index
    %c1472 = arith.constant 1472 : index
    %98 = vector.load %arg14[%c0_132, %c1472] : memref<64x1600xbf16, #tpu.memory_space<vmem>>, vector<64x64xbf16>
    tpu.vector_store %arg14[%c0_132, %c1472], %97 {strides = array<i32>} : memref<64x1600xbf16, #tpu.memory_space<vmem>>, vector<64x64xbf16>,
    %c0_133 = arith.constant 0 : index
    %c4_134 = arith.constant 4 : index
    %c4_135 = arith.constant 4 : index
    %c0_136 = arith.constant 0 : index
    %99 = vector.load %arg13[%c0_133, %c4_134, %c4_135, %c0_136] : memref<1x12x12x64xbf16, #tpu.memory_space<vmem>>, vector<1x8x8x64xbf16>
    %100 = vector.shape_cast %99 : vector<1x8x8x64xbf16> to vector<64x64xbf16>
    %c0_137 = arith.constant 0 : index
    %c1536 = arith.constant 1536 : index
    %101 = vector.load %arg14[%c0_137, %c1536] : memref<64x1600xbf16, #tpu.memory_space<vmem>>, vector<64x64xbf16>
    tpu.vector_store %arg14[%c0_137, %c1536], %100 {strides = array<i32>} : memref<64x1600xbf16, #tpu.memory_space<vmem>>, vector<64x64xbf16>,
    %c0_138 = arith.constant 0 : index
    %c0_139 = arith.constant 0 : index
    %102 = vector.load %arg14[%c0_138, %c0_139] : memref<64x1600xbf16, #tpu.memory_space<vmem>>, vector<64x1600xbf16>
    %c0_140 = arith.constant 0 : index
    %c0_141 = arith.constant 0 : index
    %103 = vector.load %arg4[%c0_140, %c0_141] : memref<1600x128xbf16, #tpu.memory_space<vmem>>, vector<1600x128xbf16>
    %cst_142 = arith.constant dense<0.000000e+00> : vector<64x128xf32>
    %104 = tpu.matmul %102, %103, %cst_142 {dimension_numbers = #tpu.dot_dimension_numbers<[1], [0], [0], [1], [0, 0, 1, 1], [], []>} : vector<64x1600xbf16>, vector<1600x128xbf16>, vector<64x128xf32> -> vector<64x128xf32>
    %c0_143 = arith.constant 0 : index
    %c0_144 = arith.constant 0 : index
    %105 = vector.load %arg5[%c0_143, %c0_144] : memref<1x128xf32, #tpu.memory_space<vmem>>, vector<1x128xf32>
    %106 = vector.broadcast %105 : vector<1x128xf32> to vector<64x128xf32>
    %107 = arith.addf %104, %106 : vector<64x128xf32>
    %108 = vector.shape_cast %107 : vector<64x128xf32> to vector<32x2x128xf32>
    %109 = vector.extract_strided_slice %108 {offsets = [0, 0, 0], sizes = [32, 1, 128], strides = [1, 1, 1]} : vector<32x2x128xf32> to vector<32x1x128xf32>
    %110 = vector.shape_cast %109 : vector<32x1x128xf32> to vector<32x128xf32>
    %111 = vector.extract_strided_slice %108 {offsets = [0, 1, 0], sizes = [32, 1, 128], strides = [1, 1, 1]} : vector<32x2x128xf32> to vector<32x1x128xf32>
    %112 = vector.shape_cast %111 : vector<32x1x128xf32> to vector<32x128xf32>
    %113 = arith.maximumf %110, %112 : vector<32x128xf32>
    %114 = vector.shape_cast %113 : vector<32x128xf32> to vector<4x2x4x128xf32>
    %115 = vector.extract_strided_slice %114 {offsets = [0, 0, 0, 0], sizes = [4, 1, 4, 128], strides = [1, 1, 1, 1]} : vector<4x2x4x128xf32> to vector<4x1x4x128xf32>
    %116 = vector.shape_cast %115 : vector<4x1x4x128xf32> to vector<4x4x128xf32>
    %117 = vector.extract_strided_slice %114 {offsets = [0, 1, 0, 0], sizes = [4, 1, 4, 128], strides = [1, 1, 1, 1]} : vector<4x2x4x128xf32> to vector<4x1x4x128xf32>
    %118 = vector.shape_cast %117 : vector<4x1x4x128xf32> to vector<4x4x128xf32>
    %119 = arith.maximumf %116, %118 : vector<4x4x128xf32>
    %cst_145 = arith.constant 2.000000e-01 : f32
    %120 = vector.broadcast %cst_145 : f32 to vector<4x4x128xf32>
    %121 = arith.mulf %120, %119 : vector<4x4x128xf32>
    %122 = arith.maximumf %119, %121 : vector<4x4x128xf32>
    %123 = vector.shape_cast %122 : vector<4x4x128xf32> to vector<1x4x4x128xf32>
    %cst_146 = arith.constant 0.000000e+00 : bf16
    %124 = vector.broadcast %cst_146 : bf16 to vector<1x8x8x128xbf16>
    %c0_147 = arith.constant 0 : index
    %c0_148 = arith.constant 0 : index
    %c0_149 = arith.constant 0 : index
    %c0_150 = arith.constant 0 : index
    %125 = vector.load %arg15[%c0_147, %c0_148, %c0_149, %c0_150] : memref<1x8x8x128xbf16, #tpu.memory_space<vmem>>, vector<1x8x8x128xbf16>
    tpu.vector_store %arg15[%c0_147, %c0_148, %c0_149, %c0_150], %124 {strides = array<i32>} : memref<1x8x8x128xbf16, #tpu.memory_space<vmem>>, vector<1x8x8x128xbf16>,
    %126 = arith.truncf %123 : vector<1x4x4x128xf32> to vector<1x4x4x128xbf16>
    %c0_151 = arith.constant 0 : index
    %c2_152 = arith.constant 2 : index
    %c2_153 = arith.constant 2 : index
    %c0_154 = arith.constant 0 : index
    %127 = vector.load %arg15[%c0_151, %c2_152, %c2_153, %c0_154] : memref<1x8x8x128xbf16, #tpu.memory_space<vmem>>, vector<1x4x4x128xbf16>
    tpu.vector_store %arg15[%c0_151, %c2_152, %c2_153, %c0_154], %126 {strides = array<i32>} : memref<1x8x8x128xbf16, #tpu.memory_space<vmem>>, vector<1x4x4x128xbf16>,
    %c0_155 = arith.constant 0 : index
    %c0_156 = arith.constant 0 : index
    %c0_157 = arith.constant 0 : index
    %c0_158 = arith.constant 0 : index
    %128 = vector.load %arg15[%c0_155, %c0_156, %c0_157, %c0_158] : memref<1x8x8x128xbf16, #tpu.memory_space<vmem>>, vector<1x4x4x128xbf16>
    %129 = vector.shape_cast %128 : vector<1x4x4x128xbf16> to vector<16x128xbf16>
    %c0_159 = arith.constant 0 : index
    %c0_160 = arith.constant 0 : index
    %130 = vector.load %arg16[%c0_159, %c0_160] : memref<16x3200xbf16, #tpu.memory_space<vmem>>, vector<16x128xbf16>
    tpu.vector_store %arg16[%c0_159, %c0_160], %129 {strides = array<i32>} : memref<16x3200xbf16, #tpu.memory_space<vmem>>, vector<16x128xbf16>,
    %c0_161 = arith.constant 0 : index
    %c0_162 = arith.constant 0 : index
    %c1_163 = arith.constant 1 : index
    %c0_164 = arith.constant 0 : index
    %131 = vector.load %arg15[%c0_161, %c0_162, %c1_163, %c0_164] : memref<1x8x8x128xbf16, #tpu.memory_space<vmem>>, vector<1x4x4x128xbf16>
    %132 = vector.shape_cast %131 : vector<1x4x4x128xbf16> to vector<16x128xbf16>
    %c0_165 = arith.constant 0 : index
    %c128_166 = arith.constant 128 : index
    %133 = vector.load %arg16[%c0_165, %c128_166] : memref<16x3200xbf16, #tpu.memory_space<vmem>>, vector<16x128xbf16>
    tpu.vector_store %arg16[%c0_165, %c128_166], %132 {strides = array<i32>} : memref<16x3200xbf16, #tpu.memory_space<vmem>>, vector<16x128xbf16>,
    %c0_167 = arith.constant 0 : index
    %c0_168 = arith.constant 0 : index
    %c2_169 = arith.constant 2 : index
    %c0_170 = arith.constant 0 : index
    %134 = vector.load %arg15[%c0_167, %c0_168, %c2_169, %c0_170] : memref<1x8x8x128xbf16, #tpu.memory_space<vmem>>, vector<1x4x4x128xbf16>
    %135 = vector.shape_cast %134 : vector<1x4x4x128xbf16> to vector<16x128xbf16>
    %c0_171 = arith.constant 0 : index
    %c256_172 = arith.constant 256 : index
    %136 = vector.load %arg16[%c0_171, %c256_172] : memref<16x3200xbf16, #tpu.memory_space<vmem>>, vector<16x128xbf16>
    tpu.vector_store %arg16[%c0_171, %c256_172], %135 {strides = array<i32>} : memref<16x3200xbf16, #tpu.memory_space<vmem>>, vector<16x128xbf16>,
    %c0_173 = arith.constant 0 : index
    %c0_174 = arith.constant 0 : index
    %c3_175 = arith.constant 3 : index
    %c0_176 = arith.constant 0 : index
    %137 = vector.load %arg15[%c0_173, %c0_174, %c3_175, %c0_176] : memref<1x8x8x128xbf16, #tpu.memory_space<vmem>>, vector<1x4x4x128xbf16>
    %138 = vector.shape_cast %137 : vector<1x4x4x128xbf16> to vector<16x128xbf16>
    %c0_177 = arith.constant 0 : index
    %c384_178 = arith.constant 384 : index
    %139 = vector.load %arg16[%c0_177, %c384_178] : memref<16x3200xbf16, #tpu.memory_space<vmem>>, vector<16x128xbf16>
    tpu.vector_store %arg16[%c0_177, %c384_178], %138 {strides = array<i32>} : memref<16x3200xbf16, #tpu.memory_space<vmem>>, vector<16x128xbf16>,
    %c0_179 = arith.constant 0 : index
    %c0_180 = arith.constant 0 : index
    %c4_181 = arith.constant 4 : index
    %c0_182 = arith.constant 0 : index
    %140 = vector.load %arg15[%c0_179, %c0_180, %c4_181, %c0_182] : memref<1x8x8x128xbf16, #tpu.memory_space<vmem>>, vector<1x4x4x128xbf16>
    %141 = vector.shape_cast %140 : vector<1x4x4x128xbf16> to vector<16x128xbf16>
    %c0_183 = arith.constant 0 : index
    %c512_184 = arith.constant 512 : index
    %142 = vector.load %arg16[%c0_183, %c512_184] : memref<16x3200xbf16, #tpu.memory_space<vmem>>, vector<16x128xbf16>
    tpu.vector_store %arg16[%c0_183, %c512_184], %141 {strides = array<i32>} : memref<16x3200xbf16, #tpu.memory_space<vmem>>, vector<16x128xbf16>,
    %c0_185 = arith.constant 0 : index
    %c1_186 = arith.constant 1 : index
    %c0_187 = arith.constant 0 : index
    %c0_188 = arith.constant 0 : index
    %143 = vector.load %arg15[%c0_185, %c1_186, %c0_187, %c0_188] : memref<1x8x8x128xbf16, #tpu.memory_space<vmem>>, vector<1x4x4x128xbf16>
    %144 = vector.shape_cast %143 : vector<1x4x4x128xbf16> to vector<16x128xbf16>
    %c0_189 = arith.constant 0 : index
    %c640_190 = arith.constant 640 : index
    %145 = vector.load %arg16[%c0_189, %c640_190] : memref<16x3200xbf16, #tpu.memory_space<vmem>>, vector<16x128xbf16>
    tpu.vector_store %arg16[%c0_189, %c640_190], %144 {strides = array<i32>} : memref<16x3200xbf16, #tpu.memory_space<vmem>>, vector<16x128xbf16>,
    %c0_191 = arith.constant 0 : index
    %c1_192 = arith.constant 1 : index
    %c1_193 = arith.constant 1 : index
    %c0_194 = arith.constant 0 : index
    %146 = vector.load %arg15[%c0_191, %c1_192, %c1_193, %c0_194] : memref<1x8x8x128xbf16, #tpu.memory_space<vmem>>, vector<1x4x4x128xbf16>
    %147 = vector.shape_cast %146 : vector<1x4x4x128xbf16> to vector<16x128xbf16>
    %c0_195 = arith.constant 0 : index
    %c768_196 = arith.constant 768 : index
    %148 = vector.load %arg16[%c0_195, %c768_196] : memref<16x3200xbf16, #tpu.memory_space<vmem>>, vector<16x128xbf16>
    tpu.vector_store %arg16[%c0_195, %c768_196], %147 {strides = array<i32>} : memref<16x3200xbf16, #tpu.memory_space<vmem>>, vector<16x128xbf16>,
    %c0_197 = arith.constant 0 : index
    %c1_198 = arith.constant 1 : index
    %c2_199 = arith.constant 2 : index
    %c0_200 = arith.constant 0 : index
    %149 = vector.load %arg15[%c0_197, %c1_198, %c2_199, %c0_200] : memref<1x8x8x128xbf16, #tpu.memory_space<vmem>>, vector<1x4x4x128xbf16>
    %150 = vector.shape_cast %149 : vector<1x4x4x128xbf16> to vector<16x128xbf16>
    %c0_201 = arith.constant 0 : index
    %c896_202 = arith.constant 896 : index
    %151 = vector.load %arg16[%c0_201, %c896_202] : memref<16x3200xbf16, #tpu.memory_space<vmem>>, vector<16x128xbf16>
    tpu.vector_store %arg16[%c0_201, %c896_202], %150 {strides = array<i32>} : memref<16x3200xbf16, #tpu.memory_space<vmem>>, vector<16x128xbf16>,
    %c0_203 = arith.constant 0 : index
    %c1_204 = arith.constant 1 : index
    %c3_205 = arith.constant 3 : index
    %c0_206 = arith.constant 0 : index
    %152 = vector.load %arg15[%c0_203, %c1_204, %c3_205, %c0_206] : memref<1x8x8x128xbf16, #tpu.memory_space<vmem>>, vector<1x4x4x128xbf16>
    %153 = vector.shape_cast %152 : vector<1x4x4x128xbf16> to vector<16x128xbf16>
    %c0_207 = arith.constant 0 : index
    %c1024_208 = arith.constant 1024 : index
    %154 = vector.load %arg16[%c0_207, %c1024_208] : memref<16x3200xbf16, #tpu.memory_space<vmem>>, vector<16x128xbf16>
    tpu.vector_store %arg16[%c0_207, %c1024_208], %153 {strides = array<i32>} : memref<16x3200xbf16, #tpu.memory_space<vmem>>, vector<16x128xbf16>,
    %c0_209 = arith.constant 0 : index
    %c1_210 = arith.constant 1 : index
    %c4_211 = arith.constant 4 : index
    %c0_212 = arith.constant 0 : index
    %155 = vector.load %arg15[%c0_209, %c1_210, %c4_211, %c0_212] : memref<1x8x8x128xbf16, #tpu.memory_space<vmem>>, vector<1x4x4x128xbf16>
    %156 = vector.shape_cast %155 : vector<1x4x4x128xbf16> to vector<16x128xbf16>
    %c0_213 = arith.constant 0 : index
    %c1152_214 = arith.constant 1152 : index
    %157 = vector.load %arg16[%c0_213, %c1152_214] : memref<16x3200xbf16, #tpu.memory_space<vmem>>, vector<16x128xbf16>
    tpu.vector_store %arg16[%c0_213, %c1152_214], %156 {strides = array<i32>} : memref<16x3200xbf16, #tpu.memory_space<vmem>>, vector<16x128xbf16>,
    %c0_215 = arith.constant 0 : index
    %c2_216 = arith.constant 2 : index
    %c0_217 = arith.constant 0 : index
    %c0_218 = arith.constant 0 : index
    %158 = vector.load %arg15[%c0_215, %c2_216, %c0_217, %c0_218] : memref<1x8x8x128xbf16, #tpu.memory_space<vmem>>, vector<1x4x4x128xbf16>
    %159 = vector.shape_cast %158 : vector<1x4x4x128xbf16> to vector<16x128xbf16>
    %c0_219 = arith.constant 0 : index
    %c1280_220 = arith.constant 1280 : index
    %160 = vector.load %arg16[%c0_219, %c1280_220] : memref<16x3200xbf16, #tpu.memory_space<vmem>>, vector<16x128xbf16>
    tpu.vector_store %arg16[%c0_219, %c1280_220], %159 {strides = array<i32>} : memref<16x3200xbf16, #tpu.memory_space<vmem>>, vector<16x128xbf16>,
    %c0_221 = arith.constant 0 : index
    %c2_222 = arith.constant 2 : index
    %c1_223 = arith.constant 1 : index
    %c0_224 = arith.constant 0 : index
    %161 = vector.load %arg15[%c0_221, %c2_222, %c1_223, %c0_224] : memref<1x8x8x128xbf16, #tpu.memory_space<vmem>>, vector<1x4x4x128xbf16>
    %162 = vector.shape_cast %161 : vector<1x4x4x128xbf16> to vector<16x128xbf16>
    %c0_225 = arith.constant 0 : index
    %c1408_226 = arith.constant 1408 : index
    %163 = vector.load %arg16[%c0_225, %c1408_226] : memref<16x3200xbf16, #tpu.memory_space<vmem>>, vector<16x128xbf16>
    tpu.vector_store %arg16[%c0_225, %c1408_226], %162 {strides = array<i32>} : memref<16x3200xbf16, #tpu.memory_space<vmem>>, vector<16x128xbf16>,
    %c0_227 = arith.constant 0 : index
    %c2_228 = arith.constant 2 : index
    %c2_229 = arith.constant 2 : index
    %c0_230 = arith.constant 0 : index
    %164 = vector.load %arg15[%c0_227, %c2_228, %c2_229, %c0_230] : memref<1x8x8x128xbf16, #tpu.memory_space<vmem>>, vector<1x4x4x128xbf16>
    %165 = vector.shape_cast %164 : vector<1x4x4x128xbf16> to vector<16x128xbf16>
    %c0_231 = arith.constant 0 : index
    %c1536_232 = arith.constant 1536 : index
    %166 = vector.load %arg16[%c0_231, %c1536_232] : memref<16x3200xbf16, #tpu.memory_space<vmem>>, vector<16x128xbf16>
    tpu.vector_store %arg16[%c0_231, %c1536_232], %165 {strides = array<i32>} : memref<16x3200xbf16, #tpu.memory_space<vmem>>, vector<16x128xbf16>,
    %c0_233 = arith.constant 0 : index
    %c2_234 = arith.constant 2 : index
    %c3_235 = arith.constant 3 : index
    %c0_236 = arith.constant 0 : index
    %167 = vector.load %arg15[%c0_233, %c2_234, %c3_235, %c0_236] : memref<1x8x8x128xbf16, #tpu.memory_space<vmem>>, vector<1x4x4x128xbf16>
    %168 = vector.shape_cast %167 : vector<1x4x4x128xbf16> to vector<16x128xbf16>
    %c0_237 = arith.constant 0 : index
    %c1664 = arith.constant 1664 : index
    %169 = vector.load %arg16[%c0_237, %c1664] : memref<16x3200xbf16, #tpu.memory_space<vmem>>, vector<16x128xbf16>
    tpu.vector_store %arg16[%c0_237, %c1664], %168 {strides = array<i32>} : memref<16x3200xbf16, #tpu.memory_space<vmem>>, vector<16x128xbf16>,
    %c0_238 = arith.constant 0 : index
    %c2_239 = arith.constant 2 : index
    %c4_240 = arith.constant 4 : index
    %c0_241 = arith.constant 0 : index
    %170 = vector.load %arg15[%c0_238, %c2_239, %c4_240, %c0_241] : memref<1x8x8x128xbf16, #tpu.memory_space<vmem>>, vector<1x4x4x128xbf16>
    %171 = vector.shape_cast %170 : vector<1x4x4x128xbf16> to vector<16x128xbf16>
    %c0_242 = arith.constant 0 : index
    %c1792 = arith.constant 1792 : index
    %172 = vector.load %arg16[%c0_242, %c1792] : memref<16x3200xbf16, #tpu.memory_space<vmem>>, vector<16x128xbf16>
    tpu.vector_store %arg16[%c0_242, %c1792], %171 {strides = array<i32>} : memref<16x3200xbf16, #tpu.memory_space<vmem>>, vector<16x128xbf16>,
    %c0_243 = arith.constant 0 : index
    %c3_244 = arith.constant 3 : index
    %c0_245 = arith.constant 0 : index
    %c0_246 = arith.constant 0 : index
    %173 = vector.load %arg15[%c0_243, %c3_244, %c0_245, %c0_246] : memref<1x8x8x128xbf16, #tpu.memory_space<vmem>>, vector<1x4x4x128xbf16>
    %174 = vector.shape_cast %173 : vector<1x4x4x128xbf16> to vector<16x128xbf16>
    %c0_247 = arith.constant 0 : index
    %c1920 = arith.constant 1920 : index
    %175 = vector.load %arg16[%c0_247, %c1920] : memref<16x3200xbf16, #tpu.memory_space<vmem>>, vector<16x128xbf16>
    tpu.vector_store %arg16[%c0_247, %c1920], %174 {strides = array<i32>} : memref<16x3200xbf16, #tpu.memory_space<vmem>>, vector<16x128xbf16>,
    %c0_248 = arith.constant 0 : index
    %c3_249 = arith.constant 3 : index
    %c1_250 = arith.constant 1 : index
    %c0_251 = arith.constant 0 : index
    %176 = vector.load %arg15[%c0_248, %c3_249, %c1_250, %c0_251] : memref<1x8x8x128xbf16, #tpu.memory_space<vmem>>, vector<1x4x4x128xbf16>
    %177 = vector.shape_cast %176 : vector<1x4x4x128xbf16> to vector<16x128xbf16>
    %c0_252 = arith.constant 0 : index
    %c2048 = arith.constant 2048 : index
    %178 = vector.load %arg16[%c0_252, %c2048] : memref<16x3200xbf16, #tpu.memory_space<vmem>>, vector<16x128xbf16>
    tpu.vector_store %arg16[%c0_252, %c2048], %177 {strides = array<i32>} : memref<16x3200xbf16, #tpu.memory_space<vmem>>, vector<16x128xbf16>,
    %c0_253 = arith.constant 0 : index
    %c3_254 = arith.constant 3 : index
    %c2_255 = arith.constant 2 : index
    %c0_256 = arith.constant 0 : index
    %179 = vector.load %arg15[%c0_253, %c3_254, %c2_255, %c0_256] : memref<1x8x8x128xbf16, #tpu.memory_space<vmem>>, vector<1x4x4x128xbf16>
    %180 = vector.shape_cast %179 : vector<1x4x4x128xbf16> to vector<16x128xbf16>
    %c0_257 = arith.constant 0 : index
    %c2176 = arith.constant 2176 : index
    %181 = vector.load %arg16[%c0_257, %c2176] : memref<16x3200xbf16, #tpu.memory_space<vmem>>, vector<16x128xbf16>
    tpu.vector_store %arg16[%c0_257, %c2176], %180 {strides = array<i32>} : memref<16x3200xbf16, #tpu.memory_space<vmem>>, vector<16x128xbf16>,
    %c0_258 = arith.constant 0 : index
    %c3_259 = arith.constant 3 : index
    %c3_260 = arith.constant 3 : index
    %c0_261 = arith.constant 0 : index
    %182 = vector.load %arg15[%c0_258, %c3_259, %c3_260, %c0_261] : memref<1x8x8x128xbf16, #tpu.memory_space<vmem>>, vector<1x4x4x128xbf16>
    %183 = vector.shape_cast %182 : vector<1x4x4x128xbf16> to vector<16x128xbf16>
    %c0_262 = arith.constant 0 : index
    %c2304 = arith.constant 2304 : index
    %184 = vector.load %arg16[%c0_262, %c2304] : memref<16x3200xbf16, #tpu.memory_space<vmem>>, vector<16x128xbf16>
    tpu.vector_store %arg16[%c0_262, %c2304], %183 {strides = array<i32>} : memref<16x3200xbf16, #tpu.memory_space<vmem>>, vector<16x128xbf16>,
    %c0_263 = arith.constant 0 : index
    %c3_264 = arith.constant 3 : index
    %c4_265 = arith.constant 4 : index
    %c0_266 = arith.constant 0 : index
    %185 = vector.load %arg15[%c0_263, %c3_264, %c4_265, %c0_266] : memref<1x8x8x128xbf16, #tpu.memory_space<vmem>>, vector<1x4x4x128xbf16>
    %186 = vector.shape_cast %185 : vector<1x4x4x128xbf16> to vector<16x128xbf16>
    %c0_267 = arith.constant 0 : index
    %c2432 = arith.constant 2432 : index
    %187 = vector.load %arg16[%c0_267, %c2432] : memref<16x3200xbf16, #tpu.memory_space<vmem>>, vector<16x128xbf16>
    tpu.vector_store %arg16[%c0_267, %c2432], %186 {strides = array<i32>} : memref<16x3200xbf16, #tpu.memory_space<vmem>>, vector<16x128xbf16>,
    %c0_268 = arith.constant 0 : index
    %c4_269 = arith.constant 4 : index
    %c0_270 = arith.constant 0 : index
    %c0_271 = arith.constant 0 : index
    %188 = vector.load %arg15[%c0_268, %c4_269, %c0_270, %c0_271] : memref<1x8x8x128xbf16, #tpu.memory_space<vmem>>, vector<1x4x4x128xbf16>
    %189 = vector.shape_cast %188 : vector<1x4x4x128xbf16> to vector<16x128xbf16>
    %c0_272 = arith.constant 0 : index
    %c2560 = arith.constant 2560 : index
    %190 = vector.load %arg16[%c0_272, %c2560] : memref<16x3200xbf16, #tpu.memory_space<vmem>>, vector<16x128xbf16>
    tpu.vector_store %arg16[%c0_272, %c2560], %189 {strides = array<i32>} : memref<16x3200xbf16, #tpu.memory_space<vmem>>, vector<16x128xbf16>,
    %c0_273 = arith.constant 0 : index
    %c4_274 = arith.constant 4 : index
    %c1_275 = arith.constant 1 : index
    %c0_276 = arith.constant 0 : index
    %191 = vector.load %arg15[%c0_273, %c4_274, %c1_275, %c0_276] : memref<1x8x8x128xbf16, #tpu.memory_space<vmem>>, vector<1x4x4x128xbf16>
    %192 = vector.shape_cast %191 : vector<1x4x4x128xbf16> to vector<16x128xbf16>
    %c0_277 = arith.constant 0 : index
    %c2688 = arith.constant 2688 : index
    %193 = vector.load %arg16[%c0_277, %c2688] : memref<16x3200xbf16, #tpu.memory_space<vmem>>, vector<16x128xbf16>
    tpu.vector_store %arg16[%c0_277, %c2688], %192 {strides = array<i32>} : memref<16x3200xbf16, #tpu.memory_space<vmem>>, vector<16x128xbf16>,
    %c0_278 = arith.constant 0 : index
    %c4_279 = arith.constant 4 : index
    %c2_280 = arith.constant 2 : index
    %c0_281 = arith.constant 0 : index
    %194 = vector.load %arg15[%c0_278, %c4_279, %c2_280, %c0_281] : memref<1x8x8x128xbf16, #tpu.memory_space<vmem>>, vector<1x4x4x128xbf16>
    %195 = vector.shape_cast %194 : vector<1x4x4x128xbf16> to vector<16x128xbf16>
    %c0_282 = arith.constant 0 : index
    %c2816 = arith.constant 2816 : index
    %196 = vector.load %arg16[%c0_282, %c2816] : memref<16x3200xbf16, #tpu.memory_space<vmem>>, vector<16x128xbf16>
    tpu.vector_store %arg16[%c0_282, %c2816], %195 {strides = array<i32>} : memref<16x3200xbf16, #tpu.memory_space<vmem>>, vector<16x128xbf16>,
    %c0_283 = arith.constant 0 : index
    %c4_284 = arith.constant 4 : index
    %c3_285 = arith.constant 3 : index
    %c0_286 = arith.constant 0 : index
    %197 = vector.load %arg15[%c0_283, %c4_284, %c3_285, %c0_286] : memref<1x8x8x128xbf16, #tpu.memory_space<vmem>>, vector<1x4x4x128xbf16>
    %198 = vector.shape_cast %197 : vector<1x4x4x128xbf16> to vector<16x128xbf16>
    %c0_287 = arith.constant 0 : index
    %c2944 = arith.constant 2944 : index
    %199 = vector.load %arg16[%c0_287, %c2944] : memref<16x3200xbf16, #tpu.memory_space<vmem>>, vector<16x128xbf16>
    tpu.vector_store %arg16[%c0_287, %c2944], %198 {strides = array<i32>} : memref<16x3200xbf16, #tpu.memory_space<vmem>>, vector<16x128xbf16>,
    %c0_288 = arith.constant 0 : index
    %c4_289 = arith.constant 4 : index
    %c4_290 = arith.constant 4 : index
    %c0_291 = arith.constant 0 : index
    %200 = vector.load %arg15[%c0_288, %c4_289, %c4_290, %c0_291] : memref<1x8x8x128xbf16, #tpu.memory_space<vmem>>, vector<1x4x4x128xbf16>
    %201 = vector.shape_cast %200 : vector<1x4x4x128xbf16> to vector<16x128xbf16>
    %c0_292 = arith.constant 0 : index
    %c3072 = arith.constant 3072 : index
    %202 = vector.load %arg16[%c0_292, %c3072] : memref<16x3200xbf16, #tpu.memory_space<vmem>>, vector<16x128xbf16>
    tpu.vector_store %arg16[%c0_292, %c3072], %201 {strides = array<i32>} : memref<16x3200xbf16, #tpu.memory_space<vmem>>, vector<16x128xbf16>,
    %c0_293 = arith.constant 0 : index
    %c0_294 = arith.constant 0 : index
    %203 = vector.load %arg16[%c0_293, %c0_294] : memref<16x3200xbf16, #tpu.memory_space<vmem>>, vector<16x3200xbf16>
    %c0_295 = arith.constant 0 : index
    %c0_296 = arith.constant 0 : index
    %204 = vector.load %arg6[%c0_295, %c0_296] : memref<3200x256xbf16, #tpu.memory_space<vmem>>, vector<3200x256xbf16>
    %cst_297 = arith.constant dense<0.000000e+00> : vector<16x256xf32>
    %205 = tpu.matmul %203, %204, %cst_297 {dimension_numbers = #tpu.dot_dimension_numbers<[1], [0], [0], [1], [0, 0, 1, 1], [], []>} : vector<16x3200xbf16>, vector<3200x256xbf16>, vector<16x256xf32> -> vector<16x256xf32>
    %c0_298 = arith.constant 0 : index
    %c0_299 = arith.constant 0 : index
    %206 = vector.load %arg7[%c0_298, %c0_299] : memref<1x256xf32, #tpu.memory_space<vmem>>, vector<1x256xf32>
    %207 = vector.broadcast %206 : vector<1x256xf32> to vector<16x256xf32>
    %208 = arith.addf %205, %207 : vector<16x256xf32>
    %209 = vector.shape_cast %208 : vector<16x256xf32> to vector<8x2x256xf32>
    %210 = vector.extract_strided_slice %209 {offsets = [0, 0, 0], sizes = [8, 1, 256], strides = [1, 1, 1]} : vector<8x2x256xf32> to vector<8x1x256xf32>
    %211 = vector.shape_cast %210 : vector<8x1x256xf32> to vector<8x256xf32>
    %212 = vector.extract_strided_slice %209 {offsets = [0, 1, 0], sizes = [8, 1, 256], strides = [1, 1, 1]} : vector<8x2x256xf32> to vector<8x1x256xf32>
    %213 = vector.shape_cast %212 : vector<8x1x256xf32> to vector<8x256xf32>
    %214 = arith.maximumf %211, %213 : vector<8x256xf32>
    %215 = vector.shape_cast %214 : vector<8x256xf32> to vector<2x2x2x256xf32>
    %216 = vector.extract_strided_slice %215 {offsets = [0, 0, 0, 0], sizes = [2, 1, 2, 256], strides = [1, 1, 1, 1]} : vector<2x2x2x256xf32> to vector<2x1x2x256xf32>
    %217 = vector.shape_cast %216 : vector<2x1x2x256xf32> to vector<2x2x256xf32>
    %218 = vector.extract_strided_slice %215 {offsets = [0, 1, 0, 0], sizes = [2, 1, 2, 256], strides = [1, 1, 1, 1]} : vector<2x2x2x256xf32> to vector<2x1x2x256xf32>
    %219 = vector.shape_cast %218 : vector<2x1x2x256xf32> to vector<2x2x256xf32>
    %220 = arith.maximumf %217, %219 : vector<2x2x256xf32>
    %cst_300 = arith.constant 2.000000e-01 : f32
    %221 = vector.broadcast %cst_300 : f32 to vector<2x2x256xf32>
    %222 = arith.mulf %221, %220 : vector<2x2x256xf32>
    %223 = arith.maximumf %220, %222 : vector<2x2x256xf32>
    %224 = vector.shape_cast %223 : vector<2x2x256xf32> to vector<1x2x2x256xf32>
    %225 = arith.truncf %224 : vector<1x2x2x256xf32> to vector<1x2x2x256xbf16>
    %226 = vector.extract_strided_slice %225 {offsets = [0, 0, 0, 0], sizes = [1, 1, 1, 256], strides = [1, 1, 1, 1]} : vector<1x2x2x256xbf16> to vector<1x1x1x256xbf16>
    %227 = vector.shape_cast %226 : vector<1x1x1x256xbf16> to vector<1x256xbf16>
    %c0_301 = arith.constant 0 : index
    %c0_302 = arith.constant 0 : index
    %c0_303 = arith.constant 0 : index
    %228 = vector.load %arg8[%c0_301, %c0_302, %c0_303] : memref<4x256x128xbf16, #tpu.memory_space<vmem>>, vector<1x256x128xbf16>
    %229 = vector.shape_cast %228 : vector<1x256x128xbf16> to vector<256x128xbf16>
    %cst_304 = arith.constant dense<0.000000e+00> : vector<1x128xf32>
    %230 = tpu.matmul %227, %229, %cst_304 {dimension_numbers = #tpu.dot_dimension_numbers<[1], [0], [0], [1], [0, 0, 1, 1], [], []>} : vector<1x256xbf16>, vector<256x128xbf16>, vector<1x128xf32> -> vector<1x128xf32>
    %231 = vector.extract_strided_slice %225 {offsets = [0, 0, 1, 0], sizes = [1, 1, 1, 256], strides = [1, 1, 1, 1]} : vector<1x2x2x256xbf16> to vector<1x1x1x256xbf16>
    %232 = vector.shape_cast %231 : vector<1x1x1x256xbf16> to vector<1x256xbf16>
    %c1_305 = arith.constant 1 : index
    %c0_306 = arith.constant 0 : index
    %c0_307 = arith.constant 0 : index
    %233 = vector.load %arg8[%c1_305, %c0_306, %c0_307] : memref<4x256x128xbf16, #tpu.memory_space<vmem>>, vector<1x256x128xbf16>
    %234 = vector.shape_cast %233 : vector<1x256x128xbf16> to vector<256x128xbf16>
    %cst_308 = arith.constant dense<0.000000e+00> : vector<1x128xf32>
    %235 = tpu.matmul %232, %234, %cst_308 {dimension_numbers = #tpu.dot_dimension_numbers<[1], [0], [0], [1], [0, 0, 1, 1], [], []>} : vector<1x256xbf16>, vector<256x128xbf16>, vector<1x128xf32> -> vector<1x128xf32>
    %236 = arith.addf %230, %235 : vector<1x128xf32>
    %237 = vector.extract_strided_slice %225 {offsets = [0, 1, 0, 0], sizes = [1, 1, 1, 256], strides = [1, 1, 1, 1]} : vector<1x2x2x256xbf16> to vector<1x1x1x256xbf16>
    %238 = vector.shape_cast %237 : vector<1x1x1x256xbf16> to vector<1x256xbf16>
    %c2_309 = arith.constant 2 : index
    %c0_310 = arith.constant 0 : index
    %c0_311 = arith.constant 0 : index
    %239 = vector.load %arg8[%c2_309, %c0_310, %c0_311] : memref<4x256x128xbf16, #tpu.memory_space<vmem>>, vector<1x256x128xbf16>
    %240 = vector.shape_cast %239 : vector<1x256x128xbf16> to vector<256x128xbf16>
    %cst_312 = arith.constant dense<0.000000e+00> : vector<1x128xf32>
    %241 = tpu.matmul %238, %240, %cst_312 {dimension_numbers = #tpu.dot_dimension_numbers<[1], [0], [0], [1], [0, 0, 1, 1], [], []>} : vector<1x256xbf16>, vector<256x128xbf16>, vector<1x128xf32> -> vector<1x128xf32>
    %242 = arith.addf %236, %241 : vector<1x128xf32>
    %243 = vector.extract_strided_slice %225 {offsets = [0, 1, 1, 0], sizes = [1, 1, 1, 256], strides = [1, 1, 1, 1]} : vector<1x2x2x256xbf16> to vector<1x1x1x256xbf16>
    %244 = vector.shape_cast %243 : vector<1x1x1x256xbf16> to vector<1x256xbf16>
    %c3_313 = arith.constant 3 : index
    %c0_314 = arith.constant 0 : index
    %c0_315 = arith.constant 0 : index
    %245 = vector.load %arg8[%c3_313, %c0_314, %c0_315] : memref<4x256x128xbf16, #tpu.memory_space<vmem>>, vector<1x256x128xbf16>
    %246 = vector.shape_cast %245 : vector<1x256x128xbf16> to vector<256x128xbf16>
    %cst_316 = arith.constant dense<0.000000e+00> : vector<1x128xf32>
    %247 = tpu.matmul %244, %246, %cst_316 {dimension_numbers = #tpu.dot_dimension_numbers<[1], [0], [0], [1], [0, 0, 1, 1], [], []>} : vector<1x256xbf16>, vector<256x128xbf16>, vector<1x128xf32> -> vector<1x128xf32>
    %248 = arith.addf %242, %247 : vector<1x128xf32>
    %c0_317 = arith.constant 0 : index
    %c0_318 = arith.constant 0 : index
    %249 = vector.load %arg9[%c0_317, %c0_318] : memref<1x128xf32, #tpu.memory_space<vmem>>, vector<1x128xf32>
    %250 = arith.addf %248, %249 : vector<1x128xf32>
    %cst_319 = arith.constant 0.000000e+00 : f32
    %251 = vector.broadcast %cst_319 : f32 to vector<1x128xf32>
    %252 = arith.maximumf %250, %251 : vector<1x128xf32>
    %253 = arith.truncf %252 : vector<1x128xf32> to vector<1x128xbf16>
    %c0_320 = arith.constant 0 : index
    %c0_321 = arith.constant 0 : index
    %254 = vector.load %arg10[%c0_320, %c0_321] : memref<128x128xbf16, #tpu.memory_space<vmem>>, vector<128x128xbf16>
    %cst_322 = arith.constant dense<0.000000e+00> : vector<1x128xf32>
    %255 = tpu.matmul %253, %254, %cst_322 {dimension_numbers = #tpu.dot_dimension_numbers<[1], [0], [0], [1], [0, 0, 1, 1], [], []>} : vector<1x128xbf16>, vector<128x128xbf16>, vector<1x128xf32> -> vector<1x128xf32>
    %c0_323 = arith.constant 0 : index
    %c0_324 = arith.constant 0 : index
    %256 = vector.load %arg11[%c0_323, %c0_324] : memref<1x128xf32, #tpu.memory_space<vmem>>, vector<1x128xf32>
    %257 = arith.addf %255, %256 : vector<1x128xf32>
    %c0_325 = arith.constant 0 : index
    %c0_326 = arith.constant 0 : index
    %c0_327 = arith.constant 0 : index
    %258 = vector.load %arg12[%c0_325, %c0_326, %c0_327] : memref<1x1x128xf32, #tpu.memory_space<vmem>>, vector<1x1x128xf32>
    %259 = vector.shape_cast %258 : vector<1x1x128xf32> to vector<1x128xf32>
    %260 = vector.shape_cast %257 : vector<1x128xf32> to vector<1x1x128xf32>
    tpu.vector_store %arg12[%c0_325, %c0_326, %c0_327], %260 {strides = array<i32>} : memref<1x1x128xf32, #tpu.memory_space<vmem>>, vector<1x1x128xf32>,
    return
  }
  func.func @transform_0(%arg0: i32) -> (i32, i32, i32) {
    %c0_i32 = arith.constant 0 : i32
    %c0_i32_0 = arith.constant 0 : i32
    %c0_i32_1 = arith.constant 0 : i32
    return %arg0, %c0_i32, %c0_i32_0 : i32, i32, i32
  }
  func.func @transform_1(%arg0: i32) -> (i32, i32) {
    %c0_i32 = arith.constant 0 : i32
    %c0_i32_0 = arith.constant 0 : i32
    %c0_i32_1 = arith.constant 0 : i32
    return %c0_i32, %c0_i32_0 : i32, i32
  }
  func.func @transform_2(%arg0: i32) -> (i32, i32) {
    %c0_i32 = arith.constant 0 : i32
    %c0_i32_0 = arith.constant 0 : i32
    %c0_i32_1 = arith.constant 0 : i32
    return %c0_i32, %c0_i32_0 : i32, i32
  }
  func.func @transform_3(%arg0: i32) -> (i32, i32) {
    %c0_i32 = arith.constant 0 : i32
    %c0_i32_0 = arith.constant 0 : i32
    %c0_i32_1 = arith.constant 0 : i32
    return %c0_i32, %c0_i32_0 : i32, i32
  }
  func.func @transform_4(%arg0: i32) -> (i32, i32) {
    %c0_i32 = arith.constant 0 : i32
    %c0_i32_0 = arith.constant 0 : i32
    %c0_i32_1 = arith.constant 0 : i32
    return %c0_i32, %c0_i32_0 : i32, i32
  }
  func.func @transform_5(%arg0: i32) -> (i32, i32) {
    %c0_i32 = arith.constant 0 : i32
    %c0_i32_0 = arith.constant 0 : i32
    %c0_i32_1 = arith.constant 0 : i32
    return %c0_i32, %c0_i32_0 : i32, i32
  }
  func.func @transform_6(%arg0: i32) -> (i32, i32) {
    %c0_i32 = arith.constant 0 : i32
    %c0_i32_0 = arith.constant 0 : i32
    %c0_i32_1 = arith.constant 0 : i32
    return %c0_i32, %c0_i32_0 : i32, i32
  }
  func.func @transform_7(%arg0: i32) -> (i32, i32, i32) {
    %c0_i32 = arith.constant 0 : i32
    %c0_i32_0 = arith.constant 0 : i32
    %c0_i32_1 = arith.constant 0 : i32
    %c0_i32_2 = arith.constant 0 : i32
    return %c0_i32, %c0_i32_0, %c0_i32_1 : i32, i32, i32
  }
  func.func @transform_8(%arg0: i32) -> (i32, i32) {
    %c0_i32 = arith.constant 0 : i32
    %c0_i32_0 = arith.constant 0 : i32
    %c0_i32_1 = arith.constant 0 : i32
    return %c0_i32, %c0_i32_0 : i32, i32
  }
  func.func @transform_9(%arg0: i32) -> (i32, i32) {
    %c0_i32 = arith.constant 0 : i32
    %c0_i32_0 = arith.constant 0 : i32
    %c0_i32_1 = arith.constant 0 : i32
    return %c0_i32, %c0_i32_0 : i32, i32
  }
  func.func @transform_10(%arg0: i32) -> (i32, i32) {
    %c0_i32 = arith.constant 0 : i32
    %c0_i32_0 = arith.constant 0 : i32
    %c0_i32_1 = arith.constant 0 : i32
    return %c0_i32, %c0_i32_0 : i32, i32
  }
  func.func @transform_11(%arg0: i32) -> (i32, i32, i32) {
    %c0_i32 = arith.constant 0 : i32
    %c0_i32_0 = arith.constant 0 : i32
    %c0_i32_1 = arith.constant 0 : i32
    return %arg0, %c0_i32, %c0_i32_0 : i32, i32, i32
  }
}

</mosaic_0001>

<llo_original>
// kernel: discriminator_forward.1
$region0: #{discriminator_forward.1}
  #allocation0 [shape = 'u32[]', space=smem, size = 0x4, offset = 0x4, fixed_abs, tag = 'smem constant byte address 0x4 - core index']
  #allocation1 [shape = 'u32[144,128]{1,0:T(1,128)}', space=vmem, size = 0x12000, scoped, tag = 'internal scratch']
  #allocation2 [shape = 'bf16[1,12,12,64]{3,2,1,0:T(8,128)(2,1)}', space=vmem, size = 0xc000, scoped, tag = 'scratch operand']
  #allocation3 [shape = 'bf16[64,1600]{1,0:T(16,128)(2,1)}', space=vmem, size = 0x34000, scoped, tag = 'scratch operand']
  #allocation4 [shape = 'bf16[1,8,8,128]{3,2,1,0:T(8,128)(2,1)}', space=vmem, size = 0x4000, scoped, tag = 'scratch operand']
  #allocation5 [shape = 'bf16[16,3200]{1,0:T(16,128)(2,1)}', space=vmem, size = 0x19000, scoped, tag = 'scratch operand']
  %s0 = inlined_call_operand.vmem [shape: bf16[2,256,100], index: 0, kind: input, shape index: {}]
  %s1 = inlined_call_operand.vmem [shape: bf16[100,64], index: 1, kind: input, shape index: {}]
  %s2 = inlined_call_operand.vmem [shape: f32[1,64], index: 2, kind: input, shape index: {}]
  %s3 = inlined_call_operand.vmem [shape: bf16[1600,128], index: 3, kind: input, shape index: {}]
  %s4 = inlined_call_operand.vmem [shape: f32[1,128], index: 4, kind: input, shape index: {}]
  %s5 = inlined_call_operand.vmem [shape: bf16[3200,256], index: 5, kind: input, shape index: {}]
  %s6 = inlined_call_operand.vmem [shape: f32[1,256], index: 6, kind: input, shape index: {}]
  %s7 = inlined_call_operand.vmem [shape: bf16[4,256,128], index: 7, kind: input, shape index: {}]
  %s8 = inlined_call_operand.vmem [shape: f32[1,128], index: 8, kind: input, shape index: {}]
  %s9 = inlined_call_operand.vmem [shape: bf16[128,128], index: 9, kind: input, shape index: {}]
  %s10 = inlined_call_operand.vmem [shape: f32[1,128], index: 10, kind: input, shape index: {}]
  %s11 = inlined_call_operand.vmem [shape: f32[2,1,128], index: 11, kind: output, shape index: {}]
  %s12 = sld [smem:[#allocation0]]
  $region77: #{discriminator_forward.1} parent=0
    _
  %s14 = ssub.s32 1, %s12
  %s15 = scalar_select 0, %s14, %s12
  loop: start=0, step=1, limit=4
  $region2: #{discriminator_forward.1} parent=0 // loop_pre_header
    _
  $region3: #{discriminator_forward.1} parent=0 // loop_header
    %s17 = sphi 0, %s21
    %p18 = scmp.ge.s32.totalorder %s17, 4
    %s27 = sphi 0, %s29
    %s30 = sphi 0, %s27
    %s31 = sphi 0, %s30
    %s47 = sphi 0, %s31
    %s51 = sphi 0, %s51
    %s53 = sphi 0, %s51
    %s54 = sphi 0, %s53
    %s68 = sphi 0, %s54
    %s72 = sphi 0, %s72
    %s74 = sphi 0, %s72
    %s75 = sphi 0, %s74
    %s89 = sphi 0, %s75
    %s93 = sphi 0, %s93
    %s95 = sphi 0, %s93
    %s96 = sphi 0, %s95
    %s110 = sphi 0, %s96
    %s114 = sphi 0, %s114
    %s116 = sphi 0, %s114
    %s117 = sphi 0, %s116
    %s131 = sphi 0, %s117
    %s135 = sphi 0, %s135
    %s137 = sphi 0, %s135
    %s138 = sphi 0, %s137
    %s152 = sphi 0, %s138
    %s156 = sphi 0, %s156
    %s158 = sphi 0, %s156
    %s159 = sphi 0, %s158
    %s173 = sphi 0, %s159
    %s177 = sphi 0, %s177
    %s179 = sphi 0, %s177
    %s180 = sphi 0, %s179
    %s194 = sphi 0, %s180
    %s198 = sphi 0, %s198
    %s200 = sphi 0, %s198
    %s201 = sphi 0, %s200
    %s215 = sphi 0, %s201
    %s219 = sphi 0, %s219
    %s221 = sphi 0, %s219
    %s222 = sphi 0, %s221
    %s236 = sphi 0, %s222
    %s240 = sphi 0, %s240
    %s242 = sphi 0, %s240
    %s243 = sphi 0, %s242
    %s257 = sphi 0, %s243
    %s263 = sphi 0, %s265
    %s266 = sphi 0, %s263
    %s267 = sphi 0, %s266
    %s283 = sphi 0, %s267
  $region4: #{discriminator_forward.1} parent=0 // loop_header_branch
    %20 = sbr.rel (%p18) target = $region8
  $region5: #{discriminator_forward.1} parent=0 // loop_body
    %s22 = ssub.s32 %s17, 1
    %s23 = ssub.s32 %s17, 2
    %s24 = sadd.s32 %s17, 1
    %s25 = ssub.s32 %s17, %s24
    %p26 = scmp.eq.s32.totalorder %s25, 0
    %s28 = sadd.s32 %s27, 1
    %s29 = scalar_select %p26, %s27, %s28
    %p32 = pneg %p26
    %p33 = scmp.eq.s32.totalorder %s17, 1
    %p34 = por %p32, %p33
    %p35 = scmp.ne.s32.totalorder %s27, %s30
    %p36 = scmp.eq.s32.totalorder %s17, 0
    %p37 = por %p35, %p36
    %p38 = scmp.ne.s32.totalorder %s27, %s30
    %p39 = scmp.eq.s32.totalorder %s22, 1
    %p40 = por %p38, %p39
    %p41 = scmp.ne.s32.totalorder %s30, %s31
    %p42 = scmp.eq.s32.totalorder %s22, 0
    %p43 = por %p41, %p42
    %p44 = scmp.ne.s32.totalorder %s30, %s31
    %p45 = scmp.eq.s32.totalorder %s23, 1
    %p46 = por %p44, %p45
    %p48 = scmp.ne.s32.totalorder %s31, %s47
    %p49 = scmp.eq.s32.totalorder %s23, 0
    %p50 = por %p48, %p49
    %s52 = sadd.s32 %s51, 1
    %p55 = scmp.eq.s32.totalorder %s17, 1
    %p56 = scmp.ne.s32.totalorder %s51, %s53
    %p57 = scmp.eq.s32.totalorder %s17, 0
    %p58 = por %p56, %p57
    %p59 = scmp.ne.s32.totalorder %s51, %s53
    %p60 = scmp.eq.s32.totalorder %s22, 1
    %p61 = por %p59, %p60
    %p62 = scmp.ne.s32.totalorder %s53, %s54
    %p63 = scmp.eq.s32.totalorder %s22, 0
    %p64 = por %p62, %p63
    %p65 = scmp.ne.s32.totalorder %s53, %s54
    %p66 = scmp.eq.s32.totalorder %s23, 1
    %p67 = por %p65, %p66
    %p69 = scmp.ne.s32.totalorder %s54, %s68
    %p70 = scmp.eq.s32.totalorder %s23, 0
    %p71 = por %p69, %p70
    %s73 = sadd.s32 %s72, 1
    %p76 = scmp.eq.s32.totalorder %s17, 1
    %p77 = scmp.ne.s32.totalorder %s72, %s74
    %p78 = scmp.eq.s32.totalorder %s17, 0
    %p79 = por %p77, %p78
    %p80 = scmp.ne.s32.totalorder %s72, %s74
    %p81 = scmp.eq.s32.totalorder %s22, 1
    %p82 = por %p80, %p81
    %p83 = scmp.ne.s32.totalorder %s74, %s75
    %p84 = scmp.eq.s32.totalorder %s22, 0
    %p85 = por %p83, %p84
    %p86 = scmp.ne.s32.totalorder %s74, %s75
    %p87 = scmp.eq.s32.totalorder %s23, 1
    %p88 = por %p86, %p87
    %p90 = scmp.ne.s32.totalorder %s75, %s89
    %p91 = scmp.eq.s32.totalorder %s23, 0
    %p92 = por %p90, %p91
    %s94 = sadd.s32 %s93, 1
    %p97 = scmp.eq.s32.totalorder %s17, 1
    %p98 = scmp.ne.s32.totalorder %s93, %s95
    %p99 = scmp.eq.s32.totalorder %s17, 0
    %p100 = por %p98, %p99
    %p101 = scmp.ne.s32.totalorder %s93, %s95
    %p102 = scmp.eq.s32.totalorder %s22, 1
    %p103 = por %p101, %p102
    %p104 = scmp.ne.s32.totalorder %s95, %s96
    %p105 = scmp.eq.s32.totalorder %s22, 0
    %p106 = por %p104, %p105
    %p107 = scmp.ne.s32.totalorder %s95, %s96
    %p108 = scmp.eq.s32.totalorder %s23, 1
    %p109 = por %p107, %p108
    %p111 = scmp.ne.s32.totalorder %s96, %s110
    %p112 = scmp.eq.s32.totalorder %s23, 0
    %p113 = por %p111, %p112
    %s115 = sadd.s32 %s114, 1
    %p118 = scmp.eq.s32.totalorder %s17, 1
    %p119 = scmp.ne.s32.totalorder %s114, %s116
    %p120 = scmp.eq.s32.totalorder %s17, 0
    %p121 = por %p119, %p120
    %p122 = scmp.ne.s32.totalorder %s114, %s116
    %p123 = scmp.eq.s32.totalorder %s22, 1
    %p124 = por %p122, %p123
    %p125 = scmp.ne.s32.totalorder %s116, %s117
    %p126 = scmp.eq.s32.totalorder %s22, 0
    %p127 = por %p125, %p126
    %p128 = scmp.ne.s32.totalorder %s116, %s117
    %p129 = scmp.eq.s32.totalorder %s23, 1
    %p130 = por %p128, %p129
    %p132 = scmp.ne.s32.totalorder %s117, %s131
    %p133 = scmp.eq.s32.totalorder %s23, 0
    %p134 = por %p132, %p133
    %s136 = sadd.s32 %s135, 1
    %p139 = scmp.eq.s32.totalorder %s17, 1
    %p140 = scmp.ne.s32.totalorder %s135, %s137
    %p141 = scmp.eq.s32.totalorder %s17, 0
    %p142 = por %p140, %p141
    %p143 = scmp.ne.s32.totalorder %s135, %s137
    %p144 = scmp.eq.s32.totalorder %s22, 1
    %p145 = por %p143, %p144
    %p146 = scmp.ne.s32.totalorder %s137, %s138
    %p147 = scmp.eq.s32.totalorder %s22, 0
    %p148 = por %p146, %p147
    %p149 = scmp.ne.s32.totalorder %s137, %s138
    %p150 = scmp.eq.s32.totalorder %s23, 1
    %p151 = por %p149, %p150
    %p153 = scmp.ne.s32.totalorder %s138, %s152
    %p154 = scmp.eq.s32.totalorder %s23, 0
    %p155 = por %p153, %p154
    %s157 = sadd.s32 %s156, 1
    %p160 = scmp.eq.s32.totalorder %s17, 1
    %p161 = scmp.ne.s32.totalorder %s156, %s158
    %p162 = scmp.eq.s32.totalorder %s17, 0
    %p163 = por %p161, %p162
    %p164 = scmp.ne.s32.totalorder %s156, %s158
    %p165 = scmp.eq.s32.totalorder %s22, 1
    %p166 = por %p164, %p165
    %p167 = scmp.ne.s32.totalorder %s158, %s159
    %p168 = scmp.eq.s32.totalorder %s22, 0
    %p169 = por %p167, %p168
    %p170 = scmp.ne.s32.totalorder %s158, %s159
    %p171 = scmp.eq.s32.totalorder %s23, 1
    %p172 = por %p170, %p171
    %p174 = scmp.ne.s32.totalorder %s159, %s173
    %p175 = scmp.eq.s32.totalorder %s23, 0
    %p176 = por %p174, %p175
    %s178 = sadd.s32 %s177, 1
    %p181 = scmp.eq.s32.totalorder %s17, 1
    %p182 = scmp.ne.s32.totalorder %s177, %s179
    %p183 = scmp.eq.s32.totalorder %s17, 0
    %p184 = por %p182, %p183
    %p185 = scmp.ne.s32.totalorder %s177, %s179
    %p186 = scmp.eq.s32.totalorder %s22, 1
    %p187 = por %p185, %p186
    %p188 = scmp.ne.s32.totalorder %s179, %s180
    %p189 = scmp.eq.s32.totalorder %s22, 0
    %p190 = por %p188, %p189
    %p191 = scmp.ne.s32.totalorder %s179, %s180
    %p192 = scmp.eq.s32.totalorder %s23, 1
    %p193 = por %p191, %p192
    %p195 = scmp.ne.s32.totalorder %s180, %s194
    %p196 = scmp.eq.s32.totalorder %s23, 0
    %p197 = por %p195, %p196
    %s199 = sadd.s32 %s198, 1
    %p202 = scmp.eq.s32.totalorder %s17, 1
    %p203 = scmp.ne.s32.totalorder %s198, %s200
    %p204 = scmp.eq.s32.totalorder %s17, 0
    %p205 = por %p203, %p204
    %p206 = scmp.ne.s32.totalorder %s198, %s200
    %p207 = scmp.eq.s32.totalorder %s22, 1
    %p208 = por %p206, %p207
    %p209 = scmp.ne.s32.totalorder %s200, %s201
    %p210 = scmp.eq.s32.totalorder %s22, 0
    %p211 = por %p209, %p210
    %p212 = scmp.ne.s32.totalorder %s200, %s201
    %p213 = scmp.eq.s32.totalorder %s23, 1
    %p214 = por %p212, %p213
    %p216 = scmp.ne.s32.totalorder %s201, %s215
    %p217 = scmp.eq.s32.totalorder %s23, 0
    %p218 = por %p216, %p217
    %s220 = sadd.s32 %s219, 1
    %p223 = scmp.eq.s32.totalorder %s17, 1
    %p224 = scmp.ne.s32.totalorder %s219, %s221
    %p225 = scmp.eq.s32.totalorder %s17, 0
    %p226 = por %p224, %p225
    %p227 = scmp.ne.s32.totalorder %s219, %s221
    %p228 = scmp.eq.s32.totalorder %s22, 1
    %p229 = por %p227, %p228
    %p230 = scmp.ne.s32.totalorder %s221, %s222
    %p231 = scmp.eq.s32.totalorder %s22, 0
    %p232 = por %p230, %p231
    %p233 = scmp.ne.s32.totalorder %s221, %s222
    %p234 = scmp.eq.s32.totalorder %s23, 1
    %p235 = por %p233, %p234
    %p237 = scmp.ne.s32.totalorder %s222, %s236
    %p238 = scmp.eq.s32.totalorder %s23, 0
    %p239 = por %p237, %p238
    %s241 = sadd.s32 %s240, 1
    %p244 = scmp.eq.s32.totalorder %s17, 1
    %p245 = scmp.ne.s32.totalorder %s240, %s242
    %p246 = scmp.eq.s32.totalorder %s17, 0
    %p247 = por %p245, %p246
    %p248 = scmp.ne.s32.totalorder %s240, %s242
    %p249 = scmp.eq.s32.totalorder %s22, 1
    %p250 = por %p248, %p249
    %p251 = scmp.ne.s32.totalorder %s242, %s243
    %p252 = scmp.eq.s32.totalorder %s22, 0
    %p253 = por %p251, %p252
    %p254 = scmp.ne.s32.totalorder %s242, %s243
    %p255 = scmp.eq.s32.totalorder %s23, 1
    %p256 = por %p254, %p255
    %p258 = scmp.ne.s32.totalorder %s243, %s257
    %p259 = scmp.eq.s32.totalorder %s23, 0
    %p260 = por %p258, %p259
    %s261 = ssub.s32 %s17, %s24
    %p262 = scmp.eq.s32.totalorder %s261, 0
    %s264 = sadd.s32 %s263, 1
    %s265 = scalar_select %p262, %s263, %s264
    %p268 = pneg %p262
    %p269 = scmp.eq.s32.totalorder %s17, 1
    %p270 = por %p268, %p269
    %p271 = scmp.ne.s32.totalorder %s263, %s266
    %p272 = scmp.eq.s32.totalorder %s17, 0
    %p273 = por %p271, %p272
    %p274 = scmp.ne.s32.totalorder %s263, %s266
    %p275 = scmp.eq.s32.totalorder %s22, 1
    %p276 = por %p274, %p275
    %p277 = scmp.ne.s32.totalorder %s266, %s267
    %p278 = scmp.eq.s32.totalorder %s22, 0
    %p279 = por %p277, %p278
    %p280 = scmp.ne.s32.totalorder %s266, %s267
    %p281 = scmp.eq.s32.totalorder %s23, 1
    %p282 = por %p280, %p281
    %p284 = scmp.ne.s32.totalorder %s267, %s283
    %p285 = scmp.eq.s32.totalorder %s23, 0
    %p286 = por %p284, %p285
    %p287 = scmp.le.s32.totalorder 1, %s17
    %p288 = scmp.lt.s32.totalorder %s17, 3
    %p289 = pnand %p287, %p288
    %p290 = pneg %p289
    // Predicated region
    $region9: #{discriminator_forward.1} parent=5 // pred_check
      _
    $region10: #{discriminator_forward.1} parent=5 // pred_check_branch
      %292 = sbr.rel (%p289) target = $region12
    $region11: #{discriminator_forward.1} parent=5 // pred_region
      %s293 = ssub.s32 %s17, 1
      // Predicated region
      $region13: #{discriminator_forward.1} parent=11 // pred_check
        %p294 = pneg %p64
      $region14: #{discriminator_forward.1} parent=11 // pred_check_branch
        %296 = sbr.rel (%p294) target = $region16
      $region15: #{discriminator_forward.1} parent=11 // pred_region
        _
      $region16: #{discriminator_forward.1} parent=11 // pred_fallthru
        _
      // Predicated region
      $region17: #{discriminator_forward.1} parent=11 // pred_check
        %p297 = pneg %p85
      $region18: #{discriminator_forward.1} parent=11 // pred_check_branch
        %299 = sbr.rel (%p297) target = $region20
      $region19: #{discriminator_forward.1} parent=11 // pred_region
        _
      $region20: #{discriminator_forward.1} parent=11 // pred_fallthru
        _
      // Predicated region
      $region21: #{discriminator_forward.1} parent=11 // pred_check
        %p300 = pneg %p106
      $region22: #{discriminator_forward.1} parent=11 // pred_check_branch
        %302 = sbr.rel (%p300) target = $region24
      $region23: #{discriminator_forward.1} parent=11 // pred_region
        _
      $region24: #{discriminator_forward.1} parent=11 // pred_fallthru
        _
      // Predicated region
      $region25: #{discriminator_forward.1} parent=11 // pred_check
        %p303 = pneg %p127
      $region26: #{discriminator_forward.1} parent=11 // pred_check_branch
        %305 = sbr.rel (%p303) target = $region28
      $region27: #{discriminator_forward.1} parent=11 // pred_region
        _
      $region28: #{discriminator_forward.1} parent=11 // pred_fallthru
        _
      // Predicated region
      $region29: #{discriminator_forward.1} parent=11 // pred_check
        %p306 = pneg %p148
      $region30: #{discriminator_forward.1} parent=11 // pred_check_branch
        %308 = sbr.rel (%p306) target = $region32
      $region31: #{discriminator_forward.1} parent=11 // pred_region
        _
      $region32: #{discriminator_forward.1} parent=11 // pred_fallthru
        _
      // Predicated region
      $region33: #{discriminator_forward.1} parent=11 // pred_check
        %p309 = pneg %p169
      $region34: #{discriminator_forward.1} parent=11 // pred_check_branch
        %311 = sbr.rel (%p309) target = $region36
      $region35: #{discriminator_forward.1} parent=11 // pred_region
        _
      $region36: #{discriminator_forward.1} parent=11 // pred_fallthru
        _
      // Predicated region
      $region37: #{discriminator_forward.1} parent=11 // pred_check
        %p312 = pneg %p190
      $region38: #{discriminator_forward.1} parent=11 // pred_check_branch
        %314 = sbr.rel (%p312) target = $region40
      $region39: #{discriminator_forward.1} parent=11 // pred_region
        _
      $region40: #{discriminator_forward.1} parent=11 // pred_fallthru
        _
      // Predicated region
      $region41: #{discriminator_forward.1} parent=11 // pred_check
        %p315 = pneg %p211
      $region42: #{discriminator_forward.1} parent=11 // pred_check_branch
        %317 = sbr.rel (%p315) target = $region44
      $region43: #{discriminator_forward.1} parent=11 // pred_region
        _
      $region44: #{discriminator_forward.1} parent=11 // pred_fallthru
        _
      // Predicated region
      $region45: #{discriminator_forward.1} parent=11 // pred_check
        %p318 = pneg %p232
      $region46: #{discriminator_forward.1} parent=11 // pred_check_branch
        %320 = sbr.rel (%p318) target = $region48
      $region47: #{discriminator_forward.1} parent=11 // pred_region
        _
      $region48: #{discriminator_forward.1} parent=11 // pred_fallthru
        _
      // Predicated region
      $region49: #{discriminator_forward.1} parent=11 // pred_check
        %p321 = pneg %p253
      $region50: #{discriminator_forward.1} parent=11 // pred_check_branch
        %323 = sbr.rel (%p321) target = $region52
      $region51: #{discriminator_forward.1} parent=11 // pred_region
        _
      $region52: #{discriminator_forward.1} parent=11 // pred_fallthru
        _
    $region12: #{discriminator_forward.1} parent=5 // pred_fallthru
      _
    %p324 = scmp.lt.s32.totalorder %s17, 2
    // Predicated region
    $region53: #{discriminator_forward.1} parent=5 // pred_check
      %p325 = pneg %p324
    $region54: #{discriminator_forward.1} parent=5 // pred_check_branch
      %327 = sbr.rel (%p325) target = $region56
    $region55: #{discriminator_forward.1} parent=5 // pred_region
      // Predicated region
      $region57: #{discriminator_forward.1} parent=55 // pred_check
        %p328 = pneg %p37
      $region58: #{discriminator_forward.1} parent=55 // pred_check_branch
        %330 = sbr.rel (%p328) target = $region60
      $region59: #{discriminator_forward.1} parent=55 // pred_region
        %p331 = scmp.lt.s32.totalorder %s17, 1
        %s332 = scalar_select %p331, %s17, 1
        %s333 = smul.addr %s332, 32
        %s334 = smul.addr %s333, 4
        %s335 = scalar_lea.vmem %s0, %s334
      $region60: #{discriminator_forward.1} parent=55 // pred_fallthru
        _
    $region56: #{discriminator_forward.1} parent=5 // pred_fallthru
      _
    %p336 = scmp.le.s32.totalorder 1, %s17
    %p337 = scmp.lt.s32.totalorder %s17, 3
    %p338 = pnand %p336, %p337
    %p339 = pneg %p338
    // Predicated region
    $region61: #{discriminator_forward.1} parent=5 // pred_check
      _
    $region62: #{discriminator_forward.1} parent=5 // pred_check_branch
      %341 = sbr.rel (%p338) target = $region64
    $region63: #{discriminator_forward.1} parent=5 // pred_region
      %s342 = ssub.s32 %s17, 1
      %p343 = scmp.lt.s32.totalorder %s22, 1
      %s344 = scalar_select %p343, %s22, 1
      %s345 = smul.addr %s344, 32
      %s346 = smul.addr %s345, 4
      %s347 = scalar_lea.vmem %s0, %s346
      %p348 = pneg %p43
      %p349 = pneg %p40
      %p350 = pneg %p64
      %p351 = pneg %p61
      %p352 = pneg %p85
      %p353 = pneg %p82
      %p354 = pneg %p106
      %p355 = pneg %p103
      %p356 = pneg %p127
      %p357 = pneg %p124
      %p358 = pneg %p148
      %p359 = pneg %p145
      %p360 = pneg %p169
      %p361 = pneg %p166
      %p362 = pneg %p190
      %p363 = pneg %p187
      %p364 = pneg %p211
      %p365 = pneg %p208
      %p366 = pneg %p232
      %p367 = pneg %p229
      %p368 = pneg %p253
      %p369 = pneg %p250
      %p370 = pneg %p279
      %p371 = pneg %p276
      %p372 = scmp.lt.s32.totalorder %s22, 1
      %s373 = scalar_select %p372, %s22, 1
      %s374 = scalar_lea.vmem %s11, %s373
      %p375 = scmp.lt.s32.totalorder %s22, 1
      %s376 = scalar_select %p375, %s22, 1
      %s377 = smul.addr %s376, 32
      %s378 = smul.addr %s377, 4
      %s379 = scalar_lea.vmem %s0, %s378
      %p380 = scmp.lt.s32.totalorder %s22, 1
      %s381 = scalar_select %p380, %s22, 1
      %s382 = scalar_lea.vmem %s11, %s381
      %v384 = vld [vmem:[%s379] sm:$0xf]
      %v385 = vld [vmem:[%s379 + $0x4] sm:$0xf]
      %v386 = vld [vmem:[%s379 + $0x8] sm:$0xf]
      %v387 = vld [vmem:[%s379 + $0xc] sm:$0xf]
      %v388 = vld [vmem:[%s379 + $0x10] sm:$0xf]
      %v389 = vld [vmem:[%s379 + $0x14] sm:$0xf]
      %v390 = vld [vmem:[%s379 + $0x18] sm:$0xf]
      %v391 = vld [vmem:[%s379 + $0x1c] sm:$0xf]
      %v392 = vld [vmem:[%s379 + $0x20] sm:$0xf]
      %v393 = vld [vmem:[%s379 + $0x24] sm:$0xf]
      %v394 = vld [vmem:[%s379 + $0x28] sm:$0xf]
      %v395 = vld [vmem:[%s379 + $0x2c] sm:$0xf]
      %v396 = vld [vmem:[%s379 + $0x30] sm:$0xf]
      %v397 = vld [vmem:[%s379 + $0x34] sm:$0xf]
      %v398 = vld [vmem:[%s379 + $0x38] sm:$0xf]
      %v399 = vld [vmem:[%s379 + $0x3c] sm:$0xf]
      %v400 = vld [vmem:[%s379 + $0x40] sm:$0xf]
      %v401 = vld [vmem:[%s379 + $0x44] sm:$0xf]
      %v402 = vld [vmem:[%s379 + $0x48] sm:$0xf]
      %v403 = vld [vmem:[%s379 + $0x4c] sm:$0xf]
      %v404 = vld [vmem:[%s379 + $0x50] sm:$0xf]
      %v405 = vld [vmem:[%s379 + $0x54] sm:$0xf]
      %v406 = vld [vmem:[%s379 + $0x58] sm:$0xf]
      %v407 = vld [vmem:[%s379 + $0x5c] sm:$0xf]
      %v408 = vld [vmem:[%s379 + $0x60] sm:$0xf]
      %v409 = vld [vmem:[%s379 + $0x64] sm:$0xf]
      %v410 = vld [vmem:[%s379 + $0x68] sm:$0xf]
      %v411 = vld [vmem:[%s379 + $0x6c] sm:$0xf]
      %v412 = vld [vmem:[%s379 + $0x70] sm:$0xf]
      %v413 = vld [vmem:[%s379 + $0x74] sm:$0xf]
      %v414 = vld [vmem:[%s379 + $0x78] sm:$0xf]
      %v415 = vld [vmem:[%s379 + $0x7c] sm:$0xf]
      %v416 = vld [vmem:[%s1] sm:$0xf]
      %v417 = vld [vmem:[%s1 + $0x4] sm:$0xf]
      %v418 = vld [vmem:[%s1 + $0x8] sm:$0xf]
      %v419 = vld [vmem:[%s1 + $0xc] sm:$0xf]
      %v420 = vld [vmem:[%s1 + $0x10] sm:$0xf]
      %v421 = vld [vmem:[%s1 + $0x14] sm:$0xf]
      %v422 = vld [vmem:[%s1 + $0x18] sm:$0xf]
      %v423 = vld [vmem:[%s1 + $0x1c] sm:$0xf]
      %v424 = vld [vmem:[%s1 + $0x20] sm:$0xf]
      %v425 = vld [vmem:[%s1 + $0x24] sm:$0xf]
      %v426 = vld [vmem:[%s1 + $0x28] sm:$0xf]
      %v427 = vld [vmem:[%s1 + $0x2c] sm:$0xf]
      %v428 = vld [vmem:[%s1 + $0x30] sm:$0x3]
      %v429 = vld [vmem:[%s2] sm:$0x1]
      %v431 = vlaneseq
      %v432 = vshrl.u32 %v431, 7
      %v433 = vsub.s32 0, %v432
      %v434 = vrot.slane %v429, %v433
      %v468 = vunpack.c.l.b16 %v384
      %v469 = vunpack.c.l.b16 %v385
      %v470 = vunpack.c.l.b16 %v386
      %v471 = vunpack.c.l.b16 %v387
      %v472 = vunpack.c.l.b16 %v388
      %v473 = vunpack.c.l.b16 %v389
      %v474 = vunpack.c.l.b16 %v390
      %v475 = vunpack.c.l.b16 %v391
      %v476 = vunpack.c.l.b16 %v392
      %v477 = vunpack.c.l.b16 %v393
      %v478 = vunpack.c.l.b16 %v394
      %v479 = vunpack.c.l.b16 %v395
      %v480 = vunpack.c.l.b16 %v396
      %v481 = vunpack.c.l.b16 %v397
      %v482 = vunpack.c.l.b16 %v398
      %v483 = vunpack.c.l.b16 %v399
      %v484 = vunpack.c.l.b16 %v400
      %v485 = vunpack.c.l.b16 %v401
      %v486 = vunpack.c.l.b16 %v402
      %v487 = vunpack.c.l.b16 %v403
      %v488 = vunpack.c.l.b16 %v404
      %v489 = vunpack.c.l.b16 %v405
      %v490 = vunpack.c.l.b16 %v406
      %v491 = vunpack.c.l.b16 %v407
      %v492 = vunpack.c.l.b16 %v408
      %v493 = vunpack.c.l.b16 %v409
      %v494 = vunpack.c.l.b16 %v410
      %v495 = vunpack.c.l.b16 %v411
      %v496 = vunpack.c.l.b16 %v412
      %v497 = vunpack.c.l.b16 %v413
      %v498 = vunpack.c.l.b16 %v414
      %v499 = vunpack.c.l.b16 %v415
      %v500 = vpack.c.b16 %v469, %v468
      %v501 = vpack.c.b16 %v471, %v470
      %v502 = vpack.c.b16 %v473, %v472
      %v503 = vpack.c.b16 %v475, %v474
      %v504 = vpack.c.b16 %v477, %v476
      %v505 = vpack.c.b16 %v479, %v478
      %v506 = vpack.c.b16 %v481, %v480
      %v507 = vpack.c.b16 %v483, %v482
      %v508 = vpack.c.b16 %v485, %v484
      %v509 = vpack.c.b16 %v487, %v486
      %v510 = vpack.c.b16 %v489, %v488
      %v511 = vpack.c.b16 %v491, %v490
      %v512 = vpack.c.b16 %v493, %v492
      %v513 = vpack.c.b16 %v495, %v494
      %v514 = vpack.c.b16 %v497, %v496
      %v515 = vpack.c.b16 %v499, %v498
      %v529 = vunpack.c.l.b16 %v416
      %v530 = vunpack.c.l.b16 %v417
      %v531 = vunpack.c.l.b16 %v418
      %v532 = vunpack.c.l.b16 %v419
      %v533 = vunpack.c.l.b16 %v420
      %v534 = vunpack.c.l.b16 %v421
      %v535 = vunpack.c.l.b16 %v422
      %v536 = vunpack.c.l.b16 %v423
      %v537 = vunpack.c.l.b16 %v424
      %v538 = vunpack.c.l.b16 %v425
      %v539 = vunpack.c.l.b16 %v426
      %v540 = vunpack.c.l.b16 %v427
      %v541 = vunpack.c.l.b16 %v428
      %v542 = vpack.c.b16 %v530, %v529
      %v543 = vpack.c.b16 %v532, %v531
      %v544 = vpack.c.b16 %v534, %v533
      %v545 = vpack.c.b16 %v536, %v535
      %v546 = vpack.c.b16 %v538, %v537
      %v547 = vpack.c.b16 %v540, %v539
      %v548 = vpack.c.b16 %v541, %v541
      %vm555 = vcmask 818176
      %v557 = vsel %vm555, %v500, 0
      %v560 = vsel %vm555, %v501, 0
      %v563 = vsel %vm555, %v502, 0
      %v566 = vsel %vm555, %v503, 0
      %v569 = vsel %vm555, %v504, 0
      %v572 = vsel %vm555, %v505, 0
      %v575 = vsel %vm555, %v506, 0
      %v578 = vsel %vm555, %v507, 0
      %v581 = vsel %vm555, %v508, 0
      %v584 = vsel %vm555, %v509, 0
      %v587 = vsel %vm555, %v510, 0
      %v590 = vsel %vm555, %v511, 0
      %v593 = vsel %vm555, %v512, 0
      %v596 = vsel %vm555, %v513, 0
      %v599 = vsel %vm555, %v514, 0
      %v602 = vsel %vm555, %v515, 0
      %vm604 = vcmask 1041408
      %v606 = vsel %vm604, %v548, 0
      %608 = vmatprep.subr.bf16.mxu0 0
      %609 = vmatpush1.bf16.msra.mxu0 %v542
      %610 = vmatprep.subr.bf16.mxu0 0
      %611 = vmatpush1.bf16.msra.mxu0 %v543
      %612 = vmatprep.subr.bf16.mxu0 0
      %613 = vmatpush1.bf16.msra.mxu0 %v544
      %614 = vmatprep.subr.bf16.mxu0 0
      %615 = vmatpush1.bf16.msra.mxu0 %v545
      %616 = vmatprep.subr.bf16.mxu0 0
      %617 = vmatpush1.bf16.msra.mxu0 %v546
      %618 = vmatprep.subr.bf16.mxu0 0
      %619 = vmatpush1.bf16.msra.mxu0 %v547
      %620 = vmatprep.subr.bf16.mxu0 0
      %621 = vmatpush1.bf16.msra.mxu0 %v606
      %622 = vmatprep.subr.bf16.mxu0 0
      %623 = vmatpush1.bf16.msra.mxu0 0
      %624 = vmatprep.subr.bf16.mxu0 0
      %625 = vmatpush1.bf16.msra.mxu0 0
      %626 = vmatprep.subr.bf16.mxu0 0
      %627 = vmatpush1.bf16.msra.mxu0 0
      %628 = vmatprep.subr.bf16.mxu0 0
      %629 = vmatpush1.bf16.msra.mxu0 0
      %630 = vmatprep.subr.bf16.mxu0 0
      %631 = vmatpush1.bf16.msra.mxu0 0
      %632 = vmatprep.subr.bf16.mxu0 0
      %633 = vmatpush1.bf16.msra.mxu0 0
      %634 = vmatprep.subr.bf16.mxu0 0
      %635 = vmatpush1.bf16.msra.mxu0 0
      %636 = vmatprep.subr.bf16.mxu0 0
      %637 = vmatpush1.bf16.msra.mxu0 0
      %638 = vmatprep.subr.bf16.mxu0 0
      %639 = vmatpush1.bf16.msra.mxu0 0
      %640 = vmatprep.mubr.bf16.mxu0 0
      %641 = vmatmul.mubr.bf16.gmra.mrb[0].mxu0 %v557
      %v642 = vpop.f32.mrb[0].mxu0
      %v643 = vadd.f32 %v434, %v642
      %v644 = vpop.f32.mrb[0].mxu0
      %v645 = vpop.f32.mrb[0].mxu0
      %v646 = vadd.f32 %v434, %v645
      %v647 = vpop.f32.mrb[0].mxu0
      %648 = vmatprep.mubr.bf16.mxu0 0
      %649 = vmatmul.mubr.bf16.gmra.mrb[0].mxu0 %v560
      %v650 = vpop.f32.mrb[0].mxu0
      %v651 = vadd.f32 %v434, %v650
      %v652 = vpop.f32.mrb[0].mxu0
      %v653 = vpop.f32.mrb[0].mxu0
      %v654 = vadd.f32 %v434, %v653
      %v655 = vpop.f32.mrb[0].mxu0
      %656 = vmatprep.mubr.bf16.mxu0 0
      %657 = vmatmul.mubr.bf16.gmra.mrb[0].mxu0 %v563
      %v658 = vpop.f32.mrb[0].mxu0
      %v659 = vadd.f32 %v434, %v658
      %v660 = vpop.f32.mrb[0].mxu0
      %v661 = vpop.f32.mrb[0].mxu0
      %v662 = vadd.f32 %v434, %v661
      %v663 = vpop.f32.mrb[0].mxu0
      %664 = vmatprep.mubr.bf16.mxu0 0
      %665 = vmatmul.mubr.bf16.gmra.mrb[0].mxu0 %v566
      %v666 = vpop.f32.mrb[0].mxu0
      %v667 = vadd.f32 %v434, %v666
      %v668 = vpop.f32.mrb[0].mxu0
      %v669 = vpop.f32.mrb[0].mxu0
      %v670 = vadd.f32 %v434, %v669
      %v671 = vpop.f32.mrb[0].mxu0
      %672 = vmatprep.mubr.bf16.mxu0 0
      %673 = vmatmul.mubr.bf16.gmra.mrb[0].mxu0 %v569
      %v674 = vpop.f32.mrb[0].mxu0
      %v675 = vadd.f32 %v434, %v674
      %v676 = vpop.f32.mrb[0].mxu0
      %v677 = vpop.f32.mrb[0].mxu0
      %v678 = vadd.f32 %v434, %v677
      %v679 = vpop.f32.mrb[0].mxu0
      %680 = vmatprep.mubr.bf16.mxu0 0
      %681 = vmatmul.mubr.bf16.gmra.mrb[0].mxu0 %v572
      %v682 = vpop.f32.mrb[0].mxu0
      %v683 = vadd.f32 %v434, %v682
      %v684 = vpop.f32.mrb[0].mxu0
      %v685 = vpop.f32.mrb[0].mxu0
      %v686 = vadd.f32 %v434, %v685
      %v687 = vpop.f32.mrb[0].mxu0
      %688 = vmatprep.mubr.bf16.mxu0 0
      %689 = vmatmul.mubr.bf16.gmra.mrb[0].mxu0 %v575
      %v690 = vpop.f32.mrb[0].mxu0
      %v691 = vadd.f32 %v434, %v690
      %v692 = vpop.f32.mrb[0].mxu0
      %v693 = vpop.f32.mrb[0].mxu0
      %v694 = vadd.f32 %v434, %v693
      %v695 = vpop.f32.mrb[0].mxu0
      %696 = vmatprep.mubr.bf16.mxu0 0
      %697 = vmatmul.mubr.bf16.gmra.mrb[0].mxu0 %v578
      %v698 = vpop.f32.mrb[0].mxu0
      %v699 = vadd.f32 %v434, %v698
      %v700 = vpop.f32.mrb[0].mxu0
      %v701 = vpop.f32.mrb[0].mxu0
      %v702 = vadd.f32 %v434, %v701
      %v703 = vpop.f32.mrb[0].mxu0
      %704 = vmatprep.mubr.bf16.mxu0 0
      %705 = vmatmul.mubr.bf16.gmra.mrb[0].mxu0 %v581
      %v706 = vpop.f32.mrb[0].mxu0
      %v707 = vadd.f32 %v434, %v706
      %v708 = vpop.f32.mrb[0].mxu0
      %v709 = vpop.f32.mrb[0].mxu0
      %v710 = vadd.f32 %v434, %v709
      %v711 = vpop.f32.mrb[0].mxu0
      %712 = vmatprep.mubr.bf16.mxu0 0
      %713 = vmatmul.mubr.bf16.gmra.mrb[0].mxu0 %v584
      %v714 = vpop.f32.mrb[0].mxu0
      %v715 = vadd.f32 %v434, %v714
      %v716 = vpop.f32.mrb[0].mxu0
      %v717 = vpop.f32.mrb[0].mxu0
      %v718 = vadd.f32 %v434, %v717
      %v719 = vpop.f32.mrb[0].mxu0
      %720 = vmatprep.mubr.bf16.mxu0 0
      %721 = vmatmul.mubr.bf16.gmra.mrb[0].mxu0 %v587
      %v722 = vpop.f32.mrb[0].mxu0
      %v723 = vadd.f32 %v434, %v722
      %v724 = vpop.f32.mrb[0].mxu0
      %v725 = vpop.f32.mrb[0].mxu0
      %v726 = vadd.f32 %v434, %v725
      %v727 = vpop.f32.mrb[0].mxu0
      %728 = vmatprep.mubr.bf16.mxu0 0
      %729 = vmatmul.mubr.bf16.gmra.mrb[0].mxu0 %v590
      %v730 = vpop.f32.mrb[0].mxu0
      %v731 = vadd.f32 %v434, %v730
      %v732 = vpop.f32.mrb[0].mxu0
      %v733 = vpop.f32.mrb[0].mxu0
      %v734 = vadd.f32 %v434, %v733
      %v735 = vpop.f32.mrb[0].mxu0
      %736 = vmatprep.mubr.bf16.mxu0 0
      %737 = vmatmul.mubr.bf16.gmra.mrb[0].mxu0 %v593
      %v738 = vpop.f32.mrb[0].mxu0
      %v739 = vadd.f32 %v434, %v738
      %v740 = vpop.f32.mrb[0].mxu0
      %v741 = vpop.f32.mrb[0].mxu0
      %v742 = vadd.f32 %v434, %v741
      %v743 = vpop.f32.mrb[0].mxu0
      %744 = vmatprep.mubr.bf16.mxu0 0
      %745 = vmatmul.mubr.bf16.gmra.mrb[0].mxu0 %v596
      %v746 = vpop.f32.mrb[0].mxu0
      %v747 = vadd.f32 %v434, %v746
      %v748 = vpop.f32.mrb[0].mxu0
      %v749 = vpop.f32.mrb[0].mxu0
      %v750 = vadd.f32 %v434, %v749
      %v751 = vpop.f32.mrb[0].mxu0
      %752 = vmatprep.mubr.bf16.mxu0 0
      %753 = vmatmul.mubr.bf16.gmra.mrb[0].mxu0 %v599
      %v754 = vpop.f32.mrb[0].mxu0
      %v755 = vadd.f32 %v434, %v754
      %v756 = vpop.f32.mrb[0].mxu0
      %v757 = vpop.f32.mrb[0].mxu0
      %v758 = vadd.f32 %v434, %v757
      %v759 = vpop.f32.mrb[0].mxu0
      %760 = vmatprep.mubr.bf16.mxu0 0
      %761 = vmatmul.mubr.bf16.gmra.mrb[0].mxu0 %v602
      %v762 = vpop.f32.mrb[0].mxu0
      %v763 = vadd.f32 %v434, %v762
      %v764 = vpop.f32.mrb[0].mxu0
      %v765 = vpop.f32.mrb[0].mxu0
      %v766 = vadd.f32 %v434, %v765
      %v767 = vpop.f32.mrb[0].mxu0
      %768 = vdwg.mxu0
      %v801 = vcombine.high %v643, %v643
      %v803 = vunpack.c.l.s4 1983009808
      %v804 = vunpack.c.0.s8 %v803
      %v805 = vlaneseq
      %v806 = vshrl.u32 %v805, 7
      %v807 = vsub.s32 %v804, %v806
      %v808 = vrot.slane %v643, %v807
      %v810 = vunpack.c.l.s4 1983009808
      %v811 = vunpack.c.0.s8 %v810
      %v812 = vlaneseq
      %v813 = vshrl.u32 %v812, 7
      %v814 = vsub.s32 %v811, %v813
      %v815 = vrot.slane %v801, %v814
      %v816 = vcombine.high %v808, %v808
      %v817 = vcombine.high %v815, %v815
      %v818 = vcombine.high %v646, %v646
      %v820 = vunpack.c.l.s4 1983009808
      %v821 = vunpack.c.0.s8 %v820
      %v822 = vlaneseq
      %v823 = vshrl.u32 %v822, 7
      %v824 = vsub.s32 %v821, %v823
      %v825 = vrot.slane %v646, %v824
      %v827 = vunpack.c.l.s4 1983009808
      %v828 = vunpack.c.0.s8 %v827
      %v829 = vlaneseq
      %v830 = vshrl.u32 %v829, 7
      %v831 = vsub.s32 %v828, %v830
      %v832 = vrot.slane %v818, %v831
      %v833 = vcombine.high %v825, %v825
      %v834 = vcombine.high %v832, %v832
      %v835 = vcombine.high %v651, %v651
      %v837 = vunpack.c.l.s4 1983009808
      %v838 = vunpack.c.0.s8 %v837
      %v839 = vlaneseq
      %v840 = vshrl.u32 %v839, 7
      %v841 = vsub.s32 %v838, %v840
      %v842 = vrot.slane %v651, %v841
      %v844 = vunpack.c.l.s4 1983009808
      %v845 = vunpack.c.0.s8 %v844
      %v846 = vlaneseq
      %v847 = vshrl.u32 %v846, 7
      %v848 = vsub.s32 %v845, %v847
      %v849 = vrot.slane %v835, %v848
      %v850 = vcombine.high %v842, %v842
      %v851 = vcombine.high %v849, %v849
      %v852 = vcombine.high %v654, %v654
      %v854 = vunpack.c.l.s4 1983009808
      %v855 = vunpack.c.0.s8 %v854
      %v856 = vlaneseq
      %v857 = vshrl.u32 %v856, 7
      %v858 = vsub.s32 %v855, %v857
      %v859 = vrot.slane %v654, %v858
      %v861 = vunpack.c.l.s4 1983009808
      %v862 = vunpack.c.0.s8 %v861
      %v863 = vlaneseq
      %v864 = vshrl.u32 %v863, 7
      %v865 = vsub.s32 %v862, %v864
      %v866 = vrot.slane %v852, %v865
      %v867 = vcombine.high %v859, %v859
      %v868 = vcombine.high %v866, %v866
      %v869 = vcombine.high %v659, %v659
      %v871 = vunpack.c.l.s4 1983009808
      %v872 = vunpack.c.0.s8 %v871
      %v873 = vlaneseq
      %v874 = vshrl.u32 %v873, 7
      %v875 = vsub.s32 %v872, %v874
      %v876 = vrot.slane %v659, %v875
      %v878 = vunpack.c.l.s4 1983009808
      %v879 = vunpack.c.0.s8 %v878
      %v880 = vlaneseq
      %v881 = vshrl.u32 %v880, 7
      %v882 = vsub.s32 %v879, %v881
      %v883 = vrot.slane %v869, %v882
      %v884 = vcombine.high %v876, %v876
      %v885 = vcombine.high %v883, %v883
      %v886 = vcombine.high %v662, %v662
      %v888 = vunpack.c.l.s4 1983009808
      %v889 = vunpack.c.0.s8 %v888
      %v890 = vlaneseq
      %v891 = vshrl.u32 %v890, 7
      %v892 = vsub.s32 %v889, %v891
      %v893 = vrot.slane %v662, %v892
      %v895 = vunpack.c.l.s4 1983009808
      %v896 = vunpack.c.0.s8 %v895
      %v897 = vlaneseq
      %v898 = vshrl.u32 %v897, 7
      %v899 = vsub.s32 %v896, %v898
      %v900 = vrot.slane %v886, %v899
      %v901 = vcombine.high %v893, %v893
      %v902 = vcombine.high %v900, %v900
      %v903 = vcombine.high %v667, %v667
      %v905 = vunpack.c.l.s4 1983009808
      %v906 = vunpack.c.0.s8 %v905
      %v907 = vlaneseq
      %v908 = vshrl.u32 %v907, 7
      %v909 = vsub.s32 %v906, %v908
      %v910 = vrot.slane %v667, %v909
      %v912 = vunpack.c.l.s4 1983009808
      %v913 = vunpack.c.0.s8 %v912
      %v914 = vlaneseq
      %v915 = vshrl.u32 %v914, 7
      %v916 = vsub.s32 %v913, %v915
      %v917 = vrot.slane %v903, %v916
      %v918 = vcombine.high %v910, %v910
      %v919 = vcombine.high %v917, %v917
      %v920 = vcombine.high %v670, %v670
      %v922 = vunpack.c.l.s4 1983009808
      %v923 = vunpack.c.0.s8 %v922
      %v924 = vlaneseq
      %v925 = vshrl.u32 %v924, 7
      %v926 = vsub.s32 %v923, %v925
      %v927 = vrot.slane %v670, %v926
      %v929 = vunpack.c.l.s4 1983009808
      %v930 = vunpack.c.0.s8 %v929
      %v931 = vlaneseq
      %v932 = vshrl.u32 %v931, 7
      %v933 = vsub.s32 %v930, %v932
      %v934 = vrot.slane %v920, %v933
      %v935 = vcombine.high %v927, %v927
      %v936 = vcombine.high %v934, %v934
      %v937 = vcombine.high %v675, %v675
      %v939 = vunpack.c.l.s4 1983009808
      %v940 = vunpack.c.0.s8 %v939
      %v941 = vlaneseq
      %v942 = vshrl.u32 %v941, 7
      %v943 = vsub.s32 %v940, %v942
      %v944 = vrot.slane %v675, %v943
      %v946 = vunpack.c.l.s4 1983009808
      %v947 = vunpack.c.0.s8 %v946
      %v948 = vlaneseq
      %v949 = vshrl.u32 %v948, 7
      %v950 = vsub.s32 %v947, %v949
      %v951 = vrot.slane %v937, %v950
      %v952 = vcombine.high %v944, %v944
      %v953 = vcombine.high %v951, %v951
      %v954 = vcombine.high %v678, %v678
      %v956 = vunpack.c.l.s4 1983009808
      %v957 = vunpack.c.0.s8 %v956
      %v958 = vlaneseq
      %v959 = vshrl.u32 %v958, 7
      %v960 = vsub.s32 %v957, %v959
      %v961 = vrot.slane %v678, %v960
      %v963 = vunpack.c.l.s4 1983009808
      %v964 = vunpack.c.0.s8 %v963
      %v965 = vlaneseq
      %v966 = vshrl.u32 %v965, 7
      %v967 = vsub.s32 %v964, %v966
      %v968 = vrot.slane %v954, %v967
      %v969 = vcombine.high %v961, %v961
      %v970 = vcombine.high %v968, %v968
      %v971 = vcombine.high %v683, %v683
      %v973 = vunpack.c.l.s4 1983009808
      %v974 = vunpack.c.0.s8 %v973
      %v975 = vlaneseq
      %v976 = vshrl.u32 %v975, 7
      %v977 = vsub.s32 %v974, %v976
      %v978 = vrot.slane %v683, %v977
      %v980 = vunpack.c.l.s4 1983009808
      %v981 = vunpack.c.0.s8 %v980
      %v982 = vlaneseq
      %v983 = vshrl.u32 %v982, 7
      %v984 = vsub.s32 %v981, %v983
      %v985 = vrot.slane %v971, %v984
      %v986 = vcombine.high %v978, %v978
      %v987 = vcombine.high %v985, %v985
      %v988 = vcombine.high %v686, %v686
      %v990 = vunpack.c.l.s4 1983009808
      %v991 = vunpack.c.0.s8 %v990
      %v992 = vlaneseq
      %v993 = vshrl.u32 %v992, 7
      %v994 = vsub.s32 %v991, %v993
      %v995 = vrot.slane %v686, %v994
      %v997 = vunpack.c.l.s4 1983009808
      %v998 = vunpack.c.0.s8 %v997
      %v999 = vlaneseq
      %v1000 = vshrl.u32 %v999, 7
      %v1001 = vsub.s32 %v998, %v1000
      %v1002 = vrot.slane %v988, %v1001
      %v1003 = vcombine.high %v995, %v995
      %v1004 = vcombine.high %v1002, %v1002
      %v1005 = vcombine.high %v691, %v691
      %v1007 = vunpack.c.l.s4 1983009808
      %v1008 = vunpack.c.0.s8 %v1007
      %v1009 = vlaneseq
      %v1010 = vshrl.u32 %v1009, 7
      %v1011 = vsub.s32 %v1008, %v1010
      %v1012 = vrot.slane %v691, %v1011
      %v1014 = vunpack.c.l.s4 1983009808
      %v1015 = vunpack.c.0.s8 %v1014
      %v1016 = vlaneseq
      %v1017 = vshrl.u32 %v1016, 7
      %v1018 = vsub.s32 %v1015, %v1017
      %v1019 = vrot.slane %v1005, %v1018
      %v1020 = vcombine.high %v1012, %v1012
      %v1021 = vcombine.high %v1019, %v1019
      %v1022 = vcombine.high %v694, %v694
      %v1024 = vunpack.c.l.s4 1983009808
      %v1025 = vunpack.c.0.s8 %v1024
      %v1026 = vlaneseq
      %v1027 = vshrl.u32 %v1026, 7
      %v1028 = vsub.s32 %v1025, %v1027
      %v1029 = vrot.slane %v694, %v1028
      %v1031 = vunpack.c.l.s4 1983009808
      %v1032 = vunpack.c.0.s8 %v1031
      %v1033 = vlaneseq
      %v1034 = vshrl.u32 %v1033, 7
      %v1035 = vsub.s32 %v1032, %v1034
      %v1036 = vrot.slane %v1022, %v1035
      %v1037 = vcombine.high %v1029, %v1029
      %v1038 = vcombine.high %v1036, %v1036
      %v1039 = vcombine.high %v699, %v699
      %v1041 = vunpack.c.l.s4 1983009808
      %v1042 = vunpack.c.0.s8 %v1041
      %v1043 = vlaneseq
      %v1044 = vshrl.u32 %v1043, 7
      %v1045 = vsub.s32 %v1042, %v1044
      %v1046 = vrot.slane %v699, %v1045
      %v1048 = vunpack.c.l.s4 1983009808
      %v1049 = vunpack.c.0.s8 %v1048
      %v1050 = vlaneseq
      %v1051 = vshrl.u32 %v1050, 7
      %v1052 = vsub.s32 %v1049, %v1051
      %v1053 = vrot.slane %v1039, %v1052
      %v1054 = vcombine.high %v1046, %v1046
      %v1055 = vcombine.high %v1053, %v1053
      %v1056 = vcombine.high %v702, %v702
      %v1058 = vunpack.c.l.s4 1983009808
      %v1059 = vunpack.c.0.s8 %v1058
      %v1060 = vlaneseq
      %v1061 = vshrl.u32 %v1060, 7
      %v1062 = vsub.s32 %v1059, %v1061
      %v1063 = vrot.slane %v702, %v1062
      %v1065 = vunpack.c.l.s4 1983009808
      %v1066 = vunpack.c.0.s8 %v1065
      %v1067 = vlaneseq
      %v1068 = vshrl.u32 %v1067, 7
      %v1069 = vsub.s32 %v1066, %v1068
      %v1070 = vrot.slane %v1056, %v1069
      %v1071 = vcombine.high %v1063, %v1063
      %v1072 = vcombine.high %v1070, %v1070
      %v1073 = vcombine.high %v707, %v707
      %v1075 = vunpack.c.l.s4 1983009808
      %v1076 = vunpack.c.0.s8 %v1075
      %v1077 = vlaneseq
      %v1078 = vshrl.u32 %v1077, 7
      %v1079 = vsub.s32 %v1076, %v1078
      %v1080 = vrot.slane %v707, %v1079
      %v1082 = vunpack.c.l.s4 1983009808
      %v1083 = vunpack.c.0.s8 %v1082
      %v1084 = vlaneseq
      %v1085 = vshrl.u32 %v1084, 7
      %v1086 = vsub.s32 %v1083, %v1085
      %v1087 = vrot.slane %v1073, %v1086
      %v1088 = vcombine.high %v1080, %v1080
      %v1089 = vcombine.high %v1087, %v1087
      %v1090 = vcombine.high %v710, %v710
      %v1092 = vunpack.c.l.s4 1983009808
      %v1093 = vunpack.c.0.s8 %v1092
      %v1094 = vlaneseq
      %v1095 = vshrl.u32 %v1094, 7
      %v1096 = vsub.s32 %v1093, %v1095
      %v1097 = vrot.slane %v710, %v1096
      %v1099 = vunpack.c.l.s4 1983009808
      %v1100 = vunpack.c.0.s8 %v1099
      %v1101 = vlaneseq
      %v1102 = vshrl.u32 %v1101, 7
      %v1103 = vsub.s32 %v1100, %v1102
      %v1104 = vrot.slane %v1090, %v1103
      %v1105 = vcombine.high %v1097, %v1097
      %v1106 = vcombine.high %v1104, %v1104
      %v1107 = vcombine.high %v715, %v715
      %v1109 = vunpack.c.l.s4 1983009808
      %v1110 = vunpack.c.0.s8 %v1109
      %v1111 = vlaneseq
      %v1112 = vshrl.u32 %v1111, 7
      %v1113 = vsub.s32 %v1110, %v1112
      %v1114 = vrot.slane %v715, %v1113
      %v1116 = vunpack.c.l.s4 1983009808
      %v1117 = vunpack.c.0.s8 %v1116
      %v1118 = vlaneseq
      %v1119 = vshrl.u32 %v1118, 7
      %v1120 = vsub.s32 %v1117, %v1119
      %v1121 = vrot.slane %v1107, %v1120
      %v1122 = vcombine.high %v1114, %v1114
      %v1123 = vcombine.high %v1121, %v1121
      %v1124 = vcombine.high %v718, %v718
      %v1126 = vunpack.c.l.s4 1983009808
      %v1127 = vunpack.c.0.s8 %v1126
      %v1128 = vlaneseq
      %v1129 = vshrl.u32 %v1128, 7
      %v1130 = vsub.s32 %v1127, %v1129
      %v1131 = vrot.slane %v718, %v1130
      %v1133 = vunpack.c.l.s4 1983009808
      %v1134 = vunpack.c.0.s8 %v1133
      %v1135 = vlaneseq
      %v1136 = vshrl.u32 %v1135, 7
      %v1137 = vsub.s32 %v1134, %v1136
      %v1138 = vrot.slane %v1124, %v1137
      %v1139 = vcombine.high %v1131, %v1131
      %v1140 = vcombine.high %v1138, %v1138
      %v1141 = vcombine.high %v723, %v723
      %v1143 = vunpack.c.l.s4 1983009808
      %v1144 = vunpack.c.0.s8 %v1143
      %v1145 = vlaneseq
      %v1146 = vshrl.u32 %v1145, 7
      %v1147 = vsub.s32 %v1144, %v1146
      %v1148 = vrot.slane %v723, %v1147
      %v1150 = vunpack.c.l.s4 1983009808
      %v1151 = vunpack.c.0.s8 %v1150
      %v1152 = vlaneseq
      %v1153 = vshrl.u32 %v1152, 7
      %v1154 = vsub.s32 %v1151, %v1153
      %v1155 = vrot.slane %v1141, %v1154
      %v1156 = vcombine.high %v1148, %v1148
      %v1157 = vcombine.high %v1155, %v1155
      %v1158 = vcombine.high %v726, %v726
      %v1160 = vunpack.c.l.s4 1983009808
      %v1161 = vunpack.c.0.s8 %v1160
      %v1162 = vlaneseq
      %v1163 = vshrl.u32 %v1162, 7
      %v1164 = vsub.s32 %v1161, %v1163
      %v1165 = vrot.slane %v726, %v1164
      %v1167 = vunpack.c.l.s4 1983009808
      %v1168 = vunpack.c.0.s8 %v1167
      %v1169 = vlaneseq
      %v1170 = vshrl.u32 %v1169, 7
      %v1171 = vsub.s32 %v1168, %v1170
      %v1172 = vrot.slane %v1158, %v1171
      %v1173 = vcombine.high %v1165, %v1165
      %v1174 = vcombine.high %v1172, %v1172
      %v1175 = vcombine.high %v731, %v731
      %v1177 = vunpack.c.l.s4 1983009808
      %v1178 = vunpack.c.0.s8 %v1177
      %v1179 = vlaneseq
      %v1180 = vshrl.u32 %v1179, 7
      %v1181 = vsub.s32 %v1178, %v1180
      %v1182 = vrot.slane %v731, %v1181
      %v1184 = vunpack.c.l.s4 1983009808
      %v1185 = vunpack.c.0.s8 %v1184
      %v1186 = vlaneseq
      %v1187 = vshrl.u32 %v1186, 7
      %v1188 = vsub.s32 %v1185, %v1187
      %v1189 = vrot.slane %v1175, %v1188
      %v1190 = vcombine.high %v1182, %v1182
      %v1191 = vcombine.high %v1189, %v1189
      %v1192 = vcombine.high %v734, %v734
      %v1194 = vunpack.c.l.s4 1983009808
      %v1195 = vunpack.c.0.s8 %v1194
      %v1196 = vlaneseq
      %v1197 = vshrl.u32 %v1196, 7
      %v1198 = vsub.s32 %v1195, %v1197
      %v1199 = vrot.slane %v734, %v1198
      %v1201 = vunpack.c.l.s4 1983009808
      %v1202 = vunpack.c.0.s8 %v1201
      %v1203 = vlaneseq
      %v1204 = vshrl.u32 %v1203, 7
      %v1205 = vsub.s32 %v1202, %v1204
      %v1206 = vrot.slane %v1192, %v1205
      %v1207 = vcombine.high %v1199, %v1199
      %v1208 = vcombine.high %v1206, %v1206
      %v1209 = vcombine.high %v739, %v739
      %v1211 = vunpack.c.l.s4 1983009808
      %v1212 = vunpack.c.0.s8 %v1211
      %v1213 = vlaneseq
      %v1214 = vshrl.u32 %v1213, 7
      %v1215 = vsub.s32 %v1212, %v1214
      %v1216 = vrot.slane %v739, %v1215
      %v1218 = vunpack.c.l.s4 1983009808
      %v1219 = vunpack.c.0.s8 %v1218
      %v1220 = vlaneseq
      %v1221 = vshrl.u32 %v1220, 7
      %v1222 = vsub.s32 %v1219, %v1221
      %v1223 = vrot.slane %v1209, %v1222
      %v1224 = vcombine.high %v1216, %v1216
      %v1225 = vcombine.high %v1223, %v1223
      %v1226 = vcombine.high %v742, %v742
      %v1228 = vunpack.c.l.s4 1983009808
      %v1229 = vunpack.c.0.s8 %v1228
      %v1230 = vlaneseq
      %v1231 = vshrl.u32 %v1230, 7
      %v1232 = vsub.s32 %v1229, %v1231
      %v1233 = vrot.slane %v742, %v1232
      %v1235 = vunpack.c.l.s4 1983009808
      %v1236 = vunpack.c.0.s8 %v1235
      %v1237 = vlaneseq
      %v1238 = vshrl.u32 %v1237, 7
      %v1239 = vsub.s32 %v1236, %v1238
      %v1240 = vrot.slane %v1226, %v1239
      %v1241 = vcombine.high %v1233, %v1233
      %v1242 = vcombine.high %v1240, %v1240
      %v1243 = vcombine.high %v747, %v747
      %v1245 = vunpack.c.l.s4 1983009808
      %v1246 = vunpack.c.0.s8 %v1245
      %v1247 = vlaneseq
      %v1248 = vshrl.u32 %v1247, 7
      %v1249 = vsub.s32 %v1246, %v1248
      %v1250 = vrot.slane %v747, %v1249
      %v1252 = vunpack.c.l.s4 1983009808
      %v1253 = vunpack.c.0.s8 %v1252
      %v1254 = vlaneseq
      %v1255 = vshrl.u32 %v1254, 7
      %v1256 = vsub.s32 %v1253, %v1255
      %v1257 = vrot.slane %v1243, %v1256
      %v1258 = vcombine.high %v1250, %v1250
      %v1259 = vcombine.high %v1257, %v1257
      %v1260 = vcombine.high %v750, %v750
      %v1262 = vunpack.c.l.s4 1983009808
      %v1263 = vunpack.c.0.s8 %v1262
      %v1264 = vlaneseq
      %v1265 = vshrl.u32 %v1264, 7
      %v1266 = vsub.s32 %v1263, %v1265
      %v1267 = vrot.slane %v750, %v1266
      %v1269 = vunpack.c.l.s4 1983009808
      %v1270 = vunpack.c.0.s8 %v1269
      %v1271 = vlaneseq
      %v1272 = vshrl.u32 %v1271, 7
      %v1273 = vsub.s32 %v1270, %v1272
      %v1274 = vrot.slane %v1260, %v1273
      %v1275 = vcombine.high %v1267, %v1267
      %v1276 = vcombine.high %v1274, %v1274
      %v1277 = vcombine.high %v755, %v755
      %v1279 = vunpack.c.l.s4 1983009808
      %v1280 = vunpack.c.0.s8 %v1279
      %v1281 = vlaneseq
      %v1282 = vshrl.u32 %v1281, 7
      %v1283 = vsub.s32 %v1280, %v1282
      %v1284 = vrot.slane %v755, %v1283
      %v1286 = vunpack.c.l.s4 1983009808
      %v1287 = vunpack.c.0.s8 %v1286
      %v1288 = vlaneseq
      %v1289 = vshrl.u32 %v1288, 7
      %v1290 = vsub.s32 %v1287, %v1289
      %v1291 = vrot.slane %v1277, %v1290
      %v1292 = vcombine.high %v1284, %v1284
      %v1293 = vcombine.high %v1291, %v1291
      %v1294 = vcombine.high %v758, %v758
      %v1296 = vunpack.c.l.s4 1983009808
      %v1297 = vunpack.c.0.s8 %v1296
      %v1298 = vlaneseq
      %v1299 = vshrl.u32 %v1298, 7
      %v1300 = vsub.s32 %v1297, %v1299
      %v1301 = vrot.slane %v758, %v1300
      %v1303 = vunpack.c.l.s4 1983009808
      %v1304 = vunpack.c.0.s8 %v1303
      %v1305 = vlaneseq
      %v1306 = vshrl.u32 %v1305, 7
      %v1307 = vsub.s32 %v1304, %v1306
      %v1308 = vrot.slane %v1294, %v1307
      %v1309 = vcombine.high %v1301, %v1301
      %v1310 = vcombine.high %v1308, %v1308
      %v1311 = vcombine.high %v763, %v763
      %v1313 = vunpack.c.l.s4 1983009808
      %v1314 = vunpack.c.0.s8 %v1313
      %v1315 = vlaneseq
      %v1316 = vshrl.u32 %v1315, 7
      %v1317 = vsub.s32 %v1314, %v1316
      %v1318 = vrot.slane %v763, %v1317
      %v1320 = vunpack.c.l.s4 1983009808
      %v1321 = vunpack.c.0.s8 %v1320
      %v1322 = vlaneseq
      %v1323 = vshrl.u32 %v1322, 7
      %v1324 = vsub.s32 %v1321, %v1323
      %v1325 = vrot.slane %v1311, %v1324
      %v1326 = vcombine.high %v1318, %v1318
      %v1327 = vcombine.high %v1325, %v1325
      %v1328 = vcombine.high %v766, %v766
      %v1330 = vunpack.c.l.s4 1983009808
      %v1331 = vunpack.c.0.s8 %v1330
      %v1332 = vlaneseq
      %v1333 = vshrl.u32 %v1332, 7
      %v1334 = vsub.s32 %v1331, %v1333
      %v1335 = vrot.slane %v766, %v1334
      %v1337 = vunpack.c.l.s4 1983009808
      %v1338 = vunpack.c.0.s8 %v1337
      %v1339 = vlaneseq
      %v1340 = vshrl.u32 %v1339, 7
      %v1341 = vsub.s32 %v1338, %v1340
      %v1342 = vrot.slane %v1328, %v1341
      %v1343 = vcombine.high %v1335, %v1335
      %v1344 = vcombine.high %v1342, %v1342
      %v1473 = vrot.slane %v808, 7
      %v1474 = vrot.slane %v1473, 2
      %v1475 = vrot.slane %v816, 7
      %v1476 = vrot.slane %v1475, 2
      %v1477 = vrot.slane %v815, 7
      %v1478 = vrot.slane %v1477, 2
      %v1479 = vrot.slane %v817, 7
      %v1480 = vrot.slane %v1479, 2
      %v1481 = vrot.slane %v825, 7
      %v1482 = vrot.slane %v1481, 2
      %v1483 = vrot.slane %v833, 7
      %v1484 = vrot.slane %v1483, 2
      %v1485 = vrot.slane %v832, 7
      %v1486 = vrot.slane %v1485, 2
      %v1487 = vrot.slane %v834, 7
      %v1488 = vrot.slane %v1487, 2
      %v1489 = vrot.slane %v842, 7
      %v1490 = vrot.slane %v1489, 2
      %v1491 = vrot.slane %v850, 7
      %v1492 = vrot.slane %v1491, 2
      %v1493 = vrot.slane %v849, 7
      %v1494 = vrot.slane %v1493, 2
      %v1495 = vrot.slane %v851, 7
      %v1496 = vrot.slane %v1495, 2
      %v1497 = vrot.slane %v859, 7
      %v1498 = vrot.slane %v1497, 2
      %v1499 = vrot.slane %v867, 7
      %v1500 = vrot.slane %v1499, 2
      %v1501 = vrot.slane %v866, 7
      %v1502 = vrot.slane %v1501, 2
      %v1503 = vrot.slane %v868, 7
      %v1504 = vrot.slane %v1503, 2
      %v1505 = vrot.slane %v876, 7
      %v1506 = vrot.slane %v1505, 2
      %v1507 = vrot.slane %v884, 7
      %v1508 = vrot.slane %v1507, 2
      %v1509 = vrot.slane %v883, 7
      %v1510 = vrot.slane %v1509, 2
      %v1511 = vrot.slane %v885, 7
      %v1512 = vrot.slane %v1511, 2
      %v1513 = vrot.slane %v893, 7
      %v1514 = vrot.slane %v1513, 2
      %v1515 = vrot.slane %v901, 7
      %v1516 = vrot.slane %v1515, 2
      %v1517 = vrot.slane %v900, 7
      %v1518 = vrot.slane %v1517, 2
      %v1519 = vrot.slane %v902, 7
      %v1520 = vrot.slane %v1519, 2
      %v1521 = vrot.slane %v910, 7
      %v1522 = vrot.slane %v1521, 2
      %v1523 = vrot.slane %v918, 7
      %v1524 = vrot.slane %v1523, 2
      %v1525 = vrot.slane %v917, 7
      %v1526 = vrot.slane %v1525, 2
      %v1527 = vrot.slane %v919, 7
      %v1528 = vrot.slane %v1527, 2
      %v1529 = vrot.slane %v927, 7
      %v1530 = vrot.slane %v1529, 2
      %v1531 = vrot.slane %v935, 7
      %v1532 = vrot.slane %v1531, 2
      %v1533 = vrot.slane %v934, 7
      %v1534 = vrot.slane %v1533, 2
      %v1535 = vrot.slane %v936, 7
      %v1536 = vrot.slane %v1535, 2
      %v1537 = vrot.slane %v944, 7
      %v1538 = vrot.slane %v1537, 2
      %v1539 = vrot.slane %v952, 7
      %v1540 = vrot.slane %v1539, 2
      %v1541 = vrot.slane %v951, 7
      %v1542 = vrot.slane %v1541, 2
      %v1543 = vrot.slane %v953, 7
      %v1544 = vrot.slane %v1543, 2
      %v1545 = vrot.slane %v961, 7
      %v1546 = vrot.slane %v1545, 2
      %v1547 = vrot.slane %v969, 7
      %v1548 = vrot.slane %v1547, 2
      %v1549 = vrot.slane %v968, 7
      %v1550 = vrot.slane %v1549, 2
      %v1551 = vrot.slane %v970, 7
      %v1552 = vrot.slane %v1551, 2
      %v1553 = vrot.slane %v978, 7
      %v1554 = vrot.slane %v1553, 2
      %v1555 = vrot.slane %v986, 7
      %v1556 = vrot.slane %v1555, 2
      %v1557 = vrot.slane %v985, 7
      %v1558 = vrot.slane %v1557, 2
      %v1559 = vrot.slane %v987, 7
      %v1560 = vrot.slane %v1559, 2
      %v1561 = vrot.slane %v995, 7
      %v1562 = vrot.slane %v1561, 2
      %v1563 = vrot.slane %v1003, 7
      %v1564 = vrot.slane %v1563, 2
      %v1565 = vrot.slane %v1002, 7
      %v1566 = vrot.slane %v1565, 2
      %v1567 = vrot.slane %v1004, 7
      %v1568 = vrot.slane %v1567, 2
      %v1569 = vrot.slane %v1012, 7
      %v1570 = vrot.slane %v1569, 2
      %v1571 = vrot.slane %v1020, 7
      %v1572 = vrot.slane %v1571, 2
      %v1573 = vrot.slane %v1019, 7
      %v1574 = vrot.slane %v1573, 2
      %v1575 = vrot.slane %v1021, 7
      %v1576 = vrot.slane %v1575, 2
      %v1577 = vrot.slane %v1029, 7
      %v1578 = vrot.slane %v1577, 2
      %v1579 = vrot.slane %v1037, 7
      %v1580 = vrot.slane %v1579, 2
      %v1581 = vrot.slane %v1036, 7
      %v1582 = vrot.slane %v1581, 2
      %v1583 = vrot.slane %v1038, 7
      %v1584 = vrot.slane %v1583, 2
      %v1585 = vrot.slane %v1046, 7
      %v1586 = vrot.slane %v1585, 2
      %v1587 = vrot.slane %v1054, 7
      %v1588 = vrot.slane %v1587, 2
      %v1589 = vrot.slane %v1053, 7
      %v1590 = vrot.slane %v1589, 2
      %v1591 = vrot.slane %v1055, 7
      %v1592 = vrot.slane %v1591, 2
      %v1593 = vrot.slane %v1063, 7
      %v1594 = vrot.slane %v1593, 2
      %v1595 = vrot.slane %v1071, 7
      %v1596 = vrot.slane %v1595, 2
      %v1597 = vrot.slane %v1070, 7
      %v1598 = vrot.slane %v1597, 2
      %v1599 = vrot.slane %v1072, 7
      %v1600 = vrot.slane %v1599, 2
      %v1601 = vrot.slane %v1080, 7
      %v1602 = vrot.slane %v1601, 2
      %v1603 = vrot.slane %v1088, 7
      %v1604 = vrot.slane %v1603, 2
      %v1605 = vrot.slane %v1087, 7
      %v1606 = vrot.slane %v1605, 2
      %v1607 = vrot.slane %v1089, 7
      %v1608 = vrot.slane %v1607, 2
      %v1609 = vrot.slane %v1097, 7
      %v1610 = vrot.slane %v1609, 2
      %v1611 = vrot.slane %v1105, 7
      %v1612 = vrot.slane %v1611, 2
      %v1613 = vrot.slane %v1104, 7
      %v1614 = vrot.slane %v1613, 2
      %v1615 = vrot.slane %v1106, 7
      %v1616 = vrot.slane %v1615, 2
      %v1617 = vrot.slane %v1114, 7
      %v1618 = vrot.slane %v1617, 2
      %v1619 = vrot.slane %v1122, 7
      %v1620 = vrot.slane %v1619, 2
      %v1621 = vrot.slane %v1121, 7
      %v1622 = vrot.slane %v1621, 2
      %v1623 = vrot.slane %v1123, 7
      %v1624 = vrot.slane %v1623, 2
      %v1625 = vrot.slane %v1131, 7
      %v1626 = vrot.slane %v1625, 2
      %v1627 = vrot.slane %v1139, 7
      %v1628 = vrot.slane %v1627, 2
      %v1629 = vrot.slane %v1138, 7
      %v1630 = vrot.slane %v1629, 2
      %v1631 = vrot.slane %v1140, 7
      %v1632 = vrot.slane %v1631, 2
      %v1633 = vrot.slane %v1148, 7
      %v1634 = vrot.slane %v1633, 2
      %v1635 = vrot.slane %v1156, 7
      %v1636 = vrot.slane %v1635, 2
      %v1637 = vrot.slane %v1155, 7
      %v1638 = vrot.slane %v1637, 2
      %v1639 = vrot.slane %v1157, 7
      %v1640 = vrot.slane %v1639, 2
      %v1641 = vrot.slane %v1165, 7
      %v1642 = vrot.slane %v1641, 2
      %v1643 = vrot.slane %v1173, 7
      %v1644 = vrot.slane %v1643, 2
      %v1645 = vrot.slane %v1172, 7
      %v1646 = vrot.slane %v1645, 2
      %v1647 = vrot.slane %v1174, 7
      %v1648 = vrot.slane %v1647, 2
      %v1649 = vrot.slane %v1182, 7
      %v1650 = vrot.slane %v1649, 2
      %v1651 = vrot.slane %v1190, 7
      %v1652 = vrot.slane %v1651, 2
      %v1653 = vrot.slane %v1189, 7
      %v1654 = vrot.slane %v1653, 2
      %v1655 = vrot.slane %v1191, 7
      %v1656 = vrot.slane %v1655, 2
      %v1657 = vrot.slane %v1199, 7
      %v1658 = vrot.slane %v1657, 2
      %v1659 = vrot.slane %v1207, 7
      %v1660 = vrot.slane %v1659, 2
      %v1661 = vrot.slane %v1206, 7
      %v1662 = vrot.slane %v1661, 2
      %v1663 = vrot.slane %v1208, 7
      %v1664 = vrot.slane %v1663, 2
      %v1665 = vrot.slane %v1216, 7
      %v1666 = vrot.slane %v1665, 2
      %v1667 = vrot.slane %v1224, 7
      %v1668 = vrot.slane %v1667, 2
      %v1669 = vrot.slane %v1223, 7
      %v1670 = vrot.slane %v1669, 2
      %v1671 = vrot.slane %v1225, 7
      %v1672 = vrot.slane %v1671, 2
      %v1673 = vrot.slane %v1233, 7
      %v1674 = vrot.slane %v1673, 2
      %v1675 = vrot.slane %v1241, 7
      %v1676 = vrot.slane %v1675, 2
      %v1677 = vrot.slane %v1240, 7
      %v1678 = vrot.slane %v1677, 2
      %v1679 = vrot.slane %v1242, 7
      %v1680 = vrot.slane %v1679, 2
      %v1681 = vrot.slane %v1250, 7
      %v1682 = vrot.slane %v1681, 2
      %v1683 = vrot.slane %v1258, 7
      %v1684 = vrot.slane %v1683, 2
      %v1685 = vrot.slane %v1257, 7
      %v1686 = vrot.slane %v1685, 2
      %v1687 = vrot.slane %v1259, 7
      %v1688 = vrot.slane %v1687, 2
      %v1689 = vrot.slane %v1267, 7
      %v1690 = vrot.slane %v1689, 2
      %v1691 = vrot.slane %v1275, 7
      %v1692 = vrot.slane %v1691, 2
      %v1693 = vrot.slane %v1274, 7
      %v1694 = vrot.slane %v1693, 2
      %v1695 = vrot.slane %v1276, 7
      %v1696 = vrot.slane %v1695, 2
      %v1697 = vrot.slane %v1284, 7
      %v1698 = vrot.slane %v1697, 2
      %v1699 = vrot.slane %v1292, 7
      %v1700 = vrot.slane %v1699, 2
      %v1701 = vrot.slane %v1291, 7
      %v1702 = vrot.slane %v1701, 2
      %v1703 = vrot.slane %v1293, 7
      %v1704 = vrot.slane %v1703, 2
      %v1705 = vrot.slane %v1301, 7
      %v1706 = vrot.slane %v1705, 2
      %v1707 = vrot.slane %v1309, 7
      %v1708 = vrot.slane %v1707, 2
      %v1709 = vrot.slane %v1308, 7
      %v1710 = vrot.slane %v1709, 2
      %v1711 = vrot.slane %v1310, 7
      %v1712 = vrot.slane %v1711, 2
      %v1713 = vrot.slane %v1318, 7
      %v1714 = vrot.slane %v1713, 2
      %v1715 = vrot.slane %v1326, 7
      %v1716 = vrot.slane %v1715, 2
      %v1717 = vrot.slane %v1325, 7
      %v1718 = vrot.slane %v1717, 2
      %v1719 = vrot.slane %v1327, 7
      %v1720 = vrot.slane %v1719, 2
      %v1721 = vrot.slane %v1335, 7
      %v1722 = vrot.slane %v1721, 2
      %v1723 = vrot.slane %v1343, 7
      %v1724 = vrot.slane %v1723, 2
      %v1725 = vrot.slane %v1342, 7
      %v1726 = vrot.slane %v1725, 2
      %v1727 = vrot.slane %v1344, 7
      %v1728 = vrot.slane %v1727, 2
      %v1857 = vmax.f32 %v808, %v1474
      %v1858 = vmax.f32 %v816, %v1476
      %v1859 = vmax.f32 %v815, %v1478
      %v1860 = vmax.f32 %v817, %v1480
      %v1861 = vmax.f32 %v825, %v1482
      %v1862 = vmax.f32 %v833, %v1484
      %v1863 = vmax.f32 %v832, %v1486
      %v1864 = vmax.f32 %v834, %v1488
      %v1865 = vmax.f32 %v842, %v1490
      %v1866 = vmax.f32 %v850, %v1492
      %v1867 = vmax.f32 %v849, %v1494
      %v1868 = vmax.f32 %v851, %v1496
      %v1869 = vmax.f32 %v859, %v1498
      %v1870 = vmax.f32 %v867, %v1500
      %v1871 = vmax.f32 %v866, %v1502
      %v1872 = vmax.f32 %v868, %v1504
      %v1873 = vmax.f32 %v876, %v1506
      %v1874 = vmax.f32 %v884, %v1508
      %v1875 = vmax.f32 %v883, %v1510
      %v1876 = vmax.f32 %v885, %v1512
      %v1877 = vmax.f32 %v893, %v1514
      %v1878 = vmax.f32 %v901, %v1516
      %v1879 = vmax.f32 %v900, %v1518
      %v1880 = vmax.f32 %v902, %v1520
      %v1881 = vmax.f32 %v910, %v1522
      %v1882 = vmax.f32 %v918, %v1524
      %v1883 = vmax.f32 %v917, %v1526
      %v1884 = vmax.f32 %v919, %v1528
      %v1885 = vmax.f32 %v927, %v1530
      %v1886 = vmax.f32 %v935, %v1532
      %v1887 = vmax.f32 %v934, %v1534
      %v1888 = vmax.f32 %v936, %v1536
      %v1889 = vmax.f32 %v944, %v1538
      %v1890 = vmax.f32 %v952, %v1540
      %v1891 = vmax.f32 %v951, %v1542
      %v1892 = vmax.f32 %v953, %v1544
      %v1893 = vmax.f32 %v961, %v1546
      %v1894 = vmax.f32 %v969, %v1548
      %v1895 = vmax.f32 %v968, %v1550
      %v1896 = vmax.f32 %v970, %v1552
      %v1897 = vmax.f32 %v978, %v1554
      %v1898 = vmax.f32 %v986, %v1556
      %v1899 = vmax.f32 %v985, %v1558
      %v1900 = vmax.f32 %v987, %v1560
      %v1901 = vmax.f32 %v995, %v1562
      %v1902 = vmax.f32 %v1003, %v1564
      %v1903 = vmax.f32 %v1002, %v1566
      %v1904 = vmax.f32 %v1004, %v1568
      %v1905 = vmax.f32 %v1012, %v1570
      %v1906 = vmax.f32 %v1020, %v1572
      %v1907 = vmax.f32 %v1019, %v1574
      %v1908 = vmax.f32 %v1021, %v1576
      %v1909 = vmax.f32 %v1029, %v1578
      %v1910 = vmax.f32 %v1037, %v1580
      %v1911 = vmax.f32 %v1036, %v1582
      %v1912 = vmax.f32 %v1038, %v1584
      %v1913 = vmax.f32 %v1046, %v1586
      %v1914 = vmax.f32 %v1054, %v1588
      %v1915 = vmax.f32 %v1053, %v1590
      %v1916 = vmax.f32 %v1055, %v1592
      %v1917 = vmax.f32 %v1063, %v1594
      %v1918 = vmax.f32 %v1071, %v1596
      %v1919 = vmax.f32 %v1070, %v1598
      %v1920 = vmax.f32 %v1072, %v1600
      %v1921 = vmax.f32 %v1080, %v1602
      %v1922 = vmax.f32 %v1088, %v1604
      %v1923 = vmax.f32 %v1087, %v1606
      %v1924 = vmax.f32 %v1089, %v1608
      %v1925 = vmax.f32 %v1097, %v1610
      %v1926 = vmax.f32 %v1105, %v1612
      %v1927 = vmax.f32 %v1104, %v1614
      %v1928 = vmax.f32 %v1106, %v1616
      %v1929 = vmax.f32 %v1114, %v1618
      %v1930 = vmax.f32 %v1122, %v1620
      %v1931 = vmax.f32 %v1121, %v1622
      %v1932 = vmax.f32 %v1123, %v1624
      %v1933 = vmax.f32 %v1131, %v1626
      %v1934 = vmax.f32 %v1139, %v1628
      %v1935 = vmax.f32 %v1138, %v1630
      %v1936 = vmax.f32 %v1140, %v1632
      %v1937 = vmax.f32 %v1148, %v1634
      %v1938 = vmax.f32 %v1156, %v1636
      %v1939 = vmax.f32 %v1155, %v1638
      %v1940 = vmax.f32 %v1157, %v1640
      %v1941 = vmax.f32 %v1165, %v1642
      %v1942 = vmax.f32 %v1173, %v1644
      %v1943 = vmax.f32 %v1172, %v1646
      %v1944 = vmax.f32 %v1174, %v1648
      %v1945 = vmax.f32 %v1182, %v1650
      %v1946 = vmax.f32 %v1190, %v1652
      %v1947 = vmax.f32 %v1189, %v1654
      %v1948 = vmax.f32 %v1191, %v1656
      %v1949 = vmax.f32 %v1199, %v1658
      %v1950 = vmax.f32 %v1207, %v1660
      %v1951 = vmax.f32 %v1206, %v1662
      %v1952 = vmax.f32 %v1208, %v1664
      %v1953 = vmax.f32 %v1216, %v1666
      %v1954 = vmax.f32 %v1224, %v1668
      %v1955 = vmax.f32 %v1223, %v1670
      %v1956 = vmax.f32 %v1225, %v1672
      %v1957 = vmax.f32 %v1233, %v1674
      %v1958 = vmax.f32 %v1241, %v1676
      %v1959 = vmax.f32 %v1240, %v1678
      %v1960 = vmax.f32 %v1242, %v1680
      %v1961 = vmax.f32 %v1250, %v1682
      %v1962 = vmax.f32 %v1258, %v1684
      %v1963 = vmax.f32 %v1257, %v1686
      %v1964 = vmax.f32 %v1259, %v1688
      %v1965 = vmax.f32 %v1267, %v1690
      %v1966 = vmax.f32 %v1275, %v1692
      %v1967 = vmax.f32 %v1274, %v1694
      %v1968 = vmax.f32 %v1276, %v1696
      %v1969 = vmax.f32 %v1284, %v1698
      %v1970 = vmax.f32 %v1292, %v1700
      %v1971 = vmax.f32 %v1291, %v1702
      %v1972 = vmax.f32 %v1293, %v1704
      %v1973 = vmax.f32 %v1301, %v1706
      %v1974 = vmax.f32 %v1309, %v1708
      %v1975 = vmax.f32 %v1308, %v1710
      %v1976 = vmax.f32 %v1310, %v1712
      %v1977 = vmax.f32 %v1318, %v1714
      %v1978 = vmax.f32 %v1326, %v1716
      %v1979 = vmax.f32 %v1325, %v1718
      %v1980 = vmax.f32 %v1327, %v1720
      %v1981 = vmax.f32 %v1335, %v1722
      %v1982 = vmax.f32 %v1343, %v1724
      %v1983 = vmax.f32 %v1342, %v1726
      %v1984 = vmax.f32 %v1344, %v1728
      %v1985 = vmax.f32 %v1857, %v1865
      %v1986 = vmax.f32 %v1858, %v1866
      %v1987 = vmax.f32 %v1859, %v1867
      %v1988 = vmax.f32 %v1860, %v1868
      %v1989 = vmax.f32 %v1861, %v1869
      %v1990 = vmax.f32 %v1862, %v1870
      %v1991 = vmax.f32 %v1863, %v1871
      %v1992 = vmax.f32 %v1864, %v1872
      %v1993 = vmax.f32 %v1873, %v1881
      %v1994 = vmax.f32 %v1874, %v1882
      %v1995 = vmax.f32 %v1875, %v1883
      %v1996 = vmax.f32 %v1876, %v1884
      %v1997 = vmax.f32 %v1877, %v1885
      %v1998 = vmax.f32 %v1878, %v1886
      %v1999 = vmax.f32 %v1879, %v1887
      %v2000 = vmax.f32 %v1880, %v1888
      %v2001 = vmax.f32 %v1889, %v1897
      %v2002 = vmax.f32 %v1890, %v1898
      %v2003 = vmax.f32 %v1891, %v1899
      %v2004 = vmax.f32 %v1892, %v1900
      %v2005 = vmax.f32 %v1893, %v1901
      %v2006 = vmax.f32 %v1894, %v1902
      %v2007 = vmax.f32 %v1895, %v1903
      %v2008 = vmax.f32 %v1896, %v1904
      %v2009 = vmax.f32 %v1905, %v1913
      %v2010 = vmax.f32 %v1906, %v1914
      %v2011 = vmax.f32 %v1907, %v1915
      %v2012 = vmax.f32 %v1908, %v1916
      %v2013 = vmax.f32 %v1909, %v1917
      %v2014 = vmax.f32 %v1910, %v1918
      %v2015 = vmax.f32 %v1911, %v1919
      %v2016 = vmax.f32 %v1912, %v1920
      %v2017 = vmax.f32 %v1921, %v1929
      %v2018 = vmax.f32 %v1922, %v1930
      %v2019 = vmax.f32 %v1923, %v1931
      %v2020 = vmax.f32 %v1924, %v1932
      %v2021 = vmax.f32 %v1925, %v1933
      %v2022 = vmax.f32 %v1926, %v1934
      %v2023 = vmax.f32 %v1927, %v1935
      %v2024 = vmax.f32 %v1928, %v1936
      %v2025 = vmax.f32 %v1937, %v1945
      %v2026 = vmax.f32 %v1938, %v1946
      %v2027 = vmax.f32 %v1939, %v1947
      %v2028 = vmax.f32 %v1940, %v1948
      %v2029 = vmax.f32 %v1941, %v1949
      %v2030 = vmax.f32 %v1942, %v1950
      %v2031 = vmax.f32 %v1943, %v1951
      %v2032 = vmax.f32 %v1944, %v1952
      %v2033 = vmax.f32 %v1953, %v1961
      %v2034 = vmax.f32 %v1954, %v1962
      %v2035 = vmax.f32 %v1955, %v1963
      %v2036 = vmax.f32 %v1956, %v1964
      %v2037 = vmax.f32 %v1957, %v1965
      %v2038 = vmax.f32 %v1958, %v1966
      %v2039 = vmax.f32 %v1959, %v1967
      %v2040 = vmax.f32 %v1960, %v1968
      %v2041 = vmax.f32 %v1969, %v1977
      %v2042 = vmax.f32 %v1970, %v1978
      %v2043 = vmax.f32 %v1971, %v1979
      %v2044 = vmax.f32 %v1972, %v1980
      %v2045 = vmax.f32 %v1973, %v1981
      %v2046 = vmax.f32 %v1974, %v1982
      %v2047 = vmax.f32 %v1975, %v1983
      %v2048 = vmax.f32 %v1976, %v1984
      %v2049 = vmul.f32 %v1985, 0.2
      %v2050 = vmul.f32 %v1986, 0.2
      %v2051 = vmul.f32 %v1987, 0.2
      %v2052 = vmul.f32 %v1988, 0.2
      %v2053 = vmul.f32 %v1989, 0.2
      %v2054 = vmul.f32 %v1990, 0.2
      %v2055 = vmul.f32 %v1991, 0.2
      %v2056 = vmul.f32 %v1992, 0.2
      %v2057 = vmul.f32 %v1993, 0.2
      %v2058 = vmul.f32 %v1994, 0.2
      %v2059 = vmul.f32 %v1995, 0.2
      %v2060 = vmul.f32 %v1996, 0.2
      %v2061 = vmul.f32 %v1997, 0.2
      %v2062 = vmul.f32 %v1998, 0.2
      %v2063 = vmul.f32 %v1999, 0.2
      %v2064 = vmul.f32 %v2000, 0.2
      %v2065 = vmul.f32 %v2001, 0.2
      %v2066 = vmul.f32 %v2002, 0.2
      %v2067 = vmul.f32 %v2003, 0.2
      %v2068 = vmul.f32 %v2004, 0.2
      %v2069 = vmul.f32 %v2005, 0.2
      %v2070 = vmul.f32 %v2006, 0.2
      %v2071 = vmul.f32 %v2007, 0.2
      %v2072 = vmul.f32 %v2008, 0.2
      %v2073 = vmul.f32 %v2009, 0.2
      %v2074 = vmul.f32 %v2010, 0.2
      %v2075 = vmul.f32 %v2011, 0.2
      %v2076 = vmul.f32 %v2012, 0.2
      %v2077 = vmul.f32 %v2013, 0.2
      %v2078 = vmul.f32 %v2014, 0.2
      %v2079 = vmul.f32 %v2015, 0.2
      %v2080 = vmul.f32 %v2016, 0.2
      %v2081 = vmul.f32 %v2017, 0.2
      %v2082 = vmul.f32 %v2018, 0.2
      %v2083 = vmul.f32 %v2019, 0.2
      %v2084 = vmul.f32 %v2020, 0.2
      %v2085 = vmul.f32 %v2021, 0.2
      %v2086 = vmul.f32 %v2022, 0.2
      %v2087 = vmul.f32 %v2023, 0.2
      %v2088 = vmul.f32 %v2024, 0.2
      %v2089 = vmul.f32 %v2025, 0.2
      %v2090 = vmul.f32 %v2026, 0.2
      %v2091 = vmul.f32 %v2027, 0.2
      %v2092 = vmul.f32 %v2028, 0.2
      %v2093 = vmul.f32 %v2029, 0.2
      %v2094 = vmul.f32 %v2030, 0.2
      %v2095 = vmul.f32 %v2031, 0.2
      %v2096 = vmul.f32 %v2032, 0.2
      %v2097 = vmul.f32 %v2033, 0.2
      %v2098 = vmul.f32 %v2034, 0.2
      %v2099 = vmul.f32 %v2035, 0.2
      %v2100 = vmul.f32 %v2036, 0.2
      %v2101 = vmul.f32 %v2037, 0.2
      %v2102 = vmul.f32 %v2038, 0.2
      %v2103 = vmul.f32 %v2039, 0.2
      %v2104 = vmul.f32 %v2040, 0.2
      %v2105 = vmul.f32 %v2041, 0.2
      %v2106 = vmul.f32 %v2042, 0.2
      %v2107 = vmul.f32 %v2043, 0.2
      %v2108 = vmul.f32 %v2044, 0.2
      %v2109 = vmul.f32 %v2045, 0.2
      %v2110 = vmul.f32 %v2046, 0.2
      %v2111 = vmul.f32 %v2047, 0.2
      %v2112 = vmul.f32 %v2048, 0.2
      %v2113 = vmax.f32 %v1985, %v2049
      %v2114 = vmax.f32 %v1986, %v2050
      %v2115 = vmax.f32 %v1987, %v2051
      %v2116 = vmax.f32 %v1988, %v2052
      %v2117 = vmax.f32 %v1989, %v2053
      %v2118 = vmax.f32 %v1990, %v2054
      %v2119 = vmax.f32 %v1991, %v2055
      %v2120 = vmax.f32 %v1992, %v2056
      %v2121 = vmax.f32 %v1993, %v2057
      %v2122 = vmax.f32 %v1994, %v2058
      %v2123 = vmax.f32 %v1995, %v2059
      %v2124 = vmax.f32 %v1996, %v2060
      %v2125 = vmax.f32 %v1997, %v2061
      %v2126 = vmax.f32 %v1998, %v2062
      %v2127 = vmax.f32 %v1999, %v2063
      %v2128 = vmax.f32 %v2000, %v2064
      %v2129 = vmax.f32 %v2001, %v2065
      %v2130 = vmax.f32 %v2002, %v2066
      %v2131 = vmax.f32 %v2003, %v2067
      %v2132 = vmax.f32 %v2004, %v2068
      %v2133 = vmax.f32 %v2005, %v2069
      %v2134 = vmax.f32 %v2006, %v2070
      %v2135 = vmax.f32 %v2007, %v2071
      %v2136 = vmax.f32 %v2008, %v2072
      %v2137 = vmax.f32 %v2009, %v2073
      %v2138 = vmax.f32 %v2010, %v2074
      %v2139 = vmax.f32 %v2011, %v2075
      %v2140 = vmax.f32 %v2012, %v2076
      %v2141 = vmax.f32 %v2013, %v2077
      %v2142 = vmax.f32 %v2014, %v2078
      %v2143 = vmax.f32 %v2015, %v2079
      %v2144 = vmax.f32 %v2016, %v2080
      %v2145 = vmax.f32 %v2017, %v2081
      %v2146 = vmax.f32 %v2018, %v2082
      %v2147 = vmax.f32 %v2019, %v2083
      %v2148 = vmax.f32 %v2020, %v2084
      %v2149 = vmax.f32 %v2021, %v2085
      %v2150 = vmax.f32 %v2022, %v2086
      %v2151 = vmax.f32 %v2023, %v2087
      %v2152 = vmax.f32 %v2024, %v2088
      %v2153 = vmax.f32 %v2025, %v2089
      %v2154 = vmax.f32 %v2026, %v2090
      %v2155 = vmax.f32 %v2027, %v2091
      %v2156 = vmax.f32 %v2028, %v2092
      %v2157 = vmax.f32 %v2029, %v2093
      %v2158 = vmax.f32 %v2030, %v2094
      %v2159 = vmax.f32 %v2031, %v2095
      %v2160 = vmax.f32 %v2032, %v2096
      %v2161 = vmax.f32 %v2033, %v2097
      %v2162 = vmax.f32 %v2034, %v2098
      %v2163 = vmax.f32 %v2035, %v2099
      %v2164 = vmax.f32 %v2036, %v2100
      %v2165 = vmax.f32 %v2037, %v2101
      %v2166 = vmax.f32 %v2038, %v2102
      %v2167 = vmax.f32 %v2039, %v2103
      %v2168 = vmax.f32 %v2040, %v2104
      %v2169 = vmax.f32 %v2041, %v2105
      %v2170 = vmax.f32 %v2042, %v2106
      %v2171 = vmax.f32 %v2043, %v2107
      %v2172 = vmax.f32 %v2044, %v2108
      %v2173 = vmax.f32 %v2045, %v2109
      %v2174 = vmax.f32 %v2046, %v2110
      %v2175 = vmax.f32 %v2047, %v2111
      %v2176 = vmax.f32 %v2048, %v2112
      %vm2177 = vcmask 519168
      %2178 = vst.msk [vmem:[#allocation2] sm:$0xf] %vm2177, 0
      %vm2179 = vcmask 517120
      %2180 = vst.msk [vmem:[#allocation2 + $0x4] sm:$0x3] %vm2179, 0
      %2181 = vst.msk [vmem:[#allocation2 + $0x8] sm:$0xf] %vm2177, 0
      %2182 = vst.msk [vmem:[#allocation2 + $0xc] sm:$0x3] %vm2179, 0
      %2183 = vst.msk [vmem:[#allocation2 + $0x10] sm:$0xf] %vm2177, 0
      %2184 = vst.msk [vmem:[#allocation2 + $0x14] sm:$0x3] %vm2179, 0
      %2185 = vst.msk [vmem:[#allocation2 + $0x18] sm:$0xf] %vm2177, 0
      %2186 = vst.msk [vmem:[#allocation2 + $0x1c] sm:$0x3] %vm2179, 0
      %2187 = vst.msk [vmem:[#allocation2 + $0x20] sm:$0xf] %vm2177, 0
      %2188 = vst.msk [vmem:[#allocation2 + $0x24] sm:$0x3] %vm2179, 0
      %2189 = vst.msk [vmem:[#allocation2 + $0x28] sm:$0xf] %vm2177, 0
      %2190 = vst.msk [vmem:[#allocation2 + $0x2c] sm:$0x3] %vm2179, 0
      %2191 = vst.msk [vmem:[#allocation2 + $0x30] sm:$0xf] %vm2177, 0
      %2192 = vst.msk [vmem:[#allocation2 + $0x34] sm:$0x3] %vm2179, 0
      %2193 = vst.msk [vmem:[#allocation2 + $0x38] sm:$0xf] %vm2177, 0
      %2194 = vst.msk [vmem:[#allocation2 + $0x3c] sm:$0x3] %vm2179, 0
      %2195 = vst.msk [vmem:[#allocation2 + $0x40] sm:$0xf] %vm2177, 0
      %2196 = vst.msk [vmem:[#allocation2 + $0x44] sm:$0x3] %vm2179, 0
      %2197 = vst.msk [vmem:[#allocation2 + $0x48] sm:$0xf] %vm2177, 0
      %2198 = vst.msk [vmem:[#allocation2 + $0x4c] sm:$0x3] %vm2179, 0
      %2199 = vst.msk [vmem:[#allocation2 + $0x50] sm:$0xf] %vm2177, 0
      %2200 = vst.msk [vmem:[#allocation2 + $0x54] sm:$0x3] %vm2179, 0
      %2201 = vst.msk [vmem:[#allocation2 + $0x58] sm:$0xf] %vm2177, 0
      %2202 = vst.msk [vmem:[#allocation2 + $0x5c] sm:$0x3] %vm2179, 0
      %v2203 = vpack.c.bf16 %v2113, %v2113
      %v2204 = vpack.c.bf16 %v2114, %v2114
      %v2205 = vpack.c.bf16 %v2115, %v2115
      %v2206 = vpack.c.bf16 %v2116, %v2116
      %v2207 = vpack.c.bf16 %v2117, %v2117
      %v2208 = vpack.c.bf16 %v2118, %v2118
      %v2209 = vpack.c.bf16 %v2119, %v2119
      %v2210 = vpack.c.bf16 %v2120, %v2120
      %v2211 = vpack.c.bf16 %v2121, %v2121
      %v2212 = vpack.c.bf16 %v2122, %v2122
      %v2213 = vpack.c.bf16 %v2123, %v2123
      %v2214 = vpack.c.bf16 %v2124, %v2124
      %v2215 = vpack.c.bf16 %v2125, %v2125
      %v2216 = vpack.c.bf16 %v2126, %v2126
      %v2217 = vpack.c.bf16 %v2127, %v2127
      %v2218 = vpack.c.bf16 %v2128, %v2128
      %v2219 = vpack.c.bf16 %v2129, %v2129
      %v2220 = vpack.c.bf16 %v2130, %v2130
      %v2221 = vpack.c.bf16 %v2131, %v2131
      %v2222 = vpack.c.bf16 %v2132, %v2132
      %v2223 = vpack.c.bf16 %v2133, %v2133
      %v2224 = vpack.c.bf16 %v2134, %v2134
      %v2225 = vpack.c.bf16 %v2135, %v2135
      %v2226 = vpack.c.bf16 %v2136, %v2136
      %v2227 = vpack.c.bf16 %v2137, %v2137
      %v2228 = vpack.c.bf16 %v2138, %v2138
      %v2229 = vpack.c.bf16 %v2139, %v2139
      %v2230 = vpack.c.bf16 %v2140, %v2140
      %v2231 = vpack.c.bf16 %v2141, %v2141
      %v2232 = vpack.c.bf16 %v2142, %v2142
      %v2233 = vpack.c.bf16 %v2143, %v2143
      %v2234 = vpack.c.bf16 %v2144, %v2144
      %v2235 = vpack.c.bf16 %v2145, %v2145
      %v2236 = vpack.c.bf16 %v2146, %v2146
      %v2237 = vpack.c.bf16 %v2147, %v2147
      %v2238 = vpack.c.bf16 %v2148, %v2148
      %v2239 = vpack.c.bf16 %v2149, %v2149
      %v2240 = vpack.c.bf16 %v2150, %v2150
      %v2241 = vpack.c.bf16 %v2151, %v2151
      %v2242 = vpack.c.bf16 %v2152, %v2152
      %v2243 = vpack.c.bf16 %v2153, %v2153
      %v2244 = vpack.c.bf16 %v2154, %v2154
      %v2245 = vpack.c.bf16 %v2155, %v2155
      %v2246 = vpack.c.bf16 %v2156, %v2156
      %v2247 = vpack.c.bf16 %v2157, %v2157
      %v2248 = vpack.c.bf16 %v2158, %v2158
      %v2249 = vpack.c.bf16 %v2159, %v2159
      %v2250 = vpack.c.bf16 %v2160, %v2160
      %v2251 = vpack.c.bf16 %v2161, %v2161
      %v2252 = vpack.c.bf16 %v2162, %v2162
      %v2253 = vpack.c.bf16 %v2163, %v2163
      %v2254 = vpack.c.bf16 %v2164, %v2164
      %v2255 = vpack.c.bf16 %v2165, %v2165
      %v2256 = vpack.c.bf16 %v2166, %v2166
      %v2257 = vpack.c.bf16 %v2167, %v2167
      %v2258 = vpack.c.bf16 %v2168, %v2168
      %v2259 = vpack.c.bf16 %v2169, %v2169
      %v2260 = vpack.c.bf16 %v2170, %v2170
      %v2261 = vpack.c.bf16 %v2171, %v2171
      %v2262 = vpack.c.bf16 %v2172, %v2172
      %v2263 = vpack.c.bf16 %v2173, %v2173
      %v2264 = vpack.c.bf16 %v2174, %v2174
      %v2265 = vpack.c.bf16 %v2175, %v2175
      %v2266 = vpack.c.bf16 %v2176, %v2176
      %v2331 = vunpack.c.l.b16 %v2203
      %v2332 = vunpack.c.l.b16 %v2204
      %v2333 = vunpack.c.l.b16 %v2205
      %v2334 = vunpack.c.l.b16 %v2206
      %v2335 = vunpack.c.l.b16 %v2207
      %v2336 = vunpack.c.l.b16 %v2208
      %v2337 = vunpack.c.l.b16 %v2209
      %v2338 = vunpack.c.l.b16 %v2210
      %v2339 = vunpack.c.l.b16 %v2211
      %v2340 = vunpack.c.l.b16 %v2212
      %v2341 = vunpack.c.l.b16 %v2213
      %v2342 = vunpack.c.l.b16 %v2214
      %v2343 = vunpack.c.l.b16 %v2215
      %v2344 = vunpack.c.l.b16 %v2216
      %v2345 = vunpack.c.l.b16 %v2217
      %v2346 = vunpack.c.l.b16 %v2218
      %v2347 = vunpack.c.l.b16 %v2219
      %v2348 = vunpack.c.l.b16 %v2220
      %v2349 = vunpack.c.l.b16 %v2221
      %v2350 = vunpack.c.l.b16 %v2222
      %v2351 = vunpack.c.l.b16 %v2223
      %v2352 = vunpack.c.l.b16 %v2224
      %v2353 = vunpack.c.l.b16 %v2225
      %v2354 = vunpack.c.l.b16 %v2226
      %v2355 = vunpack.c.l.b16 %v2227
      %v2356 = vunpack.c.l.b16 %v2228
      %v2357 = vunpack.c.l.b16 %v2229
      %v2358 = vunpack.c.l.b16 %v2230
      %v2359 = vunpack.c.l.b16 %v2231
      %v2360 = vunpack.c.l.b16 %v2232
      %v2361 = vunpack.c.l.b16 %v2233
      %v2362 = vunpack.c.l.b16 %v2234
      %v2363 = vunpack.c.l.b16 %v2235
      %v2364 = vunpack.c.l.b16 %v2236
      %v2365 = vunpack.c.l.b16 %v2237
      %v2366 = vunpack.c.l.b16 %v2238
      %v2367 = vunpack.c.l.b16 %v2239
      %v2368 = vunpack.c.l.b16 %v2240
      %v2369 = vunpack.c.l.b16 %v2241
      %v2370 = vunpack.c.l.b16 %v2242
      %v2371 = vunpack.c.l.b16 %v2243
      %v2372 = vunpack.c.l.b16 %v2244
      %v2373 = vunpack.c.l.b16 %v2245
      %v2374 = vunpack.c.l.b16 %v2246
      %v2375 = vunpack.c.l.b16 %v2247
      %v2376 = vunpack.c.l.b16 %v2248
      %v2377 = vunpack.c.l.b16 %v2249
      %v2378 = vunpack.c.l.b16 %v2250
      %v2379 = vunpack.c.l.b16 %v2251
      %v2380 = vunpack.c.l.b16 %v2252
      %v2381 = vunpack.c.l.b16 %v2253
      %v2382 = vunpack.c.l.b16 %v2254
      %v2383 = vunpack.c.l.b16 %v2255
      %v2384 = vunpack.c.l.b16 %v2256
      %v2385 = vunpack.c.l.b16 %v2257
      %v2386 = vunpack.c.l.b16 %v2258
      %v2387 = vunpack.c.l.b16 %v2259
      %v2388 = vunpack.c.l.b16 %v2260
      %v2389 = vunpack.c.l.b16 %v2261
      %v2390 = vunpack.c.l.b16 %v2262
      %v2391 = vunpack.c.l.b16 %v2263
      %v2392 = vunpack.c.l.b16 %v2264
      %v2393 = vunpack.c.l.b16 %v2265
      %v2394 = vunpack.c.l.b16 %v2266
      %v2395 = vpack.c.b16 %v2331, %v2331
      %v2396 = vpack.c.b16 %v2332, %v2332
      %v2397 = vpack.c.b16 %v2333, %v2333
      %v2398 = vpack.c.b16 %v2334, %v2334
      %v2399 = vpack.c.b16 %v2335, %v2335
      %v2400 = vpack.c.b16 %v2336, %v2336
      %v2401 = vpack.c.b16 %v2337, %v2337
      %v2402 = vpack.c.b16 %v2338, %v2338
      %v2403 = vpack.c.b16 %v2339, %v2339
      %v2404 = vpack.c.b16 %v2340, %v2340
      %v2405 = vpack.c.b16 %v2341, %v2341
      %v2406 = vpack.c.b16 %v2342, %v2342
      %v2407 = vpack.c.b16 %v2343, %v2343
      %v2408 = vpack.c.b16 %v2344, %v2344
      %v2409 = vpack.c.b16 %v2345, %v2345
      %v2410 = vpack.c.b16 %v2346, %v2346
      %v2411 = vpack.c.b16 %v2347, %v2347
      %v2412 = vpack.c.b16 %v2348, %v2348
      %v2413 = vpack.c.b16 %v2349, %v2349
      %v2414 = vpack.c.b16 %v2350, %v2350
      %v2415 = vpack.c.b16 %v2351, %v2351
      %v2416 = vpack.c.b16 %v2352, %v2352
      %v2417 = vpack.c.b16 %v2353, %v2353
      %v2418 = vpack.c.b16 %v2354, %v2354
      %v2419 = vpack.c.b16 %v2355, %v2355
      %v2420 = vpack.c.b16 %v2356, %v2356
      %v2421 = vpack.c.b16 %v2357, %v2357
      %v2422 = vpack.c.b16 %v2358, %v2358
      %v2423 = vpack.c.b16 %v2359, %v2359
      %v2424 = vpack.c.b16 %v2360, %v2360
      %v2425 = vpack.c.b16 %v2361, %v2361
      %v2426 = vpack.c.b16 %v2362, %v2362
      %v2427 = vpack.c.b16 %v2363, %v2363
      %v2428 = vpack.c.b16 %v2364, %v2364
      %v2429 = vpack.c.b16 %v2365, %v2365
      %v2430 = vpack.c.b16 %v2366, %v2366
      %v2431 = vpack.c.b16 %v2367, %v2367
      %v2432 = vpack.c.b16 %v2368, %v2368
      %v2433 = vpack.c.b16 %v2369, %v2369
      %v2434 = vpack.c.b16 %v2370, %v2370
      %v2435 = vpack.c.b16 %v2371, %v2371
      %v2436 = vpack.c.b16 %v2372, %v2372
      %v2437 = vpack.c.b16 %v2373, %v2373
      %v2438 = vpack.c.b16 %v2374, %v2374
      %v2439 = vpack.c.b16 %v2375, %v2375
      %v2440 = vpack.c.b16 %v2376, %v2376
      %v2441 = vpack.c.b16 %v2377, %v2377
      %v2442 = vpack.c.b16 %v2378, %v2378
      %v2443 = vpack.c.b16 %v2379, %v2379
      %v2444 = vpack.c.b16 %v2380, %v2380
      %v2445 = vpack.c.b16 %v2381, %v2381
      %v2446 = vpack.c.b16 %v2382, %v2382
      %v2447 = vpack.c.b16 %v2383, %v2383
      %v2448 = vpack.c.b16 %v2384, %v2384
      %v2449 = vpack.c.b16 %v2385, %v2385
      %v2450 = vpack.c.b16 %v2386, %v2386
      %v2451 = vpack.c.b16 %v2387, %v2387
      %v2452 = vpack.c.b16 %v2388, %v2388
      %v2453 = vpack.c.b16 %v2389, %v2389
      %v2454 = vpack.c.b16 %v2390, %v2390
      %v2455 = vpack.c.b16 %v2391, %v2391
      %v2456 = vpack.c.b16 %v2392, %v2392
      %v2457 = vpack.c.b16 %v2393, %v2393
      %v2458 = vpack.c.b16 %v2394, %v2394
      %v2459 = vunpack.c.l.b16 %v2395
      %v2460 = vunpack.c.l.b16 %v2396
      %v2461 = vunpack.c.l.b16 %v2397
      %v2462 = vunpack.c.l.b16 %v2398
      %v2463 = vunpack.c.l.b16 %v2399
      %v2464 = vunpack.c.l.b16 %v2400
      %v2465 = vunpack.c.l.b16 %v2401
      %v2466 = vunpack.c.l.b16 %v2402
      %v2467 = vunpack.c.l.b16 %v2403
      %v2468 = vunpack.c.l.b16 %v2404
      %v2469 = vunpack.c.l.b16 %v2405
      %v2470 = vunpack.c.l.b16 %v2406
      %v2471 = vunpack.c.l.b16 %v2407
      %v2472 = vunpack.c.l.b16 %v2408
      %v2473 = vunpack.c.l.b16 %v2409
      %v2474 = vunpack.c.l.b16 %v2410
      %v2475 = vunpack.c.l.b16 %v2411
      %v2476 = vunpack.c.l.b16 %v2412
      %v2477 = vunpack.c.l.b16 %v2413
      %v2478 = vunpack.c.l.b16 %v2414
      %v2479 = vunpack.c.l.b16 %v2415
      %v2480 = vunpack.c.l.b16 %v2416
      %v2481 = vunpack.c.l.b16 %v2417
      %v2482 = vunpack.c.l.b16 %v2418
      %v2483 = vunpack.c.l.b16 %v2419
      %v2484 = vunpack.c.l.b16 %v2420
      %v2485 = vunpack.c.l.b16 %v2421
      %v2486 = vunpack.c.l.b16 %v2422
      %v2487 = vunpack.c.l.b16 %v2423
      %v2488 = vunpack.c.l.b16 %v2424
      %v2489 = vunpack.c.l.b16 %v2425
      %v2490 = vunpack.c.l.b16 %v2426
      %v2491 = vunpack.c.l.b16 %v2427
      %v2492 = vunpack.c.l.b16 %v2428
      %v2493 = vunpack.c.l.b16 %v2429
      %v2494 = vunpack.c.l.b16 %v2430
      %v2495 = vunpack.c.l.b16 %v2431
      %v2496 = vunpack.c.l.b16 %v2432
      %v2497 = vunpack.c.l.b16 %v2433
      %v2498 = vunpack.c.l.b16 %v2434
      %v2499 = vunpack.c.l.b16 %v2435
      %v2500 = vunpack.c.l.b16 %v2436
      %v2501 = vunpack.c.l.b16 %v2437
      %v2502 = vunpack.c.l.b16 %v2438
      %v2503 = vunpack.c.l.b16 %v2439
      %v2504 = vunpack.c.l.b16 %v2440
      %v2505 = vunpack.c.l.b16 %v2441
      %v2506 = vunpack.c.l.b16 %v2442
      %v2507 = vunpack.c.l.b16 %v2443
      %v2508 = vunpack.c.l.b16 %v2444
      %v2509 = vunpack.c.l.b16 %v2445
      %v2510 = vunpack.c.l.b16 %v2446
      %v2511 = vunpack.c.l.b16 %v2447
      %v2512 = vunpack.c.l.b16 %v2448
      %v2513 = vunpack.c.l.b16 %v2449
      %v2514 = vunpack.c.l.b16 %v2450
      %v2515 = vunpack.c.l.b16 %v2451
      %v2516 = vunpack.c.l.b16 %v2452
      %v2517 = vunpack.c.l.b16 %v2453
      %v2518 = vunpack.c.l.b16 %v2454
      %v2519 = vunpack.c.l.b16 %v2455
      %v2520 = vunpack.c.l.b16 %v2456
      %v2521 = vunpack.c.l.b16 %v2457
      %v2522 = vunpack.c.l.b16 %v2458
      %v2523 = vrot.slane %v2459, 6
      %v2524 = vrot.slane %v2460, 5
      %vm2525 = vcmask 1043459
      %v2526 = vsel %vm2525, %v2524, %v2523
      %v2527 = vrot.slane %v2461, 4
      %vm2528 = vcmask 1044484
      %v2529 = vsel %vm2528, %v2527, %v2526
      %v2530 = vrot.slane %v2462, 3
      %vm2531 = vcmask 1045509
      %v2532 = vsel %vm2531, %v2530, %v2529
      %v2533 = vrot.slane %v2463, 2
      %vm2534 = vcmask 1046534
      %v2535 = vsel %vm2534, %v2533, %v2532
      %v2536 = vrot.slane %v2464, 1
      %vm2537 = vcmask 1047559
      %v2538 = vsel %vm2537, %v2536, %v2535
      %v2539 = vrot.slane %v2466, 7
      %vm2540 = vcmask 1041409
      %v2541 = vsel %vm2540, %v2539, %v2465
      %v2542 = vrot.slane %v2467, 6
      %v2543 = vrot.slane %v2468, 5
      %v2544 = vsel %vm2525, %v2543, %v2542
      %v2545 = vrot.slane %v2469, 4
      %v2546 = vsel %vm2528, %v2545, %v2544
      %v2547 = vrot.slane %v2470, 3
      %v2548 = vsel %vm2531, %v2547, %v2546
      %v2549 = vrot.slane %v2471, 2
      %v2550 = vsel %vm2534, %v2549, %v2548
      %v2551 = vrot.slane %v2472, 1
      %v2552 = vsel %vm2537, %v2551, %v2550
      %v2553 = vrot.slane %v2474, 7
      %v2554 = vsel %vm2540, %v2553, %v2473
      %v2555 = vrot.slane %v2475, 6
      %v2556 = vrot.slane %v2476, 5
      %v2557 = vsel %vm2525, %v2556, %v2555
      %v2558 = vrot.slane %v2477, 4
      %v2559 = vsel %vm2528, %v2558, %v2557
      %v2560 = vrot.slane %v2478, 3
      %v2561 = vsel %vm2531, %v2560, %v2559
      %v2562 = vrot.slane %v2479, 2
      %v2563 = vsel %vm2534, %v2562, %v2561
      %v2564 = vrot.slane %v2480, 1
      %v2565 = vsel %vm2537, %v2564, %v2563
      %v2566 = vrot.slane %v2482, 7
      %v2567 = vsel %vm2540, %v2566, %v2481
      %v2568 = vrot.slane %v2483, 6
      %v2569 = vrot.slane %v2484, 5
      %v2570 = vsel %vm2525, %v2569, %v2568
      %v2571 = vrot.slane %v2485, 4
      %v2572 = vsel %vm2528, %v2571, %v2570
      %v2573 = vrot.slane %v2486, 3
      %v2574 = vsel %vm2531, %v2573, %v2572
      %v2575 = vrot.slane %v2487, 2
      %v2576 = vsel %vm2534, %v2575, %v2574
      %v2577 = vrot.slane %v2488, 1
      %v2578 = vsel %vm2537, %v2577, %v2576
      %v2579 = vrot.slane %v2490, 7
      %v2580 = vsel %vm2540, %v2579, %v2489
      %v2581 = vrot.slane %v2491, 6
      %v2582 = vrot.slane %v2492, 5
      %v2583 = vsel %vm2525, %v2582, %v2581
      %v2584 = vrot.slane %v2493, 4
      %v2585 = vsel %vm2528, %v2584, %v2583
      %v2586 = vrot.slane %v2494, 3
      %v2587 = vsel %vm2531, %v2586, %v2585
      %v2588 = vrot.slane %v2495, 2
      %v2589 = vsel %vm2534, %v2588, %v2587
      %v2590 = vrot.slane %v2496, 1
      %v2591 = vsel %vm2537, %v2590, %v2589
      %v2592 = vrot.slane %v2498, 7
      %v2593 = vsel %vm2540, %v2592, %v2497
      %v2594 = vrot.slane %v2499, 6
      %v2595 = vrot.slane %v2500, 5
      %v2596 = vsel %vm2525, %v2595, %v2594
      %v2597 = vrot.slane %v2501, 4
      %v2598 = vsel %vm2528, %v2597, %v2596
      %v2599 = vrot.slane %v2502, 3
      %v2600 = vsel %vm2531, %v2599, %v2598
      %v2601 = vrot.slane %v2503, 2
      %v2602 = vsel %vm2534, %v2601, %v2600
      %v2603 = vrot.slane %v2504, 1
      %v2604 = vsel %vm2537, %v2603, %v2602
      %v2605 = vrot.slane %v2506, 7
      %v2606 = vsel %vm2540, %v2605, %v2505
      %v2607 = vrot.slane %v2507, 6
      %v2608 = vrot.slane %v2508, 5
      %v2609 = vsel %vm2525, %v2608, %v2607
      %v2610 = vrot.slane %v2509, 4
      %v2611 = vsel %vm2528, %v2610, %v2609
      %v2612 = vrot.slane %v2510, 3
      %v2613 = vsel %vm2531, %v2612, %v2611
      %v2614 = vrot.slane %v2511, 2
      %v2615 = vsel %vm2534, %v2614, %v2613
      %v2616 = vrot.slane %v2512, 1
      %v2617 = vsel %vm2537, %v2616, %v2615
      %v2618 = vrot.slane %v2514, 7
      %v2619 = vsel %vm2540, %v2618, %v2513
      %v2620 = vrot.slane %v2515, 6
      %v2621 = vrot.slane %v2516, 5
      %v2622 = vsel %vm2525, %v2621, %v2620
      %v2623 = vrot.slane %v2517, 4
      %v2624 = vsel %vm2528, %v2623, %v2622
      %v2625 = vrot.slane %v2518, 3
      %v2626 = vsel %vm2531, %v2625, %v2624
      %v2627 = vrot.slane %v2519, 2
      %v2628 = vsel %vm2534, %v2627, %v2626
      %v2629 = vrot.slane %v2520, 1
      %v2630 = vsel %vm2537, %v2629, %v2628
      %v2631 = vrot.slane %v2522, 7
      %v2632 = vsel %vm2540, %v2631, %v2521
      %v2633 = vpack.c.b16 %v2538, %v2538
      %v2634 = vpack.c.b16 %v2541, %v2541
      %v2635 = vpack.c.b16 %v2552, %v2552
      %v2636 = vpack.c.b16 %v2554, %v2554
      %v2637 = vpack.c.b16 %v2565, %v2565
      %v2638 = vpack.c.b16 %v2567, %v2567
      %v2639 = vpack.c.b16 %v2578, %v2578
      %v2640 = vpack.c.b16 %v2580, %v2580
      %v2641 = vpack.c.b16 %v2591, %v2591
      %v2642 = vpack.c.b16 %v2593, %v2593
      %v2643 = vpack.c.b16 %v2604, %v2604
      %v2644 = vpack.c.b16 %v2606, %v2606
      %v2645 = vpack.c.b16 %v2617, %v2617
      %v2646 = vpack.c.b16 %v2619, %v2619
      %v2647 = vpack.c.b16 %v2630, %v2630
      %v2648 = vpack.c.b16 %v2632, %v2632
      %s2665 = scalar_lea.vmem [#allocation2], 16
      %vm2666 = vcmask 519169
      %2667 = vst.msk [vmem:[%s2665] sm:$0xe] %vm2666, %v2633
      %vm2668 = vcmask 516096
      %2669 = vst.msk [vmem:[%s2665 + $0x4] sm:$0x1] %vm2668, %v2634
      %2670 = vst.msk [vmem:[%s2665 + $0x8] sm:$0xe] %vm2666, %v2635
      %2671 = vst.msk [vmem:[%s2665 + $0xc] sm:$0x1] %vm2668, %v2636
      %2672 = vst.msk [vmem:[%s2665 + $0x10] sm:$0xe] %vm2666, %v2637
      %2673 = vst.msk [vmem:[%s2665 + $0x14] sm:$0x1] %vm2668, %v2638
      %2674 = vst.msk [vmem:[%s2665 + $0x18] sm:$0xe] %vm2666, %v2639
      %2675 = vst.msk [vmem:[%s2665 + $0x1c] sm:$0x1] %vm2668, %v2640
      %2676 = vst.msk [vmem:[%s2665 + $0x20] sm:$0xe] %vm2666, %v2641
      %2677 = vst.msk [vmem:[%s2665 + $0x24] sm:$0x1] %vm2668, %v2642
      %2678 = vst.msk [vmem:[%s2665 + $0x28] sm:$0xe] %vm2666, %v2643
      %2679 = vst.msk [vmem:[%s2665 + $0x2c] sm:$0x1] %vm2668, %v2644
      %2680 = vst.msk [vmem:[%s2665 + $0x30] sm:$0xe] %vm2666, %v2645
      %2681 = vst.msk [vmem:[%s2665 + $0x34] sm:$0x1] %vm2668, %v2646
      %2682 = vst.msk [vmem:[%s2665 + $0x38] sm:$0xe] %vm2666, %v2647
      %2683 = vst.msk [vmem:[%s2665 + $0x3c] sm:$0x1] %vm2668, %v2648
      %v2684 = vld [vmem:[#allocation2] sm:$0xf]
      %v2685 = vld [vmem:[#allocation2 + $0x8] sm:$0xf]
      %v2686 = vld [vmem:[#allocation2 + $0x10] sm:$0xf]
      %v2687 = vld [vmem:[#allocation2 + $0x18] sm:$0xf]
      %v2688 = vld [vmem:[#allocation2 + $0x20] sm:$0xf]
      %v2689 = vld [vmem:[#allocation2 + $0x28] sm:$0xf]
      %v2690 = vld [vmem:[#allocation2 + $0x30] sm:$0xf]
      %v2691 = vld [vmem:[#allocation2 + $0x38] sm:$0xf]
      %v2700 = vunpack.c.l.b16 %v2684
      %v2701 = vunpack.c.l.b16 %v2685
      %v2702 = vunpack.c.l.b16 %v2686
      %v2703 = vunpack.c.l.b16 %v2687
      %v2704 = vunpack.c.l.b16 %v2688
      %v2705 = vunpack.c.l.b16 %v2689
      %v2706 = vunpack.c.l.b16 %v2690
      %v2707 = vunpack.c.l.b16 %v2691
      %v2708 = vpack.c.b16 %v2701, %v2700
      %v2709 = vpack.c.b16 %v2703, %v2702
      %v2710 = vpack.c.b16 %v2705, %v2704
      %v2711 = vpack.c.b16 %v2707, %v2706
      %vm2716 = vcmask 523264
      %2717 = vst.msk [vmem:[#allocation3] sm:$0xff] %vm2716, %v2708
      %2718 = vst.msk [vmem:[#allocation3 + $0x68] sm:$0xff] %vm2716, %v2709
      %2719 = vst.msk [vmem:[#allocation3 + $0xd0] sm:$0xff] %vm2716, %v2710
      %2720 = vst.msk [vmem:[#allocation3 + $0x138] sm:$0xff] %vm2716, %v2711
      %v2721 = vld [vmem:[#allocation2] sm:$0xf]
      %v2722 = vld [vmem:[#allocation2 + $0x4] sm:$0x1]
      %v2723 = vld [vmem:[#allocation2 + $0x8] sm:$0xf]
      %v2724 = vld [vmem:[#allocation2 + $0xc] sm:$0x1]
      %v2725 = vld [vmem:[#allocation2 + $0x10] sm:$0xf]
      %v2726 = vld [vmem:[#allocation2 + $0x14] sm:$0x1]
      %v2727 = vld [vmem:[#allocation2 + $0x18] sm:$0xf]
      %v2728 = vld [vmem:[#allocation2 + $0x1c] sm:$0x1]
      %v2729 = vld [vmem:[#allocation2 + $0x20] sm:$0xf]
      %v2730 = vld [vmem:[#allocation2 + $0x24] sm:$0x1]
      %v2731 = vld [vmem:[#allocation2 + $0x28] sm:$0xf]
      %v2732 = vld [vmem:[#allocation2 + $0x2c] sm:$0x1]
      %v2733 = vld [vmem:[#allocation2 + $0x30] sm:$0xf]
      %v2734 = vld [vmem:[#allocation2 + $0x34] sm:$0x1]
      %v2735 = vld [vmem:[#allocation2 + $0x38] sm:$0xf]
      %v2736 = vld [vmem:[#allocation2 + $0x3c] sm:$0x1]
      %vm2737 = vsmask.f32 3328
      %vm2738 = vsmask.f32 7440
      %vm2739 = vmor %vm2737, %vm2738
      %v2741 = vshrl.u32 %v2721, 16
      %v2743 = vrot.slane %v2741, 4
      %v2744 = vshll.u32 %v2721, 16
      %v2746 = vrot.slane %v2744, 5
      %v2747 = vor.u32 %v2743, %v2746
      %v2748 = vrot.slane %v2747, 4
      %v2750 = vshll.u32 %v2722, 16
      %v2752 = vrot.slane %v2750, 5
      %v2753 = vsel %vm2739, %v2748, %v2752
      %v2755 = vshrl.u32 %v2723, 16
      %v2757 = vrot.slane %v2755, 4
      %v2758 = vshll.u32 %v2723, 16
      %v2760 = vrot.slane %v2758, 5
      %v2761 = vor.u32 %v2757, %v2760
      %v2762 = vrot.slane %v2761, 4
      %v2764 = vshll.u32 %v2724, 16
      %v2766 = vrot.slane %v2764, 5
      %v2767 = vsel %vm2739, %v2762, %v2766
      %v2769 = vshrl.u32 %v2725, 16
      %v2771 = vrot.slane %v2769, 4
      %v2772 = vshll.u32 %v2725, 16
      %v2774 = vrot.slane %v2772, 5
      %v2775 = vor.u32 %v2771, %v2774
      %v2776 = vrot.slane %v2775, 4
      %v2778 = vshll.u32 %v2726, 16
      %v2780 = vrot.slane %v2778, 5
      %v2781 = vsel %vm2739, %v2776, %v2780
      %v2783 = vshrl.u32 %v2727, 16
      %v2785 = vrot.slane %v2783, 4
      %v2786 = vshll.u32 %v2727, 16
      %v2788 = vrot.slane %v2786, 5
      %v2789 = vor.u32 %v2785, %v2788
      %v2790 = vrot.slane %v2789, 4
      %v2792 = vshll.u32 %v2728, 16
      %v2794 = vrot.slane %v2792, 5
      %v2795 = vsel %vm2739, %v2790, %v2794
      %v2797 = vshrl.u32 %v2729, 16
      %v2799 = vrot.slane %v2797, 4
      %v2800 = vshll.u32 %v2729, 16
      %v2802 = vrot.slane %v2800, 5
      %v2803 = vor.u32 %v2799, %v2802
      %v2804 = vrot.slane %v2803, 4
      %v2806 = vshll.u32 %v2730, 16
      %v2808 = vrot.slane %v2806, 5
      %v2809 = vsel %vm2739, %v2804, %v2808
      %v2811 = vshrl.u32 %v2731, 16
      %v2813 = vrot.slane %v2811, 4
      %v2814 = vshll.u32 %v2731, 16
      %v2816 = vrot.slane %v2814, 5
      %v2817 = vor.u32 %v2813, %v2816
      %v2818 = vrot.slane %v2817, 4
      %v2820 = vshll.u32 %v2732, 16
      %v2822 = vrot.slane %v2820, 5
      %v2823 = vsel %vm2739, %v2818, %v2822
      %v2825 = vshrl.u32 %v2733, 16
      %v2827 = vrot.slane %v2825, 4
      %v2828 = vshll.u32 %v2733, 16
      %v2830 = vrot.slane %v2828, 5
      %v2831 = vor.u32 %v2827, %v2830
      %v2832 = vrot.slane %v2831, 4
      %v2834 = vshll.u32 %v2734, 16
      %v2836 = vrot.slane %v2834, 5
      %v2837 = vsel %vm2739, %v2832, %v2836
      %v2839 = vshrl.u32 %v2735, 16
      %v2841 = vrot.slane %v2839, 4
      %v2842 = vshll.u32 %v2735, 16
      %v2844 = vrot.slane %v2842, 5
      %v2845 = vor.u32 %v2841, %v2844
      %v2846 = vrot.slane %v2845, 4
      %v2848 = vshll.u32 %v2736, 16
      %v2850 = vrot.slane %v2848, 5
      %v2851 = vsel %vm2739, %v2846, %v2850
      %v2852 = vunpack.c.l.b16 %v2753
      %v2853 = vunpack.c.l.b16 %v2767
      %v2854 = vunpack.c.l.b16 %v2781
      %v2855 = vunpack.c.l.b16 %v2795
      %v2856 = vunpack.c.l.b16 %v2809
      %v2857 = vunpack.c.l.b16 %v2823
      %v2858 = vunpack.c.l.b16 %v2837
      %v2859 = vunpack.c.l.b16 %v2851
      %v2860 = vpack.c.b16 %v2853, %v2852
      %v2861 = vpack.c.b16 %v2855, %v2854
      %v2862 = vpack.c.b16 %v2857, %v2856
      %v2863 = vpack.c.b16 %v2859, %v2858
      %2864 = vrot.lane.b32.xlu0 %v2860, 64
      %v2865 = vpop.permute.xlu0 %2864
      %2866 = vrot.lane.b32.xlu0 %v2861, 64
      %v2867 = vpop.permute.xlu0 %2866
      %2868 = vrot.lane.b32.xlu0 %v2862, 64
      %v2869 = vpop.permute.xlu0 %2868
      %2870 = vrot.lane.b32.xlu0 %v2863, 64
      %v2871 = vpop.permute.xlu0 %2870
      %vm2876 = vcmask 1048064
      %2877 = vst.msk [vmem:[#allocation3] sm:$0xff] %vm2876, %v2865
      %2878 = vst.msk [vmem:[#allocation3 + $0x68] sm:$0xff] %vm2876, %v2867
      %2879 = vst.msk [vmem:[#allocation3 + $0xd0] sm:$0xff] %vm2876, %v2869
      %2880 = vst.msk [vmem:[#allocation3 + $0x138] sm:$0xff] %vm2876, %v2871
      %v2881 = vld [vmem:[#allocation2] sm:$0xe]
      %v2882 = vld [vmem:[#allocation2 + $0x4] sm:$0x1]
      %v2883 = vld [vmem:[#allocation2 + $0x8] sm:$0xe]
      %v2884 = vld [vmem:[#allocation2 + $0xc] sm:$0x1]
      %v2885 = vld [vmem:[#allocation2 + $0x10] sm:$0xe]
      %v2886 = vld [vmem:[#allocation2 + $0x14] sm:$0x1]
      %v2887 = vld [vmem:[#allocation2 + $0x18] sm:$0xe]
      %v2888 = vld [vmem:[#allocation2 + $0x1c] sm:$0x1]
      %v2889 = vld [vmem:[#allocation2 + $0x20] sm:$0xe]
      %v2890 = vld [vmem:[#allocation2 + $0x24] sm:$0x1]
      %v2891 = vld [vmem:[#allocation2 + $0x28] sm:$0xe]
      %v2892 = vld [vmem:[#allocation2 + $0x2c] sm:$0x1]
      %v2893 = vld [vmem:[#allocation2 + $0x30] sm:$0xe]
      %v2894 = vld [vmem:[#allocation2 + $0x34] sm:$0x1]
      %v2895 = vld [vmem:[#allocation2 + $0x38] sm:$0xe]
      %v2896 = vld [vmem:[#allocation2 + $0x3c] sm:$0x1]
      %vm2913 = vcmask 1042432
      %vm2914 = vcmask 1046532
      %vm2915 = vmor %vm2913, %vm2914
      %v2916 = vrot.slane %v2881, 5
      %v2917 = vrot.slane %v2916, 4
      %v2918 = vrot.slane %v2882, 5
      %v2919 = vsel %vm2915, %v2917, %v2918
      %v2920 = vrot.slane %v2883, 5
      %v2921 = vrot.slane %v2920, 4
      %v2922 = vrot.slane %v2884, 5
      %v2923 = vsel %vm2915, %v2921, %v2922
      %v2924 = vrot.slane %v2885, 5
      %v2925 = vrot.slane %v2924, 4
      %v2926 = vrot.slane %v2886, 5
      %v2927 = vsel %vm2915, %v2925, %v2926
      %v2928 = vrot.slane %v2887, 5
      %v2929 = vrot.slane %v2928, 4
      %v2930 = vrot.slane %v2888, 5
      %v2931 = vsel %vm2915, %v2929, %v2930
      %v2932 = vrot.slane %v2889, 5
      %v2933 = vrot.slane %v2932, 4
      %v2934 = vrot.slane %v2890, 5
      %v2935 = vsel %vm2915, %v2933, %v2934
      %v2936 = vrot.slane %v2891, 5
      %v2937 = vrot.slane %v2936, 4
      %v2938 = vrot.slane %v2892, 5
      %v2939 = vsel %vm2915, %v2937, %v2938
      %v2940 = vrot.slane %v2893, 5
      %v2941 = vrot.slane %v2940, 4
      %v2942 = vrot.slane %v2894, 5
      %v2943 = vsel %vm2915, %v2941, %v2942
      %v2944 = vrot.slane %v2895, 5
      %v2945 = vrot.slane %v2944, 4
      %v2946 = vrot.slane %v2896, 5
      %v2947 = vsel %vm2915, %v2945, %v2946
      %v2948 = vunpack.c.l.b16 %v2919
      %v2949 = vunpack.c.l.b16 %v2923
      %v2950 = vunpack.c.l.b16 %v2927
      %v2951 = vunpack.c.l.b16 %v2931
      %v2952 = vunpack.c.l.b16 %v2935
      %v2953 = vunpack.c.l.b16 %v2939
      %v2954 = vunpack.c.l.b16 %v2943
      %v2955 = vunpack.c.l.b16 %v2947
      %v2956 = vpack.c.b16 %v2949, %v2948
      %v2957 = vpack.c.b16 %v2951, %v2950
      %v2958 = vpack.c.b16 %v2953, %v2952
      %v2959 = vpack.c.b16 %v2955, %v2954
      %2964 = vst.msk [vmem:[#allocation3 + $0x8] sm:$0xff] %vm2716, %v2956
      %2965 = vst.msk [vmem:[#allocation3 + $0x70] sm:$0xff] %vm2716, %v2957
      %2966 = vst.msk [vmem:[#allocation3 + $0xd8] sm:$0xff] %vm2716, %v2958
      %2967 = vst.msk [vmem:[#allocation3 + $0x140] sm:$0xff] %vm2716, %v2959
      %v2968 = vld [vmem:[#allocation2] sm:$0xe]
      %v2969 = vld [vmem:[#allocation2 + $0x4] sm:$0x3]
      %v2970 = vld [vmem:[#allocation2 + $0x8] sm:$0xe]
      %v2971 = vld [vmem:[#allocation2 + $0xc] sm:$0x3]
      %v2972 = vld [vmem:[#allocation2 + $0x10] sm:$0xe]
      %v2973 = vld [vmem:[#allocation2 + $0x14] sm:$0x3]
      %v2974 = vld [vmem:[#allocation2 + $0x18] sm:$0xe]
      %v2975 = vld [vmem:[#allocation2 + $0x1c] sm:$0x3]
      %v2976 = vld [vmem:[#allocation2 + $0x20] sm:$0xe]
      %v2977 = vld [vmem:[#allocation2 + $0x24] sm:$0x3]
      %v2978 = vld [vmem:[#allocation2 + $0x28] sm:$0xe]
      %v2979 = vld [vmem:[#allocation2 + $0x2c] sm:$0x3]
      %v2980 = vld [vmem:[#allocation2 + $0x30] sm:$0xe]
      %v2981 = vld [vmem:[#allocation2 + $0x34] sm:$0x3]
      %v2982 = vld [vmem:[#allocation2 + $0x38] sm:$0xe]
      %v2983 = vld [vmem:[#allocation2 + $0x3c] sm:$0x3]
      %vm2984 = vsmask.f32 2304
      %vm2985 = vsmask.f32 6416
      %vm2986 = vmor %vm2984, %vm2985
      %v2988 = vshrl.u32 %v2968, 16
      %v2990 = vrot.slane %v2988, 5
      %v2991 = vshll.u32 %v2968, 16
      %v2993 = vrot.slane %v2991, 6
      %v2994 = vor.u32 %v2990, %v2993
      %v2995 = vrot.slane %v2994, 4
      %v2997 = vshrl.u32 %v2969, 16
      %v2999 = vrot.slane %v2997, 5
      %v3000 = vshll.u32 %v2969, 16
      %v3002 = vrot.slane %v3000, 6
      %v3003 = vor.u32 %v2999, %v3002
      %v3004 = vsel %vm2986, %v2995, %v3003
      %v3006 = vshrl.u32 %v2970, 16
      %v3008 = vrot.slane %v3006, 5
      %v3009 = vshll.u32 %v2970, 16
      %v3011 = vrot.slane %v3009, 6
      %v3012 = vor.u32 %v3008, %v3011
      %v3013 = vrot.slane %v3012, 4
      %v3015 = vshrl.u32 %v2971, 16
      %v3017 = vrot.slane %v3015, 5
      %v3018 = vshll.u32 %v2971, 16
      %v3020 = vrot.slane %v3018, 6
      %v3021 = vor.u32 %v3017, %v3020
      %v3022 = vsel %vm2986, %v3013, %v3021
      %v3024 = vshrl.u32 %v2972, 16
      %v3026 = vrot.slane %v3024, 5
      %v3027 = vshll.u32 %v2972, 16
      %v3029 = vrot.slane %v3027, 6
      %v3030 = vor.u32 %v3026, %v3029
      %v3031 = vrot.slane %v3030, 4
      %v3033 = vshrl.u32 %v2973, 16
      %v3035 = vrot.slane %v3033, 5
      %v3036 = vshll.u32 %v2973, 16
      %v3038 = vrot.slane %v3036, 6
      %v3039 = vor.u32 %v3035, %v3038
      %v3040 = vsel %vm2986, %v3031, %v3039
      %v3042 = vshrl.u32 %v2974, 16
      %v3044 = vrot.slane %v3042, 5
      %v3045 = vshll.u32 %v2974, 16
      %v3047 = vrot.slane %v3045, 6
      %v3048 = vor.u32 %v3044, %v3047
      %v3049 = vrot.slane %v3048, 4
      %v3051 = vshrl.u32 %v2975, 16
      %v3053 = vrot.slane %v3051, 5
      %v3054 = vshll.u32 %v2975, 16
      %v3056 = vrot.slane %v3054, 6
      %v3057 = vor.u32 %v3053, %v3056
      %v3058 = vsel %vm2986, %v3049, %v3057
      %v3060 = vshrl.u32 %v2976, 16
      %v3062 = vrot.slane %v3060, 5
      %v3063 = vshll.u32 %v2976, 16
      %v3065 = vrot.slane %v3063, 6
      %v3066 = vor.u32 %v3062, %v3065
      %v3067 = vrot.slane %v3066, 4
      %v3069 = vshrl.u32 %v2977, 16
      %v3071 = vrot.slane %v3069, 5
      %v3072 = vshll.u32 %v2977, 16
      %v3074 = vrot.slane %v3072, 6
      %v3075 = vor.u32 %v3071, %v3074
      %v3076 = vsel %vm2986, %v3067, %v3075
      %v3078 = vshrl.u32 %v2978, 16
      %v3080 = vrot.slane %v3078, 5
      %v3081 = vshll.u32 %v2978, 16
      %v3083 = vrot.slane %v3081, 6
      %v3084 = vor.u32 %v3080, %v3083
      %v3085 = vrot.slane %v3084, 4
      %v3087 = vshrl.u32 %v2979, 16
      %v3089 = vrot.slane %v3087, 5
      %v3090 = vshll.u32 %v2979, 16
      %v3092 = vrot.slane %v3090, 6
      %v3093 = vor.u32 %v3089, %v3092
      %v3094 = vsel %vm2986, %v3085, %v3093
      %v3096 = vshrl.u32 %v2980, 16
      %v3098 = vrot.slane %v3096, 5
      %v3099 = vshll.u32 %v2980, 16
      %v3101 = vrot.slane %v3099, 6
      %v3102 = vor.u32 %v3098, %v3101
      %v3103 = vrot.slane %v3102, 4
      %v3105 = vshrl.u32 %v2981, 16
      %v3107 = vrot.slane %v3105, 5
      %v3108 = vshll.u32 %v2981, 16
      %v3110 = vrot.slane %v3108, 6
      %v3111 = vor.u32 %v3107, %v3110
      %v3112 = vsel %vm2986, %v3103, %v3111
      %v3114 = vshrl.u32 %v2982, 16
      %v3116 = vrot.slane %v3114, 5
      %v3117 = vshll.u32 %v2982, 16
      %v3119 = vrot.slane %v3117, 6
      %v3120 = vor.u32 %v3116, %v3119
      %v3121 = vrot.slane %v3120, 4
      %v3123 = vshrl.u32 %v2983, 16
      %v3125 = vrot.slane %v3123, 5
      %v3126 = vshll.u32 %v2983, 16
      %v3128 = vrot.slane %v3126, 6
      %v3129 = vor.u32 %v3125, %v3128
      %v3130 = vsel %vm2986, %v3121, %v3129
      %v3131 = vunpack.c.l.b16 %v3004
      %v3132 = vunpack.c.l.b16 %v3022
      %v3133 = vunpack.c.l.b16 %v3040
      %v3134 = vunpack.c.l.b16 %v3058
      %v3135 = vunpack.c.l.b16 %v3076
      %v3136 = vunpack.c.l.b16 %v3094
      %v3137 = vunpack.c.l.b16 %v3112
      %v3138 = vunpack.c.l.b16 %v3130
      %v3139 = vpack.c.b16 %v3132, %v3131
      %v3140 = vpack.c.b16 %v3134, %v3133
      %v3141 = vpack.c.b16 %v3136, %v3135
      %v3142 = vpack.c.b16 %v3138, %v3137
      %3143 = vrot.lane.b32.xlu0 %v3139, 64
      %v3144 = vpop.permute.xlu0 %3143
      %3145 = vrot.lane.b32.xlu0 %v3140, 64
      %v3146 = vpop.permute.xlu0 %3145
      %3147 = vrot.lane.b32.xlu0 %v3141, 64
      %v3148 = vpop.permute.xlu0 %3147
      %3149 = vrot.lane.b32.xlu0 %v3142, 64
      %v3150 = vpop.permute.xlu0 %3149
      %3155 = vst.msk [vmem:[#allocation3 + $0x8] sm:$0xff] %vm2876, %v3144
      %3156 = vst.msk [vmem:[#allocation3 + $0x70] sm:$0xff] %vm2876, %v3146
      %3157 = vst.msk [vmem:[#allocation3 + $0xd8] sm:$0xff] %vm2876, %v3148
      %3158 = vst.msk [vmem:[#allocation3 + $0x140] sm:$0xff] %vm2876, %v3150
      %v3159 = vld [vmem:[#allocation2] sm:$0xc]
      %v3160 = vld [vmem:[#allocation2 + $0x4] sm:$0x3]
      %v3161 = vld [vmem:[#allocation2 + $0x8] sm:$0xc]
      %v3162 = vld [vmem:[#allocation2 + $0xc] sm:$0x3]
      %v3163 = vld [vmem:[#allocation2 + $0x10] sm:$0xc]
      %v3164 = vld [vmem:[#allocation2 + $0x14] sm:$0x3]
      %v3165 = vld [vmem:[#allocation2 + $0x18] sm:$0xc]
      %v3166 = vld [vmem:[#allocation2 + $0x1c] sm:$0x3]
      %v3167 = vld [vmem:[#allocation2 + $0x20] sm:$0xc]
      %v3168 = vld [vmem:[#allocation2 + $0x24] sm:$0x3]
      %v3169 = vld [vmem:[#allocation2 + $0x28] sm:$0xc]
      %v3170 = vld [vmem:[#allocation2 + $0x2c] sm:$0x3]
      %v3171 = vld [vmem:[#allocation2 + $0x30] sm:$0xc]
      %v3172 = vld [vmem:[#allocation2 + $0x34] sm:$0x3]
      %v3173 = vld [vmem:[#allocation2 + $0x38] sm:$0xc]
      %v3174 = vld [vmem:[#allocation2 + $0x3c] sm:$0x3]
      %vm3191 = vcmask 1041408
      %vm3192 = vcmask 1045508
      %vm3193 = vmor %vm3191, %vm3192
      %v3194 = vrot.slane %v3159, 6
      %v3195 = vrot.slane %v3194, 4
      %v3196 = vrot.slane %v3160, 6
      %v3197 = vsel %vm3193, %v3195, %v3196
      %v3198 = vrot.slane %v3161, 6
      %v3199 = vrot.slane %v3198, 4
      %v3200 = vrot.slane %v3162, 6
      %v3201 = vsel %vm3193, %v3199, %v3200
      %v3202 = vrot.slane %v3163, 6
      %v3203 = vrot.slane %v3202, 4
      %v3204 = vrot.slane %v3164, 6
      %v3205 = vsel %vm3193, %v3203, %v3204
      %v3206 = vrot.slane %v3165, 6
      %v3207 = vrot.slane %v3206, 4
      %v3208 = vrot.slane %v3166, 6
      %v3209 = vsel %vm3193, %v3207, %v3208
      %v3210 = vrot.slane %v3167, 6
      %v3211 = vrot.slane %v3210, 4
      %v3212 = vrot.slane %v3168, 6
      %v3213 = vsel %vm3193, %v3211, %v3212
      %v3214 = vrot.slane %v3169, 6
      %v3215 = vrot.slane %v3214, 4
      %v3216 = vrot.slane %v3170, 6
      %v3217 = vsel %vm3193, %v3215, %v3216
      %v3218 = vrot.slane %v3171, 6
      %v3219 = vrot.slane %v3218, 4
      %v3220 = vrot.slane %v3172, 6
      %v3221 = vsel %vm3193, %v3219, %v3220
      %v3222 = vrot.slane %v3173, 6
      %v3223 = vrot.slane %v3222, 4
      %v3224 = vrot.slane %v3174, 6
      %v3225 = vsel %vm3193, %v3223, %v3224
      %v3226 = vunpack.c.l.b16 %v3197
      %v3227 = vunpack.c.l.b16 %v3201
      %v3228 = vunpack.c.l.b16 %v3205
      %v3229 = vunpack.c.l.b16 %v3209
      %v3230 = vunpack.c.l.b16 %v3213
      %v3231 = vunpack.c.l.b16 %v3217
      %v3232 = vunpack.c.l.b16 %v3221
      %v3233 = vunpack.c.l.b16 %v3225
      %v3234 = vpack.c.b16 %v3227, %v3226
      %v3235 = vpack.c.b16 %v3229, %v3228
      %v3236 = vpack.c.b16 %v3231, %v3230
      %v3237 = vpack.c.b16 %v3233, %v3232
      %3242 = vst.msk [vmem:[#allocation3 + $0x10] sm:$0xff] %vm2716, %v3234
      %3243 = vst.msk [vmem:[#allocation3 + $0x78] sm:$0xff] %vm2716, %v3235
      %3244 = vst.msk [vmem:[#allocation3 + $0xe0] sm:$0xff] %vm2716, %v3236
      %3245 = vst.msk [vmem:[#allocation3 + $0x148] sm:$0xff] %vm2716, %v3237
      %s3246 = scalar_lea.vmem [#allocation2], 8
      %v3247 = vld [vmem:[%s3246] sm:$0xf]
      %v3248 = vld [vmem:[%s3246 + $0x8] sm:$0xf]
      %v3249 = vld [vmem:[%s3246 + $0x10] sm:$0xf]
      %v3250 = vld [vmem:[%s3246 + $0x18] sm:$0xf]
      %v3251 = vld [vmem:[%s3246 + $0x20] sm:$0xf]
      %v3252 = vld [vmem:[%s3246 + $0x28] sm:$0xf]
      %v3253 = vld [vmem:[%s3246 + $0x30] sm:$0xf]
      %v3254 = vld [vmem:[%s3246 + $0x38] sm:$0xf]
      %v3263 = vunpack.c.l.b16 %v3247
      %v3264 = vunpack.c.l.b16 %v3248
      %v3265 = vunpack.c.l.b16 %v3249
      %v3266 = vunpack.c.l.b16 %v3250
      %v3267 = vunpack.c.l.b16 %v3251
      %v3268 = vunpack.c.l.b16 %v3252
      %v3269 = vunpack.c.l.b16 %v3253
      %v3270 = vunpack.c.l.b16 %v3254
      %v3271 = vpack.c.b16 %v3264, %v3263
      %v3272 = vpack.c.b16 %v3266, %v3265
      %v3273 = vpack.c.b16 %v3268, %v3267
      %v3274 = vpack.c.b16 %v3270, %v3269
      %3275 = vrot.lane.b32.xlu0 %v3271, 64
      %v3276 = vpop.permute.xlu0 %3275
      %3277 = vrot.lane.b32.xlu0 %v3272, 64
      %v3278 = vpop.permute.xlu0 %3277
      %3279 = vrot.lane.b32.xlu0 %v3273, 64
      %v3280 = vpop.permute.xlu0 %3279
      %3281 = vrot.lane.b32.xlu0 %v3274, 64
      %v3282 = vpop.permute.xlu0 %3281
      %3287 = vst.msk [vmem:[#allocation3 + $0x10] sm:$0xff] %vm2876, %v3276
      %3288 = vst.msk [vmem:[#allocation3 + $0x78] sm:$0xff] %vm2876, %v3278
      %3289 = vst.msk [vmem:[#allocation3 + $0xe0] sm:$0xff] %vm2876, %v3280
      %3290 = vst.msk [vmem:[#allocation3 + $0x148] sm:$0xff] %vm2876, %v3282
      %v3291 = vld [vmem:[%s3246] sm:$0xf]
      %v3292 = vld [vmem:[%s3246 + $0x4] sm:$0x1]
      %v3293 = vld [vmem:[%s3246 + $0x8] sm:$0xf]
      %v3294 = vld [vmem:[%s3246 + $0xc] sm:$0x1]
      %v3295 = vld [vmem:[%s3246 + $0x10] sm:$0xf]
      %v3296 = vld [vmem:[%s3246 + $0x14] sm:$0x1]
      %v3297 = vld [vmem:[%s3246 + $0x18] sm:$0xf]
      %v3298 = vld [vmem:[%s3246 + $0x1c] sm:$0x1]
      %v3299 = vld [vmem:[%s3246 + $0x20] sm:$0xf]
      %v3300 = vld [vmem:[%s3246 + $0x24] sm:$0x1]
      %v3301 = vld [vmem:[%s3246 + $0x28] sm:$0xf]
      %v3302 = vld [vmem:[%s3246 + $0x2c] sm:$0x1]
      %v3303 = vld [vmem:[%s3246 + $0x30] sm:$0xf]
      %v3304 = vld [vmem:[%s3246 + $0x34] sm:$0x1]
      %v3305 = vld [vmem:[%s3246 + $0x38] sm:$0xf]
      %v3306 = vld [vmem:[%s3246 + $0x3c] sm:$0x1]
      %v3308 = vshrl.u32 %v3291, 16
      %v3310 = vrot.slane %v3308, 4
      %v3311 = vshll.u32 %v3291, 16
      %v3313 = vrot.slane %v3311, 5
      %v3314 = vor.u32 %v3310, %v3313
      %v3315 = vrot.slane %v3314, 4
      %v3317 = vshll.u32 %v3292, 16
      %v3319 = vrot.slane %v3317, 5
      %v3320 = vsel %vm2739, %v3315, %v3319
      %v3322 = vshrl.u32 %v3293, 16
      %v3324 = vrot.slane %v3322, 4
      %v3325 = vshll.u32 %v3293, 16
      %v3327 = vrot.slane %v3325, 5
      %v3328 = vor.u32 %v3324, %v3327
      %v3329 = vrot.slane %v3328, 4
      %v3331 = vshll.u32 %v3294, 16
      %v3333 = vrot.slane %v3331, 5
      %v3334 = vsel %vm2739, %v3329, %v3333
      %v3336 = vshrl.u32 %v3295, 16
      %v3338 = vrot.slane %v3336, 4
      %v3339 = vshll.u32 %v3295, 16
      %v3341 = vrot.slane %v3339, 5
      %v3342 = vor.u32 %v3338, %v3341
      %v3343 = vrot.slane %v3342, 4
      %v3345 = vshll.u32 %v3296, 16
      %v3347 = vrot.slane %v3345, 5
      %v3348 = vsel %vm2739, %v3343, %v3347
      %v3350 = vshrl.u32 %v3297, 16
      %v3352 = vrot.slane %v3350, 4
      %v3353 = vshll.u32 %v3297, 16
      %v3355 = vrot.slane %v3353, 5
      %v3356 = vor.u32 %v3352, %v3355
      %v3357 = vrot.slane %v3356, 4
      %v3359 = vshll.u32 %v3298, 16
      %v3361 = vrot.slane %v3359, 5
      %v3362 = vsel %vm2739, %v3357, %v3361
      %v3364 = vshrl.u32 %v3299, 16
      %v3366 = vrot.slane %v3364, 4
      %v3367 = vshll.u32 %v3299, 16
      %v3369 = vrot.slane %v3367, 5
      %v3370 = vor.u32 %v3366, %v3369
      %v3371 = vrot.slane %v3370, 4
      %v3373 = vshll.u32 %v3300, 16
      %v3375 = vrot.slane %v3373, 5
      %v3376 = vsel %vm2739, %v3371, %v3375
      %v3378 = vshrl.u32 %v3301, 16
      %v3380 = vrot.slane %v3378, 4
      %v3381 = vshll.u32 %v3301, 16
      %v3383 = vrot.slane %v3381, 5
      %v3384 = vor.u32 %v3380, %v3383
      %v3385 = vrot.slane %v3384, 4
      %v3387 = vshll.u32 %v3302, 16
      %v3389 = vrot.slane %v3387, 5
      %v3390 = vsel %vm2739, %v3385, %v3389
      %v3392 = vshrl.u32 %v3303, 16
      %v3394 = vrot.slane %v3392, 4
      %v3395 = vshll.u32 %v3303, 16
      %v3397 = vrot.slane %v3395, 5
      %v3398 = vor.u32 %v3394, %v3397
      %v3399 = vrot.slane %v3398, 4
      %v3401 = vshll.u32 %v3304, 16
      %v3403 = vrot.slane %v3401, 5
      %v3404 = vsel %vm2739, %v3399, %v3403
      %v3406 = vshrl.u32 %v3305, 16
      %v3408 = vrot.slane %v3406, 4
      %v3409 = vshll.u32 %v3305, 16
      %v3411 = vrot.slane %v3409, 5
      %v3412 = vor.u32 %v3408, %v3411
      %v3413 = vrot.slane %v3412, 4
      %v3415 = vshll.u32 %v3306, 16
      %v3417 = vrot.slane %v3415, 5
      %v3418 = vsel %vm2739, %v3413, %v3417
      %v3419 = vunpack.c.l.b16 %v3320
      %v3420 = vunpack.c.l.b16 %v3334
      %v3421 = vunpack.c.l.b16 %v3348
      %v3422 = vunpack.c.l.b16 %v3362
      %v3423 = vunpack.c.l.b16 %v3376
      %v3424 = vunpack.c.l.b16 %v3390
      %v3425 = vunpack.c.l.b16 %v3404
      %v3426 = vunpack.c.l.b16 %v3418
      %v3427 = vpack.c.b16 %v3420, %v3419
      %v3428 = vpack.c.b16 %v3422, %v3421
      %v3429 = vpack.c.b16 %v3424, %v3423
      %v3430 = vpack.c.b16 %v3426, %v3425
      %3435 = vst.msk [vmem:[#allocation3 + $0x18] sm:$0xff] %vm2716, %v3427
      %3436 = vst.msk [vmem:[#allocation3 + $0x80] sm:$0xff] %vm2716, %v3428
      %3437 = vst.msk [vmem:[#allocation3 + $0xe8] sm:$0xff] %vm2716, %v3429
      %3438 = vst.msk [vmem:[#allocation3 + $0x150] sm:$0xff] %vm2716, %v3430
      %v3439 = vld [vmem:[%s3246] sm:$0xe]
      %v3440 = vld [vmem:[%s3246 + $0x4] sm:$0x1]
      %v3441 = vld [vmem:[%s3246 + $0x8] sm:$0xe]
      %v3442 = vld [vmem:[%s3246 + $0xc] sm:$0x1]
      %v3443 = vld [vmem:[%s3246 + $0x10] sm:$0xe]
      %v3444 = vld [vmem:[%s3246 + $0x14] sm:$0x1]
      %v3445 = vld [vmem:[%s3246 + $0x18] sm:$0xe]
      %v3446 = vld [vmem:[%s3246 + $0x1c] sm:$0x1]
      %v3447 = vld [vmem:[%s3246 + $0x20] sm:$0xe]
      %v3448 = vld [vmem:[%s3246 + $0x24] sm:$0x1]
      %v3449 = vld [vmem:[%s3246 + $0x28] sm:$0xe]
      %v3450 = vld [vmem:[%s3246 + $0x2c] sm:$0x1]
      %v3451 = vld [vmem:[%s3246 + $0x30] sm:$0xe]
      %v3452 = vld [vmem:[%s3246 + $0x34] sm:$0x1]
      %v3453 = vld [vmem:[%s3246 + $0x38] sm:$0xe]
      %v3454 = vld [vmem:[%s3246 + $0x3c] sm:$0x1]
      %v3471 = vrot.slane %v3439, 5
      %v3472 = vrot.slane %v3471, 4
      %v3473 = vrot.slane %v3440, 5
      %v3474 = vsel %vm2915, %v3472, %v3473
      %v3475 = vrot.slane %v3441, 5
      %v3476 = vrot.slane %v3475, 4
      %v3477 = vrot.slane %v3442, 5
      %v3478 = vsel %vm2915, %v3476, %v3477
      %v3479 = vrot.slane %v3443, 5
      %v3480 = vrot.slane %v3479, 4
      %v3481 = vrot.slane %v3444, 5
      %v3482 = vsel %vm2915, %v3480, %v3481
      %v3483 = vrot.slane %v3445, 5
      %v3484 = vrot.slane %v3483, 4
      %v3485 = vrot.slane %v3446, 5
      %v3486 = vsel %vm2915, %v3484, %v3485
      %v3487 = vrot.slane %v3447, 5
      %v3488 = vrot.slane %v3487, 4
      %v3489 = vrot.slane %v3448, 5
      %v3490 = vsel %vm2915, %v3488, %v3489
      %v3491 = vrot.slane %v3449, 5
      %v3492 = vrot.slane %v3491, 4
      %v3493 = vrot.slane %v3450, 5
      %v3494 = vsel %vm2915, %v3492, %v3493
      %v3495 = vrot.slane %v3451, 5
      %v3496 = vrot.slane %v3495, 4
      %v3497 = vrot.slane %v3452, 5
      %v3498 = vsel %vm2915, %v3496, %v3497
      %v3499 = vrot.slane %v3453, 5
      %v3500 = vrot.slane %v3499, 4
      %v3501 = vrot.slane %v3454, 5
      %v3502 = vsel %vm2915, %v3500, %v3501
      %v3503 = vunpack.c.l.b16 %v3474
      %v3504 = vunpack.c.l.b16 %v3478
      %v3505 = vunpack.c.l.b16 %v3482
      %v3506 = vunpack.c.l.b16 %v3486
      %v3507 = vunpack.c.l.b16 %v3490
      %v3508 = vunpack.c.l.b16 %v3494
      %v3509 = vunpack.c.l.b16 %v3498
      %v3510 = vunpack.c.l.b16 %v3502
      %v3511 = vpack.c.b16 %v3504, %v3503
      %v3512 = vpack.c.b16 %v3506, %v3505
      %v3513 = vpack.c.b16 %v3508, %v3507
      %v3514 = vpack.c.b16 %v3510, %v3509
      %3515 = vrot.lane.b32.xlu0 %v3511, 64
      %v3516 = vpop.permute.xlu0 %3515
      %3517 = vrot.lane.b32.xlu0 %v3512, 64
      %v3518 = vpop.permute.xlu0 %3517
      %3519 = vrot.lane.b32.xlu0 %v3513, 64
      %v3520 = vpop.permute.xlu0 %3519
      %3521 = vrot.lane.b32.xlu0 %v3514, 64
      %v3522 = vpop.permute.xlu0 %3521
      %3527 = vst.msk [vmem:[#allocation3 + $0x18] sm:$0xff] %vm2876, %v3516
      %3528 = vst.msk [vmem:[#allocation3 + $0x80] sm:$0xff] %vm2876, %v3518
      %3529 = vst.msk [vmem:[#allocation3 + $0xe8] sm:$0xff] %vm2876, %v3520
      %3530 = vst.msk [vmem:[#allocation3 + $0x150] sm:$0xff] %vm2876, %v3522
      %v3531 = vld [vmem:[%s3246] sm:$0xe]
      %v3532 = vld [vmem:[%s3246 + $0x4] sm:$0x3]
      %v3533 = vld [vmem:[%s3246 + $0x8] sm:$0xe]
      %v3534 = vld [vmem:[%s3246 + $0xc] sm:$0x3]
      %v3535 = vld [vmem:[%s3246 + $0x10] sm:$0xe]
      %v3536 = vld [vmem:[%s3246 + $0x14] sm:$0x3]
      %v3537 = vld [vmem:[%s3246 + $0x18] sm:$0xe]
      %v3538 = vld [vmem:[%s3246 + $0x1c] sm:$0x3]
      %v3539 = vld [vmem:[%s3246 + $0x20] sm:$0xe]
      %v3540 = vld [vmem:[%s3246 + $0x24] sm:$0x3]
      %v3541 = vld [vmem:[%s3246 + $0x28] sm:$0xe]
      %v3542 = vld [vmem:[%s3246 + $0x2c] sm:$0x3]
      %v3543 = vld [vmem:[%s3246 + $0x30] sm:$0xe]
      %v3544 = vld [vmem:[%s3246 + $0x34] sm:$0x3]
      %v3545 = vld [vmem:[%s3246 + $0x38] sm:$0xe]
      %v3546 = vld [vmem:[%s3246 + $0x3c] sm:$0x3]
      %v3548 = vshrl.u32 %v3531, 16
      %v3550 = vrot.slane %v3548, 5
      %v3551 = vshll.u32 %v3531, 16
      %v3553 = vrot.slane %v3551, 6
      %v3554 = vor.u32 %v3550, %v3553
      %v3555 = vrot.slane %v3554, 4
      %v3557 = vshrl.u32 %v3532, 16
      %v3559 = vrot.slane %v3557, 5
      %v3560 = vshll.u32 %v3532, 16
      %v3562 = vrot.slane %v3560, 6
      %v3563 = vor.u32 %v3559, %v3562
      %v3564 = vsel %vm2986, %v3555, %v3563
      %v3566 = vshrl.u32 %v3533, 16
      %v3568 = vrot.slane %v3566, 5
      %v3569 = vshll.u32 %v3533, 16
      %v3571 = vrot.slane %v3569, 6
      %v3572 = vor.u32 %v3568, %v3571
      %v3573 = vrot.slane %v3572, 4
      %v3575 = vshrl.u32 %v3534, 16
      %v3577 = vrot.slane %v3575, 5
      %v3578 = vshll.u32 %v3534, 16
      %v3580 = vrot.slane %v3578, 6
      %v3581 = vor.u32 %v3577, %v3580
      %v3582 = vsel %vm2986, %v3573, %v3581
      %v3584 = vshrl.u32 %v3535, 16
      %v3586 = vrot.slane %v3584, 5
      %v3587 = vshll.u32 %v3535, 16
      %v3589 = vrot.slane %v3587, 6
      %v3590 = vor.u32 %v3586, %v3589
      %v3591 = vrot.slane %v3590, 4
      %v3593 = vshrl.u32 %v3536, 16
      %v3595 = vrot.slane %v3593, 5
      %v3596 = vshll.u32 %v3536, 16
      %v3598 = vrot.slane %v3596, 6
      %v3599 = vor.u32 %v3595, %v3598
      %v3600 = vsel %vm2986, %v3591, %v3599
      %v3602 = vshrl.u32 %v3537, 16
      %v3604 = vrot.slane %v3602, 5
      %v3605 = vshll.u32 %v3537, 16
      %v3607 = vrot.slane %v3605, 6
      %v3608 = vor.u32 %v3604, %v3607
      %v3609 = vrot.slane %v3608, 4
      %v3611 = vshrl.u32 %v3538, 16
      %v3613 = vrot.slane %v3611, 5
      %v3614 = vshll.u32 %v3538, 16
      %v3616 = vrot.slane %v3614, 6
      %v3617 = vor.u32 %v3613, %v3616
      %v3618 = vsel %vm2986, %v3609, %v3617
      %v3620 = vshrl.u32 %v3539, 16
      %v3622 = vrot.slane %v3620, 5
      %v3623 = vshll.u32 %v3539, 16
      %v3625 = vrot.slane %v3623, 6
      %v3626 = vor.u32 %v3622, %v3625
      %v3627 = vrot.slane %v3626, 4
      %v3629 = vshrl.u32 %v3540, 16
      %v3631 = vrot.slane %v3629, 5
      %v3632 = vshll.u32 %v3540, 16
      %v3634 = vrot.slane %v3632, 6
      %v3635 = vor.u32 %v3631, %v3634
      %v3636 = vsel %vm2986, %v3627, %v3635
      %v3638 = vshrl.u32 %v3541, 16
      %v3640 = vrot.slane %v3638, 5
      %v3641 = vshll.u32 %v3541, 16
      %v3643 = vrot.slane %v3641, 6
      %v3644 = vor.u32 %v3640, %v3643
      %v3645 = vrot.slane %v3644, 4
      %v3647 = vshrl.u32 %v3542, 16
      %v3649 = vrot.slane %v3647, 5
      %v3650 = vshll.u32 %v3542, 16
      %v3652 = vrot.slane %v3650, 6
      %v3653 = vor.u32 %v3649, %v3652
      %v3654 = vsel %vm2986, %v3645, %v3653
      %v3656 = vshrl.u32 %v3543, 16
      %v3658 = vrot.slane %v3656, 5
      %v3659 = vshll.u32 %v3543, 16
      %v3661 = vrot.slane %v3659, 6
      %v3662 = vor.u32 %v3658, %v3661
      %v3663 = vrot.slane %v3662, 4
      %v3665 = vshrl.u32 %v3544, 16
      %v3667 = vrot.slane %v3665, 5
      %v3668 = vshll.u32 %v3544, 16
      %v3670 = vrot.slane %v3668, 6
      %v3671 = vor.u32 %v3667, %v3670
      %v3672 = vsel %vm2986, %v3663, %v3671
      %v3674 = vshrl.u32 %v3545, 16
      %v3676 = vrot.slane %v3674, 5
      %v3677 = vshll.u32 %v3545, 16
      %v3679 = vrot.slane %v3677, 6
      %v3680 = vor.u32 %v3676, %v3679
      %v3681 = vrot.slane %v3680, 4
      %v3683 = vshrl.u32 %v3546, 16
      %v3685 = vrot.slane %v3683, 5
      %v3686 = vshll.u32 %v3546, 16
      %v3688 = vrot.slane %v3686, 6
      %v3689 = vor.u32 %v3685, %v3688
      %v3690 = vsel %vm2986, %v3681, %v3689
      %v3691 = vunpack.c.l.b16 %v3564
      %v3692 = vunpack.c.l.b16 %v3582
      %v3693 = vunpack.c.l.b16 %v3600
      %v3694 = vunpack.c.l.b16 %v3618
      %v3695 = vunpack.c.l.b16 %v3636
      %v3696 = vunpack.c.l.b16 %v3654
      %v3697 = vunpack.c.l.b16 %v3672
      %v3698 = vunpack.c.l.b16 %v3690
      %v3699 = vpack.c.b16 %v3692, %v3691
      %v3700 = vpack.c.b16 %v3694, %v3693
      %v3701 = vpack.c.b16 %v3696, %v3695
      %v3702 = vpack.c.b16 %v3698, %v3697
      %3707 = vst.msk [vmem:[#allocation3 + $0x20] sm:$0xff] %vm2716, %v3699
      %3708 = vst.msk [vmem:[#allocation3 + $0x88] sm:$0xff] %vm2716, %v3700
      %3709 = vst.msk [vmem:[#allocation3 + $0xf0] sm:$0xff] %vm2716, %v3701
      %3710 = vst.msk [vmem:[#allocation3 + $0x158] sm:$0xff] %vm2716, %v3702
      %v3711 = vld [vmem:[%s3246] sm:$0xc]
      %v3712 = vld [vmem:[%s3246 + $0x4] sm:$0x3]
      %v3713 = vld [vmem:[%s3246 + $0x8] sm:$0xc]
      %v3714 = vld [vmem:[%s3246 + $0xc] sm:$0x3]
      %v3715 = vld [vmem:[%s3246 + $0x10] sm:$0xc]
      %v3716 = vld [vmem:[%s3246 + $0x14] sm:$0x3]
      %v3717 = vld [vmem:[%s3246 + $0x18] sm:$0xc]
      %v3718 = vld [vmem:[%s3246 + $0x1c] sm:$0x3]
      %v3719 = vld [vmem:[%s3246 + $0x20] sm:$0xc]
      %v3720 = vld [vmem:[%s3246 + $0x24] sm:$0x3]
      %v3721 = vld [vmem:[%s3246 + $0x28] sm:$0xc]
      %v3722 = vld [vmem:[%s3246 + $0x2c] sm:$0x3]
      %v3723 = vld [vmem:[%s3246 + $0x30] sm:$0xc]
      %v3724 = vld [vmem:[%s3246 + $0x34] sm:$0x3]
      %v3725 = vld [vmem:[%s3246 + $0x38] sm:$0xc]
      %v3726 = vld [vmem:[%s3246 + $0x3c] sm:$0x3]
      %v3743 = vrot.slane %v3711, 6
      %v3744 = vrot.slane %v3743, 4
      %v3745 = vrot.slane %v3712, 6
      %v3746 = vsel %vm3193, %v3744, %v3745
      %v3747 = vrot.slane %v3713, 6
      %v3748 = vrot.slane %v3747, 4
      %v3749 = vrot.slane %v3714, 6
      %v3750 = vsel %vm3193, %v3748, %v3749
      %v3751 = vrot.slane %v3715, 6
      %v3752 = vrot.slane %v3751, 4
      %v3753 = vrot.slane %v3716, 6
      %v3754 = vsel %vm3193, %v3752, %v3753
      %v3755 = vrot.slane %v3717, 6
      %v3756 = vrot.slane %v3755, 4
      %v3757 = vrot.slane %v3718, 6
      %v3758 = vsel %vm3193, %v3756, %v3757
      %v3759 = vrot.slane %v3719, 6
      %v3760 = vrot.slane %v3759, 4
      %v3761 = vrot.slane %v3720, 6
      %v3762 = vsel %vm3193, %v3760, %v3761
      %v3763 = vrot.slane %v3721, 6
      %v3764 = vrot.slane %v3763, 4
      %v3765 = vrot.slane %v3722, 6
      %v3766 = vsel %vm3193, %v3764, %v3765
      %v3767 = vrot.slane %v3723, 6
      %v3768 = vrot.slane %v3767, 4
      %v3769 = vrot.slane %v3724, 6
      %v3770 = vsel %vm3193, %v3768, %v3769
      %v3771 = vrot.slane %v3725, 6
      %v3772 = vrot.slane %v3771, 4
      %v3773 = vrot.slane %v3726, 6
      %v3774 = vsel %vm3193, %v3772, %v3773
      %v3775 = vunpack.c.l.b16 %v3746
      %v3776 = vunpack.c.l.b16 %v3750
      %v3777 = vunpack.c.l.b16 %v3754
      %v3778 = vunpack.c.l.b16 %v3758
      %v3779 = vunpack.c.l.b16 %v3762
      %v3780 = vunpack.c.l.b16 %v3766
      %v3781 = vunpack.c.l.b16 %v3770
      %v3782 = vunpack.c.l.b16 %v3774
      %v3783 = vpack.c.b16 %v3776, %v3775
      %v3784 = vpack.c.b16 %v3778, %v3777
      %v3785 = vpack.c.b16 %v3780, %v3779
      %v3786 = vpack.c.b16 %v3782, %v3781
      %3787 = vrot.lane.b32.xlu0 %v3783, 64
      %v3788 = vpop.permute.xlu0 %3787
      %3789 = vrot.lane.b32.xlu0 %v3784, 64
      %v3790 = vpop.permute.xlu0 %3789
      %3791 = vrot.lane.b32.xlu0 %v3785, 64
      %v3792 = vpop.permute.xlu0 %3791
      %3793 = vrot.lane.b32.xlu0 %v3786, 64
      %v3794 = vpop.permute.xlu0 %3793
      %3799 = vst.msk [vmem:[#allocation3 + $0x20] sm:$0xff] %vm2876, %v3788
      %3800 = vst.msk [vmem:[#allocation3 + $0x88] sm:$0xff] %vm2876, %v3790
      %3801 = vst.msk [vmem:[#allocation3 + $0xf0] sm:$0xff] %vm2876, %v3792
      %3802 = vst.msk [vmem:[#allocation3 + $0x158] sm:$0xff] %vm2876, %v3794
      %v3803 = vld [vmem:[%s2665] sm:$0xf]
      %v3804 = vld [vmem:[%s2665 + $0x8] sm:$0xf]
      %v3805 = vld [vmem:[%s2665 + $0x10] sm:$0xf]
      %v3806 = vld [vmem:[%s2665 + $0x18] sm:$0xf]
      %v3807 = vld [vmem:[%s2665 + $0x20] sm:$0xf]
      %v3808 = vld [vmem:[%s2665 + $0x28] sm:$0xf]
      %v3809 = vld [vmem:[%s2665 + $0x30] sm:$0xf]
      %v3810 = vld [vmem:[%s2665 + $0x38] sm:$0xf]
      %v3819 = vunpack.c.l.b16 %v3803
      %v3820 = vunpack.c.l.b16 %v3804
      %v3821 = vunpack.c.l.b16 %v3805
      %v3822 = vunpack.c.l.b16 %v3806
      %v3823 = vunpack.c.l.b16 %v3807
      %v3824 = vunpack.c.l.b16 %v3808
      %v3825 = vunpack.c.l.b16 %v3809
      %v3826 = vunpack.c.l.b16 %v3810
      %v3827 = vpack.c.b16 %v3820, %v3819
      %v3828 = vpack.c.b16 %v3822, %v3821
      %v3829 = vpack.c.b16 %v3824, %v3823
      %v3830 = vpack.c.b16 %v3826, %v3825
      %3835 = vst.msk [vmem:[#allocation3 + $0x28] sm:$0xff] %vm2716, %v3827
      %3836 = vst.msk [vmem:[#allocation3 + $0x90] sm:$0xff] %vm2716, %v3828
      %3837 = vst.msk [vmem:[#allocation3 + $0xf8] sm:$0xff] %vm2716, %v3829
      %3838 = vst.msk [vmem:[#allocation3 + $0x160] sm:$0xff] %vm2716, %v3830
      %v3839 = vld [vmem:[%s2665] sm:$0xf]
      %v3840 = vld [vmem:[%s2665 + $0x4] sm:$0x1]
      %v3841 = vld [vmem:[%s2665 + $0x8] sm:$0xf]
      %v3842 = vld [vmem:[%s2665 + $0xc] sm:$0x1]
      %v3843 = vld [vmem:[%s2665 + $0x10] sm:$0xf]
      %v3844 = vld [vmem:[%s2665 + $0x14] sm:$0x1]
      %v3845 = vld [vmem:[%s2665 + $0x18] sm:$0xf]
      %v3846 = vld [vmem:[%s2665 + $0x1c] sm:$0x1]
      %v3847 = vld [vmem:[%s2665 + $0x20] sm:$0xf]
      %v3848 = vld [vmem:[%s2665 + $0x24] sm:$0x1]
      %v3849 = vld [vmem:[%s2665 + $0x28] sm:$0xf]
      %v3850 = vld [vmem:[%s2665 + $0x2c] sm:$0x1]
      %v3851 = vld [vmem:[%s2665 + $0x30] sm:$0xf]
      %v3852 = vld [vmem:[%s2665 + $0x34] sm:$0x1]
      %v3853 = vld [vmem:[%s2665 + $0x38] sm:$0xf]
      %v3854 = vld [vmem:[%s2665 + $0x3c] sm:$0x1]
      %v3856 = vshrl.u32 %v3839, 16
      %v3858 = vrot.slane %v3856, 4
      %v3859 = vshll.u32 %v3839, 16
      %v3861 = vrot.slane %v3859, 5
      %v3862 = vor.u32 %v3858, %v3861
      %v3863 = vrot.slane %v3862, 4
      %v3865 = vshll.u32 %v3840, 16
      %v3867 = vrot.slane %v3865, 5
      %v3868 = vsel %vm2739, %v3863, %v3867
      %v3870 = vshrl.u32 %v3841, 16
      %v3872 = vrot.slane %v3870, 4
      %v3873 = vshll.u32 %v3841, 16
      %v3875 = vrot.slane %v3873, 5
      %v3876 = vor.u32 %v3872, %v3875
      %v3877 = vrot.slane %v3876, 4
      %v3879 = vshll.u32 %v3842, 16
      %v3881 = vrot.slane %v3879, 5
      %v3882 = vsel %vm2739, %v3877, %v3881
      %v3884 = vshrl.u32 %v3843, 16
      %v3886 = vrot.slane %v3884, 4
      %v3887 = vshll.u32 %v3843, 16
      %v3889 = vrot.slane %v3887, 5
      %v3890 = vor.u32 %v3886, %v3889
      %v3891 = vrot.slane %v3890, 4
      %v3893 = vshll.u32 %v3844, 16
      %v3895 = vrot.slane %v3893, 5
      %v3896 = vsel %vm2739, %v3891, %v3895
      %v3898 = vshrl.u32 %v3845, 16
      %v3900 = vrot.slane %v3898, 4
      %v3901 = vshll.u32 %v3845, 16
      %v3903 = vrot.slane %v3901, 5
      %v3904 = vor.u32 %v3900, %v3903
      %v3905 = vrot.slane %v3904, 4
      %v3907 = vshll.u32 %v3846, 16
      %v3909 = vrot.slane %v3907, 5
      %v3910 = vsel %vm2739, %v3905, %v3909
      %v3912 = vshrl.u32 %v3847, 16
      %v3914 = vrot.slane %v3912, 4
      %v3915 = vshll.u32 %v3847, 16
      %v3917 = vrot.slane %v3915, 5
      %v3918 = vor.u32 %v3914, %v3917
      %v3919 = vrot.slane %v3918, 4
      %v3921 = vshll.u32 %v3848, 16
      %v3923 = vrot.slane %v3921, 5
      %v3924 = vsel %vm2739, %v3919, %v3923
      %v3926 = vshrl.u32 %v3849, 16
      %v3928 = vrot.slane %v3926, 4
      %v3929 = vshll.u32 %v3849, 16
      %v3931 = vrot.slane %v3929, 5
      %v3932 = vor.u32 %v3928, %v3931
      %v3933 = vrot.slane %v3932, 4
      %v3935 = vshll.u32 %v3850, 16
      %v3937 = vrot.slane %v3935, 5
      %v3938 = vsel %vm2739, %v3933, %v3937
      %v3940 = vshrl.u32 %v3851, 16
      %v3942 = vrot.slane %v3940, 4
      %v3943 = vshll.u32 %v3851, 16
      %v3945 = vrot.slane %v3943, 5
      %v3946 = vor.u32 %v3942, %v3945
      %v3947 = vrot.slane %v3946, 4
      %v3949 = vshll.u32 %v3852, 16
      %v3951 = vrot.slane %v3949, 5
      %v3952 = vsel %vm2739, %v3947, %v3951
      %v3954 = vshrl.u32 %v3853, 16
      %v3956 = vrot.slane %v3954, 4
      %v3957 = vshll.u32 %v3853, 16
      %v3959 = vrot.slane %v3957, 5
      %v3960 = vor.u32 %v3956, %v3959
      %v3961 = vrot.slane %v3960, 4
      %v3963 = vshll.u32 %v3854, 16
      %v3965 = vrot.slane %v3963, 5
      %v3966 = vsel %vm2739, %v3961, %v3965
      %v3967 = vunpack.c.l.b16 %v3868
      %v3968 = vunpack.c.l.b16 %v3882
      %v3969 = vunpack.c.l.b16 %v3896
      %v3970 = vunpack.c.l.b16 %v3910
      %v3971 = vunpack.c.l.b16 %v3924
      %v3972 = vunpack.c.l.b16 %v3938
      %v3973 = vunpack.c.l.b16 %v3952
      %v3974 = vunpack.c.l.b16 %v3966
      %v3975 = vpack.c.b16 %v3968, %v3967
      %v3976 = vpack.c.b16 %v3970, %v3969
      %v3977 = vpack.c.b16 %v3972, %v3971
      %v3978 = vpack.c.b16 %v3974, %v3973
      %3979 = vrot.lane.b32.xlu0 %v3975, 64
      %v3980 = vpop.permute.xlu0 %3979
      %3981 = vrot.lane.b32.xlu0 %v3976, 64
      %v3982 = vpop.permute.xlu0 %3981
      %3983 = vrot.lane.b32.xlu0 %v3977, 64
      %v3984 = vpop.permute.xlu0 %3983
      %3985 = vrot.lane.b32.xlu0 %v3978, 64
      %v3986 = vpop.permute.xlu0 %3985
      %3991 = vst.msk [vmem:[#allocation3 + $0x28] sm:$0xff] %vm2876, %v3980
      %3992 = vst.msk [vmem:[#allocation3 + $0x90] sm:$0xff] %vm2876, %v3982
      %3993 = vst.msk [vmem:[#allocation3 + $0xf8] sm:$0xff] %vm2876, %v3984
      %3994 = vst.msk [vmem:[#allocation3 + $0x160] sm:$0xff] %vm2876, %v3986
      %v3995 = vld [vmem:[%s2665] sm:$0xe]
      %v3996 = vld [vmem:[%s2665 + $0x4] sm:$0x1]
      %v3997 = vld [vmem:[%s2665 + $0x8] sm:$0xe]
      %v3998 = vld [vmem:[%s2665 + $0xc] sm:$0x1]
      %v3999 = vld [vmem:[%s2665 + $0x10] sm:$0xe]
      %v4000 = vld [vmem:[%s2665 + $0x14] sm:$0x1]
      %v4001 = vld [vmem:[%s2665 + $0x18] sm:$0xe]
      %v4002 = vld [vmem:[%s2665 + $0x1c] sm:$0x1]
      %v4003 = vld [vmem:[%s2665 + $0x20] sm:$0xe]
      %v4004 = vld [vmem:[%s2665 + $0x24] sm:$0x1]
      %v4005 = vld [vmem:[%s2665 + $0x28] sm:$0xe]
      %v4006 = vld [vmem:[%s2665 + $0x2c] sm:$0x1]
      %v4007 = vld [vmem:[%s2665 + $0x30] sm:$0xe]
      %v4008 = vld [vmem:[%s2665 + $0x34] sm:$0x1]
      %v4009 = vld [vmem:[%s2665 + $0x38] sm:$0xe]
      %v4010 = vld [vmem:[%s2665 + $0x3c] sm:$0x1]
      %v4027 = vrot.slane %v3995, 5
      %v4028 = vrot.slane %v4027, 4
      %v4029 = vrot.slane %v3996, 5
      %v4030 = vsel %vm2915, %v4028, %v4029
      %v4031 = vrot.slane %v3997, 5
      %v4032 = vrot.slane %v4031, 4
      %v4033 = vrot.slane %v3998, 5
      %v4034 = vsel %vm2915, %v4032, %v4033
      %v4035 = vrot.slane %v3999, 5
      %v4036 = vrot.slane %v4035, 4
      %v4037 = vrot.slane %v4000, 5
      %v4038 = vsel %vm2915, %v4036, %v4037
      %v4039 = vrot.slane %v4001, 5
      %v4040 = vrot.slane %v4039, 4
      %v4041 = vrot.slane %v4002, 5
      %v4042 = vsel %vm2915, %v4040, %v4041
      %v4043 = vrot.slane %v4003, 5
      %v4044 = vrot.slane %v4043, 4
      %v4045 = vrot.slane %v4004, 5
      %v4046 = vsel %vm2915, %v4044, %v4045
      %v4047 = vrot.slane %v4005, 5
      %v4048 = vrot.slane %v4047, 4
      %v4049 = vrot.slane %v4006, 5
      %v4050 = vsel %vm2915, %v4048, %v4049
      %v4051 = vrot.slane %v4007, 5
      %v4052 = vrot.slane %v4051, 4
      %v4053 = vrot.slane %v4008, 5
      %v4054 = vsel %vm2915, %v4052, %v4053
      %v4055 = vrot.slane %v4009, 5
      %v4056 = vrot.slane %v4055, 4
      %v4057 = vrot.slane %v4010, 5
      %v4058 = vsel %vm2915, %v4056, %v4057
      %v4059 = vunpack.c.l.b16 %v4030
      %v4060 = vunpack.c.l.b16 %v4034
      %v4061 = vunpack.c.l.b16 %v4038
      %v4062 = vunpack.c.l.b16 %v4042
      %v4063 = vunpack.c.l.b16 %v4046
      %v4064 = vunpack.c.l.b16 %v4050
      %v4065 = vunpack.c.l.b16 %v4054
      %v4066 = vunpack.c.l.b16 %v4058
      %v4067 = vpack.c.b16 %v4060, %v4059
      %v4068 = vpack.c.b16 %v4062, %v4061
      %v4069 = vpack.c.b16 %v4064, %v4063
      %v4070 = vpack.c.b16 %v4066, %v4065
      %4075 = vst.msk [vmem:[#allocation3 + $0x30] sm:$0xff] %vm2716, %v4067
      %4076 = vst.msk [vmem:[#allocation3 + $0x98] sm:$0xff] %vm2716, %v4068
      %4077 = vst.msk [vmem:[#allocation3 + $0x100] sm:$0xff] %vm2716, %v4069
      %4078 = vst.msk [vmem:[#allocation3 + $0x168] sm:$0xff] %vm2716, %v4070
      %v4079 = vld [vmem:[%s2665] sm:$0xe]
      %v4080 = vld [vmem:[%s2665 + $0x4] sm:$0x3]
      %v4081 = vld [vmem:[%s2665 + $0x8] sm:$0xe]
      %v4082 = vld [vmem:[%s2665 + $0xc] sm:$0x3]
      %v4083 = vld [vmem:[%s2665 + $0x10] sm:$0xe]
      %v4084 = vld [vmem:[%s2665 + $0x14] sm:$0x3]
      %v4085 = vld [vmem:[%s2665 + $0x18] sm:$0xe]
      %v4086 = vld [vmem:[%s2665 + $0x1c] sm:$0x3]
      %v4087 = vld [vmem:[%s2665 + $0x20] sm:$0xe]
      %v4088 = vld [vmem:[%s2665 + $0x24] sm:$0x3]
      %v4089 = vld [vmem:[%s2665 + $0x28] sm:$0xe]
      %v4090 = vld [vmem:[%s2665 + $0x2c] sm:$0x3]
      %v4091 = vld [vmem:[%s2665 + $0x30] sm:$0xe]
      %v4092 = vld [vmem:[%s2665 + $0x34] sm:$0x3]
      %v4093 = vld [vmem:[%s2665 + $0x38] sm:$0xe]
      %v4094 = vld [vmem:[%s2665 + $0x3c] sm:$0x3]
      %v4096 = vshrl.u32 %v4079, 16
      %v4098 = vrot.slane %v4096, 5
      %v4099 = vshll.u32 %v4079, 16
      %v4101 = vrot.slane %v4099, 6
      %v4102 = vor.u32 %v4098, %v4101
      %v4103 = vrot.slane %v4102, 4
      %v4105 = vshrl.u32 %v4080, 16
      %v4107 = vrot.slane %v4105, 5
      %v4108 = vshll.u32 %v4080, 16
      %v4110 = vrot.slane %v4108, 6
      %v4111 = vor.u32 %v4107, %v4110
      %v4112 = vsel %vm2986, %v4103, %v4111
      %v4114 = vshrl.u32 %v4081, 16
      %v4116 = vrot.slane %v4114, 5
      %v4117 = vshll.u32 %v4081, 16
      %v4119 = vrot.slane %v4117, 6
      %v4120 = vor.u32 %v4116, %v4119
      %v4121 = vrot.slane %v4120, 4
      %v4123 = vshrl.u32 %v4082, 16
      %v4125 = vrot.slane %v4123, 5
      %v4126 = vshll.u32 %v4082, 16
      %v4128 = vrot.slane %v4126, 6
      %v4129 = vor.u32 %v4125, %v4128
      %v4130 = vsel %vm2986, %v4121, %v4129
      %v4132 = vshrl.u32 %v4083, 16
      %v4134 = vrot.slane %v4132, 5
      %v4135 = vshll.u32 %v4083, 16
      %v4137 = vrot.slane %v4135, 6
      %v4138 = vor.u32 %v4134, %v4137
      %v4139 = vrot.slane %v4138, 4
      %v4141 = vshrl.u32 %v4084, 16
      %v4143 = vrot.slane %v4141, 5
      %v4144 = vshll.u32 %v4084, 16
      %v4146 = vrot.slane %v4144, 6
      %v4147 = vor.u32 %v4143, %v4146
      %v4148 = vsel %vm2986, %v4139, %v4147
      %v4150 = vshrl.u32 %v4085, 16
      %v4152 = vrot.slane %v4150, 5
      %v4153 = vshll.u32 %v4085, 16
      %v4155 = vrot.slane %v4153, 6
      %v4156 = vor.u32 %v4152, %v4155
      %v4157 = vrot.slane %v4156, 4
      %v4159 = vshrl.u32 %v4086, 16
      %v4161 = vrot.slane %v4159, 5
      %v4162 = vshll.u32 %v4086, 16
      %v4164 = vrot.slane %v4162, 6
      %v4165 = vor.u32 %v4161, %v4164
      %v4166 = vsel %vm2986, %v4157, %v4165
      %v4168 = vshrl.u32 %v4087, 16
      %v4170 = vrot.slane %v4168, 5
      %v4171 = vshll.u32 %v4087, 16
      %v4173 = vrot.slane %v4171, 6
      %v4174 = vor.u32 %v4170, %v4173
      %v4175 = vrot.slane %v4174, 4
      %v4177 = vshrl.u32 %v4088, 16
      %v4179 = vrot.slane %v4177, 5
      %v4180 = vshll.u32 %v4088, 16
      %v4182 = vrot.slane %v4180, 6
      %v4183 = vor.u32 %v4179, %v4182
      %v4184 = vsel %vm2986, %v4175, %v4183
      %v4186 = vshrl.u32 %v4089, 16
      %v4188 = vrot.slane %v4186, 5
      %v4189 = vshll.u32 %v4089, 16
      %v4191 = vrot.slane %v4189, 6
      %v4192 = vor.u32 %v4188, %v4191
      %v4193 = vrot.slane %v4192, 4
      %v4195 = vshrl.u32 %v4090, 16
      %v4197 = vrot.slane %v4195, 5
      %v4198 = vshll.u32 %v4090, 16
      %v4200 = vrot.slane %v4198, 6
      %v4201 = vor.u32 %v4197, %v4200
      %v4202 = vsel %vm2986, %v4193, %v4201
      %v4204 = vshrl.u32 %v4091, 16
      %v4206 = vrot.slane %v4204, 5
      %v4207 = vshll.u32 %v4091, 16
      %v4209 = vrot.slane %v4207, 6
      %v4210 = vor.u32 %v4206, %v4209
      %v4211 = vrot.slane %v4210, 4
      %v4213 = vshrl.u32 %v4092, 16
      %v4215 = vrot.slane %v4213, 5
      %v4216 = vshll.u32 %v4092, 16
      %v4218 = vrot.slane %v4216, 6
      %v4219 = vor.u32 %v4215, %v4218
      %v4220 = vsel %vm2986, %v4211, %v4219
      %v4222 = vshrl.u32 %v4093, 16
      %v4224 = vrot.slane %v4222, 5
      %v4225 = vshll.u32 %v4093, 16
      %v4227 = vrot.slane %v4225, 6
      %v4228 = vor.u32 %v4224, %v4227
      %v4229 = vrot.slane %v4228, 4
      %v4231 = vshrl.u32 %v4094, 16
      %v4233 = vrot.slane %v4231, 5
      %v4234 = vshll.u32 %v4094, 16
      %v4236 = vrot.slane %v4234, 6
      %v4237 = vor.u32 %v4233, %v4236
      %v4238 = vsel %vm2986, %v4229, %v4237
      %v4239 = vunpack.c.l.b16 %v4112
      %v4240 = vunpack.c.l.b16 %v4130
      %v4241 = vunpack.c.l.b16 %v4148
      %v4242 = vunpack.c.l.b16 %v4166
      %v4243 = vunpack.c.l.b16 %v4184
      %v4244 = vunpack.c.l.b16 %v4202
      %v4245 = vunpack.c.l.b16 %v4220
      %v4246 = vunpack.c.l.b16 %v4238
      %v4247 = vpack.c.b16 %v4240, %v4239
      %v4248 = vpack.c.b16 %v4242, %v4241
      %v4249 = vpack.c.b16 %v4244, %v4243
      %v4250 = vpack.c.b16 %v4246, %v4245
      %4251 = vrot.lane.b32.xlu0 %v4247, 64
      %v4252 = vpop.permute.xlu0 %4251
      %4253 = vrot.lane.b32.xlu0 %v4248, 64
      %v4254 = vpop.permute.xlu0 %4253
      %4255 = vrot.lane.b32.xlu0 %v4249, 64
      %v4256 = vpop.permute.xlu0 %4255
      %4257 = vrot.lane.b32.xlu0 %v4250, 64
      %v4258 = vpop.permute.xlu0 %4257
      %4263 = vst.msk [vmem:[#allocation3 + $0x30] sm:$0xff] %vm2876, %v4252
      %4264 = vst.msk [vmem:[#allocation3 + $0x98] sm:$0xff] %vm2876, %v4254
      %4265 = vst.msk [vmem:[#allocation3 + $0x100] sm:$0xff] %vm2876, %v4256
      %4266 = vst.msk [vmem:[#allocation3 + $0x168] sm:$0xff] %vm2876, %v4258
      %v4267 = vld [vmem:[%s2665] sm:$0xc]
      %v4268 = vld [vmem:[%s2665 + $0x4] sm:$0x3]
      %v4269 = vld [vmem:[%s2665 + $0x8] sm:$0xc]
      %v4270 = vld [vmem:[%s2665 + $0xc] sm:$0x3]
      %v4271 = vld [vmem:[%s2665 + $0x10] sm:$0xc]
      %v4272 = vld [vmem:[%s2665 + $0x14] sm:$0x3]
      %v4273 = vld [vmem:[%s2665 + $0x18] sm:$0xc]
      %v4274 = vld [vmem:[%s2665 + $0x1c] sm:$0x3]
      %v4275 = vld [vmem:[%s2665 + $0x20] sm:$0xc]
      %v4276 = vld [vmem:[%s2665 + $0x24] sm:$0x3]
      %v4277 = vld [vmem:[%s2665 + $0x28] sm:$0xc]
      %v4278 = vld [vmem:[%s2665 + $0x2c] sm:$0x3]
      %v4279 = vld [vmem:[%s2665 + $0x30] sm:$0xc]
      %v4280 = vld [vmem:[%s2665 + $0x34] sm:$0x3]
      %v4281 = vld [vmem:[%s2665 + $0x38] sm:$0xc]
      %v4282 = vld [vmem:[%s2665 + $0x3c] sm:$0x3]
      %v4299 = vrot.slane %v4267, 6
      %v4300 = vrot.slane %v4299, 4
      %v4301 = vrot.slane %v4268, 6
      %v4302 = vsel %vm3193, %v4300, %v4301
      %v4303 = vrot.slane %v4269, 6
      %v4304 = vrot.slane %v4303, 4
      %v4305 = vrot.slane %v4270, 6
      %v4306 = vsel %vm3193, %v4304, %v4305
      %v4307 = vrot.slane %v4271, 6
      %v4308 = vrot.slane %v4307, 4
      %v4309 = vrot.slane %v4272, 6
      %v4310 = vsel %vm3193, %v4308, %v4309
      %v4311 = vrot.slane %v4273, 6
      %v4312 = vrot.slane %v4311, 4
      %v4313 = vrot.slane %v4274, 6
      %v4314 = vsel %vm3193, %v4312, %v4313
      %v4315 = vrot.slane %v4275, 6
      %v4316 = vrot.slane %v4315, 4
      %v4317 = vrot.slane %v4276, 6
      %v4318 = vsel %vm3193, %v4316, %v4317
      %v4319 = vrot.slane %v4277, 6
      %v4320 = vrot.slane %v4319, 4
      %v4321 = vrot.slane %v4278, 6
      %v4322 = vsel %vm3193, %v4320, %v4321
      %v4323 = vrot.slane %v4279, 6
      %v4324 = vrot.slane %v4323, 4
      %v4325 = vrot.slane %v4280, 6
      %v4326 = vsel %vm3193, %v4324, %v4325
      %v4327 = vrot.slane %v4281, 6
      %v4328 = vrot.slane %v4327, 4
      %v4329 = vrot.slane %v4282, 6
      %v4330 = vsel %vm3193, %v4328, %v4329
      %v4331 = vunpack.c.l.b16 %v4302
      %v4332 = vunpack.c.l.b16 %v4306
      %v4333 = vunpack.c.l.b16 %v4310
      %v4334 = vunpack.c.l.b16 %v4314
      %v4335 = vunpack.c.l.b16 %v4318
      %v4336 = vunpack.c.l.b16 %v4322
      %v4337 = vunpack.c.l.b16 %v4326
      %v4338 = vunpack.c.l.b16 %v4330
      %v4339 = vpack.c.b16 %v4332, %v4331
      %v4340 = vpack.c.b16 %v4334, %v4333
      %v4341 = vpack.c.b16 %v4336, %v4335
      %v4342 = vpack.c.b16 %v4338, %v4337
      %4347 = vst.msk [vmem:[#allocation3 + $0x38] sm:$0xff] %vm2716, %v4339
      %4348 = vst.msk [vmem:[#allocation3 + $0xa0] sm:$0xff] %vm2716, %v4340
      %4349 = vst.msk [vmem:[#allocation3 + $0x108] sm:$0xff] %vm2716, %v4341
      %4350 = vst.msk [vmem:[#allocation3 + $0x170] sm:$0xff] %vm2716, %v4342
      %s4351 = scalar_lea.vmem [#allocation2], 24
      %v4352 = vld [vmem:[%s4351] sm:$0xf]
      %v4353 = vld [vmem:[%s4351 + $0x8] sm:$0xf]
      %v4354 = vld [vmem:[%s4351 + $0x10] sm:$0xf]
      %v4355 = vld [vmem:[%s4351 + $0x18] sm:$0xf]
      %v4356 = vld [vmem:[%s4351 + $0x20] sm:$0xf]
      %v4357 = vld [vmem:[%s4351 + $0x28] sm:$0xf]
      %v4358 = vld [vmem:[%s4351 + $0x30] sm:$0xf]
      %v4359 = vld [vmem:[%s4351 + $0x38] sm:$0xf]
      %v4368 = vunpack.c.l.b16 %v4352
      %v4369 = vunpack.c.l.b16 %v4353
      %v4370 = vunpack.c.l.b16 %v4354
      %v4371 = vunpack.c.l.b16 %v4355
      %v4372 = vunpack.c.l.b16 %v4356
      %v4373 = vunpack.c.l.b16 %v4357
      %v4374 = vunpack.c.l.b16 %v4358
      %v4375 = vunpack.c.l.b16 %v4359
      %v4376 = vpack.c.b16 %v4369, %v4368
      %v4377 = vpack.c.b16 %v4371, %v4370
      %v4378 = vpack.c.b16 %v4373, %v4372
      %v4379 = vpack.c.b16 %v4375, %v4374
      %4380 = vrot.lane.b32.xlu0 %v4376, 64
      %v4381 = vpop.permute.xlu0 %4380
      %4382 = vrot.lane.b32.xlu0 %v4377, 64
      %v4383 = vpop.permute.xlu0 %4382
      %4384 = vrot.lane.b32.xlu0 %v4378, 64
      %v4385 = vpop.permute.xlu0 %4384
      %4386 = vrot.lane.b32.xlu0 %v4379, 64
      %v4387 = vpop.permute.xlu0 %4386
      %4392 = vst.msk [vmem:[#allocation3 + $0x38] sm:$0xff] %vm2876, %v4381
      %4393 = vst.msk [vmem:[#allocation3 + $0xa0] sm:$0xff] %vm2876, %v4383
      %4394 = vst.msk [vmem:[#allocation3 + $0x108] sm:$0xff] %vm2876, %v4385
      %4395 = vst.msk [vmem:[#allocation3 + $0x170] sm:$0xff] %vm2876, %v4387
      %v4396 = vld [vmem:[%s4351] sm:$0xf]
      %v4397 = vld [vmem:[%s4351 + $0x4] sm:$0x1]
      %v4398 = vld [vmem:[%s4351 + $0x8] sm:$0xf]
      %v4399 = vld [vmem:[%s4351 + $0xc] sm:$0x1]
      %v4400 = vld [vmem:[%s4351 + $0x10] sm:$0xf]
      %v4401 = vld [vmem:[%s4351 + $0x14] sm:$0x1]
      %v4402 = vld [vmem:[%s4351 + $0x18] sm:$0xf]
      %v4403 = vld [vmem:[%s4351 + $0x1c] sm:$0x1]
      %v4404 = vld [vmem:[%s4351 + $0x20] sm:$0xf]
      %v4405 = vld [vmem:[%s4351 + $0x24] sm:$0x1]
      %v4406 = vld [vmem:[%s4351 + $0x28] sm:$0xf]
      %v4407 = vld [vmem:[%s4351 + $0x2c] sm:$0x1]
      %v4408 = vld [vmem:[%s4351 + $0x30] sm:$0xf]
      %v4409 = vld [vmem:[%s4351 + $0x34] sm:$0x1]
      %v4410 = vld [vmem:[%s4351 + $0x38] sm:$0xf]
      %v4411 = vld [vmem:[%s4351 + $0x3c] sm:$0x1]
      %v4413 = vshrl.u32 %v4396, 16
      %v4415 = vrot.slane %v4413, 4
      %v4416 = vshll.u32 %v4396, 16
      %v4418 = vrot.slane %v4416, 5
      %v4419 = vor.u32 %v4415, %v4418
      %v4420 = vrot.slane %v4419, 4
      %v4422 = vshll.u32 %v4397, 16
      %v4424 = vrot.slane %v4422, 5
      %v4425 = vsel %vm2739, %v4420, %v4424
      %v4427 = vshrl.u32 %v4398, 16
      %v4429 = vrot.slane %v4427, 4
      %v4430 = vshll.u32 %v4398, 16
      %v4432 = vrot.slane %v4430, 5
      %v4433 = vor.u32 %v4429, %v4432
      %v4434 = vrot.slane %v4433, 4
      %v4436 = vshll.u32 %v4399, 16
      %v4438 = vrot.slane %v4436, 5
      %v4439 = vsel %vm2739, %v4434, %v4438
      %v4441 = vshrl.u32 %v4400, 16
      %v4443 = vrot.slane %v4441, 4
      %v4444 = vshll.u32 %v4400, 16
      %v4446 = vrot.slane %v4444, 5
      %v4447 = vor.u32 %v4443, %v4446
      %v4448 = vrot.slane %v4447, 4
      %v4450 = vshll.u32 %v4401, 16
      %v4452 = vrot.slane %v4450, 5
      %v4453 = vsel %vm2739, %v4448, %v4452
      %v4455 = vshrl.u32 %v4402, 16
      %v4457 = vrot.slane %v4455, 4
      %v4458 = vshll.u32 %v4402, 16
      %v4460 = vrot.slane %v4458, 5
      %v4461 = vor.u32 %v4457, %v4460
      %v4462 = vrot.slane %v4461, 4
      %v4464 = vshll.u32 %v4403, 16
      %v4466 = vrot.slane %v4464, 5
      %v4467 = vsel %vm2739, %v4462, %v4466
      %v4469 = vshrl.u32 %v4404, 16
      %v4471 = vrot.slane %v4469, 4
      %v4472 = vshll.u32 %v4404, 16
      %v4474 = vrot.slane %v4472, 5
      %v4475 = vor.u32 %v4471, %v4474
      %v4476 = vrot.slane %v4475, 4
      %v4478 = vshll.u32 %v4405, 16
      %v4480 = vrot.slane %v4478, 5
      %v4481 = vsel %vm2739, %v4476, %v4480
      %v4483 = vshrl.u32 %v4406, 16
      %v4485 = vrot.slane %v4483, 4
      %v4486 = vshll.u32 %v4406, 16
      %v4488 = vrot.slane %v4486, 5
      %v4489 = vor.u32 %v4485, %v4488
      %v4490 = vrot.slane %v4489, 4
      %v4492 = vshll.u32 %v4407, 16
      %v4494 = vrot.slane %v4492, 5
      %v4495 = vsel %vm2739, %v4490, %v4494
      %v4497 = vshrl.u32 %v4408, 16
      %v4499 = vrot.slane %v4497, 4
      %v4500 = vshll.u32 %v4408, 16
      %v4502 = vrot.slane %v4500, 5
      %v4503 = vor.u32 %v4499, %v4502
      %v4504 = vrot.slane %v4503, 4
      %v4506 = vshll.u32 %v4409, 16
      %v4508 = vrot.slane %v4506, 5
      %v4509 = vsel %vm2739, %v4504, %v4508
      %v4511 = vshrl.u32 %v4410, 16
      %v4513 = vrot.slane %v4511, 4
      %v4514 = vshll.u32 %v4410, 16
      %v4516 = vrot.slane %v4514, 5
      %v4517 = vor.u32 %v4513, %v4516
      %v4518 = vrot.slane %v4517, 4
      %v4520 = vshll.u32 %v4411, 16
      %v4522 = vrot.slane %v4520, 5
      %v4523 = vsel %vm2739, %v4518, %v4522
      %v4524 = vunpack.c.l.b16 %v4425
      %v4525 = vunpack.c.l.b16 %v4439
      %v4526 = vunpack.c.l.b16 %v4453
      %v4527 = vunpack.c.l.b16 %v4467
      %v4528 = vunpack.c.l.b16 %v4481
      %v4529 = vunpack.c.l.b16 %v4495
      %v4530 = vunpack.c.l.b16 %v4509
      %v4531 = vunpack.c.l.b16 %v4523
      %v4532 = vpack.c.b16 %v4525, %v4524
      %v4533 = vpack.c.b16 %v4527, %v4526
      %v4534 = vpack.c.b16 %v4529, %v4528
      %v4535 = vpack.c.b16 %v4531, %v4530
      %4540 = vst.msk [vmem:[#allocation3 + $0x40] sm:$0xff] %vm2716, %v4532
      %4541 = vst.msk [vmem:[#allocation3 + $0xa8] sm:$0xff] %vm2716, %v4533
      %4542 = vst.msk [vmem:[#allocation3 + $0x110] sm:$0xff] %vm2716, %v4534
      %4543 = vst.msk [vmem:[#allocation3 + $0x178] sm:$0xff] %vm2716, %v4535
      %v4544 = vld [vmem:[%s4351] sm:$0xe]
      %v4545 = vld [vmem:[%s4351 + $0x4] sm:$0x1]
      %v4546 = vld [vmem:[%s4351 + $0x8] sm:$0xe]
      %v4547 = vld [vmem:[%s4351 + $0xc] sm:$0x1]
      %v4548 = vld [vmem:[%s4351 + $0x10] sm:$0xe]
      %v4549 = vld [vmem:[%s4351 + $0x14] sm:$0x1]
      %v4550 = vld [vmem:[%s4351 + $0x18] sm:$0xe]
      %v4551 = vld [vmem:[%s4351 + $0x1c] sm:$0x1]
      %v4552 = vld [vmem:[%s4351 + $0x20] sm:$0xe]
      %v4553 = vld [vmem:[%s4351 + $0x24] sm:$0x1]
      %v4554 = vld [vmem:[%s4351 + $0x28] sm:$0xe]
      %v4555 = vld [vmem:[%s4351 + $0x2c] sm:$0x1]
      %v4556 = vld [vmem:[%s4351 + $0x30] sm:$0xe]
      %v4557 = vld [vmem:[%s4351 + $0x34] sm:$0x1]
      %v4558 = vld [vmem:[%s4351 + $0x38] sm:$0xe]
      %v4559 = vld [vmem:[%s4351 + $0x3c] sm:$0x1]
      %v4576 = vrot.slane %v4544, 5
      %v4577 = vrot.slane %v4576, 4
      %v4578 = vrot.slane %v4545, 5
      %v4579 = vsel %vm2915, %v4577, %v4578
      %v4580 = vrot.slane %v4546, 5
      %v4581 = vrot.slane %v4580, 4
      %v4582 = vrot.slane %v4547, 5
      %v4583 = vsel %vm2915, %v4581, %v4582
      %v4584 = vrot.slane %v4548, 5
      %v4585 = vrot.slane %v4584, 4
      %v4586 = vrot.slane %v4549, 5
      %v4587 = vsel %vm2915, %v4585, %v4586
      %v4588 = vrot.slane %v4550, 5
      %v4589 = vrot.slane %v4588, 4
      %v4590 = vrot.slane %v4551, 5
      %v4591 = vsel %vm2915, %v4589, %v4590
      %v4592 = vrot.slane %v4552, 5
      %v4593 = vrot.slane %v4592, 4
      %v4594 = vrot.slane %v4553, 5
      %v4595 = vsel %vm2915, %v4593, %v4594
      %v4596 = vrot.slane %v4554, 5
      %v4597 = vrot.slane %v4596, 4
      %v4598 = vrot.slane %v4555, 5
      %v4599 = vsel %vm2915, %v4597, %v4598
      %v4600 = vrot.slane %v4556, 5
      %v4601 = vrot.slane %v4600, 4
      %v4602 = vrot.slane %v4557, 5
      %v4603 = vsel %vm2915, %v4601, %v4602
      %v4604 = vrot.slane %v4558, 5
      %v4605 = vrot.slane %v4604, 4
      %v4606 = vrot.slane %v4559, 5
      %v4607 = vsel %vm2915, %v4605, %v4606
      %v4608 = vunpack.c.l.b16 %v4579
      %v4609 = vunpack.c.l.b16 %v4583
      %v4610 = vunpack.c.l.b16 %v4587
      %v4611 = vunpack.c.l.b16 %v4591
      %v4612 = vunpack.c.l.b16 %v4595
      %v4613 = vunpack.c.l.b16 %v4599
      %v4614 = vunpack.c.l.b16 %v4603
      %v4615 = vunpack.c.l.b16 %v4607
      %v4616 = vpack.c.b16 %v4609, %v4608
      %v4617 = vpack.c.b16 %v4611, %v4610
      %v4618 = vpack.c.b16 %v4613, %v4612
      %v4619 = vpack.c.b16 %v4615, %v4614
      %4620 = vrot.lane.b32.xlu0 %v4616, 64
      %v4621 = vpop.permute.xlu0 %4620
      %4622 = vrot.lane.b32.xlu0 %v4617, 64
      %v4623 = vpop.permute.xlu0 %4622
      %4624 = vrot.lane.b32.xlu0 %v4618, 64
      %v4625 = vpop.permute.xlu0 %4624
      %4626 = vrot.lane.b32.xlu0 %v4619, 64
      %v4627 = vpop.permute.xlu0 %4626
      %4632 = vst.msk [vmem:[#allocation3 + $0x40] sm:$0xff] %vm2876, %v4621
      %4633 = vst.msk [vmem:[#allocation3 + $0xa8] sm:$0xff] %vm2876, %v4623
      %4634 = vst.msk [vmem:[#allocation3 + $0x110] sm:$0xff] %vm2876, %v4625
      %4635 = vst.msk [vmem:[#allocation3 + $0x178] sm:$0xff] %vm2876, %v4627
      %v4636 = vld [vmem:[%s4351] sm:$0xe]
      %v4637 = vld [vmem:[%s4351 + $0x4] sm:$0x3]
      %v4638 = vld [vmem:[%s4351 + $0x8] sm:$0xe]
      %v4639 = vld [vmem:[%s4351 + $0xc] sm:$0x3]
      %v4640 = vld [vmem:[%s4351 + $0x10] sm:$0xe]
      %v4641 = vld [vmem:[%s4351 + $0x14] sm:$0x3]
      %v4642 = vld [vmem:[%s4351 + $0x18] sm:$0xe]
      %v4643 = vld [vmem:[%s4351 + $0x1c] sm:$0x3]
      %v4644 = vld [vmem:[%s4351 + $0x20] sm:$0xe]
      %v4645 = vld [vmem:[%s4351 + $0x24] sm:$0x3]
      %v4646 = vld [vmem:[%s4351 + $0x28] sm:$0xe]
      %v4647 = vld [vmem:[%s4351 + $0x2c] sm:$0x3]
      %v4648 = vld [vmem:[%s4351 + $0x30] sm:$0xe]
      %v4649 = vld [vmem:[%s4351 + $0x34] sm:$0x3]
      %v4650 = vld [vmem:[%s4351 + $0x38] sm:$0xe]
      %v4651 = vld [vmem:[%s4351 + $0x3c] sm:$0x3]
      %v4653 = vshrl.u32 %v4636, 16
      %v4655 = vrot.slane %v4653, 5
      %v4656 = vshll.u32 %v4636, 16
      %v4658 = vrot.slane %v4656, 6
      %v4659 = vor.u32 %v4655, %v4658
      %v4660 = vrot.slane %v4659, 4
      %v4662 = vshrl.u32 %v4637, 16
      %v4664 = vrot.slane %v4662, 5
      %v4665 = vshll.u32 %v4637, 16
      %v4667 = vrot.slane %v4665, 6
      %v4668 = vor.u32 %v4664, %v4667
      %v4669 = vsel %vm2986, %v4660, %v4668
      %v4671 = vshrl.u32 %v4638, 16
      %v4673 = vrot.slane %v4671, 5
      %v4674 = vshll.u32 %v4638, 16
      %v4676 = vrot.slane %v4674, 6
      %v4677 = vor.u32 %v4673, %v4676
      %v4678 = vrot.slane %v4677, 4
      %v4680 = vshrl.u32 %v4639, 16
      %v4682 = vrot.slane %v4680, 5
      %v4683 = vshll.u32 %v4639, 16
      %v4685 = vrot.slane %v4683, 6
      %v4686 = vor.u32 %v4682, %v4685
      %v4687 = vsel %vm2986, %v4678, %v4686
      %v4689 = vshrl.u32 %v4640, 16
      %v4691 = vrot.slane %v4689, 5
      %v4692 = vshll.u32 %v4640, 16
      %v4694 = vrot.slane %v4692, 6
      %v4695 = vor.u32 %v4691, %v4694
      %v4696 = vrot.slane %v4695, 4
      %v4698 = vshrl.u32 %v4641, 16
      %v4700 = vrot.slane %v4698, 5
      %v4701 = vshll.u32 %v4641, 16
      %v4703 = vrot.slane %v4701, 6
      %v4704 = vor.u32 %v4700, %v4703
      %v4705 = vsel %vm2986, %v4696, %v4704
      %v4707 = vshrl.u32 %v4642, 16
      %v4709 = vrot.slane %v4707, 5
      %v4710 = vshll.u32 %v4642, 16
      %v4712 = vrot.slane %v4710, 6
      %v4713 = vor.u32 %v4709, %v4712
      %v4714 = vrot.slane %v4713, 4
      %v4716 = vshrl.u32 %v4643, 16
      %v4718 = vrot.slane %v4716, 5
      %v4719 = vshll.u32 %v4643, 16
      %v4721 = vrot.slane %v4719, 6
      %v4722 = vor.u32 %v4718, %v4721
      %v4723 = vsel %vm2986, %v4714, %v4722
      %v4725 = vshrl.u32 %v4644, 16
      %v4727 = vrot.slane %v4725, 5
      %v4728 = vshll.u32 %v4644, 16
      %v4730 = vrot.slane %v4728, 6
      %v4731 = vor.u32 %v4727, %v4730
      %v4732 = vrot.slane %v4731, 4
      %v4734 = vshrl.u32 %v4645, 16
      %v4736 = vrot.slane %v4734, 5
      %v4737 = vshll.u32 %v4645, 16
      %v4739 = vrot.slane %v4737, 6
      %v4740 = vor.u32 %v4736, %v4739
      %v4741 = vsel %vm2986, %v4732, %v4740
      %v4743 = vshrl.u32 %v4646, 16
      %v4745 = vrot.slane %v4743, 5
      %v4746 = vshll.u32 %v4646, 16
      %v4748 = vrot.slane %v4746, 6
      %v4749 = vor.u32 %v4745, %v4748
      %v4750 = vrot.slane %v4749, 4
      %v4752 = vshrl.u32 %v4647, 16
      %v4754 = vrot.slane %v4752, 5
      %v4755 = vshll.u32 %v4647, 16
      %v4757 = vrot.slane %v4755, 6
      %v4758 = vor.u32 %v4754, %v4757
      %v4759 = vsel %vm2986, %v4750, %v4758
      %v4761 = vshrl.u32 %v4648, 16
      %v4763 = vrot.slane %v4761, 5
      %v4764 = vshll.u32 %v4648, 16
      %v4766 = vrot.slane %v4764, 6
      %v4767 = vor.u32 %v4763, %v4766
      %v4768 = vrot.slane %v4767, 4
      %v4770 = vshrl.u32 %v4649, 16
      %v4772 = vrot.slane %v4770, 5
      %v4773 = vshll.u32 %v4649, 16
      %v4775 = vrot.slane %v4773, 6
      %v4776 = vor.u32 %v4772, %v4775
      %v4777 = vsel %vm2986, %v4768, %v4776
      %v4779 = vshrl.u32 %v4650, 16
      %v4781 = vrot.slane %v4779, 5
      %v4782 = vshll.u32 %v4650, 16
      %v4784 = vrot.slane %v4782, 6
      %v4785 = vor.u32 %v4781, %v4784
      %v4786 = vrot.slane %v4785, 4
      %v4788 = vshrl.u32 %v4651, 16
      %v4790 = vrot.slane %v4788, 5
      %v4791 = vshll.u32 %v4651, 16
      %v4793 = vrot.slane %v4791, 6
      %v4794 = vor.u32 %v4790, %v4793
      %v4795 = vsel %vm2986, %v4786, %v4794
      %v4796 = vunpack.c.l.b16 %v4669
      %v4797 = vunpack.c.l.b16 %v4687
      %v4798 = vunpack.c.l.b16 %v4705
      %v4799 = vunpack.c.l.b16 %v4723
      %v4800 = vunpack.c.l.b16 %v4741
      %v4801 = vunpack.c.l.b16 %v4759
      %v4802 = vunpack.c.l.b16 %v4777
      %v4803 = vunpack.c.l.b16 %v4795
      %v4804 = vpack.c.b16 %v4797, %v4796
      %v4805 = vpack.c.b16 %v4799, %v4798
      %v4806 = vpack.c.b16 %v4801, %v4800
      %v4807 = vpack.c.b16 %v4803, %v4802
      %4812 = vst.msk [vmem:[#allocation3 + $0x48] sm:$0xff] %vm2716, %v4804
      %4813 = vst.msk [vmem:[#allocation3 + $0xb0] sm:$0xff] %vm2716, %v4805
      %4814 = vst.msk [vmem:[#allocation3 + $0x118] sm:$0xff] %vm2716, %v4806
      %4815 = vst.msk [vmem:[#allocation3 + $0x180] sm:$0xff] %vm2716, %v4807
      %v4816 = vld [vmem:[%s4351] sm:$0xc]
      %v4817 = vld [vmem:[%s4351 + $0x4] sm:$0x3]
      %v4818 = vld [vmem:[%s4351 + $0x8] sm:$0xc]
      %v4819 = vld [vmem:[%s4351 + $0xc] sm:$0x3]
      %v4820 = vld [vmem:[%s4351 + $0x10] sm:$0xc]
      %v4821 = vld [vmem:[%s4351 + $0x14] sm:$0x3]
      %v4822 = vld [vmem:[%s4351 + $0x18] sm:$0xc]
      %v4823 = vld [vmem:[%s4351 + $0x1c] sm:$0x3]
      %v4824 = vld [vmem:[%s4351 + $0x20] sm:$0xc]
      %v4825 = vld [vmem:[%s4351 + $0x24] sm:$0x3]
      %v4826 = vld [vmem:[%s4351 + $0x28] sm:$0xc]
      %v4827 = vld [vmem:[%s4351 + $0x2c] sm:$0x3]
      %v4828 = vld [vmem:[%s4351 + $0x30] sm:$0xc]
      %v4829 = vld [vmem:[%s4351 + $0x34] sm:$0x3]
      %v4830 = vld [vmem:[%s4351 + $0x38] sm:$0xc]
      %v4831 = vld [vmem:[%s4351 + $0x3c] sm:$0x3]
      %v4848 = vrot.slane %v4816, 6
      %v4849 = vrot.slane %v4848, 4
      %v4850 = vrot.slane %v4817, 6
      %v4851 = vsel %vm3193, %v4849, %v4850
      %v4852 = vrot.slane %v4818, 6
      %v4853 = vrot.slane %v4852, 4
      %v4854 = vrot.slane %v4819, 6
      %v4855 = vsel %vm3193, %v4853, %v4854
      %v4856 = vrot.slane %v4820, 6
      %v4857 = vrot.slane %v4856, 4
      %v4858 = vrot.slane %v4821, 6
      %v4859 = vsel %vm3193, %v4857, %v4858
      %v4860 = vrot.slane %v4822, 6
      %v4861 = vrot.slane %v4860, 4
      %v4862 = vrot.slane %v4823, 6
      %v4863 = vsel %vm3193, %v4861, %v4862
      %v4864 = vrot.slane %v4824, 6
      %v4865 = vrot.slane %v4864, 4
      %v4866 = vrot.slane %v4825, 6
      %v4867 = vsel %vm3193, %v4865, %v4866
      %v4868 = vrot.slane %v4826, 6
      %v4869 = vrot.slane %v4868, 4
      %v4870 = vrot.slane %v4827, 6
      %v4871 = vsel %vm3193, %v4869, %v4870
      %v4872 = vrot.slane %v4828, 6
      %v4873 = vrot.slane %v4872, 4
      %v4874 = vrot.slane %v4829, 6
      %v4875 = vsel %vm3193, %v4873, %v4874
      %v4876 = vrot.slane %v4830, 6
      %v4877 = vrot.slane %v4876, 4
      %v4878 = vrot.slane %v4831, 6
      %v4879 = vsel %vm3193, %v4877, %v4878
      %v4880 = vunpack.c.l.b16 %v4851
      %v4881 = vunpack.c.l.b16 %v4855
      %v4882 = vunpack.c.l.b16 %v4859
      %v4883 = vunpack.c.l.b16 %v4863
      %v4884 = vunpack.c.l.b16 %v4867
      %v4885 = vunpack.c.l.b16 %v4871
      %v4886 = vunpack.c.l.b16 %v4875
      %v4887 = vunpack.c.l.b16 %v4879
      %v4888 = vpack.c.b16 %v4881, %v4880
      %v4889 = vpack.c.b16 %v4883, %v4882
      %v4890 = vpack.c.b16 %v4885, %v4884
      %v4891 = vpack.c.b16 %v4887, %v4886
      %4892 = vrot.lane.b32.xlu0 %v4888, 64
      %v4893 = vpop.permute.xlu0 %4892
      %4894 = vrot.lane.b32.xlu0 %v4889, 64
      %v4895 = vpop.permute.xlu0 %4894
      %4896 = vrot.lane.b32.xlu0 %v4890, 64
      %v4897 = vpop.permute.xlu0 %4896
      %4898 = vrot.lane.b32.xlu0 %v4891, 64
      %v4899 = vpop.permute.xlu0 %4898
      %4904 = vst.msk [vmem:[#allocation3 + $0x48] sm:$0xff] %vm2876, %v4893
      %4905 = vst.msk [vmem:[#allocation3 + $0xb0] sm:$0xff] %vm2876, %v4895
      %4906 = vst.msk [vmem:[#allocation3 + $0x118] sm:$0xff] %vm2876, %v4897
      %4907 = vst.msk [vmem:[#allocation3 + $0x180] sm:$0xff] %vm2876, %v4899
      %s4908 = scalar_lea.vmem [#allocation2], 32
      %v4909 = vld [vmem:[%s4908] sm:$0xf]
      %v4910 = vld [vmem:[%s4908 + $0x8] sm:$0xf]
      %v4911 = vld [vmem:[%s4908 + $0x10] sm:$0xf]
      %v4912 = vld [vmem:[%s4908 + $0x18] sm:$0xf]
      %v4913 = vld [vmem:[%s4908 + $0x20] sm:$0xf]
      %v4914 = vld [vmem:[%s4908 + $0x28] sm:$0xf]
      %v4915 = vld [vmem:[%s4908 + $0x30] sm:$0xf]
      %v4916 = vld [vmem:[%s4908 + $0x38] sm:$0xf]
      %v4925 = vunpack.c.l.b16 %v4909
      %v4926 = vunpack.c.l.b16 %v4910
      %v4927 = vunpack.c.l.b16 %v4911
      %v4928 = vunpack.c.l.b16 %v4912
      %v4929 = vunpack.c.l.b16 %v4913
      %v4930 = vunpack.c.l.b16 %v4914
      %v4931 = vunpack.c.l.b16 %v4915
      %v4932 = vunpack.c.l.b16 %v4916
      %v4933 = vpack.c.b16 %v4926, %v4925
      %v4934 = vpack.c.b16 %v4928, %v4927
      %v4935 = vpack.c.b16 %v4930, %v4929
      %v4936 = vpack.c.b16 %v4932, %v4931
      %4941 = vst.msk [vmem:[#allocation3 + $0x50] sm:$0xff] %vm2716, %v4933
      %4942 = vst.msk [vmem:[#allocation3 + $0xb8] sm:$0xff] %vm2716, %v4934
      %4943 = vst.msk [vmem:[#allocation3 + $0x120] sm:$0xff] %vm2716, %v4935
      %4944 = vst.msk [vmem:[#allocation3 + $0x188] sm:$0xff] %vm2716, %v4936
      %v4945 = vld [vmem:[%s4908] sm:$0xf]
      %v4946 = vld [vmem:[%s4908 + $0x4] sm:$0x1]
      %v4947 = vld [vmem:[%s4908 + $0x8] sm:$0xf]
      %v4948 = vld [vmem:[%s4908 + $0xc] sm:$0x1]
      %v4949 = vld [vmem:[%s4908 + $0x10] sm:$0xf]
      %v4950 = vld [vmem:[%s4908 + $0x14] sm:$0x1]
      %v4951 = vld [vmem:[%s4908 + $0x18] sm:$0xf]
      %v4952 = vld [vmem:[%s4908 + $0x1c] sm:$0x1]
      %v4953 = vld [vmem:[%s4908 + $0x20] sm:$0xf]
      %v4954 = vld [vmem:[%s4908 + $0x24] sm:$0x1]
      %v4955 = vld [vmem:[%s4908 + $0x28] sm:$0xf]
      %v4956 = vld [vmem:[%s4908 + $0x2c] sm:$0x1]
      %v4957 = vld [vmem:[%s4908 + $0x30] sm:$0xf]
      %v4958 = vld [vmem:[%s4908 + $0x34] sm:$0x1]
      %v4959 = vld [vmem:[%s4908 + $0x38] sm:$0xf]
      %v4960 = vld [vmem:[%s4908 + $0x3c] sm:$0x1]
      %v4962 = vshrl.u32 %v4945, 16
      %v4964 = vrot.slane %v4962, 4
      %v4965 = vshll.u32 %v4945, 16
      %v4967 = vrot.slane %v4965, 5
      %v4968 = vor.u32 %v4964, %v4967
      %v4969 = vrot.slane %v4968, 4
      %v4971 = vshll.u32 %v4946, 16
      %v4973 = vrot.slane %v4971, 5
      %v4974 = vsel %vm2739, %v4969, %v4973
      %v4976 = vshrl.u32 %v4947, 16
      %v4978 = vrot.slane %v4976, 4
      %v4979 = vshll.u32 %v4947, 16
      %v4981 = vrot.slane %v4979, 5
      %v4982 = vor.u32 %v4978, %v4981
      %v4983 = vrot.slane %v4982, 4
      %v4985 = vshll.u32 %v4948, 16
      %v4987 = vrot.slane %v4985, 5
      %v4988 = vsel %vm2739, %v4983, %v4987
      %v4990 = vshrl.u32 %v4949, 16
      %v4992 = vrot.slane %v4990, 4
      %v4993 = vshll.u32 %v4949, 16
      %v4995 = vrot.slane %v4993, 5
      %v4996 = vor.u32 %v4992, %v4995
      %v4997 = vrot.slane %v4996, 4
      %v4999 = vshll.u32 %v4950, 16
      %v5001 = vrot.slane %v4999, 5
      %v5002 = vsel %vm2739, %v4997, %v5001
      %v5004 = vshrl.u32 %v4951, 16
      %v5006 = vrot.slane %v5004, 4
      %v5007 = vshll.u32 %v4951, 16
      %v5009 = vrot.slane %v5007, 5
      %v5010 = vor.u32 %v5006, %v5009
      %v5011 = vrot.slane %v5010, 4
      %v5013 = vshll.u32 %v4952, 16
      %v5015 = vrot.slane %v5013, 5
      %v5016 = vsel %vm2739, %v5011, %v5015
      %v5018 = vshrl.u32 %v4953, 16
      %v5020 = vrot.slane %v5018, 4
      %v5021 = vshll.u32 %v4953, 16
      %v5023 = vrot.slane %v5021, 5
      %v5024 = vor.u32 %v5020, %v5023
      %v5025 = vrot.slane %v5024, 4
      %v5027 = vshll.u32 %v4954, 16
      %v5029 = vrot.slane %v5027, 5
      %v5030 = vsel %vm2739, %v5025, %v5029
      %v5032 = vshrl.u32 %v4955, 16
      %v5034 = vrot.slane %v5032, 4
      %v5035 = vshll.u32 %v4955, 16
      %v5037 = vrot.slane %v5035, 5
      %v5038 = vor.u32 %v5034, %v5037
      %v5039 = vrot.slane %v5038, 4
      %v5041 = vshll.u32 %v4956, 16
      %v5043 = vrot.slane %v5041, 5
      %v5044 = vsel %vm2739, %v5039, %v5043
      %v5046 = vshrl.u32 %v4957, 16
      %v5048 = vrot.slane %v5046, 4
      %v5049 = vshll.u32 %v4957, 16
      %v5051 = vrot.slane %v5049, 5
      %v5052 = vor.u32 %v5048, %v5051
      %v5053 = vrot.slane %v5052, 4
      %v5055 = vshll.u32 %v4958, 16
      %v5057 = vrot.slane %v5055, 5
      %v5058 = vsel %vm2739, %v5053, %v5057
      %v5060 = vshrl.u32 %v4959, 16
      %v5062 = vrot.slane %v5060, 4
      %v5063 = vshll.u32 %v4959, 16
      %v5065 = vrot.slane %v5063, 5
      %v5066 = vor.u32 %v5062, %v5065
      %v5067 = vrot.slane %v5066, 4
      %v5069 = vshll.u32 %v4960, 16
      %v5071 = vrot.slane %v5069, 5
      %v5072 = vsel %vm2739, %v5067, %v5071
      %v5073 = vunpack.c.l.b16 %v4974
      %v5074 = vunpack.c.l.b16 %v4988
      %v5075 = vunpack.c.l.b16 %v5002
      %v5076 = vunpack.c.l.b16 %v5016
      %v5077 = vunpack.c.l.b16 %v5030
      %v5078 = vunpack.c.l.b16 %v5044
      %v5079 = vunpack.c.l.b16 %v5058
      %v5080 = vunpack.c.l.b16 %v5072
      %v5081 = vpack.c.b16 %v5074, %v5073
      %v5082 = vpack.c.b16 %v5076, %v5075
      %v5083 = vpack.c.b16 %v5078, %v5077
      %v5084 = vpack.c.b16 %v5080, %v5079
      %5085 = vrot.lane.b32.xlu0 %v5081, 64
      %v5086 = vpop.permute.xlu0 %5085
      %5087 = vrot.lane.b32.xlu0 %v5082, 64
      %v5088 = vpop.permute.xlu0 %5087
      %5089 = vrot.lane.b32.xlu0 %v5083, 64
      %v5090 = vpop.permute.xlu0 %5089
      %5091 = vrot.lane.b32.xlu0 %v5084, 64
      %v5092 = vpop.permute.xlu0 %5091
      %5097 = vst.msk [vmem:[#allocation3 + $0x50] sm:$0xff] %vm2876, %v5086
      %5098 = vst.msk [vmem:[#allocation3 + $0xb8] sm:$0xff] %vm2876, %v5088
      %5099 = vst.msk [vmem:[#allocation3 + $0x120] sm:$0xff] %vm2876, %v5090
      %5100 = vst.msk [vmem:[#allocation3 + $0x188] sm:$0xff] %vm2876, %v5092
      %v5101 = vld [vmem:[%s4908] sm:$0xe]
      %v5102 = vld [vmem:[%s4908 + $0x4] sm:$0x1]
      %v5103 = vld [vmem:[%s4908 + $0x8] sm:$0xe]
      %v5104 = vld [vmem:[%s4908 + $0xc] sm:$0x1]
      %v5105 = vld [vmem:[%s4908 + $0x10] sm:$0xe]
      %v5106 = vld [vmem:[%s4908 + $0x14] sm:$0x1]
      %v5107 = vld [vmem:[%s4908 + $0x18] sm:$0xe]
      %v5108 = vld [vmem:[%s4908 + $0x1c] sm:$0x1]
      %v5109 = vld [vmem:[%s4908 + $0x20] sm:$0xe]
      %v5110 = vld [vmem:[%s4908 + $0x24] sm:$0x1]
      %v5111 = vld [vmem:[%s4908 + $0x28] sm:$0xe]
      %v5112 = vld [vmem:[%s4908 + $0x2c] sm:$0x1]
      %v5113 = vld [vmem:[%s4908 + $0x30] sm:$0xe]
      %v5114 = vld [vmem:[%s4908 + $0x34] sm:$0x1]
      %v5115 = vld [vmem:[%s4908 + $0x38] sm:$0xe]
      %v5116 = vld [vmem:[%s4908 + $0x3c] sm:$0x1]
      %v5133 = vrot.slane %v5101, 5
      %v5134 = vrot.slane %v5133, 4
      %v5135 = vrot.slane %v5102, 5
      %v5136 = vsel %vm2915, %v5134, %v5135
      %v5137 = vrot.slane %v5103, 5
      %v5138 = vrot.slane %v5137, 4
      %v5139 = vrot.slane %v5104, 5
      %v5140 = vsel %vm2915, %v5138, %v5139
      %v5141 = vrot.slane %v5105, 5
      %v5142 = vrot.slane %v5141, 4
      %v5143 = vrot.slane %v5106, 5
      %v5144 = vsel %vm2915, %v5142, %v5143
      %v5145 = vrot.slane %v5107, 5
      %v5146 = vrot.slane %v5145, 4
      %v5147 = vrot.slane %v5108, 5
      %v5148 = vsel %vm2915, %v5146, %v5147
      %v5149 = vrot.slane %v5109, 5
      %v5150 = vrot.slane %v5149, 4
      %v5151 = vrot.slane %v5110, 5
      %v5152 = vsel %vm2915, %v5150, %v5151
      %v5153 = vrot.slane %v5111, 5
      %v5154 = vrot.slane %v5153, 4
      %v5155 = vrot.slane %v5112, 5
      %v5156 = vsel %vm2915, %v5154, %v5155
      %v5157 = vrot.slane %v5113, 5
      %v5158 = vrot.slane %v5157, 4
      %v5159 = vrot.slane %v5114, 5
      %v5160 = vsel %vm2915, %v5158, %v5159
      %v5161 = vrot.slane %v5115, 5
      %v5162 = vrot.slane %v5161, 4
      %v5163 = vrot.slane %v5116, 5
      %v5164 = vsel %vm2915, %v5162, %v5163
      %v5165 = vunpack.c.l.b16 %v5136
      %v5166 = vunpack.c.l.b16 %v5140
      %v5167 = vunpack.c.l.b16 %v5144
      %v5168 = vunpack.c.l.b16 %v5148
      %v5169 = vunpack.c.l.b16 %v5152
      %v5170 = vunpack.c.l.b16 %v5156
      %v5171 = vunpack.c.l.b16 %v5160
      %v5172 = vunpack.c.l.b16 %v5164
      %v5173 = vpack.c.b16 %v5166, %v5165
      %v5174 = vpack.c.b16 %v5168, %v5167
      %v5175 = vpack.c.b16 %v5170, %v5169
      %v5176 = vpack.c.b16 %v5172, %v5171
      %5181 = vst.msk [vmem:[#allocation3 + $0x58] sm:$0xff] %vm2716, %v5173
      %5182 = vst.msk [vmem:[#allocation3 + $0xc0] sm:$0xff] %vm2716, %v5174
      %5183 = vst.msk [vmem:[#allocation3 + $0x128] sm:$0xff] %vm2716, %v5175
      %5184 = vst.msk [vmem:[#allocation3 + $0x190] sm:$0xff] %vm2716, %v5176
      %v5185 = vld [vmem:[%s4908] sm:$0xe]
      %v5186 = vld [vmem:[%s4908 + $0x4] sm:$0x3]
      %v5187 = vld [vmem:[%s4908 + $0x8] sm:$0xe]
      %v5188 = vld [vmem:[%s4908 + $0xc] sm:$0x3]
      %v5189 = vld [vmem:[%s4908 + $0x10] sm:$0xe]
      %v5190 = vld [vmem:[%s4908 + $0x14] sm:$0x3]
      %v5191 = vld [vmem:[%s4908 + $0x18] sm:$0xe]
      %v5192 = vld [vmem:[%s4908 + $0x1c] sm:$0x3]
      %v5193 = vld [vmem:[%s4908 + $0x20] sm:$0xe]
      %v5194 = vld [vmem:[%s4908 + $0x24] sm:$0x3]
      %v5195 = vld [vmem:[%s4908 + $0x28] sm:$0xe]
      %v5196 = vld [vmem:[%s4908 + $0x2c] sm:$0x3]
      %v5197 = vld [vmem:[%s4908 + $0x30] sm:$0xe]
      %v5198 = vld [vmem:[%s4908 + $0x34] sm:$0x3]
      %v5199 = vld [vmem:[%s4908 + $0x38] sm:$0xe]
      %v5200 = vld [vmem:[%s4908 + $0x3c] sm:$0x3]
      %v5202 = vshrl.u32 %v5185, 16
      %v5204 = vrot.slane %v5202, 5
      %v5205 = vshll.u32 %v5185, 16
      %v5207 = vrot.slane %v5205, 6
      %v5208 = vor.u32 %v5204, %v5207
      %v5209 = vrot.slane %v5208, 4
      %v5211 = vshrl.u32 %v5186, 16
      %v5213 = vrot.slane %v5211, 5
      %v5214 = vshll.u32 %v5186, 16
      %v5216 = vrot.slane %v5214, 6
      %v5217 = vor.u32 %v5213, %v5216
      %v5218 = vsel %vm2986, %v5209, %v5217
      %v5220 = vshrl.u32 %v5187, 16
      %v5222 = vrot.slane %v5220, 5
      %v5223 = vshll.u32 %v5187, 16
      %v5225 = vrot.slane %v5223, 6
      %v5226 = vor.u32 %v5222, %v5225
      %v5227 = vrot.slane %v5226, 4
      %v5229 = vshrl.u32 %v5188, 16
      %v5231 = vrot.slane %v5229, 5
      %v5232 = vshll.u32 %v5188, 16
      %v5234 = vrot.slane %v5232, 6
      %v5235 = vor.u32 %v5231, %v5234
      %v5236 = vsel %vm2986, %v5227, %v5235
      %v5238 = vshrl.u32 %v5189, 16
      %v5240 = vrot.slane %v5238, 5
      %v5241 = vshll.u32 %v5189, 16
      %v5243 = vrot.slane %v5241, 6
      %v5244 = vor.u32 %v5240, %v5243
      %v5245 = vrot.slane %v5244, 4
      %v5247 = vshrl.u32 %v5190, 16
      %v5249 = vrot.slane %v5247, 5
      %v5250 = vshll.u32 %v5190, 16
      %v5252 = vrot.slane %v5250, 6
      %v5253 = vor.u32 %v5249, %v5252
      %v5254 = vsel %vm2986, %v5245, %v5253
      %v5256 = vshrl.u32 %v5191, 16
      %v5258 = vrot.slane %v5256, 5
      %v5259 = vshll.u32 %v5191, 16
      %v5261 = vrot.slane %v5259, 6
      %v5262 = vor.u32 %v5258, %v5261
      %v5263 = vrot.slane %v5262, 4
      %v5265 = vshrl.u32 %v5192, 16
      %v5267 = vrot.slane %v5265, 5
      %v5268 = vshll.u32 %v5192, 16
      %v5270 = vrot.slane %v5268, 6
      %v5271 = vor.u32 %v5267, %v5270
      %v5272 = vsel %vm2986, %v5263, %v5271
      %v5274 = vshrl.u32 %v5193, 16
      %v5276 = vrot.slane %v5274, 5
      %v5277 = vshll.u32 %v5193, 16
      %v5279 = vrot.slane %v5277, 6
      %v5280 = vor.u32 %v5276, %v5279
      %v5281 = vrot.slane %v5280, 4
      %v5283 = vshrl.u32 %v5194, 16
      %v5285 = vrot.slane %v5283, 5
      %v5286 = vshll.u32 %v5194, 16
      %v5288 = vrot.slane %v5286, 6
      %v5289 = vor.u32 %v5285, %v5288
      %v5290 = vsel %vm2986, %v5281, %v5289
      %v5292 = vshrl.u32 %v5195, 16
      %v5294 = vrot.slane %v5292, 5
      %v5295 = vshll.u32 %v5195, 16
      %v5297 = vrot.slane %v5295, 6
      %v5298 = vor.u32 %v5294, %v5297
      %v5299 = vrot.slane %v5298, 4
      %v5301 = vshrl.u32 %v5196, 16
      %v5303 = vrot.slane %v5301, 5
      %v5304 = vshll.u32 %v5196, 16
      %v5306 = vrot.slane %v5304, 6
      %v5307 = vor.u32 %v5303, %v5306
      %v5308 = vsel %vm2986, %v5299, %v5307
      %v5310 = vshrl.u32 %v5197, 16
      %v5312 = vrot.slane %v5310, 5
      %v5313 = vshll.u32 %v5197, 16
      %v5315 = vrot.slane %v5313, 6
      %v5316 = vor.u32 %v5312, %v5315
      %v5317 = vrot.slane %v5316, 4
      %v5319 = vshrl.u32 %v5198, 16
      %v5321 = vrot.slane %v5319, 5
      %v5322 = vshll.u32 %v5198, 16
      %v5324 = vrot.slane %v5322, 6
      %v5325 = vor.u32 %v5321, %v5324
      %v5326 = vsel %vm2986, %v5317, %v5325
      %v5328 = vshrl.u32 %v5199, 16
      %v5330 = vrot.slane %v5328, 5
      %v5331 = vshll.u32 %v5199, 16
      %v5333 = vrot.slane %v5331, 6
      %v5334 = vor.u32 %v5330, %v5333
      %v5335 = vrot.slane %v5334, 4
      %v5337 = vshrl.u32 %v5200, 16
      %v5339 = vrot.slane %v5337, 5
      %v5340 = vshll.u32 %v5200, 16
      %v5342 = vrot.slane %v5340, 6
      %v5343 = vor.u32 %v5339, %v5342
      %v5344 = vsel %vm2986, %v5335, %v5343
      %v5345 = vunpack.c.l.b16 %v5218
      %v5346 = vunpack.c.l.b16 %v5236
      %v5347 = vunpack.c.l.b16 %v5254
      %v5348 = vunpack.c.l.b16 %v5272
      %v5349 = vunpack.c.l.b16 %v5290
      %v5350 = vunpack.c.l.b16 %v5308
      %v5351 = vunpack.c.l.b16 %v5326
      %v5352 = vunpack.c.l.b16 %v5344
      %v5353 = vpack.c.b16 %v5346, %v5345
      %v5354 = vpack.c.b16 %v5348, %v5347
      %v5355 = vpack.c.b16 %v5350, %v5349
      %v5356 = vpack.c.b16 %v5352, %v5351
      %5357 = vrot.lane.b32.xlu0 %v5353, 64
      %v5358 = vpop.permute.xlu0 %5357
      %5359 = vrot.lane.b32.xlu0 %v5354, 64
      %v5360 = vpop.permute.xlu0 %5359
      %5361 = vrot.lane.b32.xlu0 %v5355, 64
      %v5362 = vpop.permute.xlu0 %5361
      %5363 = vrot.lane.b32.xlu0 %v5356, 64
      %v5364 = vpop.permute.xlu0 %5363
      %5369 = vst.msk [vmem:[#allocation3 + $0x58] sm:$0xff] %vm2876, %v5358
      %5370 = vst.msk [vmem:[#allocation3 + $0xc0] sm:$0xff] %vm2876, %v5360
      %5371 = vst.msk [vmem:[#allocation3 + $0x128] sm:$0xff] %vm2876, %v5362
      %5372 = vst.msk [vmem:[#allocation3 + $0x190] sm:$0xff] %vm2876, %v5364
      %v5373 = vld [vmem:[%s4908] sm:$0xc]
      %v5374 = vld [vmem:[%s4908 + $0x4] sm:$0x3]
      %v5375 = vld [vmem:[%s4908 + $0x8] sm:$0xc]
      %v5376 = vld [vmem:[%s4908 + $0xc] sm:$0x3]
      %v5377 = vld [vmem:[%s4908 + $0x10] sm:$0xc]
      %v5378 = vld [vmem:[%s4908 + $0x14] sm:$0x3]
      %v5379 = vld [vmem:[%s4908 + $0x18] sm:$0xc]
      %v5380 = vld [vmem:[%s4908 + $0x1c] sm:$0x3]
      %v5381 = vld [vmem:[%s4908 + $0x20] sm:$0xc]
      %v5382 = vld [vmem:[%s4908 + $0x24] sm:$0x3]
      %v5383 = vld [vmem:[%s4908 + $0x28] sm:$0xc]
      %v5384 = vld [vmem:[%s4908 + $0x2c] sm:$0x3]
      %v5385 = vld [vmem:[%s4908 + $0x30] sm:$0xc]
      %v5386 = vld [vmem:[%s4908 + $0x34] sm:$0x3]
      %v5387 = vld [vmem:[%s4908 + $0x38] sm:$0xc]
      %v5388 = vld [vmem:[%s4908 + $0x3c] sm:$0x3]
      %v5405 = vrot.slane %v5373, 6
      %v5406 = vrot.slane %v5405, 4
      %v5407 = vrot.slane %v5374, 6
      %v5408 = vsel %vm3193, %v5406, %v5407
      %v5409 = vrot.slane %v5375, 6
      %v5410 = vrot.slane %v5409, 4
      %v5411 = vrot.slane %v5376, 6
      %v5412 = vsel %vm3193, %v5410, %v5411
      %v5413 = vrot.slane %v5377, 6
      %v5414 = vrot.slane %v5413, 4
      %v5415 = vrot.slane %v5378, 6
      %v5416 = vsel %vm3193, %v5414, %v5415
      %v5417 = vrot.slane %v5379, 6
      %v5418 = vrot.slane %v5417, 4
      %v5419 = vrot.slane %v5380, 6
      %v5420 = vsel %vm3193, %v5418, %v5419
      %v5421 = vrot.slane %v5381, 6
      %v5422 = vrot.slane %v5421, 4
      %v5423 = vrot.slane %v5382, 6
      %v5424 = vsel %vm3193, %v5422, %v5423
      %v5425 = vrot.slane %v5383, 6
      %v5426 = vrot.slane %v5425, 4
      %v5427 = vrot.slane %v5384, 6
      %v5428 = vsel %vm3193, %v5426, %v5427
      %v5429 = vrot.slane %v5385, 6
      %v5430 = vrot.slane %v5429, 4
      %v5431 = vrot.slane %v5386, 6
      %v5432 = vsel %vm3193, %v5430, %v5431
      %v5433 = vrot.slane %v5387, 6
      %v5434 = vrot.slane %v5433, 4
      %v5435 = vrot.slane %v5388, 6
      %v5436 = vsel %vm3193, %v5434, %v5435
      %v5437 = vunpack.c.l.b16 %v5408
      %v5438 = vunpack.c.l.b16 %v5412
      %v5439 = vunpack.c.l.b16 %v5416
      %v5440 = vunpack.c.l.b16 %v5420
      %v5441 = vunpack.c.l.b16 %v5424
      %v5442 = vunpack.c.l.b16 %v5428
      %v5443 = vunpack.c.l.b16 %v5432
      %v5444 = vunpack.c.l.b16 %v5436
      %v5445 = vpack.c.b16 %v5438, %v5437
      %v5446 = vpack.c.b16 %v5440, %v5439
      %v5447 = vpack.c.b16 %v5442, %v5441
      %v5448 = vpack.c.b16 %v5444, %v5443
      %5453 = vst.msk [vmem:[#allocation3 + $0x60] sm:$0xff] %vm2716, %v5445
      %5454 = vst.msk [vmem:[#allocation3 + $0xc8] sm:$0xff] %vm2716, %v5446
      %5455 = vst.msk [vmem:[#allocation3 + $0x130] sm:$0xff] %vm2716, %v5447
      %5456 = vst.msk [vmem:[#allocation3 + $0x198] sm:$0xff] %vm2716, %v5448
      %v5457 = vld [vmem:[#allocation3] sm:$0xff]
      %v5458 = vld [vmem:[#allocation3 + $0x8] sm:$0xff]
      %v5459 = vld [vmem:[#allocation3 + $0x10] sm:$0xff]
      %v5460 = vld [vmem:[#allocation3 + $0x18] sm:$0xff]
      %v5461 = vld [vmem:[#allocation3 + $0x20] sm:$0xff]
      %v5462 = vld [vmem:[#allocation3 + $0x28] sm:$0xff]
      %v5463 = vld [vmem:[#allocation3 + $0x30] sm:$0xff]
      %v5464 = vld [vmem:[#allocation3 + $0x38] sm:$0xff]
      %v5465 = vld [vmem:[#allocation3 + $0x40] sm:$0xff]
      %v5466 = vld [vmem:[#allocation3 + $0x48] sm:$0xff]
      %v5467 = vld [vmem:[#allocation3 + $0x50] sm:$0xff]
      %v5468 = vld [vmem:[#allocation3 + $0x58] sm:$0xff]
      %v5469 = vld [vmem:[#allocation3 + $0x60] sm:$0xff]
      %v5470 = vld [vmem:[#allocation3 + $0x68] sm:$0xff]
      %v5471 = vld [vmem:[#allocation3 + $0x70] sm:$0xff]
      %v5472 = vld [vmem:[#allocation3 + $0x78] sm:$0xff]
      %v5473 = vld [vmem:[#allocation3 + $0x80] sm:$0xff]
      %v5474 = vld [vmem:[#allocation3 + $0x88] sm:$0xff]
      %v5475 = vld [vmem:[#allocation3 + $0x90] sm:$0xff]
      %v5476 = vld [vmem:[#allocation3 + $0x98] sm:$0xff]
      %v5477 = vld [vmem:[#allocation3 + $0xa0] sm:$0xff]
      %v5478 = vld [vmem:[#allocation3 + $0xa8] sm:$0xff]
      %v5479 = vld [vmem:[#allocation3 + $0xb0] sm:$0xff]
      %v5480 = vld [vmem:[#allocation3 + $0xb8] sm:$0xff]
      %v5481 = vld [vmem:[#allocation3 + $0xc0] sm:$0xff]
      %v5482 = vld [vmem:[#allocation3 + $0xc8] sm:$0xff]
      %v5483 = vld [vmem:[#allocation3 + $0xd0] sm:$0xff]
      %v5484 = vld [vmem:[#allocation3 + $0xd8] sm:$0xff]
      %v5485 = vld [vmem:[#allocation3 + $0xe0] sm:$0xff]
      %v5486 = vld [vmem:[#allocation3 + $0xe8] sm:$0xff]
      %v5487 = vld [vmem:[#allocation3 + $0xf0] sm:$0xff]
      %v5488 = vld [vmem:[#allocation3 + $0xf8] sm:$0xff]
      %v5489 = vld [vmem:[#allocation3 + $0x100] sm:$0xff]
      %v5490 = vld [vmem:[#allocation3 + $0x108] sm:$0xff]
      %v5491 = vld [vmem:[#allocation3 + $0x110] sm:$0xff]
      %v5492 = vld [vmem:[#allocation3 + $0x118] sm:$0xff]
      %v5493 = vld [vmem:[#allocation3 + $0x120] sm:$0xff]
      %v5494 = vld [vmem:[#allocation3 + $0x128] sm:$0xff]
      %v5495 = vld [vmem:[#allocation3 + $0x130] sm:$0xff]
      %v5496 = vld [vmem:[#allocation3 + $0x138] sm:$0xff]
      %v5497 = vld [vmem:[#allocation3 + $0x140] sm:$0xff]
      %v5498 = vld [vmem:[#allocation3 + $0x148] sm:$0xff]
      %v5499 = vld [vmem:[#allocation3 + $0x150] sm:$0xff]
      %v5500 = vld [vmem:[#allocation3 + $0x158] sm:$0xff]
      %v5501 = vld [vmem:[#allocation3 + $0x160] sm:$0xff]
      %v5502 = vld [vmem:[#allocation3 + $0x168] sm:$0xff]
      %v5503 = vld [vmem:[#allocation3 + $0x170] sm:$0xff]
      %v5504 = vld [vmem:[#allocation3 + $0x178] sm:$0xff]
      %v5505 = vld [vmem:[#allocation3 + $0x180] sm:$0xff]
      %v5506 = vld [vmem:[#allocation3 + $0x188] sm:$0xff]
      %v5507 = vld [vmem:[#allocation3 + $0x190] sm:$0xff]
      %v5508 = vld [vmem:[#allocation3 + $0x198] sm:$0xff]
      %v5509 = vld [vmem:[%s3] sm:$0xf]
      %v5510 = vld [vmem:[%s3 + $0x4] sm:$0xf]
      %v5511 = vld [vmem:[%s3 + $0x8] sm:$0xf]
      %v5512 = vld [vmem:[%s3 + $0xc] sm:$0xf]
      %v5513 = vld [vmem:[%s3 + $0x10] sm:$0xf]
      %v5514 = vld [vmem:[%s3 + $0x14] sm:$0xf]
      %v5515 = vld [vmem:[%s3 + $0x18] sm:$0xf]
      %v5516 = vld [vmem:[%s3 + $0x1c] sm:$0xf]
      %v5517 = vld [vmem:[%s3 + $0x20] sm:$0xf]
      %v5518 = vld [vmem:[%s3 + $0x24] sm:$0xf]
      %v5519 = vld [vmem:[%s3 + $0x28] sm:$0xf]
      %v5520 = vld [vmem:[%s3 + $0x2c] sm:$0xf]
      %v5521 = vld [vmem:[%s3 + $0x30] sm:$0xf]
      %v5522 = vld [vmem:[%s3 + $0x34] sm:$0xf]
      %v5523 = vld [vmem:[%s3 + $0x38] sm:$0xf]
      %v5524 = vld [vmem:[%s3 + $0x3c] sm:$0xf]
      %v5525 = vld [vmem:[%s3 + $0x40] sm:$0xf]
      %v5526 = vld [vmem:[%s3 + $0x44] sm:$0xf]
      %v5527 = vld [vmem:[%s3 + $0x48] sm:$0xf]
      %v5528 = vld [vmem:[%s3 + $0x4c] sm:$0xf]
      %v5529 = vld [vmem:[%s3 + $0x50] sm:$0xf]
      %v5530 = vld [vmem:[%s3 + $0x54] sm:$0xf]
      %v5531 = vld [vmem:[%s3 + $0x58] sm:$0xf]
      %v5532 = vld [vmem:[%s3 + $0x5c] sm:$0xf]
      %v5533 = vld [vmem:[%s3 + $0x60] sm:$0xf]
      %v5534 = vld [vmem:[%s3 + $0x64] sm:$0xf]
      %v5535 = vld [vmem:[%s3 + $0x68] sm:$0xf]
      %v5536 = vld [vmem:[%s3 + $0x6c] sm:$0xf]
      %v5537 = vld [vmem:[%s3 + $0x70] sm:$0xf]
      %v5538 = vld [vmem:[%s3 + $0x74] sm:$0xf]
      %v5539 = vld [vmem:[%s3 + $0x78] sm:$0xf]
      %v5540 = vld [vmem:[%s3 + $0x7c] sm:$0xf]
      %v5541 = vld [vmem:[%s3 + $0x80] sm:$0xf]
      %v5542 = vld [vmem:[%s3 + $0x84] sm:$0xf]
      %v5543 = vld [vmem:[%s3 + $0x88] sm:$0xf]
      %v5544 = vld [vmem:[%s3 + $0x8c] sm:$0xf]
      %v5545 = vld [vmem:[%s3 + $0x90] sm:$0xf]
      %v5546 = vld [vmem:[%s3 + $0x94] sm:$0xf]
      %v5547 = vld [vmem:[%s3 + $0x98] sm:$0xf]
      %v5548 = vld [vmem:[%s3 + $0x9c] sm:$0xf]
      %v5549 = vld [vmem:[%s3 + $0xa0] sm:$0xf]
      %v5550 = vld [vmem:[%s3 + $0xa4] sm:$0xf]
      %v5551 = vld [vmem:[%s3 + $0xa8] sm:$0xf]
      %v5552 = vld [vmem:[%s3 + $0xac] sm:$0xf]
      %v5553 = vld [vmem:[%s3 + $0xb0] sm:$0xf]
      %v5554 = vld [vmem:[%s3 + $0xb4] sm:$0xf]
      %v5555 = vld [vmem:[%s3 + $0xb8] sm:$0xf]
      %v5556 = vld [vmem:[%s3 + $0xbc] sm:$0xf]
      %v5557 = vld [vmem:[%s3 + $0xc0] sm:$0xf]
      %v5558 = vld [vmem:[%s3 + $0xc4] sm:$0xf]
      %v5559 = vld [vmem:[%s3 + $0xc8] sm:$0xf]
      %v5560 = vld [vmem:[%s3 + $0xcc] sm:$0xf]
      %v5561 = vld [vmem:[%s3 + $0xd0] sm:$0xf]
      %v5562 = vld [vmem:[%s3 + $0xd4] sm:$0xf]
      %v5563 = vld [vmem:[%s3 + $0xd8] sm:$0xf]
      %v5564 = vld [vmem:[%s3 + $0xdc] sm:$0xf]
      %v5565 = vld [vmem:[%s3 + $0xe0] sm:$0xf]
      %v5566 = vld [vmem:[%s3 + $0xe4] sm:$0xf]
      %v5567 = vld [vmem:[%s3 + $0xe8] sm:$0xf]
      %v5568 = vld [vmem:[%s3 + $0xec] sm:$0xf]
      %v5569 = vld [vmem:[%s3 + $0xf0] sm:$0xf]
      %v5570 = vld [vmem:[%s3 + $0xf4] sm:$0xf]
      %v5571 = vld [vmem:[%s3 + $0xf8] sm:$0xf]
      %v5572 = vld [vmem:[%s3 + $0xfc] sm:$0xf]
      %v5573 = vld [vmem:[%s3 + $0x100] sm:$0xf]
      %v5574 = vld [vmem:[%s3 + $0x104] sm:$0xf]
      %v5575 = vld [vmem:[%s3 + $0x108] sm:$0xf]
      %v5576 = vld [vmem:[%s3 + $0x10c] sm:$0xf]
      %v5577 = vld [vmem:[%s3 + $0x110] sm:$0xf]
      %v5578 = vld [vmem:[%s3 + $0x114] sm:$0xf]
      %v5579 = vld [vmem:[%s3 + $0x118] sm:$0xf]
      %v5580 = vld [vmem:[%s3 + $0x11c] sm:$0xf]
      %v5581 = vld [vmem:[%s3 + $0x120] sm:$0xf]
      %v5582 = vld [vmem:[%s3 + $0x124] sm:$0xf]
      %v5583 = vld [vmem:[%s3 + $0x128] sm:$0xf]
      %v5584 = vld [vmem:[%s3 + $0x12c] sm:$0xf]
      %v5585 = vld [vmem:[%s3 + $0x130] sm:$0xf]
      %v5586 = vld [vmem:[%s3 + $0x134] sm:$0xf]
      %v5587 = vld [vmem:[%s3 + $0x138] sm:$0xf]
      %v5588 = vld [vmem:[%s3 + $0x13c] sm:$0xf]
      %v5589 = vld [vmem:[%s3 + $0x140] sm:$0xf]
      %v5590 = vld [vmem:[%s3 + $0x144] sm:$0xf]
      %v5591 = vld [vmem:[%s3 + $0x148] sm:$0xf]
      %v5592 = vld [vmem:[%s3 + $0x14c] sm:$0xf]
      %v5593 = vld [vmem:[%s3 + $0x150] sm:$0xf]
      %v5594 = vld [vmem:[%s3 + $0x154] sm:$0xf]
      %v5595 = vld [vmem:[%s3 + $0x158] sm:$0xf]
      %v5596 = vld [vmem:[%s3 + $0x15c] sm:$0xf]
      %v5597 = vld [vmem:[%s3 + $0x160] sm:$0xf]
      %v5598 = vld [vmem:[%s3 + $0x164] sm:$0xf]
      %v5599 = vld [vmem:[%s3 + $0x168] sm:$0xf]
      %v5600 = vld [vmem:[%s3 + $0x16c] sm:$0xf]
      %v5601 = vld [vmem:[%s3 + $0x170] sm:$0xf]
      %v5602 = vld [vmem:[%s3 + $0x174] sm:$0xf]
      %v5603 = vld [vmem:[%s3 + $0x178] sm:$0xf]
      %v5604 = vld [vmem:[%s3 + $0x17c] sm:$0xf]
      %v5605 = vld [vmem:[%s3 + $0x180] sm:$0xf]
      %v5606 = vld [vmem:[%s3 + $0x184] sm:$0xf]
      %v5607 = vld [vmem:[%s3 + $0x188] sm:$0xf]
      %v5608 = vld [vmem:[%s3 + $0x18c] sm:$0xf]
      %v5609 = vld [vmem:[%s3 + $0x190] sm:$0xf]
      %v5610 = vld [vmem:[%s3 + $0x194] sm:$0xf]
      %v5611 = vld [vmem:[%s3 + $0x198] sm:$0xf]
      %v5612 = vld [vmem:[%s3 + $0x19c] sm:$0xf]
      %v5613 = vld [vmem:[%s3 + $0x1a0] sm:$0xf]
      %v5614 = vld [vmem:[%s3 + $0x1a4] sm:$0xf]
      %v5615 = vld [vmem:[%s3 + $0x1a8] sm:$0xf]
      %v5616 = vld [vmem:[%s3 + $0x1ac] sm:$0xf]
      %v5617 = vld [vmem:[%s3 + $0x1b0] sm:$0xf]
      %v5618 = vld [vmem:[%s3 + $0x1b4] sm:$0xf]
      %v5619 = vld [vmem:[%s3 + $0x1b8] sm:$0xf]
      %v5620 = vld [vmem:[%s3 + $0x1bc] sm:$0xf]
      %v5621 = vld [vmem:[%s3 + $0x1c0] sm:$0xf]
      %v5622 = vld [vmem:[%s3 + $0x1c4] sm:$0xf]
      %v5623 = vld [vmem:[%s3 + $0x1c8] sm:$0xf]
      %v5624 = vld [vmem:[%s3 + $0x1cc] sm:$0xf]
      %v5625 = vld [vmem:[%s3 + $0x1d0] sm:$0xf]
      %v5626 = vld [vmem:[%s3 + $0x1d4] sm:$0xf]
      %v5627 = vld [vmem:[%s3 + $0x1d8] sm:$0xf]
      %v5628 = vld [vmem:[%s3 + $0x1dc] sm:$0xf]
      %v5629 = vld [vmem:[%s3 + $0x1e0] sm:$0xf]
      %v5630 = vld [vmem:[%s3 + $0x1e4] sm:$0xf]
      %v5631 = vld [vmem:[%s3 + $0x1e8] sm:$0xf]
      %v5632 = vld [vmem:[%s3 + $0x1ec] sm:$0xf]
      %v5633 = vld [vmem:[%s3 + $0x1f0] sm:$0xf]
      %v5634 = vld [vmem:[%s3 + $0x1f4] sm:$0xf]
      %v5635 = vld [vmem:[%s3 + $0x1f8] sm:$0xf]
      %v5636 = vld [vmem:[%s3 + $0x1fc] sm:$0xf]
      %v5637 = vld [vmem:[%s3 + $0x200] sm:$0xf]
      %v5638 = vld [vmem:[%s3 + $0x204] sm:$0xf]
      %v5639 = vld [vmem:[%s3 + $0x208] sm:$0xf]
      %v5640 = vld [vmem:[%s3 + $0x20c] sm:$0xf]
      %v5641 = vld [vmem:[%s3 + $0x210] sm:$0xf]
      %v5642 = vld [vmem:[%s3 + $0x214] sm:$0xf]
      %v5643 = vld [vmem:[%s3 + $0x218] sm:$0xf]
      %v5644 = vld [vmem:[%s3 + $0x21c] sm:$0xf]
      %v5645 = vld [vmem:[%s3 + $0x220] sm:$0xf]
      %v5646 = vld [vmem:[%s3 + $0x224] sm:$0xf]
      %v5647 = vld [vmem:[%s3 + $0x228] sm:$0xf]
      %v5648 = vld [vmem:[%s3 + $0x22c] sm:$0xf]
      %v5649 = vld [vmem:[%s3 + $0x230] sm:$0xf]
      %v5650 = vld [vmem:[%s3 + $0x234] sm:$0xf]
      %v5651 = vld [vmem:[%s3 + $0x238] sm:$0xf]
      %v5652 = vld [vmem:[%s3 + $0x23c] sm:$0xf]
      %v5653 = vld [vmem:[%s3 + $0x240] sm:$0xf]
      %v5654 = vld [vmem:[%s3 + $0x244] sm:$0xf]
      %v5655 = vld [vmem:[%s3 + $0x248] sm:$0xf]
      %v5656 = vld [vmem:[%s3 + $0x24c] sm:$0xf]
      %v5657 = vld [vmem:[%s3 + $0x250] sm:$0xf]
      %v5658 = vld [vmem:[%s3 + $0x254] sm:$0xf]
      %v5659 = vld [vmem:[%s3 + $0x258] sm:$0xf]
      %v5660 = vld [vmem:[%s3 + $0x25c] sm:$0xf]
      %v5661 = vld [vmem:[%s3 + $0x260] sm:$0xf]
      %v5662 = vld [vmem:[%s3 + $0x264] sm:$0xf]
      %v5663 = vld [vmem:[%s3 + $0x268] sm:$0xf]
      %v5664 = vld [vmem:[%s3 + $0x26c] sm:$0xf]
      %v5665 = vld [vmem:[%s3 + $0x270] sm:$0xf]
      %v5666 = vld [vmem:[%s3 + $0x274] sm:$0xf]
      %v5667 = vld [vmem:[%s3 + $0x278] sm:$0xf]
      %v5668 = vld [vmem:[%s3 + $0x27c] sm:$0xf]
      %v5669 = vld [vmem:[%s3 + $0x280] sm:$0xf]
      %v5670 = vld [vmem:[%s3 + $0x284] sm:$0xf]
      %v5671 = vld [vmem:[%s3 + $0x288] sm:$0xf]
      %v5672 = vld [vmem:[%s3 + $0x28c] sm:$0xf]
      %v5673 = vld [vmem:[%s3 + $0x290] sm:$0xf]
      %v5674 = vld [vmem:[%s3 + $0x294] sm:$0xf]
      %v5675 = vld [vmem:[%s3 + $0x298] sm:$0xf]
      %v5676 = vld [vmem:[%s3 + $0x29c] sm:$0xf]
      %v5677 = vld [vmem:[%s3 + $0x2a0] sm:$0xf]
      %v5678 = vld [vmem:[%s3 + $0x2a4] sm:$0xf]
      %v5679 = vld [vmem:[%s3 + $0x2a8] sm:$0xf]
      %v5680 = vld [vmem:[%s3 + $0x2ac] sm:$0xf]
      %v5681 = vld [vmem:[%s3 + $0x2b0] sm:$0xf]
      %v5682 = vld [vmem:[%s3 + $0x2b4] sm:$0xf]
      %v5683 = vld [vmem:[%s3 + $0x2b8] sm:$0xf]
      %v5684 = vld [vmem:[%s3 + $0x2bc] sm:$0xf]
      %v5685 = vld [vmem:[%s3 + $0x2c0] sm:$0xf]
      %v5686 = vld [vmem:[%s3 + $0x2c4] sm:$0xf]
      %v5687 = vld [vmem:[%s3 + $0x2c8] sm:$0xf]
      %v5688 = vld [vmem:[%s3 + $0x2cc] sm:$0xf]
      %v5689 = vld [vmem:[%s3 + $0x2d0] sm:$0xf]
      %v5690 = vld [vmem:[%s3 + $0x2d4] sm:$0xf]
      %v5691 = vld [vmem:[%s3 + $0x2d8] sm:$0xf]
      %v5692 = vld [vmem:[%s3 + $0x2dc] sm:$0xf]
      %v5693 = vld [vmem:[%s3 + $0x2e0] sm:$0xf]
      %v5694 = vld [vmem:[%s3 + $0x2e4] sm:$0xf]
      %v5695 = vld [vmem:[%s3 + $0x2e8] sm:$0xf]
      %v5696 = vld [vmem:[%s3 + $0x2ec] sm:$0xf]
      %v5697 = vld [vmem:[%s3 + $0x2f0] sm:$0xf]
      %v5698 = vld [vmem:[%s3 + $0x2f4] sm:$0xf]
      %v5699 = vld [vmem:[%s3 + $0x2f8] sm:$0xf]
      %v5700 = vld [vmem:[%s3 + $0x2fc] sm:$0xf]
      %v5701 = vld [vmem:[%s3 + $0x300] sm:$0xf]
      %v5702 = vld [vmem:[%s3 + $0x304] sm:$0xf]
      %v5703 = vld [vmem:[%s3 + $0x308] sm:$0xf]
      %v5704 = vld [vmem:[%s3 + $0x30c] sm:$0xf]
      %v5705 = vld [vmem:[%s3 + $0x310] sm:$0xf]
      %v5706 = vld [vmem:[%s3 + $0x314] sm:$0xf]
      %v5707 = vld [vmem:[%s3 + $0x318] sm:$0xf]
      %v5708 = vld [vmem:[%s3 + $0x31c] sm:$0xf]
      %v5709 = vld [vmem:[%s4] sm:$0x1]
      %v5711 = vlaneseq
      %v5712 = vshrl.u32 %v5711, 7
      %v5713 = vsub.s32 0, %v5712
      %v5714 = vrot.slane %v5709, %v5713
      %v5916 = vunpack.c.l.b16 %v5509
      %v5917 = vunpack.c.l.b16 %v5510
      %v5918 = vunpack.c.l.b16 %v5511
      %v5919 = vunpack.c.l.b16 %v5512
      %v5920 = vunpack.c.l.b16 %v5513
      %v5921 = vunpack.c.l.b16 %v5514
      %v5922 = vunpack.c.l.b16 %v5515
      %v5923 = vunpack.c.l.b16 %v5516
      %v5924 = vunpack.c.l.b16 %v5517
      %v5925 = vunpack.c.l.b16 %v5518
      %v5926 = vunpack.c.l.b16 %v5519
      %v5927 = vunpack.c.l.b16 %v5520
      %v5928 = vunpack.c.l.b16 %v5521
      %v5929 = vunpack.c.l.b16 %v5522
      %v5930 = vunpack.c.l.b16 %v5523
      %v5931 = vunpack.c.l.b16 %v5524
      %v5932 = vunpack.c.l.b16 %v5525
      %v5933 = vunpack.c.l.b16 %v5526
      %v5934 = vunpack.c.l.b16 %v5527
      %v5935 = vunpack.c.l.b16 %v5528
      %v5936 = vunpack.c.l.b16 %v5529
      %v5937 = vunpack.c.l.b16 %v5530
      %v5938 = vunpack.c.l.b16 %v5531
      %v5939 = vunpack.c.l.b16 %v5532
      %v5940 = vunpack.c.l.b16 %v5533
      %v5941 = vunpack.c.l.b16 %v5534
      %v5942 = vunpack.c.l.b16 %v5535
      %v5943 = vunpack.c.l.b16 %v5536
      %v5944 = vunpack.c.l.b16 %v5537
      %v5945 = vunpack.c.l.b16 %v5538
      %v5946 = vunpack.c.l.b16 %v5539
      %v5947 = vunpack.c.l.b16 %v5540
      %v5948 = vunpack.c.l.b16 %v5541
      %v5949 = vunpack.c.l.b16 %v5542
      %v5950 = vunpack.c.l.b16 %v5543
      %v5951 = vunpack.c.l.b16 %v5544
      %v5952 = vunpack.c.l.b16 %v5545
      %v5953 = vunpack.c.l.b16 %v5546
      %v5954 = vunpack.c.l.b16 %v5547
      %v5955 = vunpack.c.l.b16 %v5548
      %v5956 = vunpack.c.l.b16 %v5549
      %v5957 = vunpack.c.l.b16 %v5550
      %v5958 = vunpack.c.l.b16 %v5551
      %v5959 = vunpack.c.l.b16 %v5552
      %v5960 = vunpack.c.l.b16 %v5553
      %v5961 = vunpack.c.l.b16 %v5554
      %v5962 = vunpack.c.l.b16 %v5555
      %v5963 = vunpack.c.l.b16 %v5556
      %v5964 = vunpack.c.l.b16 %v5557
      %v5965 = vunpack.c.l.b16 %v5558
      %v5966 = vunpack.c.l.b16 %v5559
      %v5967 = vunpack.c.l.b16 %v5560
      %v5968 = vunpack.c.l.b16 %v5561
      %v5969 = vunpack.c.l.b16 %v5562
      %v5970 = vunpack.c.l.b16 %v5563
      %v5971 = vunpack.c.l.b16 %v5564
      %v5972 = vunpack.c.l.b16 %v5565
      %v5973 = vunpack.c.l.b16 %v5566
      %v5974 = vunpack.c.l.b16 %v5567
      %v5975 = vunpack.c.l.b16 %v5568
      %v5976 = vunpack.c.l.b16 %v5569
      %v5977 = vunpack.c.l.b16 %v5570
      %v5978 = vunpack.c.l.b16 %v5571
      %v5979 = vunpack.c.l.b16 %v5572
      %v5980 = vunpack.c.l.b16 %v5573
      %v5981 = vunpack.c.l.b16 %v5574
      %v5982 = vunpack.c.l.b16 %v5575
      %v5983 = vunpack.c.l.b16 %v5576
      %v5984 = vunpack.c.l.b16 %v5577
      %v5985 = vunpack.c.l.b16 %v5578
      %v5986 = vunpack.c.l.b16 %v5579
      %v5987 = vunpack.c.l.b16 %v5580
      %v5988 = vunpack.c.l.b16 %v5581
      %v5989 = vunpack.c.l.b16 %v5582
      %v5990 = vunpack.c.l.b16 %v5583
      %v5991 = vunpack.c.l.b16 %v5584
      %v5992 = vunpack.c.l.b16 %v5585
      %v5993 = vunpack.c.l.b16 %v5586
      %v5994 = vunpack.c.l.b16 %v5587
      %v5995 = vunpack.c.l.b16 %v5588
      %v5996 = vunpack.c.l.b16 %v5589
      %v5997 = vunpack.c.l.b16 %v5590
      %v5998 = vunpack.c.l.b16 %v5591
      %v5999 = vunpack.c.l.b16 %v5592
      %v6000 = vunpack.c.l.b16 %v5593
      %v6001 = vunpack.c.l.b16 %v5594
      %v6002 = vunpack.c.l.b16 %v5595
      %v6003 = vunpack.c.l.b16 %v5596
      %v6004 = vunpack.c.l.b16 %v5597
      %v6005 = vunpack.c.l.b16 %v5598
      %v6006 = vunpack.c.l.b16 %v5599
      %v6007 = vunpack.c.l.b16 %v5600
      %v6008 = vunpack.c.l.b16 %v5601
      %v6009 = vunpack.c.l.b16 %v5602
      %v6010 = vunpack.c.l.b16 %v5603
      %v6011 = vunpack.c.l.b16 %v5604
      %v6012 = vunpack.c.l.b16 %v5605
      %v6013 = vunpack.c.l.b16 %v5606
      %v6014 = vunpack.c.l.b16 %v5607
      %v6015 = vunpack.c.l.b16 %v5608
      %v6016 = vunpack.c.l.b16 %v5609
      %v6017 = vunpack.c.l.b16 %v5610
      %v6018 = vunpack.c.l.b16 %v5611
      %v6019 = vunpack.c.l.b16 %v5612
      %v6020 = vunpack.c.l.b16 %v5613
      %v6021 = vunpack.c.l.b16 %v5614
      %v6022 = vunpack.c.l.b16 %v5615
      %v6023 = vunpack.c.l.b16 %v5616
      %v6024 = vunpack.c.l.b16 %v5617
      %v6025 = vunpack.c.l.b16 %v5618
      %v6026 = vunpack.c.l.b16 %v5619
      %v6027 = vunpack.c.l.b16 %v5620
      %v6028 = vunpack.c.l.b16 %v5621
      %v6029 = vunpack.c.l.b16 %v5622
      %v6030 = vunpack.c.l.b16 %v5623
      %v6031 = vunpack.c.l.b16 %v5624
      %v6032 = vunpack.c.l.b16 %v5625
      %v6033 = vunpack.c.l.b16 %v5626
      %v6034 = vunpack.c.l.b16 %v5627
      %v6035 = vunpack.c.l.b16 %v5628
      %v6036 = vunpack.c.l.b16 %v5629
      %v6037 = vunpack.c.l.b16 %v5630
      %v6038 = vunpack.c.l.b16 %v5631
      %v6039 = vunpack.c.l.b16 %v5632
      %v6040 = vunpack.c.l.b16 %v5633
      %v6041 = vunpack.c.l.b16 %v5634
      %v6042 = vunpack.c.l.b16 %v5635
      %v6043 = vunpack.c.l.b16 %v5636
      %v6044 = vunpack.c.l.b16 %v5637
      %v6045 = vunpack.c.l.b16 %v5638
      %v6046 = vunpack.c.l.b16 %v5639
      %v6047 = vunpack.c.l.b16 %v5640
      %v6048 = vunpack.c.l.b16 %v5641
      %v6049 = vunpack.c.l.b16 %v5642
      %v6050 = vunpack.c.l.b16 %v5643
      %v6051 = vunpack.c.l.b16 %v5644
      %v6052 = vunpack.c.l.b16 %v5645
      %v6053 = vunpack.c.l.b16 %v5646
      %v6054 = vunpack.c.l.b16 %v5647
      %v6055 = vunpack.c.l.b16 %v5648
      %v6056 = vunpack.c.l.b16 %v5649
      %v6057 = vunpack.c.l.b16 %v5650
      %v6058 = vunpack.c.l.b16 %v5651
      %v6059 = vunpack.c.l.b16 %v5652
      %v6060 = vunpack.c.l.b16 %v5653
      %v6061 = vunpack.c.l.b16 %v5654
      %v6062 = vunpack.c.l.b16 %v5655
      %v6063 = vunpack.c.l.b16 %v5656
      %v6064 = vunpack.c.l.b16 %v5657
      %v6065 = vunpack.c.l.b16 %v5658
      %v6066 = vunpack.c.l.b16 %v5659
      %v6067 = vunpack.c.l.b16 %v5660
      %v6068 = vunpack.c.l.b16 %v5661
      %v6069 = vunpack.c.l.b16 %v5662
      %v6070 = vunpack.c.l.b16 %v5663
      %v6071 = vunpack.c.l.b16 %v5664
      %v6072 = vunpack.c.l.b16 %v5665
      %v6073 = vunpack.c.l.b16 %v5666
      %v6074 = vunpack.c.l.b16 %v5667
      %v6075 = vunpack.c.l.b16 %v5668
      %v6076 = vunpack.c.l.b16 %v5669
      %v6077 = vunpack.c.l.b16 %v5670
      %v6078 = vunpack.c.l.b16 %v5671
      %v6079 = vunpack.c.l.b16 %v5672
      %v6080 = vunpack.c.l.b16 %v5673
      %v6081 = vunpack.c.l.b16 %v5674
      %v6082 = vunpack.c.l.b16 %v5675
      %v6083 = vunpack.c.l.b16 %v5676
      %v6084 = vunpack.c.l.b16 %v5677
      %v6085 = vunpack.c.l.b16 %v5678
      %v6086 = vunpack.c.l.b16 %v5679
      %v6087 = vunpack.c.l.b16 %v5680
      %v6088 = vunpack.c.l.b16 %v5681
      %v6089 = vunpack.c.l.b16 %v5682
      %v6090 = vunpack.c.l.b16 %v5683
      %v6091 = vunpack.c.l.b16 %v5684
      %v6092 = vunpack.c.l.b16 %v5685
      %v6093 = vunpack.c.l.b16 %v5686
      %v6094 = vunpack.c.l.b16 %v5687
      %v6095 = vunpack.c.l.b16 %v5688
      %v6096 = vunpack.c.l.b16 %v5689
      %v6097 = vunpack.c.l.b16 %v5690
      %v6098 = vunpack.c.l.b16 %v5691
      %v6099 = vunpack.c.l.b16 %v5692
      %v6100 = vunpack.c.l.b16 %v5693
      %v6101 = vunpack.c.l.b16 %v5694
      %v6102 = vunpack.c.l.b16 %v5695
      %v6103 = vunpack.c.l.b16 %v5696
      %v6104 = vunpack.c.l.b16 %v5697
      %v6105 = vunpack.c.l.b16 %v5698
      %v6106 = vunpack.c.l.b16 %v5699
      %v6107 = vunpack.c.l.b16 %v5700
      %v6108 = vunpack.c.l.b16 %v5701
      %v6109 = vunpack.c.l.b16 %v5702
      %v6110 = vunpack.c.l.b16 %v5703
      %v6111 = vunpack.c.l.b16 %v5704
      %v6112 = vunpack.c.l.b16 %v5705
      %v6113 = vunpack.c.l.b16 %v5706
      %v6114 = vunpack.c.l.b16 %v5707
      %v6115 = vunpack.c.l.b16 %v5708
      %v6116 = vpack.c.b16 %v5917, %v5916
      %v6117 = vpack.c.b16 %v5919, %v5918
      %v6118 = vpack.c.b16 %v5921, %v5920
      %v6119 = vpack.c.b16 %v5923, %v5922
      %v6120 = vpack.c.b16 %v5925, %v5924
      %v6121 = vpack.c.b16 %v5927, %v5926
      %v6122 = vpack.c.b16 %v5929, %v5928
      %v6123 = vpack.c.b16 %v5931, %v5930
      %v6124 = vpack.c.b16 %v5933, %v5932
      %v6125 = vpack.c.b16 %v5935, %v5934
      %v6126 = vpack.c.b16 %v5937, %v5936
      %v6127 = vpack.c.b16 %v5939, %v5938
      %v6128 = vpack.c.b16 %v5941, %v5940
      %v6129 = vpack.c.b16 %v5943, %v5942
      %v6130 = vpack.c.b16 %v5945, %v5944
      %v6131 = vpack.c.b16 %v5947, %v5946
      %v6132 = vpack.c.b16 %v5949, %v5948
      %v6133 = vpack.c.b16 %v5951, %v5950
      %v6134 = vpack.c.b16 %v5953, %v5952
      %v6135 = vpack.c.b16 %v5955, %v5954
      %v6136 = vpack.c.b16 %v5957, %v5956
      %v6137 = vpack.c.b16 %v5959, %v5958
      %v6138 = vpack.c.b16 %v5961, %v5960
      %v6139 = vpack.c.b16 %v5963, %v5962
      %v6140 = vpack.c.b16 %v5965, %v5964
      %v6141 = vpack.c.b16 %v5967, %v5966
      %v6142 = vpack.c.b16 %v5969, %v5968
      %v6143 = vpack.c.b16 %v5971, %v5970
      %v6144 = vpack.c.b16 %v5973, %v5972
      %v6145 = vpack.c.b16 %v5975, %v5974
      %v6146 = vpack.c.b16 %v5977, %v5976
      %v6147 = vpack.c.b16 %v5979, %v5978
      %v6148 = vpack.c.b16 %v5981, %v5980
      %v6149 = vpack.c.b16 %v5983, %v5982
      %v6150 = vpack.c.b16 %v5985, %v5984
      %v6151 = vpack.c.b16 %v5987, %v5986
      %v6152 = vpack.c.b16 %v5989, %v5988
      %v6153 = vpack.c.b16 %v5991, %v5990
      %v6154 = vpack.c.b16 %v5993, %v5992
      %v6155 = vpack.c.b16 %v5995, %v5994
      %v6156 = vpack.c.b16 %v5997, %v5996
      %v6157 = vpack.c.b16 %v5999, %v5998
      %v6158 = vpack.c.b16 %v6001, %v6000
      %v6159 = vpack.c.b16 %v6003, %v6002
      %v6160 = vpack.c.b16 %v6005, %v6004
      %v6161 = vpack.c.b16 %v6007, %v6006
      %v6162 = vpack.c.b16 %v6009, %v6008
      %v6163 = vpack.c.b16 %v6011, %v6010
      %v6164 = vpack.c.b16 %v6013, %v6012
      %v6165 = vpack.c.b16 %v6015, %v6014
      %v6166 = vpack.c.b16 %v6017, %v6016
      %v6167 = vpack.c.b16 %v6019, %v6018
      %v6168 = vpack.c.b16 %v6021, %v6020
      %v6169 = vpack.c.b16 %v6023, %v6022
      %v6170 = vpack.c.b16 %v6025, %v6024
      %v6171 = vpack.c.b16 %v6027, %v6026
      %v6172 = vpack.c.b16 %v6029, %v6028
      %v6173 = vpack.c.b16 %v6031, %v6030
      %v6174 = vpack.c.b16 %v6033, %v6032
      %v6175 = vpack.c.b16 %v6035, %v6034
      %v6176 = vpack.c.b16 %v6037, %v6036
      %v6177 = vpack.c.b16 %v6039, %v6038
      %v6178 = vpack.c.b16 %v6041, %v6040
      %v6179 = vpack.c.b16 %v6043, %v6042
      %v6180 = vpack.c.b16 %v6045, %v6044
      %v6181 = vpack.c.b16 %v6047, %v6046
      %v6182 = vpack.c.b16 %v6049, %v6048
      %v6183 = vpack.c.b16 %v6051, %v6050
      %v6184 = vpack.c.b16 %v6053, %v6052
      %v6185 = vpack.c.b16 %v6055, %v6054
      %v6186 = vpack.c.b16 %v6057, %v6056
      %v6187 = vpack.c.b16 %v6059, %v6058
      %v6188 = vpack.c.b16 %v6061, %v6060
      %v6189 = vpack.c.b16 %v6063, %v6062
      %v6190 = vpack.c.b16 %v6065, %v6064
      %v6191 = vpack.c.b16 %v6067, %v6066
      %v6192 = vpack.c.b16 %v6069, %v6068
      %v6193 = vpack.c.b16 %v6071, %v6070
      %v6194 = vpack.c.b16 %v6073, %v6072
      %v6195 = vpack.c.b16 %v6075, %v6074
      %v6196 = vpack.c.b16 %v6077, %v6076
      %v6197 = vpack.c.b16 %v6079, %v6078
      %v6198 = vpack.c.b16 %v6081, %v6080
      %v6199 = vpack.c.b16 %v6083, %v6082
      %v6200 = vpack.c.b16 %v6085, %v6084
      %v6201 = vpack.c.b16 %v6087, %v6086
      %v6202 = vpack.c.b16 %v6089, %v6088
      %v6203 = vpack.c.b16 %v6091, %v6090
      %v6204 = vpack.c.b16 %v6093, %v6092
      %v6205 = vpack.c.b16 %v6095, %v6094
      %v6206 = vpack.c.b16 %v6097, %v6096
      %v6207 = vpack.c.b16 %v6099, %v6098
      %v6208 = vpack.c.b16 %v6101, %v6100
      %v6209 = vpack.c.b16 %v6103, %v6102
      %v6210 = vpack.c.b16 %v6105, %v6104
      %v6211 = vpack.c.b16 %v6107, %v6106
      %v6212 = vpack.c.b16 %v6109, %v6108
      %v6213 = vpack.c.b16 %v6111, %v6110
      %v6214 = vpack.c.b16 %v6113, %v6112
      %v6215 = vpack.c.b16 %v6115, %v6114
      %v6317 = vsel %vm2716, %v5469, 0
      %v6320 = vsel %vm2716, %v5482, 0
      %v6323 = vsel %vm2716, %v5495, 0
      %v6326 = vsel %vm2716, %v5508, 0
      %6328 = vmatprep.subr.bf16.mxu0 0
      %6329 = vmatpush1.bf16.msra.mxu0 %v6116
      %6330 = vmatprep.subr.bf16.mxu0 0
      %6331 = vmatpush1.bf16.msra.mxu0 %v6117
      %6332 = vmatprep.subr.bf16.mxu0 0
      %6333 = vmatpush1.bf16.msra.mxu0 %v6118
      %6334 = vmatprep.subr.bf16.mxu0 0
      %6335 = vmatpush1.bf16.msra.mxu0 %v6119
      %6336 = vmatprep.subr.bf16.mxu0 0
      %6337 = vmatpush1.bf16.msra.mxu0 %v6120
      %6338 = vmatprep.subr.bf16.mxu0 0
      %6339 = vmatpush1.bf16.msra.mxu0 %v6121
      %6340 = vmatprep.subr.bf16.mxu0 0
      %6341 = vmatpush1.bf16.msra.mxu0 %v6122
      %6342 = vmatprep.subr.bf16.mxu0 0
      %6343 = vmatpush1.bf16.msra.mxu0 %v6123
      %6344 = vmatprep.subr.bf16.mxu0 0
      %6345 = vmatpush1.bf16.msra.mxu0 %v6124
      %6346 = vmatprep.subr.bf16.mxu0 0
      %6347 = vmatpush1.bf16.msra.mxu0 %v6125
      %6348 = vmatprep.subr.bf16.mxu0 0
      %6349 = vmatpush1.bf16.msra.mxu0 %v6126
      %6350 = vmatprep.subr.bf16.mxu0 0
      %6351 = vmatpush1.bf16.msra.mxu0 %v6127
      %6352 = vmatprep.subr.bf16.mxu0 0
      %6353 = vmatpush1.bf16.msra.mxu0 %v6128
      %6354 = vmatprep.subr.bf16.mxu0 0
      %6355 = vmatpush1.bf16.msra.mxu0 %v6129
      %6356 = vmatprep.subr.bf16.mxu0 0
      %6357 = vmatpush1.bf16.msra.mxu0 %v6130
      %6358 = vmatprep.subr.bf16.mxu0 0
      %6359 = vmatpush1.bf16.msra.mxu0 %v6131
      %6360 = vmatprep.mubr.bf16.mxu0 %v5458
      %6361 = vmatmul.mubr.bf16.gmra.mrb[0].mxu0 %v5457
      %v6362 = vpop.f32.mrb[0].mxu0
      %v6363 = vadd.f32 %v5714, %v6362
      %v6364 = vpop.f32.mrb[0].mxu0
      %v6365 = vpop.f32.mrb[0].mxu0
      %v6366 = vadd.f32 %v5714, %v6365
      %v6367 = vpop.f32.mrb[0].mxu0
      %6368 = vmatprep.mubr.bf16.mxu0 %v5471
      %6369 = vmatmul.mubr.bf16.gmra.mrb[0].mxu0 %v5470
      %v6370 = vpop.f32.mrb[0].mxu0
      %v6371 = vadd.f32 %v5714, %v6370
      %v6372 = vpop.f32.mrb[0].mxu0
      %v6373 = vpop.f32.mrb[0].mxu0
      %v6374 = vadd.f32 %v5714, %v6373
      %v6375 = vpop.f32.mrb[0].mxu0
      %6376 = vmatprep.mubr.bf16.mxu0 %v5484
      %6377 = vmatmul.mubr.bf16.gmra.mrb[0].mxu0 %v5483
      %v6378 = vpop.f32.mrb[0].mxu0
      %v6379 = vadd.f32 %v5714, %v6378
      %v6380 = vpop.f32.mrb[0].mxu0
      %v6381 = vpop.f32.mrb[0].mxu0
      %v6382 = vadd.f32 %v5714, %v6381
      %v6383 = vpop.f32.mrb[0].mxu0
      %6384 = vmatprep.mubr.bf16.mxu0 %v5497
      %6385 = vmatmul.mubr.bf16.gmra.mrb[0].mxu0 %v5496
      %v6386 = vpop.f32.mrb[0].mxu0
      %v6387 = vadd.f32 %v5714, %v6386
      %v6388 = vpop.f32.mrb[0].mxu0
      %v6389 = vpop.f32.mrb[0].mxu0
      %v6390 = vadd.f32 %v5714, %v6389
      %v6391 = vpop.f32.mrb[0].mxu0
      %6392 = vdwg.mxu0
      %6393 = vmatprep.subr.bf16.mxu0 0
      %6394 = vmatpush1.bf16.msra.mxu0 %v6132
      %6395 = vmatprep.subr.bf16.mxu0 0
      %6396 = vmatpush1.bf16.msra.mxu0 %v6133
      %6397 = vmatprep.subr.bf16.mxu0 0
      %6398 = vmatpush1.bf16.msra.mxu0 %v6134
      %6399 = vmatprep.subr.bf16.mxu0 0
      %6400 = vmatpush1.bf16.msra.mxu0 %v6135
      %6401 = vmatprep.subr.bf16.mxu0 0
      %6402 = vmatpush1.bf16.msra.mxu0 %v6136
      %6403 = vmatprep.subr.bf16.mxu0 0
      %6404 = vmatpush1.bf16.msra.mxu0 %v6137
      %6405 = vmatprep.subr.bf16.mxu0 0
      %6406 = vmatpush1.bf16.msra.mxu0 %v6138
      %6407 = vmatprep.subr.bf16.mxu0 0
      %6408 = vmatpush1.bf16.msra.mxu0 %v6139
      %6409 = vmatprep.subr.bf16.mxu0 0
      %6410 = vmatpush1.bf16.msra.mxu0 %v6140
      %6411 = vmatprep.subr.bf16.mxu0 0
      %6412 = vmatpush1.bf16.msra.mxu0 %v6141
      %6413 = vmatprep.subr.bf16.mxu0 0
      %6414 = vmatpush1.bf16.msra.mxu0 %v6142
      %6415 = vmatprep.subr.bf16.mxu0 0
      %6416 = vmatpush1.bf16.msra.mxu0 %v6143
      %6417 = vmatprep.subr.bf16.mxu0 0
      %6418 = vmatpush1.bf16.msra.mxu0 %v6144
      %6419 = vmatprep.subr.bf16.mxu0 0
      %6420 = vmatpush1.bf16.msra.mxu0 %v6145
      %6421 = vmatprep.subr.bf16.mxu0 0
      %6422 = vmatpush1.bf16.msra.mxu0 %v6146
      %6423 = vmatprep.subr.bf16.mxu0 0
      %6424 = vmatpush1.bf16.msra.mxu0 %v6147
      %6425 = vmatprep.mubr.bf16.mxu0 %v5460
      %6426 = vmatmul.mubr.bf16.gmra.mrb[0].mxu0 %v5459
      %v6427 = vpop.f32.mrb[0].mxu0
      %v6428 = vadd.f32 %v6363, %v6427
      %v6429 = vpop.f32.mrb[0].mxu0
      %v6430 = vpop.f32.mrb[0].mxu0
      %v6431 = vadd.f32 %v6366, %v6430
      %v6432 = vpop.f32.mrb[0].mxu0
      %6433 = vmatprep.mubr.bf16.mxu0 %v5473
      %6434 = vmatmul.mubr.bf16.gmra.mrb[0].mxu0 %v5472
      %v6435 = vpop.f32.mrb[0].mxu0
      %v6436 = vadd.f32 %v6371, %v6435
      %v6437 = vpop.f32.mrb[0].mxu0
      %v6438 = vpop.f32.mrb[0].mxu0
      %v6439 = vadd.f32 %v6374, %v6438
      %v6440 = vpop.f32.mrb[0].mxu0
      %6441 = vmatprep.mubr.bf16.mxu0 %v5486
      %6442 = vmatmul.mubr.bf16.gmra.mrb[0].mxu0 %v5485
      %v6443 = vpop.f32.mrb[0].mxu0
      %v6444 = vadd.f32 %v6379, %v6443
      %v6445 = vpop.f32.mrb[0].mxu0
      %v6446 = vpop.f32.mrb[0].mxu0
      %v6447 = vadd.f32 %v6382, %v6446
      %v6448 = vpop.f32.mrb[0].mxu0
      %6449 = vmatprep.mubr.bf16.mxu0 %v5499
      %6450 = vmatmul.mubr.bf16.gmra.mrb[0].mxu0 %v5498
      %v6451 = vpop.f32.mrb[0].mxu0
      %v6452 = vadd.f32 %v6387, %v6451
      %v6453 = vpop.f32.mrb[0].mxu0
      %v6454 = vpop.f32.mrb[0].mxu0
      %v6455 = vadd.f32 %v6390, %v6454
      %v6456 = vpop.f32.mrb[0].mxu0
      %6457 = vdwg.mxu0
      %6458 = vmatprep.subr.bf16.mxu0 0
      %6459 = vmatpush1.bf16.msra.mxu0 %v6148
      %6460 = vmatprep.subr.bf16.mxu0 0
      %6461 = vmatpush1.bf16.msra.mxu0 %v6149
      %6462 = vmatprep.subr.bf16.mxu0 0
      %6463 = vmatpush1.bf16.msra.mxu0 %v6150
      %6464 = vmatprep.subr.bf16.mxu0 0
      %6465 = vmatpush1.bf16.msra.mxu0 %v6151
      %6466 = vmatprep.subr.bf16.mxu0 0
      %6467 = vmatpush1.bf16.msra.mxu0 %v6152
      %6468 = vmatprep.subr.bf16.mxu0 0
      %6469 = vmatpush1.bf16.msra.mxu0 %v6153
      %6470 = vmatprep.subr.bf16.mxu0 0
      %6471 = vmatpush1.bf16.msra.mxu0 %v6154
      %6472 = vmatprep.subr.bf16.mxu0 0
      %6473 = vmatpush1.bf16.msra.mxu0 %v6155
      %6474 = vmatprep.subr.bf16.mxu0 0
      %6475 = vmatpush1.bf16.msra.mxu0 %v6156
      %6476 = vmatprep.subr.bf16.mxu0 0
      %6477 = vmatpush1.bf16.msra.mxu0 %v6157
      %6478 = vmatprep.subr.bf16.mxu0 0
      %6479 = vmatpush1.bf16.msra.mxu0 %v6158
      %6480 = vmatprep.subr.bf16.mxu0 0
      %6481 = vmatpush1.bf16.msra.mxu0 %v6159
      %6482 = vmatprep.subr.bf16.mxu0 0
      %6483 = vmatpush1.bf16.msra.mxu0 %v6160
      %6484 = vmatprep.subr.bf16.mxu0 0
      %6485 = vmatpush1.bf16.msra.mxu0 %v6161
      %6486 = vmatprep.subr.bf16.mxu0 0
      %6487 = vmatpush1.bf16.msra.mxu0 %v6162
      %6488 = vmatprep.subr.bf16.mxu0 0
      %6489 = vmatpush1.bf16.msra.mxu0 %v6163
      %6490 = vmatprep.mubr.bf16.mxu0 %v5462
      %6491 = vmatmul.mubr.bf16.gmra.mrb[0].mxu0 %v5461
      %v6492 = vpop.f32.mrb[0].mxu0
      %v6493 = vadd.f32 %v6428, %v6492
      %v6494 = vpop.f32.mrb[0].mxu0
      %v6495 = vpop.f32.mrb[0].mxu0
      %v6496 = vadd.f32 %v6431, %v6495
      %v6497 = vpop.f32.mrb[0].mxu0
      %6498 = vmatprep.mubr.bf16.mxu0 %v5475
      %6499 = vmatmul.mubr.bf16.gmra.mrb[0].mxu0 %v5474
      %v6500 = vpop.f32.mrb[0].mxu0
      %v6501 = vadd.f32 %v6436, %v6500
      %v6502 = vpop.f32.mrb[0].mxu0
      %v6503 = vpop.f32.mrb[0].mxu0
      %v6504 = vadd.f32 %v6439, %v6503
      %v6505 = vpop.f32.mrb[0].mxu0
      %6506 = vmatprep.mubr.bf16.mxu0 %v5488
      %6507 = vmatmul.mubr.bf16.gmra.mrb[0].mxu0 %v5487
      %v6508 = vpop.f32.mrb[0].mxu0
      %v6509 = vadd.f32 %v6444, %v6508
      %v6510 = vpop.f32.mrb[0].mxu0
      %v6511 = vpop.f32.mrb[0].mxu0
      %v6512 = vadd.f32 %v6447, %v6511
      %v6513 = vpop.f32.mrb[0].mxu0
      %6514 = vmatprep.mubr.bf16.mxu0 %v5501
      %6515 = vmatmul.mubr.bf16.gmra.mrb[0].mxu0 %v5500
      %v6516 = vpop.f32.mrb[0].mxu0
      %v6517 = vadd.f32 %v6452, %v6516
      %v6518 = vpop.f32.mrb[0].mxu0
      %v6519 = vpop.f32.mrb[0].mxu0
      %v6520 = vadd.f32 %v6455, %v6519
      %v6521 = vpop.f32.mrb[0].mxu0
      %6522 = vdwg.mxu0
      %6523 = vmatprep.subr.bf16.mxu0 0
      %6524 = vmatpush1.bf16.msra.mxu0 %v6164
      %6525 = vmatprep.subr.bf16.mxu0 0
      %6526 = vmatpush1.bf16.msra.mxu0 %v6165
      %6527 = vmatprep.subr.bf16.mxu0 0
      %6528 = vmatpush1.bf16.msra.mxu0 %v6166
      %6529 = vmatprep.subr.bf16.mxu0 0
      %6530 = vmatpush1.bf16.msra.mxu0 %v6167
      %6531 = vmatprep.subr.bf16.mxu0 0
      %6532 = vmatpush1.bf16.msra.mxu0 %v6168
      %6533 = vmatprep.subr.bf16.mxu0 0
      %6534 = vmatpush1.bf16.msra.mxu0 %v6169
      %6535 = vmatprep.subr.bf16.mxu0 0
      %6536 = vmatpush1.bf16.msra.mxu0 %v6170
      %6537 = vmatprep.subr.bf16.mxu0 0
      %6538 = vmatpush1.bf16.msra.mxu0 %v6171
      %6539 = vmatprep.subr.bf16.mxu0 0
      %6540 = vmatpush1.bf16.msra.mxu0 %v6172
      %6541 = vmatprep.subr.bf16.mxu0 0
      %6542 = vmatpush1.bf16.msra.mxu0 %v6173
      %6543 = vmatprep.subr.bf16.mxu0 0
      %6544 = vmatpush1.bf16.msra.mxu0 %v6174
      %6545 = vmatprep.subr.bf16.mxu0 0
      %6546 = vmatpush1.bf16.msra.mxu0 %v6175
      %6547 = vmatprep.subr.bf16.mxu0 0
      %6548 = vmatpush1.bf16.msra.mxu0 %v6176
      %6549 = vmatprep.subr.bf16.mxu0 0
      %6550 = vmatpush1.bf16.msra.mxu0 %v6177
      %6551 = vmatprep.subr.bf16.mxu0 0
      %6552 = vmatpush1.bf16.msra.mxu0 %v6178
      %6553 = vmatprep.subr.bf16.mxu0 0
      %6554 = vmatpush1.bf16.msra.mxu0 %v6179
      %6555 = vmatprep.mubr.bf16.mxu0 %v5464
      %6556 = vmatmul.mubr.bf16.gmra.mrb[0].mxu0 %v5463
      %v6557 = vpop.f32.mrb[0].mxu0
      %v6558 = vadd.f32 %v6493, %v6557
      %v6559 = vpop.f32.mrb[0].mxu0
      %v6560 = vpop.f32.mrb[0].mxu0
      %v6561 = vadd.f32 %v6496, %v6560
      %v6562 = vpop.f32.mrb[0].mxu0
      %6563 = vmatprep.mubr.bf16.mxu0 %v5477
      %6564 = vmatmul.mubr.bf16.gmra.mrb[0].mxu0 %v5476
      %v6565 = vpop.f32.mrb[0].mxu0
      %v6566 = vadd.f32 %v6501, %v6565
      %v6567 = vpop.f32.mrb[0].mxu0
      %v6568 = vpop.f32.mrb[0].mxu0
      %v6569 = vadd.f32 %v6504, %v6568
      %v6570 = vpop.f32.mrb[0].mxu0
      %6571 = vmatprep.mubr.bf16.mxu0 %v5490
      %6572 = vmatmul.mubr.bf16.gmra.mrb[0].mxu0 %v5489
      %v6573 = vpop.f32.mrb[0].mxu0
      %v6574 = vadd.f32 %v6509, %v6573
      %v6575 = vpop.f32.mrb[0].mxu0
      %v6576 = vpop.f32.mrb[0].mxu0
      %v6577 = vadd.f32 %v6512, %v6576
      %v6578 = vpop.f32.mrb[0].mxu0
      %6579 = vmatprep.mubr.bf16.mxu0 %v5503
      %6580 = vmatmul.mubr.bf16.gmra.mrb[0].mxu0 %v5502
      %v6581 = vpop.f32.mrb[0].mxu0
      %v6582 = vadd.f32 %v6517, %v6581
      %v6583 = vpop.f32.mrb[0].mxu0
      %v6584 = vpop.f32.mrb[0].mxu0
      %v6585 = vadd.f32 %v6520, %v6584
      %v6586 = vpop.f32.mrb[0].mxu0
      %6587 = vdwg.mxu0
      %6588 = vmatprep.subr.bf16.mxu0 0
      %6589 = vmatpush1.bf16.msra.mxu0 %v6180
      %6590 = vmatprep.subr.bf16.mxu0 0
      %6591 = vmatpush1.bf16.msra.mxu0 %v6181
      %6592 = vmatprep.subr.bf16.mxu0 0
      %6593 = vmatpush1.bf16.msra.mxu0 %v6182
      %6594 = vmatprep.subr.bf16.mxu0 0
      %6595 = vmatpush1.bf16.msra.mxu0 %v6183
      %6596 = vmatprep.subr.bf16.mxu0 0
      %6597 = vmatpush1.bf16.msra.mxu0 %v6184
      %6598 = vmatprep.subr.bf16.mxu0 0
      %6599 = vmatpush1.bf16.msra.mxu0 %v6185
      %6600 = vmatprep.subr.bf16.mxu0 0
      %6601 = vmatpush1.bf16.msra.mxu0 %v6186
      %6602 = vmatprep.subr.bf16.mxu0 0
      %6603 = vmatpush1.bf16.msra.mxu0 %v6187
      %6604 = vmatprep.subr.bf16.mxu0 0
      %6605 = vmatpush1.bf16.msra.mxu0 %v6188
      %6606 = vmatprep.subr.bf16.mxu0 0
      %6607 = vmatpush1.bf16.msra.mxu0 %v6189
      %6608 = vmatprep.subr.bf16.mxu0 0
      %6609 = vmatpush1.bf16.msra.mxu0 %v6190
      %6610 = vmatprep.subr.bf16.mxu0 0
      %6611 = vmatpush1.bf16.msra.mxu0 %v6191
      %6612 = vmatprep.subr.bf16.mxu0 0
      %6613 = vmatpush1.bf16.msra.mxu0 %v6192
      %6614 = vmatprep.subr.bf16.mxu0 0
      %6615 = vmatpush1.bf16.msra.mxu0 %v6193
      %6616 = vmatprep.subr.bf16.mxu0 0
      %6617 = vmatpush1.bf16.msra.mxu0 %v6194
      %6618 = vmatprep.subr.bf16.mxu0 0
      %6619 = vmatpush1.bf16.msra.mxu0 %v6195
      %6620 = vmatprep.mubr.bf16.mxu0 %v5466
      %6621 = vmatmul.mubr.bf16.gmra.mrb[0].mxu0 %v5465
      %v6622 = vpop.f32.mrb[0].mxu0
      %v6623 = vadd.f32 %v6558, %v6622
      %v6624 = vpop.f32.mrb[0].mxu0
      %v6625 = vpop.f32.mrb[0].mxu0
      %v6626 = vadd.f32 %v6561, %v6625
      %v6627 = vpop.f32.mrb[0].mxu0
      %6628 = vmatprep.mubr.bf16.mxu0 %v5479
      %6629 = vmatmul.mubr.bf16.gmra.mrb[0].mxu0 %v5478
      %v6630 = vpop.f32.mrb[0].mxu0
      %v6631 = vadd.f32 %v6566, %v6630
      %v6632 = vpop.f32.mrb[0].mxu0
      %v6633 = vpop.f32.mrb[0].mxu0
      %v6634 = vadd.f32 %v6569, %v6633
      %v6635 = vpop.f32.mrb[0].mxu0
      %6636 = vmatprep.mubr.bf16.mxu0 %v5492
      %6637 = vmatmul.mubr.bf16.gmra.mrb[0].mxu0 %v5491
      %v6638 = vpop.f32.mrb[0].mxu0
      %v6639 = vadd.f32 %v6574, %v6638
      %v6640 = vpop.f32.mrb[0].mxu0
      %v6641 = vpop.f32.mrb[0].mxu0
      %v6642 = vadd.f32 %v6577, %v6641
      %v6643 = vpop.f32.mrb[0].mxu0
      %6644 = vmatprep.mubr.bf16.mxu0 %v5505
      %6645 = vmatmul.mubr.bf16.gmra.mrb[0].mxu0 %v5504
      %v6646 = vpop.f32.mrb[0].mxu0
      %v6647 = vadd.f32 %v6582, %v6646
      %v6648 = vpop.f32.mrb[0].mxu0
      %v6649 = vpop.f32.mrb[0].mxu0
      %v6650 = vadd.f32 %v6585, %v6649
      %v6651 = vpop.f32.mrb[0].mxu0
      %6652 = vdwg.mxu0
      %6653 = vmatprep.subr.bf16.mxu0 0
      %6654 = vmatpush1.bf16.msra.mxu0 %v6196
      %6655 = vmatprep.subr.bf16.mxu0 0
      %6656 = vmatpush1.bf16.msra.mxu0 %v6197
      %6657 = vmatprep.subr.bf16.mxu0 0
      %6658 = vmatpush1.bf16.msra.mxu0 %v6198
      %6659 = vmatprep.subr.bf16.mxu0 0
      %6660 = vmatpush1.bf16.msra.mxu0 %v6199
      %6661 = vmatprep.subr.bf16.mxu0 0
      %6662 = vmatpush1.bf16.msra.mxu0 %v6200
      %6663 = vmatprep.subr.bf16.mxu0 0
      %6664 = vmatpush1.bf16.msra.mxu0 %v6201
      %6665 = vmatprep.subr.bf16.mxu0 0
      %6666 = vmatpush1.bf16.msra.mxu0 %v6202
      %6667 = vmatprep.subr.bf16.mxu0 0
      %6668 = vmatpush1.bf16.msra.mxu0 %v6203
      %6669 = vmatprep.subr.bf16.mxu0 0
      %6670 = vmatpush1.bf16.msra.mxu0 %v6204
      %6671 = vmatprep.subr.bf16.mxu0 0
      %6672 = vmatpush1.bf16.msra.mxu0 %v6205
      %6673 = vmatprep.subr.bf16.mxu0 0
      %6674 = vmatpush1.bf16.msra.mxu0 %v6206
      %6675 = vmatprep.subr.bf16.mxu0 0
      %6676 = vmatpush1.bf16.msra.mxu0 %v6207
      %6677 = vmatprep.subr.bf16.mxu0 0
      %6678 = vmatpush1.bf16.msra.mxu0 %v6208
      %6679 = vmatprep.subr.bf16.mxu0 0
      %6680 = vmatpush1.bf16.msra.mxu0 %v6209
      %6681 = vmatprep.subr.bf16.mxu0 0
      %6682 = vmatpush1.bf16.msra.mxu0 %v6210
      %6683 = vmatprep.subr.bf16.mxu0 0
      %6684 = vmatpush1.bf16.msra.mxu0 %v6211
      %6685 = vmatprep.mubr.bf16.mxu0 %v5468
      %6686 = vmatmul.mubr.bf16.gmra.mrb[0].mxu0 %v5467
      %v6687 = vpop.f32.mrb[0].mxu0
      %v6688 = vadd.f32 %v6623, %v6687
      %v6689 = vpop.f32.mrb[0].mxu0
      %v6690 = vpop.f32.mrb[0].mxu0
      %v6691 = vadd.f32 %v6626, %v6690
      %v6692 = vpop.f32.mrb[0].mxu0
      %6693 = vmatprep.mubr.bf16.mxu0 %v5481
      %6694 = vmatmul.mubr.bf16.gmra.mrb[0].mxu0 %v5480
      %v6695 = vpop.f32.mrb[0].mxu0
      %v6696 = vadd.f32 %v6631, %v6695
      %v6697 = vpop.f32.mrb[0].mxu0
      %v6698 = vpop.f32.mrb[0].mxu0
      %v6699 = vadd.f32 %v6634, %v6698
      %v6700 = vpop.f32.mrb[0].mxu0
      %6701 = vmatprep.mubr.bf16.mxu0 %v5494
      %6702 = vmatmul.mubr.bf16.gmra.mrb[0].mxu0 %v5493
      %v6703 = vpop.f32.mrb[0].mxu0
      %v6704 = vadd.f32 %v6639, %v6703
      %v6705 = vpop.f32.mrb[0].mxu0
      %v6706 = vpop.f32.mrb[0].mxu0
      %v6707 = vadd.f32 %v6642, %v6706
      %v6708 = vpop.f32.mrb[0].mxu0
      %6709 = vmatprep.mubr.bf16.mxu0 %v5507
      %6710 = vmatmul.mubr.bf16.gmra.mrb[0].mxu0 %v5506
      %v6711 = vpop.f32.mrb[0].mxu0
      %v6712 = vadd.f32 %v6647, %v6711
      %v6713 = vpop.f32.mrb[0].mxu0
      %v6714 = vpop.f32.mrb[0].mxu0
      %v6715 = vadd.f32 %v6650, %v6714
      %v6716 = vpop.f32.mrb[0].mxu0
      %6717 = vdwg.mxu0
      %6718 = vmatprep.subr.bf16.mxu0 0
      %6719 = vmatpush1.bf16.msra.mxu0 %v6212
      %6720 = vmatprep.subr.bf16.mxu0 0
      %6721 = vmatpush1.bf16.msra.mxu0 %v6213
      %6722 = vmatprep.subr.bf16.mxu0 0
      %6723 = vmatpush1.bf16.msra.mxu0 %v6214
      %6724 = vmatprep.subr.bf16.mxu0 0
      %6725 = vmatpush1.bf16.msra.mxu0 %v6215
      %6726 = vmatprep.subr.bf16.mxu0 0
      %6727 = vmatpush1.bf16.msra.mxu0 0
      %6728 = vmatprep.subr.bf16.mxu0 0
      %6729 = vmatpush1.bf16.msra.mxu0 0
      %6730 = vmatprep.subr.bf16.mxu0 0
      %6731 = vmatpush1.bf16.msra.mxu0 0
      %6732 = vmatprep.subr.bf16.mxu0 0
      %6733 = vmatpush1.bf16.msra.mxu0 0
      %6734 = vmatprep.subr.bf16.mxu0 0
      %6735 = vmatpush1.bf16.msra.mxu0 0
      %6736 = vmatprep.subr.bf16.mxu0 0
      %6737 = vmatpush1.bf16.msra.mxu0 0
      %6738 = vmatprep.subr.bf16.mxu0 0
      %6739 = vmatpush1.bf16.msra.mxu0 0
      %6740 = vmatprep.subr.bf16.mxu0 0
      %6741 = vmatpush1.bf16.msra.mxu0 0
      %6742 = vmatprep.subr.bf16.mxu0 0
      %6743 = vmatpush1.bf16.msra.mxu0 0
      %6744 = vmatprep.subr.bf16.mxu0 0
      %6745 = vmatpush1.bf16.msra.mxu0 0
      %6746 = vmatprep.subr.bf16.mxu0 0
      %6747 = vmatpush1.bf16.msra.mxu0 0
      %6748 = vmatprep.subr.bf16.mxu0 0
      %6749 = vmatpush1.bf16.msra.mxu0 0
      %6750 = vmatprep.mubr.bf16.mxu0 0
      %6751 = vmatmul.mubr.bf16.gmra.mrb[0].mxu0 %v6317
      %v6752 = vpop.f32.mrb[0].mxu0
      %v6753 = vadd.f32 %v6688, %v6752
      %v6754 = vpop.f32.mrb[0].mxu0
      %v6755 = vpop.f32.mrb[0].mxu0
      %v6756 = vadd.f32 %v6691, %v6755
      %v6757 = vpop.f32.mrb[0].mxu0
      %6758 = vmatprep.mubr.bf16.mxu0 0
      %6759 = vmatmul.mubr.bf16.gmra.mrb[0].mxu0 %v6320
      %v6760 = vpop.f32.mrb[0].mxu0
      %v6761 = vadd.f32 %v6696, %v6760
      %v6762 = vpop.f32.mrb[0].mxu0
      %v6763 = vpop.f32.mrb[0].mxu0
      %v6764 = vadd.f32 %v6699, %v6763
      %v6765 = vpop.f32.mrb[0].mxu0
      %6766 = vmatprep.mubr.bf16.mxu0 0
      %6767 = vmatmul.mubr.bf16.gmra.mrb[0].mxu0 %v6323
      %v6768 = vpop.f32.mrb[0].mxu0
      %v6769 = vadd.f32 %v6704, %v6768
      %v6770 = vpop.f32.mrb[0].mxu0
      %v6771 = vpop.f32.mrb[0].mxu0
      %v6772 = vadd.f32 %v6707, %v6771
      %v6773 = vpop.f32.mrb[0].mxu0
      %6774 = vmatprep.mubr.bf16.mxu0 0
      %6775 = vmatmul.mubr.bf16.gmra.mrb[0].mxu0 %v6326
      %v6776 = vpop.f32.mrb[0].mxu0
      %v6777 = vadd.f32 %v6712, %v6776
      %v6778 = vpop.f32.mrb[0].mxu0
      %v6779 = vpop.f32.mrb[0].mxu0
      %v6780 = vadd.f32 %v6715, %v6779
      %v6781 = vpop.f32.mrb[0].mxu0
      %6782 = vdwg.mxu0
      %v6791 = vcombine.high %v6753, %v6753
      %v6793 = vunpack.c.l.s4 1983009808
      %v6794 = vunpack.c.0.s8 %v6793
      %v6795 = vlaneseq
      %v6796 = vshrl.u32 %v6795, 7
      %v6797 = vsub.s32 %v6794, %v6796
      %v6798 = vrot.slane %v6753, %v6797
      %v6800 = vunpack.c.l.s4 1983009808
      %v6801 = vunpack.c.0.s8 %v6800
      %v6802 = vlaneseq
      %v6803 = vshrl.u32 %v6802, 7
      %v6804 = vsub.s32 %v6801, %v6803
      %v6805 = vrot.slane %v6791, %v6804
      %v6806 = vcombine.high %v6798, %v6798
      %v6807 = vcombine.high %v6805, %v6805
      %v6808 = vcombine.high %v6756, %v6756
      %v6810 = vunpack.c.l.s4 1983009808
      %v6811 = vunpack.c.0.s8 %v6810
      %v6812 = vlaneseq
      %v6813 = vshrl.u32 %v6812, 7
      %v6814 = vsub.s32 %v6811, %v6813
      %v6815 = vrot.slane %v6756, %v6814
      %v6817 = vunpack.c.l.s4 1983009808
      %v6818 = vunpack.c.0.s8 %v6817
      %v6819 = vlaneseq
      %v6820 = vshrl.u32 %v6819, 7
      %v6821 = vsub.s32 %v6818, %v6820
      %v6822 = vrot.slane %v6808, %v6821
      %v6823 = vcombine.high %v6815, %v6815
      %v6824 = vcombine.high %v6822, %v6822
      %v6825 = vcombine.high %v6761, %v6761
      %v6827 = vunpack.c.l.s4 1983009808
      %v6828 = vunpack.c.0.s8 %v6827
      %v6829 = vlaneseq
      %v6830 = vshrl.u32 %v6829, 7
      %v6831 = vsub.s32 %v6828, %v6830
      %v6832 = vrot.slane %v6761, %v6831
      %v6834 = vunpack.c.l.s4 1983009808
      %v6835 = vunpack.c.0.s8 %v6834
      %v6836 = vlaneseq
      %v6837 = vshrl.u32 %v6836, 7
      %v6838 = vsub.s32 %v6835, %v6837
      %v6839 = vrot.slane %v6825, %v6838
      %v6840 = vcombine.high %v6832, %v6832
      %v6841 = vcombine.high %v6839, %v6839
      %v6842 = vcombine.high %v6764, %v6764
      %v6844 = vunpack.c.l.s4 1983009808
      %v6845 = vunpack.c.0.s8 %v6844
      %v6846 = vlaneseq
      %v6847 = vshrl.u32 %v6846, 7
      %v6848 = vsub.s32 %v6845, %v6847
      %v6849 = vrot.slane %v6764, %v6848
      %v6851 = vunpack.c.l.s4 1983009808
      %v6852 = vunpack.c.0.s8 %v6851
      %v6853 = vlaneseq
      %v6854 = vshrl.u32 %v6853, 7
      %v6855 = vsub.s32 %v6852, %v6854
      %v6856 = vrot.slane %v6842, %v6855
      %v6857 = vcombine.high %v6849, %v6849
      %v6858 = vcombine.high %v6856, %v6856
      %v6859 = vcombine.high %v6769, %v6769
      %v6861 = vunpack.c.l.s4 1983009808
      %v6862 = vunpack.c.0.s8 %v6861
      %v6863 = vlaneseq
      %v6864 = vshrl.u32 %v6863, 7
      %v6865 = vsub.s32 %v6862, %v6864
      %v6866 = vrot.slane %v6769, %v6865
      %v6868 = vunpack.c.l.s4 1983009808
      %v6869 = vunpack.c.0.s8 %v6868
      %v6870 = vlaneseq
      %v6871 = vshrl.u32 %v6870, 7
      %v6872 = vsub.s32 %v6869, %v6871
      %v6873 = vrot.slane %v6859, %v6872
      %v6874 = vcombine.high %v6866, %v6866
      %v6875 = vcombine.high %v6873, %v6873
      %v6876 = vcombine.high %v6772, %v6772
      %v6878 = vunpack.c.l.s4 1983009808
      %v6879 = vunpack.c.0.s8 %v6878
      %v6880 = vlaneseq
      %v6881 = vshrl.u32 %v6880, 7
      %v6882 = vsub.s32 %v6879, %v6881
      %v6883 = vrot.slane %v6772, %v6882
      %v6885 = vunpack.c.l.s4 1983009808
      %v6886 = vunpack.c.0.s8 %v6885
      %v6887 = vlaneseq
      %v6888 = vshrl.u32 %v6887, 7
      %v6889 = vsub.s32 %v6886, %v6888
      %v6890 = vrot.slane %v6876, %v6889
      %v6891 = vcombine.high %v6883, %v6883
      %v6892 = vcombine.high %v6890, %v6890
      %v6893 = vcombine.high %v6777, %v6777
      %v6895 = vunpack.c.l.s4 1983009808
      %v6896 = vunpack.c.0.s8 %v6895
      %v6897 = vlaneseq
      %v6898 = vshrl.u32 %v6897, 7
      %v6899 = vsub.s32 %v6896, %v6898
      %v6900 = vrot.slane %v6777, %v6899
      %v6902 = vunpack.c.l.s4 1983009808
      %v6903 = vunpack.c.0.s8 %v6902
      %v6904 = vlaneseq
      %v6905 = vshrl.u32 %v6904, 7
      %v6906 = vsub.s32 %v6903, %v6905
      %v6907 = vrot.slane %v6893, %v6906
      %v6908 = vcombine.high %v6900, %v6900
      %v6909 = vcombine.high %v6907, %v6907
      %v6910 = vcombine.high %v6780, %v6780
      %v6912 = vunpack.c.l.s4 1983009808
      %v6913 = vunpack.c.0.s8 %v6912
      %v6914 = vlaneseq
      %v6915 = vshrl.u32 %v6914, 7
      %v6916 = vsub.s32 %v6913, %v6915
      %v6917 = vrot.slane %v6780, %v6916
      %v6919 = vunpack.c.l.s4 1983009808
      %v6920 = vunpack.c.0.s8 %v6919
      %v6921 = vlaneseq
      %v6922 = vshrl.u32 %v6921, 7
      %v6923 = vsub.s32 %v6920, %v6922
      %v6924 = vrot.slane %v6910, %v6923
      %v6925 = vcombine.high %v6917, %v6917
      %v6926 = vcombine.high %v6924, %v6924
      %v6959 = vrot.slane %v6798, 7
      %v6960 = vrot.slane %v6959, 2
      %v6961 = vrot.slane %v6806, 7
      %v6962 = vrot.slane %v6961, 2
      %v6963 = vrot.slane %v6805, 7
      %v6964 = vrot.slane %v6963, 2
      %v6965 = vrot.slane %v6807, 7
      %v6966 = vrot.slane %v6965, 2
      %v6967 = vrot.slane %v6815, 7
      %v6968 = vrot.slane %v6967, 2
      %v6969 = vrot.slane %v6823, 7
      %v6970 = vrot.slane %v6969, 2
      %v6971 = vrot.slane %v6822, 7
      %v6972 = vrot.slane %v6971, 2
      %v6973 = vrot.slane %v6824, 7
      %v6974 = vrot.slane %v6973, 2
      %v6975 = vrot.slane %v6832, 7
      %v6976 = vrot.slane %v6975, 2
      %v6977 = vrot.slane %v6840, 7
      %v6978 = vrot.slane %v6977, 2
      %v6979 = vrot.slane %v6839, 7
      %v6980 = vrot.slane %v6979, 2
      %v6981 = vrot.slane %v6841, 7
      %v6982 = vrot.slane %v6981, 2
      %v6983 = vrot.slane %v6849, 7
      %v6984 = vrot.slane %v6983, 2
      %v6985 = vrot.slane %v6857, 7
      %v6986 = vrot.slane %v6985, 2
      %v6987 = vrot.slane %v6856, 7
      %v6988 = vrot.slane %v6987, 2
      %v6989 = vrot.slane %v6858, 7
      %v6990 = vrot.slane %v6989, 2
      %v6991 = vrot.slane %v6866, 7
      %v6992 = vrot.slane %v6991, 2
      %v6993 = vrot.slane %v6874, 7
      %v6994 = vrot.slane %v6993, 2
      %v6995 = vrot.slane %v6873, 7
      %v6996 = vrot.slane %v6995, 2
      %v6997 = vrot.slane %v6875, 7
      %v6998 = vrot.slane %v6997, 2
      %v6999 = vrot.slane %v6883, 7
      %v7000 = vrot.slane %v6999, 2
      %v7001 = vrot.slane %v6891, 7
      %v7002 = vrot.slane %v7001, 2
      %v7003 = vrot.slane %v6890, 7
      %v7004 = vrot.slane %v7003, 2
      %v7005 = vrot.slane %v6892, 7
      %v7006 = vrot.slane %v7005, 2
      %v7007 = vrot.slane %v6900, 7
      %v7008 = vrot.slane %v7007, 2
      %v7009 = vrot.slane %v6908, 7
      %v7010 = vrot.slane %v7009, 2
      %v7011 = vrot.slane %v6907, 7
      %v7012 = vrot.slane %v7011, 2
      %v7013 = vrot.slane %v6909, 7
      %v7014 = vrot.slane %v7013, 2
      %v7015 = vrot.slane %v6917, 7
      %v7016 = vrot.slane %v7015, 2
      %v7017 = vrot.slane %v6925, 7
      %v7018 = vrot.slane %v7017, 2
      %v7019 = vrot.slane %v6924, 7
      %v7020 = vrot.slane %v7019, 2
      %v7021 = vrot.slane %v6926, 7
      %v7022 = vrot.slane %v7021, 2
      %v7055 = vmax.f32 %v6798, %v6960
      %v7056 = vmax.f32 %v6806, %v6962
      %v7057 = vmax.f32 %v6805, %v6964
      %v7058 = vmax.f32 %v6807, %v6966
      %v7059 = vmax.f32 %v6815, %v6968
      %v7060 = vmax.f32 %v6823, %v6970
      %v7061 = vmax.f32 %v6822, %v6972
      %v7062 = vmax.f32 %v6824, %v6974
      %v7063 = vmax.f32 %v6832, %v6976
      %v7064 = vmax.f32 %v6840, %v6978
      %v7065 = vmax.f32 %v6839, %v6980
      %v7066 = vmax.f32 %v6841, %v6982
      %v7067 = vmax.f32 %v6849, %v6984
      %v7068 = vmax.f32 %v6857, %v6986
      %v7069 = vmax.f32 %v6856, %v6988
      %v7070 = vmax.f32 %v6858, %v6990
      %v7071 = vmax.f32 %v6866, %v6992
      %v7072 = vmax.f32 %v6874, %v6994
      %v7073 = vmax.f32 %v6873, %v6996
      %v7074 = vmax.f32 %v6875, %v6998
      %v7075 = vmax.f32 %v6883, %v7000
      %v7076 = vmax.f32 %v6891, %v7002
      %v7077 = vmax.f32 %v6890, %v7004
      %v7078 = vmax.f32 %v6892, %v7006
      %v7079 = vmax.f32 %v6900, %v7008
      %v7080 = vmax.f32 %v6908, %v7010
      %v7081 = vmax.f32 %v6907, %v7012
      %v7082 = vmax.f32 %v6909, %v7014
      %v7083 = vmax.f32 %v6917, %v7016
      %v7084 = vmax.f32 %v6925, %v7018
      %v7085 = vmax.f32 %v6924, %v7020
      %v7086 = vmax.f32 %v6926, %v7022
      %v7087 = vmax.f32 %v7055, %v7059
      %v7088 = vmax.f32 %v7056, %v7060
      %v7089 = vmax.f32 %v7057, %v7061
      %v7090 = vmax.f32 %v7058, %v7062
      %v7091 = vmax.f32 %v7063, %v7067
      %v7092 = vmax.f32 %v7064, %v7068
      %v7093 = vmax.f32 %v7065, %v7069
      %v7094 = vmax.f32 %v7066, %v7070
      %v7095 = vmax.f32 %v7071, %v7075
      %v7096 = vmax.f32 %v7072, %v7076
      %v7097 = vmax.f32 %v7073, %v7077
      %v7098 = vmax.f32 %v7074, %v7078
      %v7099 = vmax.f32 %v7079, %v7083
      %v7100 = vmax.f32 %v7080, %v7084
      %v7101 = vmax.f32 %v7081, %v7085
      %v7102 = vmax.f32 %v7082, %v7086
      %v7103 = vmul.f32 %v7087, 0.2
      %v7104 = vmul.f32 %v7088, 0.2
      %v7105 = vmul.f32 %v7089, 0.2
      %v7106 = vmul.f32 %v7090, 0.2
      %v7107 = vmul.f32 %v7091, 0.2
      %v7108 = vmul.f32 %v7092, 0.2
      %v7109 = vmul.f32 %v7093, 0.2
      %v7110 = vmul.f32 %v7094, 0.2
      %v7111 = vmul.f32 %v7095, 0.2
      %v7112 = vmul.f32 %v7096, 0.2
      %v7113 = vmul.f32 %v7097, 0.2
      %v7114 = vmul.f32 %v7098, 0.2
      %v7115 = vmul.f32 %v7099, 0.2
      %v7116 = vmul.f32 %v7100, 0.2
      %v7117 = vmul.f32 %v7101, 0.2
      %v7118 = vmul.f32 %v7102, 0.2
      %v7119 = vmax.f32 %v7087, %v7103
      %v7120 = vmax.f32 %v7088, %v7104
      %v7121 = vmax.f32 %v7089, %v7105
      %v7122 = vmax.f32 %v7090, %v7106
      %v7123 = vmax.f32 %v7091, %v7107
      %v7124 = vmax.f32 %v7092, %v7108
      %v7125 = vmax.f32 %v7093, %v7109
      %v7126 = vmax.f32 %v7094, %v7110
      %v7127 = vmax.f32 %v7095, %v7111
      %v7128 = vmax.f32 %v7096, %v7112
      %v7129 = vmax.f32 %v7097, %v7113
      %v7130 = vmax.f32 %v7098, %v7114
      %v7131 = vmax.f32 %v7099, %v7115
      %v7132 = vmax.f32 %v7100, %v7116
      %v7133 = vmax.f32 %v7101, %v7117
      %v7134 = vmax.f32 %v7102, %v7118
      %7135 = vst [vmem:[#allocation4] sm:$0xf] 0
      %7136 = vst [vmem:[#allocation4 + $0x4] sm:$0xf] 0
      %7137 = vst [vmem:[#allocation4 + $0x8] sm:$0xf] 0
      %7138 = vst [vmem:[#allocation4 + $0xc] sm:$0xf] 0
      %7139 = vst [vmem:[#allocation4 + $0x10] sm:$0xf] 0
      %7140 = vst [vmem:[#allocation4 + $0x14] sm:$0xf] 0
      %7141 = vst [vmem:[#allocation4 + $0x18] sm:$0xf] 0
      %7142 = vst [vmem:[#allocation4 + $0x1c] sm:$0xf] 0
      %v7143 = vpack.c.bf16 %v7119, %v7119
      %v7144 = vpack.c.bf16 %v7120, %v7120
      %v7145 = vpack.c.bf16 %v7121, %v7121
      %v7146 = vpack.c.bf16 %v7122, %v7122
      %v7147 = vpack.c.bf16 %v7123, %v7123
      %v7148 = vpack.c.bf16 %v7124, %v7124
      %v7149 = vpack.c.bf16 %v7125, %v7125
      %v7150 = vpack.c.bf16 %v7126, %v7126
      %v7151 = vpack.c.bf16 %v7127, %v7127
      %v7152 = vpack.c.bf16 %v7128, %v7128
      %v7153 = vpack.c.bf16 %v7129, %v7129
      %v7154 = vpack.c.bf16 %v7130, %v7130
      %v7155 = vpack.c.bf16 %v7131, %v7131
      %v7156 = vpack.c.bf16 %v7132, %v7132
      %v7157 = vpack.c.bf16 %v7133, %v7133
      %v7158 = vpack.c.bf16 %v7134, %v7134
      %v7175 = vunpack.c.l.b16 %v7143
      %v7176 = vunpack.c.l.b16 %v7144
      %v7177 = vunpack.c.l.b16 %v7145
      %v7178 = vunpack.c.l.b16 %v7146
      %v7179 = vunpack.c.l.b16 %v7147
      %v7180 = vunpack.c.l.b16 %v7148
      %v7181 = vunpack.c.l.b16 %v7149
      %v7182 = vunpack.c.l.b16 %v7150
      %v7183 = vunpack.c.l.b16 %v7151
      %v7184 = vunpack.c.l.b16 %v7152
      %v7185 = vunpack.c.l.b16 %v7153
      %v7186 = vunpack.c.l.b16 %v7154
      %v7187 = vunpack.c.l.b16 %v7155
      %v7188 = vunpack.c.l.b16 %v7156
      %v7189 = vunpack.c.l.b16 %v7157
      %v7190 = vunpack.c.l.b16 %v7158
      %v7191 = vpack.c.b16 %v7175, %v7175
      %v7192 = vpack.c.b16 %v7176, %v7176
      %v7193 = vpack.c.b16 %v7177, %v7177
      %v7194 = vpack.c.b16 %v7178, %v7178
      %v7195 = vpack.c.b16 %v7179, %v7179
      %v7196 = vpack.c.b16 %v7180, %v7180
      %v7197 = vpack.c.b16 %v7181, %v7181
      %v7198 = vpack.c.b16 %v7182, %v7182
      %v7199 = vpack.c.b16 %v7183, %v7183
      %v7200 = vpack.c.b16 %v7184, %v7184
      %v7201 = vpack.c.b16 %v7185, %v7185
      %v7202 = vpack.c.b16 %v7186, %v7186
      %v7203 = vpack.c.b16 %v7187, %v7187
      %v7204 = vpack.c.b16 %v7188, %v7188
      %v7205 = vpack.c.b16 %v7189, %v7189
      %v7206 = vpack.c.b16 %v7190, %v7190
      %v7207 = vunpack.c.l.b16 %v7191
      %v7208 = vunpack.c.l.b16 %v7192
      %v7209 = vunpack.c.l.b16 %v7193
      %v7210 = vunpack.c.l.b16 %v7194
      %v7211 = vunpack.c.l.b16 %v7195
      %v7212 = vunpack.c.l.b16 %v7196
      %v7213 = vunpack.c.l.b16 %v7197
      %v7214 = vunpack.c.l.b16 %v7198
      %v7215 = vunpack.c.l.b16 %v7199
      %v7216 = vunpack.c.l.b16 %v7200
      %v7217 = vunpack.c.l.b16 %v7201
      %v7218 = vunpack.c.l.b16 %v7202
      %v7219 = vunpack.c.l.b16 %v7203
      %v7220 = vunpack.c.l.b16 %v7204
      %v7221 = vunpack.c.l.b16 %v7205
      %v7222 = vunpack.c.l.b16 %v7206
      %v7223 = vrot.slane %v7207, 6
      %v7224 = vrot.slane %v7208, 5
      %v7225 = vsel %vm2525, %v7224, %v7223
      %v7226 = vrot.slane %v7209, 4
      %v7227 = vsel %vm2528, %v7226, %v7225
      %v7228 = vrot.slane %v7210, 3
      %v7229 = vsel %vm2531, %v7228, %v7227
      %v7230 = vrot.slane %v7211, 6
      %v7231 = vrot.slane %v7212, 5
      %v7232 = vsel %vm2525, %v7231, %v7230
      %v7233 = vrot.slane %v7213, 4
      %v7234 = vsel %vm2528, %v7233, %v7232
      %v7235 = vrot.slane %v7214, 3
      %v7236 = vsel %vm2531, %v7235, %v7234
      %v7237 = vrot.slane %v7215, 6
      %v7238 = vrot.slane %v7216, 5
      %v7239 = vsel %vm2525, %v7238, %v7237
      %v7240 = vrot.slane %v7217, 4
      %v7241 = vsel %vm2528, %v7240, %v7239
      %v7242 = vrot.slane %v7218, 3
      %v7243 = vsel %vm2531, %v7242, %v7241
      %v7244 = vrot.slane %v7219, 6
      %v7245 = vrot.slane %v7220, 5
      %v7246 = vsel %vm2525, %v7245, %v7244
      %v7247 = vrot.slane %v7221, 4
      %v7248 = vsel %vm2528, %v7247, %v7246
      %v7249 = vrot.slane %v7222, 3
      %v7250 = vsel %vm2531, %v7249, %v7248
      %v7251 = vpack.c.b16 %v7229, %v7229
      %v7252 = vpack.c.b16 %v7236, %v7236
      %v7253 = vpack.c.b16 %v7243, %v7243
      %v7254 = vpack.c.b16 %v7250, %v7250
      %s7259 = scalar_lea.vmem [#allocation4], 8
      %7260 = vst [vmem:[%s7259] sm:$0x6] %v7251
      %7261 = vst [vmem:[%s7259 + $0x4] sm:$0x6] %v7252
      %7262 = vst [vmem:[%s7259 + $0x8] sm:$0x6] %v7253
      %7263 = vst [vmem:[%s7259 + $0xc] sm:$0x6] %v7254
      %v7264 = vld [vmem:[#allocation4] sm:$0x3]
      %v7265 = vld [vmem:[#allocation4 + $0x4] sm:$0x3]
      %v7266 = vld [vmem:[#allocation4 + $0x8] sm:$0x3]
      %v7267 = vld [vmem:[#allocation4 + $0xc] sm:$0x3]
      %v7272 = vcombine.low %v7264, %v7265
      %v7273 = vcombine.low %v7266, %v7267
      %v7275 = vunpack.c.l.s4 1983009808
      %v7276 = vunpack.c.0.s8 %v7275
      %v7277 = vlaneseq
      %v7278 = vshrl.u32 %v7277, 7
      %v7279 = vsub.s32 %v7276, %v7278
      %v7280 = vrot.slane %v7272, %v7279
      %v7282 = vunpack.c.l.s4 1983009808
      %v7283 = vunpack.c.0.s8 %v7282
      %v7284 = vlaneseq
      %v7285 = vshrl.u32 %v7284, 7
      %v7286 = vsub.s32 %v7283, %v7285
      %v7287 = vrot.slane %v7273, %v7286
      %v7288 = vcombine.low %v7280, %v7287
      %7290 = vst [vmem:[#allocation5] sm:$0xff] %v7288
      %v7291 = vld [vmem:[#allocation4] sm:$0x7]
      %v7292 = vld [vmem:[#allocation4 + $0x4] sm:$0x7]
      %v7293 = vld [vmem:[#allocation4 + $0x8] sm:$0x7]
      %v7294 = vld [vmem:[#allocation4 + $0xc] sm:$0x7]
      %v7300 = vunpack.c.l.s4 1983009808
      %v7301 = vunpack.c.0.s8 %v7300
      %v7302 = vlaneseq
      %v7303 = vshrl.u32 %v7302, 7
      %v7304 = vsub.s32 %v7301, %v7303
      %v7305 = vrot.slane %v7291, %v7304
      %v7306 = vcombine.high %v7305, %v7305
      %v7308 = vunpack.c.l.s4 1983009808
      %v7309 = vunpack.c.0.s8 %v7308
      %v7310 = vlaneseq
      %v7311 = vshrl.u32 %v7310, 7
      %v7312 = vsub.s32 %v7309, %v7311
      %v7313 = vrot.slane %v7292, %v7312
      %v7314 = vcombine.high %v7313, %v7313
      %v7316 = vunpack.c.l.s4 1983009808
      %v7317 = vunpack.c.0.s8 %v7316
      %v7318 = vlaneseq
      %v7319 = vshrl.u32 %v7318, 7
      %v7320 = vsub.s32 %v7317, %v7319
      %v7321 = vrot.slane %v7293, %v7320
      %v7322 = vcombine.high %v7321, %v7321
      %v7324 = vunpack.c.l.s4 1983009808
      %v7325 = vunpack.c.0.s8 %v7324
      %v7326 = vlaneseq
      %v7327 = vshrl.u32 %v7326, 7
      %v7328 = vsub.s32 %v7325, %v7327
      %v7329 = vrot.slane %v7294, %v7328
      %v7330 = vcombine.high %v7329, %v7329
      %vm7331 = vsmask.f32 1280
      %vm7332 = vsmask.f32 3336
      %vm7333 = vmor %vm7331, %vm7332
      %vm7334 = vsmask.f32 5392
      %vm7335 = vmor %vm7333, %vm7334
      %vm7336 = vsmask.f32 7448
      %vm7337 = vmor %vm7335, %vm7336
      %v7339 = vshrl.u32 %v7305, 16
      %v7341 = vrot.slane %v7339, 6
      %v7342 = vshll.u32 %v7305, 16
      %v7344 = vrot.slane %v7342, 7
      %v7345 = vor.u32 %v7341, %v7344
      %v7346 = vrot.slane %v7345, 2
      %v7348 = vshll.u32 %v7306, 16
      %v7350 = vrot.slane %v7348, 7
      %v7351 = vsel %vm7337, %v7346, %v7350
      %v7353 = vshrl.u32 %v7313, 16
      %v7355 = vrot.slane %v7353, 6
      %v7356 = vshll.u32 %v7313, 16
      %v7358 = vrot.slane %v7356, 7
      %v7359 = vor.u32 %v7355, %v7358
      %v7360 = vrot.slane %v7359, 2
      %v7362 = vshll.u32 %v7314, 16
      %v7364 = vrot.slane %v7362, 7
      %v7365 = vsel %vm7337, %v7360, %v7364
      %v7367 = vshrl.u32 %v7321, 16
      %v7369 = vrot.slane %v7367, 6
      %v7370 = vshll.u32 %v7321, 16
      %v7372 = vrot.slane %v7370, 7
      %v7373 = vor.u32 %v7369, %v7372
      %v7374 = vrot.slane %v7373, 2
      %v7376 = vshll.u32 %v7322, 16
      %v7378 = vrot.slane %v7376, 7
      %v7379 = vsel %vm7337, %v7374, %v7378
      %v7381 = vshrl.u32 %v7329, 16
      %v7383 = vrot.slane %v7381, 6
      %v7384 = vshll.u32 %v7329, 16
      %v7386 = vrot.slane %v7384, 7
      %v7387 = vor.u32 %v7383, %v7386
      %v7388 = vrot.slane %v7387, 2
      %v7390 = vshll.u32 %v7330, 16
      %v7392 = vrot.slane %v7390, 7
      %v7393 = vsel %vm7337, %v7388, %v7392
      %v7394 = vcombine.low %v7351, %v7365
      %v7395 = vcombine.low %v7379, %v7393
      %v7397 = vunpack.c.l.s4 1983009808
      %v7398 = vunpack.c.0.s8 %v7397
      %v7399 = vlaneseq
      %v7400 = vshrl.u32 %v7399, 7
      %v7401 = vsub.s32 %v7398, %v7400
      %v7402 = vrot.slane %v7394, %v7401
      %v7404 = vunpack.c.l.s4 1983009808
      %v7405 = vunpack.c.0.s8 %v7404
      %v7406 = vlaneseq
      %v7407 = vshrl.u32 %v7406, 7
      %v7408 = vsub.s32 %v7405, %v7407
      %v7409 = vrot.slane %v7395, %v7408
      %v7410 = vcombine.low %v7402, %v7409
      %7412 = vst [vmem:[#allocation5 + $0x8] sm:$0xff] %v7410
      %v7413 = vld [vmem:[#allocation4] sm:$0x6]
      %v7414 = vld [vmem:[#allocation4 + $0x4] sm:$0x6]
      %v7415 = vld [vmem:[#allocation4 + $0x8] sm:$0x6]
      %v7416 = vld [vmem:[#allocation4 + $0xc] sm:$0x6]
      %v7422 = vunpack.c.l.s4 1983009808
      %v7423 = vunpack.c.0.s8 %v7422
      %v7424 = vlaneseq
      %v7425 = vshrl.u32 %v7424, 7
      %v7426 = vsub.s32 %v7423, %v7425
      %v7427 = vrot.slane %v7413, %v7426
      %v7428 = vcombine.high %v7427, %v7427
      %v7430 = vunpack.c.l.s4 1983009808
      %v7431 = vunpack.c.0.s8 %v7430
      %v7432 = vlaneseq
      %v7433 = vshrl.u32 %v7432, 7
      %v7434 = vsub.s32 %v7431, %v7433
      %v7435 = vrot.slane %v7414, %v7434
      %v7436 = vcombine.high %v7435, %v7435
      %v7438 = vunpack.c.l.s4 1983009808
      %v7439 = vunpack.c.0.s8 %v7438
      %v7440 = vlaneseq
      %v7441 = vshrl.u32 %v7440, 7
      %v7442 = vsub.s32 %v7439, %v7441
      %v7443 = vrot.slane %v7415, %v7442
      %v7444 = vcombine.high %v7443, %v7443
      %v7446 = vunpack.c.l.s4 1983009808
      %v7447 = vunpack.c.0.s8 %v7446
      %v7448 = vlaneseq
      %v7449 = vshrl.u32 %v7448, 7
      %v7450 = vsub.s32 %v7447, %v7449
      %v7451 = vrot.slane %v7416, %v7450
      %v7452 = vcombine.high %v7451, %v7451
      %vm7453 = vcmask 1040384
      %vm7454 = vcmask 1042434
      %vm7455 = vmor %vm7453, %vm7454
      %vm7456 = vcmask 1044484
      %vm7457 = vmor %vm7455, %vm7456
      %vm7458 = vcmask 1046534
      %vm7459 = vmor %vm7457, %vm7458
      %v7460 = vrot.slane %v7427, 7
      %v7461 = vrot.slane %v7460, 2
      %v7462 = vrot.slane %v7428, 7
      %v7463 = vsel %vm7459, %v7461, %v7462
      %v7464 = vrot.slane %v7435, 7
      %v7465 = vrot.slane %v7464, 2
      %v7466 = vrot.slane %v7436, 7
      %v7467 = vsel %vm7459, %v7465, %v7466
      %v7468 = vrot.slane %v7443, 7
      %v7469 = vrot.slane %v7468, 2
      %v7470 = vrot.slane %v7444, 7
      %v7471 = vsel %vm7459, %v7469, %v7470
      %v7472 = vrot.slane %v7451, 7
      %v7473 = vrot.slane %v7472, 2
      %v7474 = vrot.slane %v7452, 7
      %v7475 = vsel %vm7459, %v7473, %v7474
      %v7476 = vcombine.low %v7463, %v7467
      %v7477 = vcombine.low %v7471, %v7475
      %v7479 = vunpack.c.l.s4 1983009808
      %v7480 = vunpack.c.0.s8 %v7479
      %v7481 = vlaneseq
      %v7482 = vshrl.u32 %v7481, 7
      %v7483 = vsub.s32 %v7480, %v7482
      %v7484 = vrot.slane %v7476, %v7483
      %v7486 = vunpack.c.l.s4 1983009808
      %v7487 = vunpack.c.0.s8 %v7486
      %v7488 = vlaneseq
      %v7489 = vshrl.u32 %v7488, 7
      %v7490 = vsub.s32 %v7487, %v7489
      %v7491 = vrot.slane %v7477, %v7490
      %v7492 = vcombine.low %v7484, %v7491
      %7494 = vst [vmem:[#allocation5 + $0x10] sm:$0xff] %v7492
      %v7495 = vld [vmem:[#allocation4] sm:$0xe]
      %v7496 = vld [vmem:[#allocation4 + $0x4] sm:$0xe]
      %v7497 = vld [vmem:[#allocation4 + $0x8] sm:$0xe]
      %v7498 = vld [vmem:[#allocation4 + $0xc] sm:$0xe]
      %v7504 = vunpack.c.l.s4 1983009808
      %v7505 = vunpack.c.0.s8 %v7504
      %v7506 = vlaneseq
      %v7507 = vshrl.u32 %v7506, 7
      %v7508 = vsub.s32 %v7505, %v7507
      %v7509 = vrot.slane %v7495, %v7508
      %v7510 = vcombine.high %v7509, %v7509
      %v7512 = vunpack.c.l.s4 1983009808
      %v7513 = vunpack.c.0.s8 %v7512
      %v7514 = vlaneseq
      %v7515 = vshrl.u32 %v7514, 7
      %v7516 = vsub.s32 %v7513, %v7515
      %v7517 = vrot.slane %v7496, %v7516
      %v7518 = vcombine.high %v7517, %v7517
      %v7520 = vunpack.c.l.s4 1983009808
      %v7521 = vunpack.c.0.s8 %v7520
      %v7522 = vlaneseq
      %v7523 = vshrl.u32 %v7522, 7
      %v7524 = vsub.s32 %v7521, %v7523
      %v7525 = vrot.slane %v7497, %v7524
      %v7526 = vcombine.high %v7525, %v7525
      %v7528 = vunpack.c.l.s4 1983009808
      %v7529 = vunpack.c.0.s8 %v7528
      %v7530 = vlaneseq
      %v7531 = vshrl.u32 %v7530, 7
      %v7532 = vsub.s32 %v7529, %v7531
      %v7533 = vrot.slane %v7498, %v7532
      %v7534 = vcombine.high %v7533, %v7533
      %vm7535 = vsmask.f32 256
      %vm7536 = vsmask.f32 2312
      %vm7537 = vmor %vm7535, %vm7536
      %vm7538 = vsmask.f32 4368
      %vm7539 = vmor %vm7537, %vm7538
      %vm7540 = vsmask.f32 6424
      %vm7541 = vmor %vm7539, %vm7540
      %v7543 = vshrl.u32 %v7509, 16
      %v7545 = vrot.slane %v7543, 7
      %v7546 = vrot.slane %v7545, 2
      %v7548 = vshrl.u32 %v7510, 16
      %v7550 = vrot.slane %v7548, 7
      %v7551 = vshll.u32 %v7510, 16
      %v7553 = vor.u32 %v7550, %v7551
      %v7554 = vsel %vm7541, %v7546, %v7553
      %v7556 = vshrl.u32 %v7517, 16
      %v7558 = vrot.slane %v7556, 7
      %v7559 = vrot.slane %v7558, 2
      %v7561 = vshrl.u32 %v7518, 16
      %v7563 = vrot.slane %v7561, 7
      %v7564 = vshll.u32 %v7518, 16
      %v7566 = vor.u32 %v7563, %v7564
      %v7567 = vsel %vm7541, %v7559, %v7566
      %v7569 = vshrl.u32 %v7525, 16
      %v7571 = vrot.slane %v7569, 7
      %v7572 = vrot.slane %v7571, 2
      %v7574 = vshrl.u32 %v7526, 16
      %v7576 = vrot.slane %v7574, 7
      %v7577 = vshll.u32 %v7526, 16
      %v7579 = vor.u32 %v7576, %v7577
      %v7580 = vsel %vm7541, %v7572, %v7579
      %v7582 = vshrl.u32 %v7533, 16
      %v7584 = vrot.slane %v7582, 7
      %v7585 = vrot.slane %v7584, 2
      %v7587 = vshrl.u32 %v7534, 16
      %v7589 = vrot.slane %v7587, 7
      %v7590 = vshll.u32 %v7534, 16
      %v7592 = vor.u32 %v7589, %v7590
      %v7593 = vsel %vm7541, %v7585, %v7592
      %v7594 = vcombine.low %v7554, %v7567
      %v7595 = vcombine.low %v7580, %v7593
      %v7597 = vunpack.c.l.s4 1983009808
      %v7598 = vunpack.c.0.s8 %v7597
      %v7599 = vlaneseq
      %v7600 = vshrl.u32 %v7599, 7
      %v7601 = vsub.s32 %v7598, %v7600
      %v7602 = vrot.slane %v7594, %v7601
      %v7604 = vunpack.c.l.s4 1983009808
      %v7605 = vunpack.c.0.s8 %v7604
      %v7606 = vlaneseq
      %v7607 = vshrl.u32 %v7606, 7
      %v7608 = vsub.s32 %v7605, %v7607
      %v7609 = vrot.slane %v7595, %v7608
      %v7610 = vcombine.low %v7602, %v7609
      %7612 = vst [vmem:[#allocation5 + $0x18] sm:$0xff] %v7610
      %v7613 = vld [vmem:[#allocation4] sm:$0xc]
      %v7614 = vld [vmem:[#allocation4 + $0x4] sm:$0xc]
      %v7615 = vld [vmem:[#allocation4 + $0x8] sm:$0xc]
      %v7616 = vld [vmem:[#allocation4 + $0xc] sm:$0xc]
      %v7622 = vunpack.c.l.s4 1983009808
      %v7623 = vunpack.c.0.s8 %v7622
      %v7624 = vlaneseq
      %v7625 = vshrl.u32 %v7624, 7
      %v7626 = vsub.s32 %v7623, %v7625
      %v7627 = vrot.slane %v7613, %v7626
      %v7628 = vcombine.high %v7627, %v7627
      %v7630 = vunpack.c.l.s4 1983009808
      %v7631 = vunpack.c.0.s8 %v7630
      %v7632 = vlaneseq
      %v7633 = vshrl.u32 %v7632, 7
      %v7634 = vsub.s32 %v7631, %v7633
      %v7635 = vrot.slane %v7614, %v7634
      %v7636 = vcombine.high %v7635, %v7635
      %v7638 = vunpack.c.l.s4 1983009808
      %v7639 = vunpack.c.0.s8 %v7638
      %v7640 = vlaneseq
      %v7641 = vshrl.u32 %v7640, 7
      %v7642 = vsub.s32 %v7639, %v7641
      %v7643 = vrot.slane %v7615, %v7642
      %v7644 = vcombine.high %v7643, %v7643
      %v7646 = vunpack.c.l.s4 1983009808
      %v7647 = vunpack.c.0.s8 %v7646
      %v7648 = vlaneseq
      %v7649 = vshrl.u32 %v7648, 7
      %v7650 = vsub.s32 %v7647, %v7649
      %v7651 = vrot.slane %v7616, %v7650
      %v7652 = vcombine.high %v7651, %v7651
      %v7653 = vcombine.low %v7628, %v7636
      %v7654 = vcombine.low %v7644, %v7652
      %v7656 = vunpack.c.l.s4 1983009808
      %v7657 = vunpack.c.0.s8 %v7656
      %v7658 = vlaneseq
      %v7659 = vshrl.u32 %v7658, 7
      %v7660 = vsub.s32 %v7657, %v7659
      %v7661 = vrot.slane %v7653, %v7660
      %v7663 = vunpack.c.l.s4 1983009808
      %v7664 = vunpack.c.0.s8 %v7663
      %v7665 = vlaneseq
      %v7666 = vshrl.u32 %v7665, 7
      %v7667 = vsub.s32 %v7664, %v7666
      %v7668 = vrot.slane %v7654, %v7667
      %v7669 = vcombine.low %v7661, %v7668
      %7671 = vst [vmem:[#allocation5 + $0x20] sm:$0xff] %v7669
      %s7672 = scalar_lea.vmem [#allocation4], 4
      %v7673 = vld [vmem:[%s7672] sm:$0x3]
      %v7674 = vld [vmem:[%s7672 + $0x4] sm:$0x3]
      %v7675 = vld [vmem:[%s7672 + $0x8] sm:$0x3]
      %v7676 = vld [vmem:[%s7672 + $0xc] sm:$0x3]
      %v7681 = vcombine.low %v7673, %v7674
      %v7682 = vcombine.low %v7675, %v7676
      %v7684 = vunpack.c.l.s4 1983009808
      %v7685 = vunpack.c.0.s8 %v7684
      %v7686 = vlaneseq
      %v7687 = vshrl.u32 %v7686, 7
      %v7688 = vsub.s32 %v7685, %v7687
      %v7689 = vrot.slane %v7681, %v7688
      %v7691 = vunpack.c.l.s4 1983009808
      %v7692 = vunpack.c.0.s8 %v7691
      %v7693 = vlaneseq
      %v7694 = vshrl.u32 %v7693, 7
      %v7695 = vsub.s32 %v7692, %v7694
      %v7696 = vrot.slane %v7682, %v7695
      %v7697 = vcombine.low %v7689, %v7696
      %7699 = vst [vmem:[#allocation5 + $0x28] sm:$0xff] %v7697
      %v7700 = vld [vmem:[%s7672] sm:$0x7]
      %v7701 = vld [vmem:[%s7672 + $0x4] sm:$0x7]
      %v7702 = vld [vmem:[%s7672 + $0x8] sm:$0x7]
      %v7703 = vld [vmem:[%s7672 + $0xc] sm:$0x7]
      %v7709 = vunpack.c.l.s4 1983009808
      %v7710 = vunpack.c.0.s8 %v7709
      %v7711 = vlaneseq
      %v7712 = vshrl.u32 %v7711, 7
      %v7713 = vsub.s32 %v7710, %v7712
      %v7714 = vrot.slane %v7700, %v7713
      %v7715 = vcombine.high %v7714, %v7714
      %v7717 = vunpack.c.l.s4 1983009808
      %v7718 = vunpack.c.0.s8 %v7717
      %v7719 = vlaneseq
      %v7720 = vshrl.u32 %v7719, 7
      %v7721 = vsub.s32 %v7718, %v7720
      %v7722 = vrot.slane %v7701, %v7721
      %v7723 = vcombine.high %v7722, %v7722
      %v7725 = vunpack.c.l.s4 1983009808
      %v7726 = vunpack.c.0.s8 %v7725
      %v7727 = vlaneseq
      %v7728 = vshrl.u32 %v7727, 7
      %v7729 = vsub.s32 %v7726, %v7728
      %v7730 = vrot.slane %v7702, %v7729
      %v7731 = vcombine.high %v7730, %v7730
      %v7733 = vunpack.c.l.s4 1983009808
      %v7734 = vunpack.c.0.s8 %v7733
      %v7735 = vlaneseq
      %v7736 = vshrl.u32 %v7735, 7
      %v7737 = vsub.s32 %v7734, %v7736
      %v7738 = vrot.slane %v7703, %v7737
      %v7739 = vcombine.high %v7738, %v7738
      %v7741 = vshrl.u32 %v7714, 16
      %v7743 = vrot.slane %v7741, 6
      %v7744 = vshll.u32 %v7714, 16
      %v7746 = vrot.slane %v7744, 7
      %v7747 = vor.u32 %v7743, %v7746
      %v7748 = vrot.slane %v7747, 2
      %v7750 = vshll.u32 %v7715, 16
      %v7752 = vrot.slane %v7750, 7
      %v7753 = vsel %vm7337, %v7748, %v7752
      %v7755 = vshrl.u32 %v7722, 16
      %v7757 = vrot.slane %v7755, 6
      %v7758 = vshll.u32 %v7722, 16
      %v7760 = vrot.slane %v7758, 7
      %v7761 = vor.u32 %v7757, %v7760
      %v7762 = vrot.slane %v7761, 2
      %v7764 = vshll.u32 %v7723, 16
      %v7766 = vrot.slane %v7764, 7
      %v7767 = vsel %vm7337, %v7762, %v7766
      %v7769 = vshrl.u32 %v7730, 16
      %v7771 = vrot.slane %v7769, 6
      %v7772 = vshll.u32 %v7730, 16
      %v7774 = vrot.slane %v7772, 7
      %v7775 = vor.u32 %v7771, %v7774
      %v7776 = vrot.slane %v7775, 2
      %v7778 = vshll.u32 %v7731, 16
      %v7780 = vrot.slane %v7778, 7
      %v7781 = vsel %vm7337, %v7776, %v7780
      %v7783 = vshrl.u32 %v7738, 16
      %v7785 = vrot.slane %v7783, 6
      %v7786 = vshll.u32 %v7738, 16
      %v7788 = vrot.slane %v7786, 7
      %v7789 = vor.u32 %v7785, %v7788
      %v7790 = vrot.slane %v7789, 2
      %v7792 = vshll.u32 %v7739, 16
      %v7794 = vrot.slane %v7792, 7
      %v7795 = vsel %vm7337, %v7790, %v7794
      %v7796 = vcombine.low %v7753, %v7767
      %v7797 = vcombine.low %v7781, %v7795
      %v7799 = vunpack.c.l.s4 1983009808
      %v7800 = vunpack.c.0.s8 %v7799
      %v7801 = vlaneseq
      %v7802 = vshrl.u32 %v7801, 7
      %v7803 = vsub.s32 %v7800, %v7802
      %v7804 = vrot.slane %v7796, %v7803
      %v7806 = vunpack.c.l.s4 1983009808
      %v7807 = vunpack.c.0.s8 %v7806
      %v7808 = vlaneseq
      %v7809 = vshrl.u32 %v7808, 7
      %v7810 = vsub.s32 %v7807, %v7809
      %v7811 = vrot.slane %v7797, %v7810
      %v7812 = vcombine.low %v7804, %v7811
      %7814 = vst [vmem:[#allocation5 + $0x30] sm:$0xff] %v7812
      %v7815 = vld [vmem:[%s7672] sm:$0x6]
      %v7816 = vld [vmem:[%s7672 + $0x4] sm:$0x6]
      %v7817 = vld [vmem:[%s7672 + $0x8] sm:$0x6]
      %v7818 = vld [vmem:[%s7672 + $0xc] sm:$0x6]
      %v7824 = vunpack.c.l.s4 1983009808
      %v7825 = vunpack.c.0.s8 %v7824
      %v7826 = vlaneseq
      %v7827 = vshrl.u32 %v7826, 7
      %v7828 = vsub.s32 %v7825, %v7827
      %v7829 = vrot.slane %v7815, %v7828
      %v7830 = vcombine.high %v7829, %v7829
      %v7832 = vunpack.c.l.s4 1983009808
      %v7833 = vunpack.c.0.s8 %v7832
      %v7834 = vlaneseq
      %v7835 = vshrl.u32 %v7834, 7
      %v7836 = vsub.s32 %v7833, %v7835
      %v7837 = vrot.slane %v7816, %v7836
      %v7838 = vcombine.high %v7837, %v7837
      %v7840 = vunpack.c.l.s4 1983009808
      %v7841 = vunpack.c.0.s8 %v7840
      %v7842 = vlaneseq
      %v7843 = vshrl.u32 %v7842, 7
      %v7844 = vsub.s32 %v7841, %v7843
      %v7845 = vrot.slane %v7817, %v7844
      %v7846 = vcombine.high %v7845, %v7845
      %v7848 = vunpack.c.l.s4 1983009808
      %v7849 = vunpack.c.0.s8 %v7848
      %v7850 = vlaneseq
      %v7851 = vshrl.u32 %v7850, 7
      %v7852 = vsub.s32 %v7849, %v7851
      %v7853 = vrot.slane %v7818, %v7852
      %v7854 = vcombine.high %v7853, %v7853
      %v7855 = vrot.slane %v7829, 7
      %v7856 = vrot.slane %v7855, 2
      %v7857 = vrot.slane %v7830, 7
      %v7858 = vsel %vm7459, %v7856, %v7857
      %v7859 = vrot.slane %v7837, 7
      %v7860 = vrot.slane %v7859, 2
      %v7861 = vrot.slane %v7838, 7
      %v7862 = vsel %vm7459, %v7860, %v7861
      %v7863 = vrot.slane %v7845, 7
      %v7864 = vrot.slane %v7863, 2
      %v7865 = vrot.slane %v7846, 7
      %v7866 = vsel %vm7459, %v7864, %v7865
      %v7867 = vrot.slane %v7853, 7
      %v7868 = vrot.slane %v7867, 2
      %v7869 = vrot.slane %v7854, 7
      %v7870 = vsel %vm7459, %v7868, %v7869
      %v7871 = vcombine.low %v7858, %v7862
      %v7872 = vcombine.low %v7866, %v7870
      %v7874 = vunpack.c.l.s4 1983009808
      %v7875 = vunpack.c.0.s8 %v7874
      %v7876 = vlaneseq
      %v7877 = vshrl.u32 %v7876, 7
      %v7878 = vsub.s32 %v7875, %v7877
      %v7879 = vrot.slane %v7871, %v7878
      %v7881 = vunpack.c.l.s4 1983009808
      %v7882 = vunpack.c.0.s8 %v7881
      %v7883 = vlaneseq
      %v7884 = vshrl.u32 %v7883, 7
      %v7885 = vsub.s32 %v7882, %v7884
      %v7886 = vrot.slane %v7872, %v7885
      %v7887 = vcombine.low %v7879, %v7886
      %7889 = vst [vmem:[#allocation5 + $0x38] sm:$0xff] %v7887
      %v7890 = vld [vmem:[%s7672] sm:$0xe]
      %v7891 = vld [vmem:[%s7672 + $0x4] sm:$0xe]
      %v7892 = vld [vmem:[%s7672 + $0x8] sm:$0xe]
      %v7893 = vld [vmem:[%s7672 + $0xc] sm:$0xe]
      %v7899 = vunpack.c.l.s4 1983009808
      %v7900 = vunpack.c.0.s8 %v7899
      %v7901 = vlaneseq
      %v7902 = vshrl.u32 %v7901, 7
      %v7903 = vsub.s32 %v7900, %v7902
      %v7904 = vrot.slane %v7890, %v7903
      %v7905 = vcombine.high %v7904, %v7904
      %v7907 = vunpack.c.l.s4 1983009808
      %v7908 = vunpack.c.0.s8 %v7907
      %v7909 = vlaneseq
      %v7910 = vshrl.u32 %v7909, 7
      %v7911 = vsub.s32 %v7908, %v7910
      %v7912 = vrot.slane %v7891, %v7911
      %v7913 = vcombine.high %v7912, %v7912
      %v7915 = vunpack.c.l.s4 1983009808
      %v7916 = vunpack.c.0.s8 %v7915
      %v7917 = vlaneseq
      %v7918 = vshrl.u32 %v7917, 7
      %v7919 = vsub.s32 %v7916, %v7918
      %v7920 = vrot.slane %v7892, %v7919
      %v7921 = vcombine.high %v7920, %v7920
      %v7923 = vunpack.c.l.s4 1983009808
      %v7924 = vunpack.c.0.s8 %v7923
      %v7925 = vlaneseq
      %v7926 = vshrl.u32 %v7925, 7
      %v7927 = vsub.s32 %v7924, %v7926
      %v7928 = vrot.slane %v7893, %v7927
      %v7929 = vcombine.high %v7928, %v7928
      %v7931 = vshrl.u32 %v7904, 16
      %v7933 = vrot.slane %v7931, 7
      %v7934 = vrot.slane %v7933, 2
      %v7936 = vshrl.u32 %v7905, 16
      %v7938 = vrot.slane %v7936, 7
      %v7939 = vshll.u32 %v7905, 16
      %v7941 = vor.u32 %v7938, %v7939
      %v7942 = vsel %vm7541, %v7934, %v7941
      %v7944 = vshrl.u32 %v7912, 16
      %v7946 = vrot.slane %v7944, 7
      %v7947 = vrot.slane %v7946, 2
      %v7949 = vshrl.u32 %v7913, 16
      %v7951 = vrot.slane %v7949, 7
      %v7952 = vshll.u32 %v7913, 16
      %v7954 = vor.u32 %v7951, %v7952
      %v7955 = vsel %vm7541, %v7947, %v7954
      %v7957 = vshrl.u32 %v7920, 16
      %v7959 = vrot.slane %v7957, 7
      %v7960 = vrot.slane %v7959, 2
      %v7962 = vshrl.u32 %v7921, 16
      %v7964 = vrot.slane %v7962, 7
      %v7965 = vshll.u32 %v7921, 16
      %v7967 = vor.u32 %v7964, %v7965
      %v7968 = vsel %vm7541, %v7960, %v7967
      %v7970 = vshrl.u32 %v7928, 16
      %v7972 = vrot.slane %v7970, 7
      %v7973 = vrot.slane %v7972, 2
      %v7975 = vshrl.u32 %v7929, 16
      %v7977 = vrot.slane %v7975, 7
      %v7978 = vshll.u32 %v7929, 16
      %v7980 = vor.u32 %v7977, %v7978
      %v7981 = vsel %vm7541, %v7973, %v7980
      %v7982 = vcombine.low %v7942, %v7955
      %v7983 = vcombine.low %v7968, %v7981
      %v7985 = vunpack.c.l.s4 1983009808
      %v7986 = vunpack.c.0.s8 %v7985
      %v7987 = vlaneseq
      %v7988 = vshrl.u32 %v7987, 7
      %v7989 = vsub.s32 %v7986, %v7988
      %v7990 = vrot.slane %v7982, %v7989
      %v7992 = vunpack.c.l.s4 1983009808
      %v7993 = vunpack.c.0.s8 %v7992
      %v7994 = vlaneseq
      %v7995 = vshrl.u32 %v7994, 7
      %v7996 = vsub.s32 %v7993, %v7995
      %v7997 = vrot.slane %v7983, %v7996
      %v7998 = vcombine.low %v7990, %v7997
      %8000 = vst [vmem:[#allocation5 + $0x40] sm:$0xff] %v7998
      %v8001 = vld [vmem:[%s7672] sm:$0xc]
      %v8002 = vld [vmem:[%s7672 + $0x4] sm:$0xc]
      %v8003 = vld [vmem:[%s7672 + $0x8] sm:$0xc]
      %v8004 = vld [vmem:[%s7672 + $0xc] sm:$0xc]
      %v8010 = vunpack.c.l.s4 1983009808
      %v8011 = vunpack.c.0.s8 %v8010
      %v8012 = vlaneseq
      %v8013 = vshrl.u32 %v8012, 7
      %v8014 = vsub.s32 %v8011, %v8013
      %v8015 = vrot.slane %v8001, %v8014
      %v8016 = vcombine.high %v8015, %v8015
      %v8018 = vunpack.c.l.s4 1983009808
      %v8019 = vunpack.c.0.s8 %v8018
      %v8020 = vlaneseq
      %v8021 = vshrl.u32 %v8020, 7
      %v8022 = vsub.s32 %v8019, %v8021
      %v8023 = vrot.slane %v8002, %v8022
      %v8024 = vcombine.high %v8023, %v8023
      %v8026 = vunpack.c.l.s4 1983009808
      %v8027 = vunpack.c.0.s8 %v8026
      %v8028 = vlaneseq
      %v8029 = vshrl.u32 %v8028, 7
      %v8030 = vsub.s32 %v8027, %v8029
      %v8031 = vrot.slane %v8003, %v8030
      %v8032 = vcombine.high %v8031, %v8031
      %v8034 = vunpack.c.l.s4 1983009808
      %v8035 = vunpack.c.0.s8 %v8034
      %v8036 = vlaneseq
      %v8037 = vshrl.u32 %v8036, 7
      %v8038 = vsub.s32 %v8035, %v8037
      %v8039 = vrot.slane %v8004, %v8038
      %v8040 = vcombine.high %v8039, %v8039
      %v8041 = vcombine.low %v8016, %v8024
      %v8042 = vcombine.low %v8032, %v8040
      %v8044 = vunpack.c.l.s4 1983009808
      %v8045 = vunpack.c.0.s8 %v8044
      %v8046 = vlaneseq
      %v8047 = vshrl.u32 %v8046, 7
      %v8048 = vsub.s32 %v8045, %v8047
      %v8049 = vrot.slane %v8041, %v8048
      %v8051 = vunpack.c.l.s4 1983009808
      %v8052 = vunpack.c.0.s8 %v8051
      %v8053 = vlaneseq
      %v8054 = vshrl.u32 %v8053, 7
      %v8055 = vsub.s32 %v8052, %v8054
      %v8056 = vrot.slane %v8042, %v8055
      %v8057 = vcombine.low %v8049, %v8056
      %8059 = vst [vmem:[#allocation5 + $0x48] sm:$0xff] %v8057
      %v8060 = vld [vmem:[%s7259] sm:$0x3]
      %v8061 = vld [vmem:[%s7259 + $0x4] sm:$0x3]
      %v8062 = vld [vmem:[%s7259 + $0x8] sm:$0x3]
      %v8063 = vld [vmem:[%s7259 + $0xc] sm:$0x3]
      %v8068 = vcombine.low %v8060, %v8061
      %v8069 = vcombine.low %v8062, %v8063
      %v8071 = vunpack.c.l.s4 1983009808
      %v8072 = vunpack.c.0.s8 %v8071
      %v8073 = vlaneseq
      %v8074 = vshrl.u32 %v8073, 7
      %v8075 = vsub.s32 %v8072, %v8074
      %v8076 = vrot.slane %v8068, %v8075
      %v8078 = vunpack.c.l.s4 1983009808
      %v8079 = vunpack.c.0.s8 %v8078
      %v8080 = vlaneseq
      %v8081 = vshrl.u32 %v8080, 7
      %v8082 = vsub.s32 %v8079, %v8081
      %v8083 = vrot.slane %v8069, %v8082
      %v8084 = vcombine.low %v8076, %v8083
      %8086 = vst [vmem:[#allocation5 + $0x50] sm:$0xff] %v8084
      %v8087 = vld [vmem:[%s7259] sm:$0x7]
      %v8088 = vld [vmem:[%s7259 + $0x4] sm:$0x7]
      %v8089 = vld [vmem:[%s7259 + $0x8] sm:$0x7]
      %v8090 = vld [vmem:[%s7259 + $0xc] sm:$0x7]
      %v8096 = vunpack.c.l.s4 1983009808
      %v8097 = vunpack.c.0.s8 %v8096
      %v8098 = vlaneseq
      %v8099 = vshrl.u32 %v8098, 7
      %v8100 = vsub.s32 %v8097, %v8099
      %v8101 = vrot.slane %v8087, %v8100
      %v8102 = vcombine.high %v8101, %v8101
      %v8104 = vunpack.c.l.s4 1983009808
      %v8105 = vunpack.c.0.s8 %v8104
      %v8106 = vlaneseq
      %v8107 = vshrl.u32 %v8106, 7
      %v8108 = vsub.s32 %v8105, %v8107
      %v8109 = vrot.slane %v8088, %v8108
      %v8110 = vcombine.high %v8109, %v8109
      %v8112 = vunpack.c.l.s4 1983009808
      %v8113 = vunpack.c.0.s8 %v8112
      %v8114 = vlaneseq
      %v8115 = vshrl.u32 %v8114, 7
      %v8116 = vsub.s32 %v8113, %v8115
      %v8117 = vrot.slane %v8089, %v8116
      %v8118 = vcombine.high %v8117, %v8117
      %v8120 = vunpack.c.l.s4 1983009808
      %v8121 = vunpack.c.0.s8 %v8120
      %v8122 = vlaneseq
      %v8123 = vshrl.u32 %v8122, 7
      %v8124 = vsub.s32 %v8121, %v8123
      %v8125 = vrot.slane %v8090, %v8124
      %v8126 = vcombine.high %v8125, %v8125
      %v8128 = vshrl.u32 %v8101, 16
      %v8130 = vrot.slane %v8128, 6
      %v8131 = vshll.u32 %v8101, 16
      %v8133 = vrot.slane %v8131, 7
      %v8134 = vor.u32 %v8130, %v8133
      %v8135 = vrot.slane %v8134, 2
      %v8137 = vshll.u32 %v8102, 16
      %v8139 = vrot.slane %v8137, 7
      %v8140 = vsel %vm7337, %v8135, %v8139
      %v8142 = vshrl.u32 %v8109, 16
      %v8144 = vrot.slane %v8142, 6
      %v8145 = vshll.u32 %v8109, 16
      %v8147 = vrot.slane %v8145, 7
      %v8148 = vor.u32 %v8144, %v8147
      %v8149 = vrot.slane %v8148, 2
      %v8151 = vshll.u32 %v8110, 16
      %v8153 = vrot.slane %v8151, 7
      %v8154 = vsel %vm7337, %v8149, %v8153
      %v8156 = vshrl.u32 %v8117, 16
      %v8158 = vrot.slane %v8156, 6
      %v8159 = vshll.u32 %v8117, 16
      %v8161 = vrot.slane %v8159, 7
      %v8162 = vor.u32 %v8158, %v8161
      %v8163 = vrot.slane %v8162, 2
      %v8165 = vshll.u32 %v8118, 16
      %v8167 = vrot.slane %v8165, 7
      %v8168 = vsel %vm7337, %v8163, %v8167
      %v8170 = vshrl.u32 %v8125, 16
      %v8172 = vrot.slane %v8170, 6
      %v8173 = vshll.u32 %v8125, 16
      %v8175 = vrot.slane %v8173, 7
      %v8176 = vor.u32 %v8172, %v8175
      %v8177 = vrot.slane %v8176, 2
      %v8179 = vshll.u32 %v8126, 16
      %v8181 = vrot.slane %v8179, 7
      %v8182 = vsel %vm7337, %v8177, %v8181
      %v8183 = vcombine.low %v8140, %v8154
      %v8184 = vcombine.low %v8168, %v8182
      %v8186 = vunpack.c.l.s4 1983009808
      %v8187 = vunpack.c.0.s8 %v8186
      %v8188 = vlaneseq
      %v8189 = vshrl.u32 %v8188, 7
      %v8190 = vsub.s32 %v8187, %v8189
      %v8191 = vrot.slane %v8183, %v8190
      %v8193 = vunpack.c.l.s4 1983009808
      %v8194 = vunpack.c.0.s8 %v8193
      %v8195 = vlaneseq
      %v8196 = vshrl.u32 %v8195, 7
      %v8197 = vsub.s32 %v8194, %v8196
      %v8198 = vrot.slane %v8184, %v8197
      %v8199 = vcombine.low %v8191, %v8198
      %8201 = vst [vmem:[#allocation5 + $0x58] sm:$0xff] %v8199
      %v8202 = vld [vmem:[%s7259] sm:$0x6]
      %v8203 = vld [vmem:[%s7259 + $0x4] sm:$0x6]
      %v8204 = vld [vmem:[%s7259 + $0x8] sm:$0x6]
      %v8205 = vld [vmem:[%s7259 + $0xc] sm:$0x6]
      %v8211 = vunpack.c.l.s4 1983009808
      %v8212 = vunpack.c.0.s8 %v8211
      %v8213 = vlaneseq
      %v8214 = vshrl.u32 %v8213, 7
      %v8215 = vsub.s32 %v8212, %v8214
      %v8216 = vrot.slane %v8202, %v8215
      %v8217 = vcombine.high %v8216, %v8216
      %v8219 = vunpack.c.l.s4 1983009808
      %v8220 = vunpack.c.0.s8 %v8219
      %v8221 = vlaneseq
      %v8222 = vshrl.u32 %v8221, 7
      %v8223 = vsub.s32 %v8220, %v8222
      %v8224 = vrot.slane %v8203, %v8223
      %v8225 = vcombine.high %v8224, %v8224
      %v8227 = vunpack.c.l.s4 1983009808
      %v8228 = vunpack.c.0.s8 %v8227
      %v8229 = vlaneseq
      %v8230 = vshrl.u32 %v8229, 7
      %v8231 = vsub.s32 %v8228, %v8230
      %v8232 = vrot.slane %v8204, %v8231
      %v8233 = vcombine.high %v8232, %v8232
      %v8235 = vunpack.c.l.s4 1983009808
      %v8236 = vunpack.c.0.s8 %v8235
      %v8237 = vlaneseq
      %v8238 = vshrl.u32 %v8237, 7
      %v8239 = vsub.s32 %v8236, %v8238
      %v8240 = vrot.slane %v8205, %v8239
      %v8241 = vcombine.high %v8240, %v8240
      %v8242 = vrot.slane %v8216, 7
      %v8243 = vrot.slane %v8242, 2
      %v8244 = vrot.slane %v8217, 7
      %v8245 = vsel %vm7459, %v8243, %v8244
      %v8246 = vrot.slane %v8224, 7
      %v8247 = vrot.slane %v8246, 2
      %v8248 = vrot.slane %v8225, 7
      %v8249 = vsel %vm7459, %v8247, %v8248
      %v8250 = vrot.slane %v8232, 7
      %v8251 = vrot.slane %v8250, 2
      %v8252 = vrot.slane %v8233, 7
      %v8253 = vsel %vm7459, %v8251, %v8252
      %v8254 = vrot.slane %v8240, 7
      %v8255 = vrot.slane %v8254, 2
      %v8256 = vrot.slane %v8241, 7
      %v8257 = vsel %vm7459, %v8255, %v8256
      %v8258 = vcombine.low %v8245, %v8249
      %v8259 = vcombine.low %v8253, %v8257
      %v8261 = vunpack.c.l.s4 1983009808
      %v8262 = vunpack.c.0.s8 %v8261
      %v8263 = vlaneseq
      %v8264 = vshrl.u32 %v8263, 7
      %v8265 = vsub.s32 %v8262, %v8264
      %v8266 = vrot.slane %v8258, %v8265
      %v8268 = vunpack.c.l.s4 1983009808
      %v8269 = vunpack.c.0.s8 %v8268
      %v8270 = vlaneseq
      %v8271 = vshrl.u32 %v8270, 7
      %v8272 = vsub.s32 %v8269, %v8271
      %v8273 = vrot.slane %v8259, %v8272
      %v8274 = vcombine.low %v8266, %v8273
      %8276 = vst [vmem:[#allocation5 + $0x60] sm:$0xff] %v8274
      %v8277 = vld [vmem:[%s7259] sm:$0xe]
      %v8278 = vld [vmem:[%s7259 + $0x4] sm:$0xe]
      %v8279 = vld [vmem:[%s7259 + $0x8] sm:$0xe]
      %v8280 = vld [vmem:[%s7259 + $0xc] sm:$0xe]
      %v8286 = vunpack.c.l.s4 1983009808
      %v8287 = vunpack.c.0.s8 %v8286
      %v8288 = vlaneseq
      %v8289 = vshrl.u32 %v8288, 7
      %v8290 = vsub.s32 %v8287, %v8289
      %v8291 = vrot.slane %v8277, %v8290
      %v8292 = vcombine.high %v8291, %v8291
      %v8294 = vunpack.c.l.s4 1983009808
      %v8295 = vunpack.c.0.s8 %v8294
      %v8296 = vlaneseq
      %v8297 = vshrl.u32 %v8296, 7
      %v8298 = vsub.s32 %v8295, %v8297
      %v8299 = vrot.slane %v8278, %v8298
      %v8300 = vcombine.high %v8299, %v8299
      %v8302 = vunpack.c.l.s4 1983009808
      %v8303 = vunpack.c.0.s8 %v8302
      %v8304 = vlaneseq
      %v8305 = vshrl.u32 %v8304, 7
      %v8306 = vsub.s32 %v8303, %v8305
      %v8307 = vrot.slane %v8279, %v8306
      %v8308 = vcombine.high %v8307, %v8307
      %v8310 = vunpack.c.l.s4 1983009808
      %v8311 = vunpack.c.0.s8 %v8310
      %v8312 = vlaneseq
      %v8313 = vshrl.u32 %v8312, 7
      %v8314 = vsub.s32 %v8311, %v8313
      %v8315 = vrot.slane %v8280, %v8314
      %v8316 = vcombine.high %v8315, %v8315
      %v8318 = vshrl.u32 %v8291, 16
      %v8320 = vrot.slane %v8318, 7
      %v8321 = vrot.slane %v8320, 2
      %v8323 = vshrl.u32 %v8292, 16
      %v8325 = vrot.slane %v8323, 7
      %v8326 = vshll.u32 %v8292, 16
      %v8328 = vor.u32 %v8325, %v8326
      %v8329 = vsel %vm7541, %v8321, %v8328
      %v8331 = vshrl.u32 %v8299, 16
      %v8333 = vrot.slane %v8331, 7
      %v8334 = vrot.slane %v8333, 2
      %v8336 = vshrl.u32 %v8300, 16
      %v8338 = vrot.slane %v8336, 7
      %v8339 = vshll.u32 %v8300, 16
      %v8341 = vor.u32 %v8338, %v8339
      %v8342 = vsel %vm7541, %v8334, %v8341
      %v8344 = vshrl.u32 %v8307, 16
      %v8346 = vrot.slane %v8344, 7
      %v8347 = vrot.slane %v8346, 2
      %v8349 = vshrl.u32 %v8308, 16
      %v8351 = vrot.slane %v8349, 7
      %v8352 = vshll.u32 %v8308, 16
      %v8354 = vor.u32 %v8351, %v8352
      %v8355 = vsel %vm7541, %v8347, %v8354
      %v8357 = vshrl.u32 %v8315, 16
      %v8359 = vrot.slane %v8357, 7
      %v8360 = vrot.slane %v8359, 2
      %v8362 = vshrl.u32 %v8316, 16
      %v8364 = vrot.slane %v8362, 7
      %v8365 = vshll.u32 %v8316, 16
      %v8367 = vor.u32 %v8364, %v8365
      %v8368 = vsel %vm7541, %v8360, %v8367
      %v8369 = vcombine.low %v8329, %v8342
      %v8370 = vcombine.low %v8355, %v8368
      %v8372 = vunpack.c.l.s4 1983009808
      %v8373 = vunpack.c.0.s8 %v8372
      %v8374 = vlaneseq
      %v8375 = vshrl.u32 %v8374, 7
      %v8376 = vsub.s32 %v8373, %v8375
      %v8377 = vrot.slane %v8369, %v8376
      %v8379 = vunpack.c.l.s4 1983009808
      %v8380 = vunpack.c.0.s8 %v8379
      %v8381 = vlaneseq
      %v8382 = vshrl.u32 %v8381, 7
      %v8383 = vsub.s32 %v8380, %v8382
      %v8384 = vrot.slane %v8370, %v8383
      %v8385 = vcombine.low %v8377, %v8384
      %8387 = vst [vmem:[#allocation5 + $0x68] sm:$0xff] %v8385
      %v8388 = vld [vmem:[%s7259] sm:$0xc]
      %v8389 = vld [vmem:[%s7259 + $0x4] sm:$0xc]
      %v8390 = vld [vmem:[%s7259 + $0x8] sm:$0xc]
      %v8391 = vld [vmem:[%s7259 + $0xc] sm:$0xc]
      %v8397 = vunpack.c.l.s4 1983009808
      %v8398 = vunpack.c.0.s8 %v8397
      %v8399 = vlaneseq
      %v8400 = vshrl.u32 %v8399, 7
      %v8401 = vsub.s32 %v8398, %v8400
      %v8402 = vrot.slane %v8388, %v8401
      %v8403 = vcombine.high %v8402, %v8402
      %v8405 = vunpack.c.l.s4 1983009808
      %v8406 = vunpack.c.0.s8 %v8405
      %v8407 = vlaneseq
      %v8408 = vshrl.u32 %v8407, 7
      %v8409 = vsub.s32 %v8406, %v8408
      %v8410 = vrot.slane %v8389, %v8409
      %v8411 = vcombine.high %v8410, %v8410
      %v8413 = vunpack.c.l.s4 1983009808
      %v8414 = vunpack.c.0.s8 %v8413
      %v8415 = vlaneseq
      %v8416 = vshrl.u32 %v8415, 7
      %v8417 = vsub.s32 %v8414, %v8416
      %v8418 = vrot.slane %v8390, %v8417
      %v8419 = vcombine.high %v8418, %v8418
      %v8421 = vunpack.c.l.s4 1983009808
      %v8422 = vunpack.c.0.s8 %v8421
      %v8423 = vlaneseq
      %v8424 = vshrl.u32 %v8423, 7
      %v8425 = vsub.s32 %v8422, %v8424
      %v8426 = vrot.slane %v8391, %v8425
      %v8427 = vcombine.high %v8426, %v8426
      %v8428 = vcombine.low %v8403, %v8411
      %v8429 = vcombine.low %v8419, %v8427
      %v8431 = vunpack.c.l.s4 1983009808
      %v8432 = vunpack.c.0.s8 %v8431
      %v8433 = vlaneseq
      %v8434 = vshrl.u32 %v8433, 7
      %v8435 = vsub.s32 %v8432, %v8434
      %v8436 = vrot.slane %v8428, %v8435
      %v8438 = vunpack.c.l.s4 1983009808
      %v8439 = vunpack.c.0.s8 %v8438
      %v8440 = vlaneseq
      %v8441 = vshrl.u32 %v8440, 7
      %v8442 = vsub.s32 %v8439, %v8441
      %v8443 = vrot.slane %v8429, %v8442
      %v8444 = vcombine.low %v8436, %v8443
      %8446 = vst [vmem:[#allocation5 + $0x70] sm:$0xff] %v8444
      %s8447 = scalar_lea.vmem [#allocation4], 12
      %v8448 = vld [vmem:[%s8447] sm:$0x3]
      %v8449 = vld [vmem:[%s8447 + $0x4] sm:$0x3]
      %v8450 = vld [vmem:[%s8447 + $0x8] sm:$0x3]
      %v8451 = vld [vmem:[%s8447 + $0xc] sm:$0x3]
      %v8456 = vcombine.low %v8448, %v8449
      %v8457 = vcombine.low %v8450, %v8451
      %v8459 = vunpack.c.l.s4 1983009808
      %v8460 = vunpack.c.0.s8 %v8459
      %v8461 = vlaneseq
      %v8462 = vshrl.u32 %v8461, 7
      %v8463 = vsub.s32 %v8460, %v8462
      %v8464 = vrot.slane %v8456, %v8463
      %v8466 = vunpack.c.l.s4 1983009808
      %v8467 = vunpack.c.0.s8 %v8466
      %v8468 = vlaneseq
      %v8469 = vshrl.u32 %v8468, 7
      %v8470 = vsub.s32 %v8467, %v8469
      %v8471 = vrot.slane %v8457, %v8470
      %v8472 = vcombine.low %v8464, %v8471
      %8474 = vst [vmem:[#allocation5 + $0x78] sm:$0xff] %v8472
      %v8475 = vld [vmem:[%s8447] sm:$0x7]
      %v8476 = vld [vmem:[%s8447 + $0x4] sm:$0x7]
      %v8477 = vld [vmem:[%s8447 + $0x8] sm:$0x7]
      %v8478 = vld [vmem:[%s8447 + $0xc] sm:$0x7]
      %v8484 = vunpack.c.l.s4 1983009808
      %v8485 = vunpack.c.0.s8 %v8484
      %v8486 = vlaneseq
      %v8487 = vshrl.u32 %v8486, 7
      %v8488 = vsub.s32 %v8485, %v8487
      %v8489 = vrot.slane %v8475, %v8488
      %v8490 = vcombine.high %v8489, %v8489
      %v8492 = vunpack.c.l.s4 1983009808
      %v8493 = vunpack.c.0.s8 %v8492
      %v8494 = vlaneseq
      %v8495 = vshrl.u32 %v8494, 7
      %v8496 = vsub.s32 %v8493, %v8495
      %v8497 = vrot.slane %v8476, %v8496
      %v8498 = vcombine.high %v8497, %v8497
      %v8500 = vunpack.c.l.s4 1983009808
      %v8501 = vunpack.c.0.s8 %v8500
      %v8502 = vlaneseq
      %v8503 = vshrl.u32 %v8502, 7
      %v8504 = vsub.s32 %v8501, %v8503
      %v8505 = vrot.slane %v8477, %v8504
      %v8506 = vcombine.high %v8505, %v8505
      %v8508 = vunpack.c.l.s4 1983009808
      %v8509 = vunpack.c.0.s8 %v8508
      %v8510 = vlaneseq
      %v8511 = vshrl.u32 %v8510, 7
      %v8512 = vsub.s32 %v8509, %v8511
      %v8513 = vrot.slane %v8478, %v8512
      %v8514 = vcombine.high %v8513, %v8513
      %v8516 = vshrl.u32 %v8489, 16
      %v8518 = vrot.slane %v8516, 6
      %v8519 = vshll.u32 %v8489, 16
      %v8521 = vrot.slane %v8519, 7
      %v8522 = vor.u32 %v8518, %v8521
      %v8523 = vrot.slane %v8522, 2
      %v8525 = vshll.u32 %v8490, 16
      %v8527 = vrot.slane %v8525, 7
      %v8528 = vsel %vm7337, %v8523, %v8527
      %v8530 = vshrl.u32 %v8497, 16
      %v8532 = vrot.slane %v8530, 6
      %v8533 = vshll.u32 %v8497, 16
      %v8535 = vrot.slane %v8533, 7
      %v8536 = vor.u32 %v8532, %v8535
      %v8537 = vrot.slane %v8536, 2
      %v8539 = vshll.u32 %v8498, 16
      %v8541 = vrot.slane %v8539, 7
      %v8542 = vsel %vm7337, %v8537, %v8541
      %v8544 = vshrl.u32 %v8505, 16
      %v8546 = vrot.slane %v8544, 6
      %v8547 = vshll.u32 %v8505, 16
      %v8549 = vrot.slane %v8547, 7
      %v8550 = vor.u32 %v8546, %v8549
      %v8551 = vrot.slane %v8550, 2
      %v8553 = vshll.u32 %v8506, 16
      %v8555 = vrot.slane %v8553, 7
      %v8556 = vsel %vm7337, %v8551, %v8555
      %v8558 = vshrl.u32 %v8513, 16
      %v8560 = vrot.slane %v8558, 6
      %v8561 = vshll.u32 %v8513, 16
      %v8563 = vrot.slane %v8561, 7
      %v8564 = vor.u32 %v8560, %v8563
      %v8565 = vrot.slane %v8564, 2
      %v8567 = vshll.u32 %v8514, 16
      %v8569 = vrot.slane %v8567, 7
      %v8570 = vsel %vm7337, %v8565, %v8569
      %v8571 = vcombine.low %v8528, %v8542
      %v8572 = vcombine.low %v8556, %v8570
      %v8574 = vunpack.c.l.s4 1983009808
      %v8575 = vunpack.c.0.s8 %v8574
      %v8576 = vlaneseq
      %v8577 = vshrl.u32 %v8576, 7
      %v8578 = vsub.s32 %v8575, %v8577
      %v8579 = vrot.slane %v8571, %v8578
      %v8581 = vunpack.c.l.s4 1983009808
      %v8582 = vunpack.c.0.s8 %v8581
      %v8583 = vlaneseq
      %v8584 = vshrl.u32 %v8583, 7
      %v8585 = vsub.s32 %v8582, %v8584
      %v8586 = vrot.slane %v8572, %v8585
      %v8587 = vcombine.low %v8579, %v8586
      %8589 = vst [vmem:[#allocation5 + $0x80] sm:$0xff] %v8587
      %v8590 = vld [vmem:[%s8447] sm:$0x6]
      %v8591 = vld [vmem:[%s8447 + $0x4] sm:$0x6]
      %v8592 = vld [vmem:[%s8447 + $0x8] sm:$0x6]
      %v8593 = vld [vmem:[%s8447 + $0xc] sm:$0x6]
      %v8599 = vunpack.c.l.s4 1983009808
      %v8600 = vunpack.c.0.s8 %v8599
      %v8601 = vlaneseq
      %v8602 = vshrl.u32 %v8601, 7
      %v8603 = vsub.s32 %v8600, %v8602
      %v8604 = vrot.slane %v8590, %v8603
      %v8605 = vcombine.high %v8604, %v8604
      %v8607 = vunpack.c.l.s4 1983009808
      %v8608 = vunpack.c.0.s8 %v8607
      %v8609 = vlaneseq
      %v8610 = vshrl.u32 %v8609, 7
      %v8611 = vsub.s32 %v8608, %v8610
      %v8612 = vrot.slane %v8591, %v8611
      %v8613 = vcombine.high %v8612, %v8612
      %v8615 = vunpack.c.l.s4 1983009808
      %v8616 = vunpack.c.0.s8 %v8615
      %v8617 = vlaneseq
      %v8618 = vshrl.u32 %v8617, 7
      %v8619 = vsub.s32 %v8616, %v8618
      %v8620 = vrot.slane %v8592, %v8619
      %v8621 = vcombine.high %v8620, %v8620
      %v8623 = vunpack.c.l.s4 1983009808
      %v8624 = vunpack.c.0.s8 %v8623
      %v8625 = vlaneseq
      %v8626 = vshrl.u32 %v8625, 7
      %v8627 = vsub.s32 %v8624, %v8626
      %v8628 = vrot.slane %v8593, %v8627
      %v8629 = vcombine.high %v8628, %v8628
      %v8630 = vrot.slane %v8604, 7
      %v8631 = vrot.slane %v8630, 2
      %v8632 = vrot.slane %v8605, 7
      %v8633 = vsel %vm7459, %v8631, %v8632
      %v8634 = vrot.slane %v8612, 7
      %v8635 = vrot.slane %v8634, 2
      %v8636 = vrot.slane %v8613, 7
      %v8637 = vsel %vm7459, %v8635, %v8636
      %v8638 = vrot.slane %v8620, 7
      %v8639 = vrot.slane %v8638, 2
      %v8640 = vrot.slane %v8621, 7
      %v8641 = vsel %vm7459, %v8639, %v8640
      %v8642 = vrot.slane %v8628, 7
      %v8643 = vrot.slane %v8642, 2
      %v8644 = vrot.slane %v8629, 7
      %v8645 = vsel %vm7459, %v8643, %v8644
      %v8646 = vcombine.low %v8633, %v8637
      %v8647 = vcombine.low %v8641, %v8645
      %v8649 = vunpack.c.l.s4 1983009808
      %v8650 = vunpack.c.0.s8 %v8649
      %v8651 = vlaneseq
      %v8652 = vshrl.u32 %v8651, 7
      %v8653 = vsub.s32 %v8650, %v8652
      %v8654 = vrot.slane %v8646, %v8653
      %v8656 = vunpack.c.l.s4 1983009808
      %v8657 = vunpack.c.0.s8 %v8656
      %v8658 = vlaneseq
      %v8659 = vshrl.u32 %v8658, 7
      %v8660 = vsub.s32 %v8657, %v8659
      %v8661 = vrot.slane %v8647, %v8660
      %v8662 = vcombine.low %v8654, %v8661
      %8664 = vst [vmem:[#allocation5 + $0x88] sm:$0xff] %v8662
      %v8665 = vld [vmem:[%s8447] sm:$0xe]
      %v8666 = vld [vmem:[%s8447 + $0x4] sm:$0xe]
      %v8667 = vld [vmem:[%s8447 + $0x8] sm:$0xe]
      %v8668 = vld [vmem:[%s8447 + $0xc] sm:$0xe]
      %v8674 = vunpack.c.l.s4 1983009808
      %v8675 = vunpack.c.0.s8 %v8674
      %v8676 = vlaneseq
      %v8677 = vshrl.u32 %v8676, 7
      %v8678 = vsub.s32 %v8675, %v8677
      %v8679 = vrot.slane %v8665, %v8678
      %v8680 = vcombine.high %v8679, %v8679
      %v8682 = vunpack.c.l.s4 1983009808
      %v8683 = vunpack.c.0.s8 %v8682
      %v8684 = vlaneseq
      %v8685 = vshrl.u32 %v8684, 7
      %v8686 = vsub.s32 %v8683, %v8685
      %v8687 = vrot.slane %v8666, %v8686
      %v8688 = vcombine.high %v8687, %v8687
      %v8690 = vunpack.c.l.s4 1983009808
      %v8691 = vunpack.c.0.s8 %v8690
      %v8692 = vlaneseq
      %v8693 = vshrl.u32 %v8692, 7
      %v8694 = vsub.s32 %v8691, %v8693
      %v8695 = vrot.slane %v8667, %v8694
      %v8696 = vcombine.high %v8695, %v8695
      %v8698 = vunpack.c.l.s4 1983009808
      %v8699 = vunpack.c.0.s8 %v8698
      %v8700 = vlaneseq
      %v8701 = vshrl.u32 %v8700, 7
      %v8702 = vsub.s32 %v8699, %v8701
      %v8703 = vrot.slane %v8668, %v8702
      %v8704 = vcombine.high %v8703, %v8703
      %v8706 = vshrl.u32 %v8679, 16
      %v8708 = vrot.slane %v8706, 7
      %v8709 = vrot.slane %v8708, 2
      %v8711 = vshrl.u32 %v8680, 16
      %v8713 = vrot.slane %v8711, 7
      %v8714 = vshll.u32 %v8680, 16
      %v8716 = vor.u32 %v8713, %v8714
      %v8717 = vsel %vm7541, %v8709, %v8716
      %v8719 = vshrl.u32 %v8687, 16
      %v8721 = vrot.slane %v8719, 7
      %v8722 = vrot.slane %v8721, 2
      %v8724 = vshrl.u32 %v8688, 16
      %v8726 = vrot.slane %v8724, 7
      %v8727 = vshll.u32 %v8688, 16
      %v8729 = vor.u32 %v8726, %v8727
      %v8730 = vsel %vm7541, %v8722, %v8729
      %v8732 = vshrl.u32 %v8695, 16
      %v8734 = vrot.slane %v8732, 7
      %v8735 = vrot.slane %v8734, 2
      %v8737 = vshrl.u32 %v8696, 16
      %v8739 = vrot.slane %v8737, 7
      %v8740 = vshll.u32 %v8696, 16
      %v8742 = vor.u32 %v8739, %v8740
      %v8743 = vsel %vm7541, %v8735, %v8742
      %v8745 = vshrl.u32 %v8703, 16
      %v8747 = vrot.slane %v8745, 7
      %v8748 = vrot.slane %v8747, 2
      %v8750 = vshrl.u32 %v8704, 16
      %v8752 = vrot.slane %v8750, 7
      %v8753 = vshll.u32 %v8704, 16
      %v8755 = vor.u32 %v8752, %v8753
      %v8756 = vsel %vm7541, %v8748, %v8755
      %v8757 = vcombine.low %v8717, %v8730
      %v8758 = vcombine.low %v8743, %v8756
      %v8760 = vunpack.c.l.s4 1983009808
      %v8761 = vunpack.c.0.s8 %v8760
      %v8762 = vlaneseq
      %v8763 = vshrl.u32 %v8762, 7
      %v8764 = vsub.s32 %v8761, %v8763
      %v8765 = vrot.slane %v8757, %v8764
      %v8767 = vunpack.c.l.s4 1983009808
      %v8768 = vunpack.c.0.s8 %v8767
      %v8769 = vlaneseq
      %v8770 = vshrl.u32 %v8769, 7
      %v8771 = vsub.s32 %v8768, %v8770
      %v8772 = vrot.slane %v8758, %v8771
      %v8773 = vcombine.low %v8765, %v8772
      %8775 = vst [vmem:[#allocation5 + $0x90] sm:$0xff] %v8773
      %v8776 = vld [vmem:[%s8447] sm:$0xc]
      %v8777 = vld [vmem:[%s8447 + $0x4] sm:$0xc]
      %v8778 = vld [vmem:[%s8447 + $0x8] sm:$0xc]
      %v8779 = vld [vmem:[%s8447 + $0xc] sm:$0xc]
      %v8785 = vunpack.c.l.s4 1983009808
      %v8786 = vunpack.c.0.s8 %v8785
      %v8787 = vlaneseq
      %v8788 = vshrl.u32 %v8787, 7
      %v8789 = vsub.s32 %v8786, %v8788
      %v8790 = vrot.slane %v8776, %v8789
      %v8791 = vcombine.high %v8790, %v8790
      %v8793 = vunpack.c.l.s4 1983009808
      %v8794 = vunpack.c.0.s8 %v8793
      %v8795 = vlaneseq
      %v8796 = vshrl.u32 %v8795, 7
      %v8797 = vsub.s32 %v8794, %v8796
      %v8798 = vrot.slane %v8777, %v8797
      %v8799 = vcombine.high %v8798, %v8798
      %v8801 = vunpack.c.l.s4 1983009808
      %v8802 = vunpack.c.0.s8 %v8801
      %v8803 = vlaneseq
      %v8804 = vshrl.u32 %v8803, 7
      %v8805 = vsub.s32 %v8802, %v8804
      %v8806 = vrot.slane %v8778, %v8805
      %v8807 = vcombine.high %v8806, %v8806
      %v8809 = vunpack.c.l.s4 1983009808
      %v8810 = vunpack.c.0.s8 %v8809
      %v8811 = vlaneseq
      %v8812 = vshrl.u32 %v8811, 7
      %v8813 = vsub.s32 %v8810, %v8812
      %v8814 = vrot.slane %v8779, %v8813
      %v8815 = vcombine.high %v8814, %v8814
      %v8816 = vcombine.low %v8791, %v8799
      %v8817 = vcombine.low %v8807, %v8815
      %v8819 = vunpack.c.l.s4 1983009808
      %v8820 = vunpack.c.0.s8 %v8819
      %v8821 = vlaneseq
      %v8822 = vshrl.u32 %v8821, 7
      %v8823 = vsub.s32 %v8820, %v8822
      %v8824 = vrot.slane %v8816, %v8823
      %v8826 = vunpack.c.l.s4 1983009808
      %v8827 = vunpack.c.0.s8 %v8826
      %v8828 = vlaneseq
      %v8829 = vshrl.u32 %v8828, 7
      %v8830 = vsub.s32 %v8827, %v8829
      %v8831 = vrot.slane %v8817, %v8830
      %v8832 = vcombine.low %v8824, %v8831
      %8834 = vst [vmem:[#allocation5 + $0x98] sm:$0xff] %v8832
      %s8835 = scalar_lea.vmem [#allocation4], 16
      %v8836 = vld [vmem:[%s8835] sm:$0x3]
      %v8837 = vld [vmem:[%s8835 + $0x4] sm:$0x3]
      %v8838 = vld [vmem:[%s8835 + $0x8] sm:$0x3]
      %v8839 = vld [vmem:[%s8835 + $0xc] sm:$0x3]
      %v8844 = vcombine.low %v8836, %v8837
      %v8845 = vcombine.low %v8838, %v8839
      %v8847 = vunpack.c.l.s4 1983009808
      %v8848 = vunpack.c.0.s8 %v8847
      %v8849 = vlaneseq
      %v8850 = vshrl.u32 %v8849, 7
      %v8851 = vsub.s32 %v8848, %v8850
      %v8852 = vrot.slane %v8844, %v8851
      %v8854 = vunpack.c.l.s4 1983009808
      %v8855 = vunpack.c.0.s8 %v8854
      %v8856 = vlaneseq
      %v8857 = vshrl.u32 %v8856, 7
      %v8858 = vsub.s32 %v8855, %v8857
      %v8859 = vrot.slane %v8845, %v8858
      %v8860 = vcombine.low %v8852, %v8859
      %8862 = vst [vmem:[#allocation5 + $0xa0] sm:$0xff] %v8860
      %v8863 = vld [vmem:[%s8835] sm:$0x7]
      %v8864 = vld [vmem:[%s8835 + $0x4] sm:$0x7]
      %v8865 = vld [vmem:[%s8835 + $0x8] sm:$0x7]
      %v8866 = vld [vmem:[%s8835 + $0xc] sm:$0x7]
      %v8872 = vunpack.c.l.s4 1983009808
      %v8873 = vunpack.c.0.s8 %v8872
      %v8874 = vlaneseq
      %v8875 = vshrl.u32 %v8874, 7
      %v8876 = vsub.s32 %v8873, %v8875
      %v8877 = vrot.slane %v8863, %v8876
      %v8878 = vcombine.high %v8877, %v8877
      %v8880 = vunpack.c.l.s4 1983009808
      %v8881 = vunpack.c.0.s8 %v8880
      %v8882 = vlaneseq
      %v8883 = vshrl.u32 %v8882, 7
      %v8884 = vsub.s32 %v8881, %v8883
      %v8885 = vrot.slane %v8864, %v8884
      %v8886 = vcombine.high %v8885, %v8885
      %v8888 = vunpack.c.l.s4 1983009808
      %v8889 = vunpack.c.0.s8 %v8888
      %v8890 = vlaneseq
      %v8891 = vshrl.u32 %v8890, 7
      %v8892 = vsub.s32 %v8889, %v8891
      %v8893 = vrot.slane %v8865, %v8892
      %v8894 = vcombine.high %v8893, %v8893
      %v8896 = vunpack.c.l.s4 1983009808
      %v8897 = vunpack.c.0.s8 %v8896
      %v8898 = vlaneseq
      %v8899 = vshrl.u32 %v8898, 7
      %v8900 = vsub.s32 %v8897, %v8899
      %v8901 = vrot.slane %v8866, %v8900
      %v8902 = vcombine.high %v8901, %v8901
      %v8904 = vshrl.u32 %v8877, 16
      %v8906 = vrot.slane %v8904, 6
      %v8907 = vshll.u32 %v8877, 16
      %v8909 = vrot.slane %v8907, 7
      %v8910 = vor.u32 %v8906, %v8909
      %v8911 = vrot.slane %v8910, 2
      %v8913 = vshll.u32 %v8878, 16
      %v8915 = vrot.slane %v8913, 7
      %v8916 = vsel %vm7337, %v8911, %v8915
      %v8918 = vshrl.u32 %v8885, 16
      %v8920 = vrot.slane %v8918, 6
      %v8921 = vshll.u32 %v8885, 16
      %v8923 = vrot.slane %v8921, 7
      %v8924 = vor.u32 %v8920, %v8923
      %v8925 = vrot.slane %v8924, 2
      %v8927 = vshll.u32 %v8886, 16
      %v8929 = vrot.slane %v8927, 7
      %v8930 = vsel %vm7337, %v8925, %v8929
      %v8932 = vshrl.u32 %v8893, 16
      %v8934 = vrot.slane %v8932, 6
      %v8935 = vshll.u32 %v8893, 16
      %v8937 = vrot.slane %v8935, 7
      %v8938 = vor.u32 %v8934, %v8937
      %v8939 = vrot.slane %v8938, 2
      %v8941 = vshll.u32 %v8894, 16
      %v8943 = vrot.slane %v8941, 7
      %v8944 = vsel %vm7337, %v8939, %v8943
      %v8946 = vshrl.u32 %v8901, 16
      %v8948 = vrot.slane %v8946, 6
      %v8949 = vshll.u32 %v8901, 16
      %v8951 = vrot.slane %v8949, 7
      %v8952 = vor.u32 %v8948, %v8951
      %v8953 = vrot.slane %v8952, 2
      %v8955 = vshll.u32 %v8902, 16
      %v8957 = vrot.slane %v8955, 7
      %v8958 = vsel %vm7337, %v8953, %v8957
      %v8959 = vcombine.low %v8916, %v8930
      %v8960 = vcombine.low %v8944, %v8958
      %v8962 = vunpack.c.l.s4 1983009808
      %v8963 = vunpack.c.0.s8 %v8962
      %v8964 = vlaneseq
      %v8965 = vshrl.u32 %v8964, 7
      %v8966 = vsub.s32 %v8963, %v8965
      %v8967 = vrot.slane %v8959, %v8966
      %v8969 = vunpack.c.l.s4 1983009808
      %v8970 = vunpack.c.0.s8 %v8969
      %v8971 = vlaneseq
      %v8972 = vshrl.u32 %v8971, 7
      %v8973 = vsub.s32 %v8970, %v8972
      %v8974 = vrot.slane %v8960, %v8973
      %v8975 = vcombine.low %v8967, %v8974
      %8977 = vst [vmem:[#allocation5 + $0xa8] sm:$0xff] %v8975
      %v8978 = vld [vmem:[%s8835] sm:$0x6]
      %v8979 = vld [vmem:[%s8835 + $0x4] sm:$0x6]
      %v8980 = vld [vmem:[%s8835 + $0x8] sm:$0x6]
      %v8981 = vld [vmem:[%s8835 + $0xc] sm:$0x6]
      %v8987 = vunpack.c.l.s4 1983009808
      %v8988 = vunpack.c.0.s8 %v8987
      %v8989 = vlaneseq
      %v8990 = vshrl.u32 %v8989, 7
      %v8991 = vsub.s32 %v8988, %v8990
      %v8992 = vrot.slane %v8978, %v8991
      %v8993 = vcombine.high %v8992, %v8992
      %v8995 = vunpack.c.l.s4 1983009808
      %v8996 = vunpack.c.0.s8 %v8995
      %v8997 = vlaneseq
      %v8998 = vshrl.u32 %v8997, 7
      %v8999 = vsub.s32 %v8996, %v8998
      %v9000 = vrot.slane %v8979, %v8999
      %v9001 = vcombine.high %v9000, %v9000
      %v9003 = vunpack.c.l.s4 1983009808
      %v9004 = vunpack.c.0.s8 %v9003
      %v9005 = vlaneseq
      %v9006 = vshrl.u32 %v9005, 7
      %v9007 = vsub.s32 %v9004, %v9006
      %v9008 = vrot.slane %v8980, %v9007
      %v9009 = vcombine.high %v9008, %v9008
      %v9011 = vunpack.c.l.s4 1983009808
      %v9012 = vunpack.c.0.s8 %v9011
      %v9013 = vlaneseq
      %v9014 = vshrl.u32 %v9013, 7
      %v9015 = vsub.s32 %v9012, %v9014
      %v9016 = vrot.slane %v8981, %v9015
      %v9017 = vcombine.high %v9016, %v9016
      %v9018 = vrot.slane %v8992, 7
      %v9019 = vrot.slane %v9018, 2
      %v9020 = vrot.slane %v8993, 7
      %v9021 = vsel %vm7459, %v9019, %v9020
      %v9022 = vrot.slane %v9000, 7
      %v9023 = vrot.slane %v9022, 2
      %v9024 = vrot.slane %v9001, 7
      %v9025 = vsel %vm7459, %v9023, %v9024
      %v9026 = vrot.slane %v9008, 7
      %v9027 = vrot.slane %v9026, 2
      %v9028 = vrot.slane %v9009, 7
      %v9029 = vsel %vm7459, %v9027, %v9028
      %v9030 = vrot.slane %v9016, 7
      %v9031 = vrot.slane %v9030, 2
      %v9032 = vrot.slane %v9017, 7
      %v9033 = vsel %vm7459, %v9031, %v9032
      %v9034 = vcombine.low %v9021, %v9025
      %v9035 = vcombine.low %v9029, %v9033
      %v9037 = vunpack.c.l.s4 1983009808
      %v9038 = vunpack.c.0.s8 %v9037
      %v9039 = vlaneseq
      %v9040 = vshrl.u32 %v9039, 7
      %v9041 = vsub.s32 %v9038, %v9040
      %v9042 = vrot.slane %v9034, %v9041
      %v9044 = vunpack.c.l.s4 1983009808
      %v9045 = vunpack.c.0.s8 %v9044
      %v9046 = vlaneseq
      %v9047 = vshrl.u32 %v9046, 7
      %v9048 = vsub.s32 %v9045, %v9047
      %v9049 = vrot.slane %v9035, %v9048
      %v9050 = vcombine.low %v9042, %v9049
      %9052 = vst [vmem:[#allocation5 + $0xb0] sm:$0xff] %v9050
      %v9053 = vld [vmem:[%s8835] sm:$0xe]
      %v9054 = vld [vmem:[%s8835 + $0x4] sm:$0xe]
      %v9055 = vld [vmem:[%s8835 + $0x8] sm:$0xe]
      %v9056 = vld [vmem:[%s8835 + $0xc] sm:$0xe]
      %v9062 = vunpack.c.l.s4 1983009808
      %v9063 = vunpack.c.0.s8 %v9062
      %v9064 = vlaneseq
      %v9065 = vshrl.u32 %v9064, 7
      %v9066 = vsub.s32 %v9063, %v9065
      %v9067 = vrot.slane %v9053, %v9066
      %v9068 = vcombine.high %v9067, %v9067
      %v9070 = vunpack.c.l.s4 1983009808
      %v9071 = vunpack.c.0.s8 %v9070
      %v9072 = vlaneseq
      %v9073 = vshrl.u32 %v9072, 7
      %v9074 = vsub.s32 %v9071, %v9073
      %v9075 = vrot.slane %v9054, %v9074
      %v9076 = vcombine.high %v9075, %v9075
      %v9078 = vunpack.c.l.s4 1983009808
      %v9079 = vunpack.c.0.s8 %v9078
      %v9080 = vlaneseq
      %v9081 = vshrl.u32 %v9080, 7
      %v9082 = vsub.s32 %v9079, %v9081
      %v9083 = vrot.slane %v9055, %v9082
      %v9084 = vcombine.high %v9083, %v9083
      %v9086 = vunpack.c.l.s4 1983009808
      %v9087 = vunpack.c.0.s8 %v9086
      %v9088 = vlaneseq
      %v9089 = vshrl.u32 %v9088, 7
      %v9090 = vsub.s32 %v9087, %v9089
      %v9091 = vrot.slane %v9056, %v9090
      %v9092 = vcombine.high %v9091, %v9091
      %v9094 = vshrl.u32 %v9067, 16
      %v9096 = vrot.slane %v9094, 7
      %v9097 = vrot.slane %v9096, 2
      %v9099 = vshrl.u32 %v9068, 16
      %v9101 = vrot.slane %v9099, 7
      %v9102 = vshll.u32 %v9068, 16
      %v9104 = vor.u32 %v9101, %v9102
      %v9105 = vsel %vm7541, %v9097, %v9104
      %v9107 = vshrl.u32 %v9075, 16
      %v9109 = vrot.slane %v9107, 7
      %v9110 = vrot.slane %v9109, 2
      %v9112 = vshrl.u32 %v9076, 16
      %v9114 = vrot.slane %v9112, 7
      %v9115 = vshll.u32 %v9076, 16
      %v9117 = vor.u32 %v9114, %v9115
      %v9118 = vsel %vm7541, %v9110, %v9117
      %v9120 = vshrl.u32 %v9083, 16
      %v9122 = vrot.slane %v9120, 7
      %v9123 = vrot.slane %v9122, 2
      %v9125 = vshrl.u32 %v9084, 16
      %v9127 = vrot.slane %v9125, 7
      %v9128 = vshll.u32 %v9084, 16
      %v9130 = vor.u32 %v9127, %v9128
      %v9131 = vsel %vm7541, %v9123, %v9130
      %v9133 = vshrl.u32 %v9091, 16
      %v9135 = vrot.slane %v9133, 7
      %v9136 = vrot.slane %v9135, 2
      %v9138 = vshrl.u32 %v9092, 16
      %v9140 = vrot.slane %v9138, 7
      %v9141 = vshll.u32 %v9092, 16
      %v9143 = vor.u32 %v9140, %v9141
      %v9144 = vsel %vm7541, %v9136, %v9143
      %v9145 = vcombine.low %v9105, %v9118
      %v9146 = vcombine.low %v9131, %v9144
      %v9148 = vunpack.c.l.s4 1983009808
      %v9149 = vunpack.c.0.s8 %v9148
      %v9150 = vlaneseq
      %v9151 = vshrl.u32 %v9150, 7
      %v9152 = vsub.s32 %v9149, %v9151
      %v9153 = vrot.slane %v9145, %v9152
      %v9155 = vunpack.c.l.s4 1983009808
      %v9156 = vunpack.c.0.s8 %v9155
      %v9157 = vlaneseq
      %v9158 = vshrl.u32 %v9157, 7
      %v9159 = vsub.s32 %v9156, %v9158
      %v9160 = vrot.slane %v9146, %v9159
      %v9161 = vcombine.low %v9153, %v9160
      %9163 = vst [vmem:[#allocation5 + $0xb8] sm:$0xff] %v9161
      %v9164 = vld [vmem:[%s8835] sm:$0xc]
      %v9165 = vld [vmem:[%s8835 + $0x4] sm:$0xc]
      %v9166 = vld [vmem:[%s8835 + $0x8] sm:$0xc]
      %v9167 = vld [vmem:[%s8835 + $0xc] sm:$0xc]
      %v9173 = vunpack.c.l.s4 1983009808
      %v9174 = vunpack.c.0.s8 %v9173
      %v9175 = vlaneseq
      %v9176 = vshrl.u32 %v9175, 7
      %v9177 = vsub.s32 %v9174, %v9176
      %v9178 = vrot.slane %v9164, %v9177
      %v9179 = vcombine.high %v9178, %v9178
      %v9181 = vunpack.c.l.s4 1983009808
      %v9182 = vunpack.c.0.s8 %v9181
      %v9183 = vlaneseq
      %v9184 = vshrl.u32 %v9183, 7
      %v9185 = vsub.s32 %v9182, %v9184
      %v9186 = vrot.slane %v9165, %v9185
      %v9187 = vcombine.high %v9186, %v9186
      %v9189 = vunpack.c.l.s4 1983009808
      %v9190 = vunpack.c.0.s8 %v9189
      %v9191 = vlaneseq
      %v9192 = vshrl.u32 %v9191, 7
      %v9193 = vsub.s32 %v9190, %v9192
      %v9194 = vrot.slane %v9166, %v9193
      %v9195 = vcombine.high %v9194, %v9194
      %v9197 = vunpack.c.l.s4 1983009808
      %v9198 = vunpack.c.0.s8 %v9197
      %v9199 = vlaneseq
      %v9200 = vshrl.u32 %v9199, 7
      %v9201 = vsub.s32 %v9198, %v9200
      %v9202 = vrot.slane %v9167, %v9201
      %v9203 = vcombine.high %v9202, %v9202
      %v9204 = vcombine.low %v9179, %v9187
      %v9205 = vcombine.low %v9195, %v9203
      %v9207 = vunpack.c.l.s4 1983009808
      %v9208 = vunpack.c.0.s8 %v9207
      %v9209 = vlaneseq
      %v9210 = vshrl.u32 %v9209, 7
      %v9211 = vsub.s32 %v9208, %v9210
      %v9212 = vrot.slane %v9204, %v9211
      %v9214 = vunpack.c.l.s4 1983009808
      %v9215 = vunpack.c.0.s8 %v9214
      %v9216 = vlaneseq
      %v9217 = vshrl.u32 %v9216, 7
      %v9218 = vsub.s32 %v9215, %v9217
      %v9219 = vrot.slane %v9205, %v9218
      %v9220 = vcombine.low %v9212, %v9219
      %9222 = vst [vmem:[#allocation5 + $0xc0] sm:$0xff] %v9220
      %v9223 = vld [vmem:[#allocation5] sm:$0xff]
      %v9224 = vld [vmem:[#allocation5 + $0x8] sm:$0xff]
      %v9225 = vld [vmem:[#allocation5 + $0x10] sm:$0xff]
      %v9226 = vld [vmem:[#allocation5 + $0x18] sm:$0xff]
      %v9227 = vld [vmem:[#allocation5 + $0x20] sm:$0xff]
      %v9228 = vld [vmem:[#allocation5 + $0x28] sm:$0xff]
      %v9229 = vld [vmem:[#allocation5 + $0x30] sm:$0xff]
      %v9230 = vld [vmem:[#allocation5 + $0x38] sm:$0xff]
      %v9231 = vld [vmem:[#allocation5 + $0x40] sm:$0xff]
      %v9232 = vld [vmem:[#allocation5 + $0x48] sm:$0xff]
      %v9233 = vld [vmem:[#allocation5 + $0x50] sm:$0xff]
      %v9234 = vld [vmem:[#allocation5 + $0x58] sm:$0xff]
      %v9235 = vld [vmem:[#allocation5 + $0x60] sm:$0xff]
      %v9236 = vld [vmem:[#allocation5 + $0x68] sm:$0xff]
      %v9237 = vld [vmem:[#allocation5 + $0x70] sm:$0xff]
      %v9238 = vld [vmem:[#allocation5 + $0x78] sm:$0xff]
      %v9239 = vld [vmem:[#allocation5 + $0x80] sm:$0xff]
      %v9240 = vld [vmem:[#allocation5 + $0x88] sm:$0xff]
      %v9241 = vld [vmem:[#allocation5 + $0x90] sm:$0xff]
      %v9242 = vld [vmem:[#allocation5 + $0x98] sm:$0xff]
      %v9243 = vld [vmem:[#allocation5 + $0xa0] sm:$0xff]
      %v9244 = vld [vmem:[#allocation5 + $0xa8] sm:$0xff]
      %v9245 = vld [vmem:[#allocation5 + $0xb0] sm:$0xff]
      %v9246 = vld [vmem:[#allocation5 + $0xb8] sm:$0xff]
      %v9247 = vld [vmem:[#allocation5 + $0xc0] sm:$0xff]
      %v9248 = vld [vmem:[%s5] sm:$0xff]
      %v9249 = vld [vmem:[%s5 + $0x8] sm:$0xff]
      %v9250 = vld [vmem:[%s5 + $0x10] sm:$0xff]
      %v9251 = vld [vmem:[%s5 + $0x18] sm:$0xff]
      %v9252 = vld [vmem:[%s5 + $0x20] sm:$0xff]
      %v9253 = vld [vmem:[%s5 + $0x28] sm:$0xff]
      %v9254 = vld [vmem:[%s5 + $0x30] sm:$0xff]
      %v9255 = vld [vmem:[%s5 + $0x38] sm:$0xff]
      %v9256 = vld [vmem:[%s5 + $0x40] sm:$0xff]
      %v9257 = vld [vmem:[%s5 + $0x48] sm:$0xff]
      %v9258 = vld [vmem:[%s5 + $0x50] sm:$0xff]
      %v9259 = vld [vmem:[%s5 + $0x58] sm:$0xff]
      %v9260 = vld [vmem:[%s5 + $0x60] sm:$0xff]
      %v9261 = vld [vmem:[%s5 + $0x68] sm:$0xff]
      %v9262 = vld [vmem:[%s5 + $0x70] sm:$0xff]
      %v9263 = vld [vmem:[%s5 + $0x78] sm:$0xff]
      %v9264 = vld [vmem:[%s5 + $0x80] sm:$0xff]
      %v9265 = vld [vmem:[%s5 + $0x88] sm:$0xff]
      %v9266 = vld [vmem:[%s5 + $0x90] sm:$0xff]
      %v9267 = vld [vmem:[%s5 + $0x98] sm:$0xff]
      %v9268 = vld [vmem:[%s5 + $0xa0] sm:$0xff]
      %v9269 = vld [vmem:[%s5 + $0xa8] sm:$0xff]
      %v9270 = vld [vmem:[%s5 + $0xb0] sm:$0xff]
      %v9271 = vld [vmem:[%s5 + $0xb8] sm:$0xff]
      %v9272 = vld [vmem:[%s5 + $0xc0] sm:$0xff]
      %v9273 = vld [vmem:[%s5 + $0xc8] sm:$0xff]
      %v9274 = vld [vmem:[%s5 + $0xd0] sm:$0xff]
      %v9275 = vld [vmem:[%s5 + $0xd8] sm:$0xff]
      %v9276 = vld [vmem:[%s5 + $0xe0] sm:$0xff]
      %v9277 = vld [vmem:[%s5 + $0xe8] sm:$0xff]
      %v9278 = vld [vmem:[%s5 + $0xf0] sm:$0xff]
      %v9279 = vld [vmem:[%s5 + $0xf8] sm:$0xff]
      %v9280 = vld [vmem:[%s5 + $0x100] sm:$0xff]
      %v9281 = vld [vmem:[%s5 + $0x108] sm:$0xff]
      %v9282 = vld [vmem:[%s5 + $0x110] sm:$0xff]
      %v9283 = vld [vmem:[%s5 + $0x118] sm:$0xff]
      %v9284 = vld [vmem:[%s5 + $0x120] sm:$0xff]
      %v9285 = vld [vmem:[%s5 + $0x128] sm:$0xff]
      %v9286 = vld [vmem:[%s5 + $0x130] sm:$0xff]
      %v9287 = vld [vmem:[%s5 + $0x138] sm:$0xff]
      %v9288 = vld [vmem:[%s5 + $0x140] sm:$0xff]
      %v9289 = vld [vmem:[%s5 + $0x148] sm:$0xff]
      %v9290 = vld [vmem:[%s5 + $0x150] sm:$0xff]
      %v9291 = vld [vmem:[%s5 + $0x158] sm:$0xff]
      %v9292 = vld [vmem:[%s5 + $0x160] sm:$0xff]
      %v9293 = vld [vmem:[%s5 + $0x168] sm:$0xff]
      %v9294 = vld [vmem:[%s5 + $0x170] sm:$0xff]
      %v9295 = vld [vmem:[%s5 + $0x178] sm:$0xff]
      %v9296 = vld [vmem:[%s5 + $0x180] sm:$0xff]
      %v9297 = vld [vmem:[%s5 + $0x188] sm:$0xff]
      %v9298 = vld [vmem:[%s5 + $0x190] sm:$0xff]
      %v9299 = vld [vmem:[%s5 + $0x198] sm:$0xff]
      %v9300 = vld [vmem:[%s5 + $0x1a0] sm:$0xff]
      %v9301 = vld [vmem:[%s5 + $0x1a8] sm:$0xff]
      %v9302 = vld [vmem:[%s5 + $0x1b0] sm:$0xff]
      %v9303 = vld [vmem:[%s5 + $0x1b8] sm:$0xff]
      %v9304 = vld [vmem:[%s5 + $0x1c0] sm:$0xff]
      %v9305 = vld [vmem:[%s5 + $0x1c8] sm:$0xff]
      %v9306 = vld [vmem:[%s5 + $0x1d0] sm:$0xff]
      %v9307 = vld [vmem:[%s5 + $0x1d8] sm:$0xff]
      %v9308 = vld [vmem:[%s5 + $0x1e0] sm:$0xff]
      %v9309 = vld [vmem:[%s5 + $0x1e8] sm:$0xff]
      %v9310 = vld [vmem:[%s5 + $0x1f0] sm:$0xff]
      %v9311 = vld [vmem:[%s5 + $0x1f8] sm:$0xff]
      %v9312 = vld [vmem:[%s5 + $0x200] sm:$0xff]
      %v9313 = vld [vmem:[%s5 + $0x208] sm:$0xff]
      %v9314 = vld [vmem:[%s5 + $0x210] sm:$0xff]
      %v9315 = vld [vmem:[%s5 + $0x218] sm:$0xff]
      %v9316 = vld [vmem:[%s5 + $0x220] sm:$0xff]
      %v9317 = vld [vmem:[%s5 + $0x228] sm:$0xff]
      %v9318 = vld [vmem:[%s5 + $0x230] sm:$0xff]
      %v9319 = vld [vmem:[%s5 + $0x238] sm:$0xff]
      %v9320 = vld [vmem:[%s5 + $0x240] sm:$0xff]
      %v9321 = vld [vmem:[%s5 + $0x248] sm:$0xff]
      %v9322 = vld [vmem:[%s5 + $0x250] sm:$0xff]
      %v9323 = vld [vmem:[%s5 + $0x258] sm:$0xff]
      %v9324 = vld [vmem:[%s5 + $0x260] sm:$0xff]
      %v9325 = vld [vmem:[%s5 + $0x268] sm:$0xff]
      %v9326 = vld [vmem:[%s5 + $0x270] sm:$0xff]
      %v9327 = vld [vmem:[%s5 + $0x278] sm:$0xff]
      %v9328 = vld [vmem:[%s5 + $0x280] sm:$0xff]
      %v9329 = vld [vmem:[%s5 + $0x288] sm:$0xff]
      %v9330 = vld [vmem:[%s5 + $0x290] sm:$0xff]
      %v9331 = vld [vmem:[%s5 + $0x298] sm:$0xff]
      %v9332 = vld [vmem:[%s5 + $0x2a0] sm:$0xff]
      %v9333 = vld [vmem:[%s5 + $0x2a8] sm:$0xff]
      %v9334 = vld [vmem:[%s5 + $0x2b0] sm:$0xff]
      %v9335 = vld [vmem:[%s5 + $0x2b8] sm:$0xff]
      %v9336 = vld [vmem:[%s5 + $0x2c0] sm:$0xff]
      %v9337 = vld [vmem:[%s5 + $0x2c8] sm:$0xff]
      %v9338 = vld [vmem:[%s5 + $0x2d0] sm:$0xff]
      %v9339 = vld [vmem:[%s5 + $0x2d8] sm:$0xff]
      %v9340 = vld [vmem:[%s5 + $0x2e0] sm:$0xff]
      %v9341 = vld [vmem:[%s5 + $0x2e8] sm:$0xff]
      %v9342 = vld [vmem:[%s5 + $0x2f0] sm:$0xff]
      %v9343 = vld [vmem:[%s5 + $0x2f8] sm:$0xff]
      %v9344 = vld [vmem:[%s5 + $0x300] sm:$0xff]
      %v9345 = vld [vmem:[%s5 + $0x308] sm:$0xff]
      %v9346 = vld [vmem:[%s5 + $0x310] sm:$0xff]
      %v9347 = vld [vmem:[%s5 + $0x318] sm:$0xff]
      %v9348 = vld [vmem:[%s5 + $0x320] sm:$0xff]
      %v9349 = vld [vmem:[%s5 + $0x328] sm:$0xff]
      %v9350 = vld [vmem:[%s5 + $0x330] sm:$0xff]
      %v9351 = vld [vmem:[%s5 + $0x338] sm:$0xff]
      %v9352 = vld [vmem:[%s5 + $0x340] sm:$0xff]
      %v9353 = vld [vmem:[%s5 + $0x348] sm:$0xff]
      %v9354 = vld [vmem:[%s5 + $0x350] sm:$0xff]
      %v9355 = vld [vmem:[%s5 + $0x358] sm:$0xff]
      %v9356 = vld [vmem:[%s5 + $0x360] sm:$0xff]
      %v9357 = vld [vmem:[%s5 + $0x368] sm:$0xff]
      %v9358 = vld [vmem:[%s5 + $0x370] sm:$0xff]
      %v9359 = vld [vmem:[%s5 + $0x378] sm:$0xff]
      %v9360 = vld [vmem:[%s5 + $0x380] sm:$0xff]
      %v9361 = vld [vmem:[%s5 + $0x388] sm:$0xff]
      %v9362 = vld [vmem:[%s5 + $0x390] sm:$0xff]
      %v9363 = vld [vmem:[%s5 + $0x398] sm:$0xff]
      %v9364 = vld [vmem:[%s5 + $0x3a0] sm:$0xff]
      %v9365 = vld [vmem:[%s5 + $0x3a8] sm:$0xff]
      %v9366 = vld [vmem:[%s5 + $0x3b0] sm:$0xff]
      %v9367 = vld [vmem:[%s5 + $0x3b8] sm:$0xff]
      %v9368 = vld [vmem:[%s5 + $0x3c0] sm:$0xff]
      %v9369 = vld [vmem:[%s5 + $0x3c8] sm:$0xff]
      %v9370 = vld [vmem:[%s5 + $0x3d0] sm:$0xff]
      %v9371 = vld [vmem:[%s5 + $0x3d8] sm:$0xff]
      %v9372 = vld [vmem:[%s5 + $0x3e0] sm:$0xff]
      %v9373 = vld [vmem:[%s5 + $0x3e8] sm:$0xff]
      %v9374 = vld [vmem:[%s5 + $0x3f0] sm:$0xff]
      %v9375 = vld [vmem:[%s5 + $0x3f8] sm:$0xff]
      %v9376 = vld [vmem:[%s5 + $0x400] sm:$0xff]
      %v9377 = vld [vmem:[%s5 + $0x408] sm:$0xff]
      %v9378 = vld [vmem:[%s5 + $0x410] sm:$0xff]
      %v9379 = vld [vmem:[%s5 + $0x418] sm:$0xff]
      %v9380 = vld [vmem:[%s5 + $0x420] sm:$0xff]
      %v9381 = vld [vmem:[%s5 + $0x428] sm:$0xff]
      %v9382 = vld [vmem:[%s5 + $0x430] sm:$0xff]
      %v9383 = vld [vmem:[%s5 + $0x438] sm:$0xff]
      %v9384 = vld [vmem:[%s5 + $0x440] sm:$0xff]
      %v9385 = vld [vmem:[%s5 + $0x448] sm:$0xff]
      %v9386 = vld [vmem:[%s5 + $0x450] sm:$0xff]
      %v9387 = vld [vmem:[%s5 + $0x458] sm:$0xff]
      %v9388 = vld [vmem:[%s5 + $0x460] sm:$0xff]
      %v9389 = vld [vmem:[%s5 + $0x468] sm:$0xff]
      %v9390 = vld [vmem:[%s5 + $0x470] sm:$0xff]
      %v9391 = vld [vmem:[%s5 + $0x478] sm:$0xff]
      %v9392 = vld [vmem:[%s5 + $0x480] sm:$0xff]
      %v9393 = vld [vmem:[%s5 + $0x488] sm:$0xff]
      %v9394 = vld [vmem:[%s5 + $0x490] sm:$0xff]
      %v9395 = vld [vmem:[%s5 + $0x498] sm:$0xff]
      %v9396 = vld [vmem:[%s5 + $0x4a0] sm:$0xff]
      %v9397 = vld [vmem:[%s5 + $0x4a8] sm:$0xff]
      %v9398 = vld [vmem:[%s5 + $0x4b0] sm:$0xff]
      %v9399 = vld [vmem:[%s5 + $0x4b8] sm:$0xff]
      %v9400 = vld [vmem:[%s5 + $0x4c0] sm:$0xff]
      %v9401 = vld [vmem:[%s5 + $0x4c8] sm:$0xff]
      %v9402 = vld [vmem:[%s5 + $0x4d0] sm:$0xff]
      %v9403 = vld [vmem:[%s5 + $0x4d8] sm:$0xff]
      %v9404 = vld [vmem:[%s5 + $0x4e0] sm:$0xff]
      %v9405 = vld [vmem:[%s5 + $0x4e8] sm:$0xff]
      %v9406 = vld [vmem:[%s5 + $0x4f0] sm:$0xff]
      %v9407 = vld [vmem:[%s5 + $0x4f8] sm:$0xff]
      %v9408 = vld [vmem:[%s5 + $0x500] sm:$0xff]
      %v9409 = vld [vmem:[%s5 + $0x508] sm:$0xff]
      %v9410 = vld [vmem:[%s5 + $0x510] sm:$0xff]
      %v9411 = vld [vmem:[%s5 + $0x518] sm:$0xff]
      %v9412 = vld [vmem:[%s5 + $0x520] sm:$0xff]
      %v9413 = vld [vmem:[%s5 + $0x528] sm:$0xff]
      %v9414 = vld [vmem:[%s5 + $0x530] sm:$0xff]
      %v9415 = vld [vmem:[%s5 + $0x538] sm:$0xff]
      %v9416 = vld [vmem:[%s5 + $0x540] sm:$0xff]
      %v9417 = vld [vmem:[%s5 + $0x548] sm:$0xff]
      %v9418 = vld [vmem:[%s5 + $0x550] sm:$0xff]
      %v9419 = vld [vmem:[%s5 + $0x558] sm:$0xff]
      %v9420 = vld [vmem:[%s5 + $0x560] sm:$0xff]
      %v9421 = vld [vmem:[%s5 + $0x568] sm:$0xff]
      %v9422 = vld [vmem:[%s5 + $0x570] sm:$0xff]
      %v9423 = vld [vmem:[%s5 + $0x578] sm:$0xff]
      %v9424 = vld [vmem:[%s5 + $0x580] sm:$0xff]
      %v9425 = vld [vmem:[%s5 + $0x588] sm:$0xff]
      %v9426 = vld [vmem:[%s5 + $0x590] sm:$0xff]
      %v9427 = vld [vmem:[%s5 + $0x598] sm:$0xff]
      %v9428 = vld [vmem:[%s5 + $0x5a0] sm:$0xff]
      %v9429 = vld [vmem:[%s5 + $0x5a8] sm:$0xff]
      %v9430 = vld [vmem:[%s5 + $0x5b0] sm:$0xff]
      %v9431 = vld [vmem:[%s5 + $0x5b8] sm:$0xff]
      %v9432 = vld [vmem:[%s5 + $0x5c0] sm:$0xff]
      %v9433 = vld [vmem:[%s5 + $0x5c8] sm:$0xff]
      %v9434 = vld [vmem:[%s5 + $0x5d0] sm:$0xff]
      %v9435 = vld [vmem:[%s5 + $0x5d8] sm:$0xff]
      %v9436 = vld [vmem:[%s5 + $0x5e0] sm:$0xff]
      %v9437 = vld [vmem:[%s5 + $0x5e8] sm:$0xff]
      %v9438 = vld [vmem:[%s5 + $0x5f0] sm:$0xff]
      %v9439 = vld [vmem:[%s5 + $0x5f8] sm:$0xff]
      %v9440 = vld [vmem:[%s5 + $0x600] sm:$0xff]
      %v9441 = vld [vmem:[%s5 + $0x608] sm:$0xff]
      %v9442 = vld [vmem:[%s5 + $0x610] sm:$0xff]
      %v9443 = vld [vmem:[%s5 + $0x618] sm:$0xff]
      %v9444 = vld [vmem:[%s5 + $0x620] sm:$0xff]
      %v9445 = vld [vmem:[%s5 + $0x628] sm:$0xff]
      %v9446 = vld [vmem:[%s5 + $0x630] sm:$0xff]
      %v9447 = vld [vmem:[%s5 + $0x638] sm:$0xff]
      %v9448 = vld [vmem:[%s5 + $0x640] sm:$0xff]
      %v9449 = vld [vmem:[%s5 + $0x648] sm:$0xff]
      %v9450 = vld [vmem:[%s5 + $0x650] sm:$0xff]
      %v9451 = vld [vmem:[%s5 + $0x658] sm:$0xff]
      %v9452 = vld [vmem:[%s5 + $0x660] sm:$0xff]
      %v9453 = vld [vmem:[%s5 + $0x668] sm:$0xff]
      %v9454 = vld [vmem:[%s5 + $0x670] sm:$0xff]
      %v9455 = vld [vmem:[%s5 + $0x678] sm:$0xff]
      %v9456 = vld [vmem:[%s5 + $0x680] sm:$0xff]
      %v9457 = vld [vmem:[%s5 + $0x688] sm:$0xff]
      %v9458 = vld [vmem:[%s5 + $0x690] sm:$0xff]
      %v9459 = vld [vmem:[%s5 + $0x698] sm:$0xff]
      %v9460 = vld [vmem:[%s5 + $0x6a0] sm:$0xff]
      %v9461 = vld [vmem:[%s5 + $0x6a8] sm:$0xff]
      %v9462 = vld [vmem:[%s5 + $0x6b0] sm:$0xff]
      %v9463 = vld [vmem:[%s5 + $0x6b8] sm:$0xff]
      %v9464 = vld [vmem:[%s5 + $0x6c0] sm:$0xff]
      %v9465 = vld [vmem:[%s5 + $0x6c8] sm:$0xff]
      %v9466 = vld [vmem:[%s5 + $0x6d0] sm:$0xff]
      %v9467 = vld [vmem:[%s5 + $0x6d8] sm:$0xff]
      %v9468 = vld [vmem:[%s5 + $0x6e0] sm:$0xff]
      %v9469 = vld [vmem:[%s5 + $0x6e8] sm:$0xff]
      %v9470 = vld [vmem:[%s5 + $0x6f0] sm:$0xff]
      %v9471 = vld [vmem:[%s5 + $0x6f8] sm:$0xff]
      %v9472 = vld [vmem:[%s5 + $0x700] sm:$0xff]
      %v9473 = vld [vmem:[%s5 + $0x708] sm:$0xff]
      %v9474 = vld [vmem:[%s5 + $0x710] sm:$0xff]
      %v9475 = vld [vmem:[%s5 + $0x718] sm:$0xff]
      %v9476 = vld [vmem:[%s5 + $0x720] sm:$0xff]
      %v9477 = vld [vmem:[%s5 + $0x728] sm:$0xff]
      %v9478 = vld [vmem:[%s5 + $0x730] sm:$0xff]
      %v9479 = vld [vmem:[%s5 + $0x738] sm:$0xff]
      %v9480 = vld [vmem:[%s5 + $0x740] sm:$0xff]
      %v9481 = vld [vmem:[%s5 + $0x748] sm:$0xff]
      %v9482 = vld [vmem:[%s5 + $0x750] sm:$0xff]
      %v9483 = vld [vmem:[%s5 + $0x758] sm:$0xff]
      %v9484 = vld [vmem:[%s5 + $0x760] sm:$0xff]
      %v9485 = vld [vmem:[%s5 + $0x768] sm:$0xff]
      %v9486 = vld [vmem:[%s5 + $0x770] sm:$0xff]
      %v9487 = vld [vmem:[%s5 + $0x778] sm:$0xff]
      %v9488 = vld [vmem:[%s5 + $0x780] sm:$0xff]
      %v9489 = vld [vmem:[%s5 + $0x788] sm:$0xff]
      %v9490 = vld [vmem:[%s5 + $0x790] sm:$0xff]
      %v9491 = vld [vmem:[%s5 + $0x798] sm:$0xff]
      %v9492 = vld [vmem:[%s5 + $0x7a0] sm:$0xff]
      %v9493 = vld [vmem:[%s5 + $0x7a8] sm:$0xff]
      %v9494 = vld [vmem:[%s5 + $0x7b0] sm:$0xff]
      %v9495 = vld [vmem:[%s5 + $0x7b8] sm:$0xff]
      %v9496 = vld [vmem:[%s5 + $0x7c0] sm:$0xff]
      %v9497 = vld [vmem:[%s5 + $0x7c8] sm:$0xff]
      %v9498 = vld [vmem:[%s5 + $0x7d0] sm:$0xff]
      %v9499 = vld [vmem:[%s5 + $0x7d8] sm:$0xff]
      %v9500 = vld [vmem:[%s5 + $0x7e0] sm:$0xff]
      %v9501 = vld [vmem:[%s5 + $0x7e8] sm:$0xff]
      %v9502 = vld [vmem:[%s5 + $0x7f0] sm:$0xff]
      %v9503 = vld [vmem:[%s5 + $0x7f8] sm:$0xff]
      %v9504 = vld [vmem:[%s5 + $0x800] sm:$0xff]
      %v9505 = vld [vmem:[%s5 + $0x808] sm:$0xff]
      %v9506 = vld [vmem:[%s5 + $0x810] sm:$0xff]
      %v9507 = vld [vmem:[%s5 + $0x818] sm:$0xff]
      %v9508 = vld [vmem:[%s5 + $0x820] sm:$0xff]
      %v9509 = vld [vmem:[%s5 + $0x828] sm:$0xff]
      %v9510 = vld [vmem:[%s5 + $0x830] sm:$0xff]
      %v9511 = vld [vmem:[%s5 + $0x838] sm:$0xff]
      %v9512 = vld [vmem:[%s5 + $0x840] sm:$0xff]
      %v9513 = vld [vmem:[%s5 + $0x848] sm:$0xff]
      %v9514 = vld [vmem:[%s5 + $0x850] sm:$0xff]
      %v9515 = vld [vmem:[%s5 + $0x858] sm:$0xff]
      %v9516 = vld [vmem:[%s5 + $0x860] sm:$0xff]
      %v9517 = vld [vmem:[%s5 + $0x868] sm:$0xff]
      %v9518 = vld [vmem:[%s5 + $0x870] sm:$0xff]
      %v9519 = vld [vmem:[%s5 + $0x878] sm:$0xff]
      %v9520 = vld [vmem:[%s5 + $0x880] sm:$0xff]
      %v9521 = vld [vmem:[%s5 + $0x888] sm:$0xff]
      %v9522 = vld [vmem:[%s5 + $0x890] sm:$0xff]
      %v9523 = vld [vmem:[%s5 + $0x898] sm:$0xff]
      %v9524 = vld [vmem:[%s5 + $0x8a0] sm:$0xff]
      %v9525 = vld [vmem:[%s5 + $0x8a8] sm:$0xff]
      %v9526 = vld [vmem:[%s5 + $0x8b0] sm:$0xff]
      %v9527 = vld [vmem:[%s5 + $0x8b8] sm:$0xff]
      %v9528 = vld [vmem:[%s5 + $0x8c0] sm:$0xff]
      %v9529 = vld [vmem:[%s5 + $0x8c8] sm:$0xff]
      %v9530 = vld [vmem:[%s5 + $0x8d0] sm:$0xff]
      %v9531 = vld [vmem:[%s5 + $0x8d8] sm:$0xff]
      %v9532 = vld [vmem:[%s5 + $0x8e0] sm:$0xff]
      %v9533 = vld [vmem:[%s5 + $0x8e8] sm:$0xff]
      %v9534 = vld [vmem:[%s5 + $0x8f0] sm:$0xff]
      %v9535 = vld [vmem:[%s5 + $0x8f8] sm:$0xff]
      %v9536 = vld [vmem:[%s5 + $0x900] sm:$0xff]
      %v9537 = vld [vmem:[%s5 + $0x908] sm:$0xff]
      %v9538 = vld [vmem:[%s5 + $0x910] sm:$0xff]
      %v9539 = vld [vmem:[%s5 + $0x918] sm:$0xff]
      %v9540 = vld [vmem:[%s5 + $0x920] sm:$0xff]
      %v9541 = vld [vmem:[%s5 + $0x928] sm:$0xff]
      %v9542 = vld [vmem:[%s5 + $0x930] sm:$0xff]
      %v9543 = vld [vmem:[%s5 + $0x938] sm:$0xff]
      %v9544 = vld [vmem:[%s5 + $0x940] sm:$0xff]
      %v9545 = vld [vmem:[%s5 + $0x948] sm:$0xff]
      %v9546 = vld [vmem:[%s5 + $0x950] sm:$0xff]
      %v9547 = vld [vmem:[%s5 + $0x958] sm:$0xff]
      %v9548 = vld [vmem:[%s5 + $0x960] sm:$0xff]
      %v9549 = vld [vmem:[%s5 + $0x968] sm:$0xff]
      %v9550 = vld [vmem:[%s5 + $0x970] sm:$0xff]
      %v9551 = vld [vmem:[%s5 + $0x978] sm:$0xff]
      %v9552 = vld [vmem:[%s5 + $0x980] sm:$0xff]
      %v9553 = vld [vmem:[%s5 + $0x988] sm:$0xff]
      %v9554 = vld [vmem:[%s5 + $0x990] sm:$0xff]
      %v9555 = vld [vmem:[%s5 + $0x998] sm:$0xff]
      %v9556 = vld [vmem:[%s5 + $0x9a0] sm:$0xff]
      %v9557 = vld [vmem:[%s5 + $0x9a8] sm:$0xff]
      %v9558 = vld [vmem:[%s5 + $0x9b0] sm:$0xff]
      %v9559 = vld [vmem:[%s5 + $0x9b8] sm:$0xff]
      %v9560 = vld [vmem:[%s5 + $0x9c0] sm:$0xff]
      %v9561 = vld [vmem:[%s5 + $0x9c8] sm:$0xff]
      %v9562 = vld [vmem:[%s5 + $0x9d0] sm:$0xff]
      %v9563 = vld [vmem:[%s5 + $0x9d8] sm:$0xff]
      %v9564 = vld [vmem:[%s5 + $0x9e0] sm:$0xff]
      %v9565 = vld [vmem:[%s5 + $0x9e8] sm:$0xff]
      %v9566 = vld [vmem:[%s5 + $0x9f0] sm:$0xff]
      %v9567 = vld [vmem:[%s5 + $0x9f8] sm:$0xff]
      %v9568 = vld [vmem:[%s5 + $0xa00] sm:$0xff]
      %v9569 = vld [vmem:[%s5 + $0xa08] sm:$0xff]
      %v9570 = vld [vmem:[%s5 + $0xa10] sm:$0xff]
      %v9571 = vld [vmem:[%s5 + $0xa18] sm:$0xff]
      %v9572 = vld [vmem:[%s5 + $0xa20] sm:$0xff]
      %v9573 = vld [vmem:[%s5 + $0xa28] sm:$0xff]
      %v9574 = vld [vmem:[%s5 + $0xa30] sm:$0xff]
      %v9575 = vld [vmem:[%s5 + $0xa38] sm:$0xff]
      %v9576 = vld [vmem:[%s5 + $0xa40] sm:$0xff]
      %v9577 = vld [vmem:[%s5 + $0xa48] sm:$0xff]
      %v9578 = vld [vmem:[%s5 + $0xa50] sm:$0xff]
      %v9579 = vld [vmem:[%s5 + $0xa58] sm:$0xff]
      %v9580 = vld [vmem:[%s5 + $0xa60] sm:$0xff]
      %v9581 = vld [vmem:[%s5 + $0xa68] sm:$0xff]
      %v9582 = vld [vmem:[%s5 + $0xa70] sm:$0xff]
      %v9583 = vld [vmem:[%s5 + $0xa78] sm:$0xff]
      %v9584 = vld [vmem:[%s5 + $0xa80] sm:$0xff]
      %v9585 = vld [vmem:[%s5 + $0xa88] sm:$0xff]
      %v9586 = vld [vmem:[%s5 + $0xa90] sm:$0xff]
      %v9587 = vld [vmem:[%s5 + $0xa98] sm:$0xff]
      %v9588 = vld [vmem:[%s5 + $0xaa0] sm:$0xff]
      %v9589 = vld [vmem:[%s5 + $0xaa8] sm:$0xff]
      %v9590 = vld [vmem:[%s5 + $0xab0] sm:$0xff]
      %v9591 = vld [vmem:[%s5 + $0xab8] sm:$0xff]
      %v9592 = vld [vmem:[%s5 + $0xac0] sm:$0xff]
      %v9593 = vld [vmem:[%s5 + $0xac8] sm:$0xff]
      %v9594 = vld [vmem:[%s5 + $0xad0] sm:$0xff]
      %v9595 = vld [vmem:[%s5 + $0xad8] sm:$0xff]
      %v9596 = vld [vmem:[%s5 + $0xae0] sm:$0xff]
      %v9597 = vld [vmem:[%s5 + $0xae8] sm:$0xff]
      %v9598 = vld [vmem:[%s5 + $0xaf0] sm:$0xff]
      %v9599 = vld [vmem:[%s5 + $0xaf8] sm:$0xff]
      %v9600 = vld [vmem:[%s5 + $0xb00] sm:$0xff]
      %v9601 = vld [vmem:[%s5 + $0xb08] sm:$0xff]
      %v9602 = vld [vmem:[%s5 + $0xb10] sm:$0xff]
      %v9603 = vld [vmem:[%s5 + $0xb18] sm:$0xff]
      %v9604 = vld [vmem:[%s5 + $0xb20] sm:$0xff]
      %v9605 = vld [vmem:[%s5 + $0xb28] sm:$0xff]
      %v9606 = vld [vmem:[%s5 + $0xb30] sm:$0xff]
      %v9607 = vld [vmem:[%s5 + $0xb38] sm:$0xff]
      %v9608 = vld [vmem:[%s5 + $0xb40] sm:$0xff]
      %v9609 = vld [vmem:[%s5 + $0xb48] sm:$0xff]
      %v9610 = vld [vmem:[%s5 + $0xb50] sm:$0xff]
      %v9611 = vld [vmem:[%s5 + $0xb58] sm:$0xff]
      %v9612 = vld [vmem:[%s5 + $0xb60] sm:$0xff]
      %v9613 = vld [vmem:[%s5 + $0xb68] sm:$0xff]
      %v9614 = vld [vmem:[%s5 + $0xb70] sm:$0xff]
      %v9615 = vld [vmem:[%s5 + $0xb78] sm:$0xff]
      %v9616 = vld [vmem:[%s5 + $0xb80] sm:$0xff]
      %v9617 = vld [vmem:[%s5 + $0xb88] sm:$0xff]
      %v9618 = vld [vmem:[%s5 + $0xb90] sm:$0xff]
      %v9619 = vld [vmem:[%s5 + $0xb98] sm:$0xff]
      %v9620 = vld [vmem:[%s5 + $0xba0] sm:$0xff]
      %v9621 = vld [vmem:[%s5 + $0xba8] sm:$0xff]
      %v9622 = vld [vmem:[%s5 + $0xbb0] sm:$0xff]
      %v9623 = vld [vmem:[%s5 + $0xbb8] sm:$0xff]
      %v9624 = vld [vmem:[%s5 + $0xbc0] sm:$0xff]
      %v9625 = vld [vmem:[%s5 + $0xbc8] sm:$0xff]
      %v9626 = vld [vmem:[%s5 + $0xbd0] sm:$0xff]
      %v9627 = vld [vmem:[%s5 + $0xbd8] sm:$0xff]
      %v9628 = vld [vmem:[%s5 + $0xbe0] sm:$0xff]
      %v9629 = vld [vmem:[%s5 + $0xbe8] sm:$0xff]
      %v9630 = vld [vmem:[%s5 + $0xbf0] sm:$0xff]
      %v9631 = vld [vmem:[%s5 + $0xbf8] sm:$0xff]
      %v9632 = vld [vmem:[%s5 + $0xc00] sm:$0xff]
      %v9633 = vld [vmem:[%s5 + $0xc08] sm:$0xff]
      %v9634 = vld [vmem:[%s5 + $0xc10] sm:$0xff]
      %v9635 = vld [vmem:[%s5 + $0xc18] sm:$0xff]
      %v9636 = vld [vmem:[%s5 + $0xc20] sm:$0xff]
      %v9637 = vld [vmem:[%s5 + $0xc28] sm:$0xff]
      %v9638 = vld [vmem:[%s5 + $0xc30] sm:$0xff]
      %v9639 = vld [vmem:[%s5 + $0xc38] sm:$0xff]
      %v9640 = vld [vmem:[%s5 + $0xc40] sm:$0xff]
      %v9641 = vld [vmem:[%s5 + $0xc48] sm:$0xff]
      %v9642 = vld [vmem:[%s5 + $0xc50] sm:$0xff]
      %v9643 = vld [vmem:[%s5 + $0xc58] sm:$0xff]
      %v9644 = vld [vmem:[%s5 + $0xc60] sm:$0xff]
      %v9645 = vld [vmem:[%s5 + $0xc68] sm:$0xff]
      %v9646 = vld [vmem:[%s5 + $0xc70] sm:$0xff]
      %v9647 = vld [vmem:[%s5 + $0xc78] sm:$0xff]
      %v9648 = vld [vmem:[%s6] sm:$0x3]
      %v9650 = vlaneseq
      %v9651 = vshrl.u32 %v9650, 7
      %v9652 = vsub.s32 0, %v9651
      %v9653 = vrot.slane %v9648, %v9652
      %v9654 = vlaneseq
      %v9655 = vshrl.u32 %v9654, 7
      %v9656 = vsub.s32 1, %v9655
      %v9657 = vrot.slane %v9648, %v9656
      %v10060 = vunpack.c.l.b16 %v9248
      %v10061 = vunpack.c.h.b16 %v9248
      %v10062 = vunpack.c.l.b16 %v9249
      %v10063 = vunpack.c.h.b16 %v9249
      %v10064 = vunpack.c.l.b16 %v9250
      %v10065 = vunpack.c.h.b16 %v9250
      %v10066 = vunpack.c.l.b16 %v9251
      %v10067 = vunpack.c.h.b16 %v9251
      %v10068 = vunpack.c.l.b16 %v9252
      %v10069 = vunpack.c.h.b16 %v9252
      %v10070 = vunpack.c.l.b16 %v9253
      %v10071 = vunpack.c.h.b16 %v9253
      %v10072 = vunpack.c.l.b16 %v9254
      %v10073 = vunpack.c.h.b16 %v9254
      %v10074 = vunpack.c.l.b16 %v9255
      %v10075 = vunpack.c.h.b16 %v9255
      %v10076 = vunpack.c.l.b16 %v9256
      %v10077 = vunpack.c.h.b16 %v9256
      %v10078 = vunpack.c.l.b16 %v9257
      %v10079 = vunpack.c.h.b16 %v9257
      %v10080 = vunpack.c.l.b16 %v9258
      %v10081 = vunpack.c.h.b16 %v9258
      %v10082 = vunpack.c.l.b16 %v9259
      %v10083 = vunpack.c.h.b16 %v9259
      %v10084 = vunpack.c.l.b16 %v9260
      %v10085 = vunpack.c.h.b16 %v9260
      %v10086 = vunpack.c.l.b16 %v9261
      %v10087 = vunpack.c.h.b16 %v9261
      %v10088 = vunpack.c.l.b16 %v9262
      %v10089 = vunpack.c.h.b16 %v9262
      %v10090 = vunpack.c.l.b16 %v9263
      %v10091 = vunpack.c.h.b16 %v9263
      %v10092 = vunpack.c.l.b16 %v9264
      %v10093 = vunpack.c.h.b16 %v9264
      %v10094 = vunpack.c.l.b16 %v9265
      %v10095 = vunpack.c.h.b16 %v9265
      %v10096 = vunpack.c.l.b16 %v9266
      %v10097 = vunpack.c.h.b16 %v9266
      %v10098 = vunpack.c.l.b16 %v9267
      %v10099 = vunpack.c.h.b16 %v9267
      %v10100 = vunpack.c.l.b16 %v9268
      %v10101 = vunpack.c.h.b16 %v9268
      %v10102 = vunpack.c.l.b16 %v9269
      %v10103 = vunpack.c.h.b16 %v9269
      %v10104 = vunpack.c.l.b16 %v9270
      %v10105 = vunpack.c.h.b16 %v9270
      %v10106 = vunpack.c.l.b16 %v9271
      %v10107 = vunpack.c.h.b16 %v9271
      %v10108 = vunpack.c.l.b16 %v9272
      %v10109 = vunpack.c.h.b16 %v9272
      %v10110 = vunpack.c.l.b16 %v9273
      %v10111 = vunpack.c.h.b16 %v9273
      %v10112 = vunpack.c.l.b16 %v9274
      %v10113 = vunpack.c.h.b16 %v9274
      %v10114 = vunpack.c.l.b16 %v9275
      %v10115 = vunpack.c.h.b16 %v9275
      %v10116 = vunpack.c.l.b16 %v9276
      %v10117 = vunpack.c.h.b16 %v9276
      %v10118 = vunpack.c.l.b16 %v9277
      %v10119 = vunpack.c.h.b16 %v9277
      %v10120 = vunpack.c.l.b16 %v9278
      %v10121 = vunpack.c.h.b16 %v9278
      %v10122 = vunpack.c.l.b16 %v9279
      %v10123 = vunpack.c.h.b16 %v9279
      %v10124 = vunpack.c.l.b16 %v9280
      %v10125 = vunpack.c.h.b16 %v9280
      %v10126 = vunpack.c.l.b16 %v9281
      %v10127 = vunpack.c.h.b16 %v9281
      %v10128 = vunpack.c.l.b16 %v9282
      %v10129 = vunpack.c.h.b16 %v9282
      %v10130 = vunpack.c.l.b16 %v9283
      %v10131 = vunpack.c.h.b16 %v9283
      %v10132 = vunpack.c.l.b16 %v9284
      %v10133 = vunpack.c.h.b16 %v9284
      %v10134 = vunpack.c.l.b16 %v9285
      %v10135 = vunpack.c.h.b16 %v9285
      %v10136 = vunpack.c.l.b16 %v9286
      %v10137 = vunpack.c.h.b16 %v9286
      %v10138 = vunpack.c.l.b16 %v9287
      %v10139 = vunpack.c.h.b16 %v9287
      %v10140 = vunpack.c.l.b16 %v9288
      %v10141 = vunpack.c.h.b16 %v9288
      %v10142 = vunpack.c.l.b16 %v9289
      %v10143 = vunpack.c.h.b16 %v9289
      %v10144 = vunpack.c.l.b16 %v9290
      %v10145 = vunpack.c.h.b16 %v9290
      %v10146 = vunpack.c.l.b16 %v9291
      %v10147 = vunpack.c.h.b16 %v9291
      %v10148 = vunpack.c.l.b16 %v9292
      %v10149 = vunpack.c.h.b16 %v9292
      %v10150 = vunpack.c.l.b16 %v9293
      %v10151 = vunpack.c.h.b16 %v9293
      %v10152 = vunpack.c.l.b16 %v9294
      %v10153 = vunpack.c.h.b16 %v9294
      %v10154 = vunpack.c.l.b16 %v9295
      %v10155 = vunpack.c.h.b16 %v9295
      %v10156 = vunpack.c.l.b16 %v9296
      %v10157 = vunpack.c.h.b16 %v9296
      %v10158 = vunpack.c.l.b16 %v9297
      %v10159 = vunpack.c.h.b16 %v9297
      %v10160 = vunpack.c.l.b16 %v9298
      %v10161 = vunpack.c.h.b16 %v9298
      %v10162 = vunpack.c.l.b16 %v9299
      %v10163 = vunpack.c.h.b16 %v9299
      %v10164 = vunpack.c.l.b16 %v9300
      %v10165 = vunpack.c.h.b16 %v9300
      %v10166 = vunpack.c.l.b16 %v9301
      %v10167 = vunpack.c.h.b16 %v9301
      %v10168 = vunpack.c.l.b16 %v9302
      %v10169 = vunpack.c.h.b16 %v9302
      %v10170 = vunpack.c.l.b16 %v9303
      %v10171 = vunpack.c.h.b16 %v9303
      %v10172 = vunpack.c.l.b16 %v9304
      %v10173 = vunpack.c.h.b16 %v9304
      %v10174 = vunpack.c.l.b16 %v9305
      %v10175 = vunpack.c.h.b16 %v9305
      %v10176 = vunpack.c.l.b16 %v9306
      %v10177 = vunpack.c.h.b16 %v9306
      %v10178 = vunpack.c.l.b16 %v9307
      %v10179 = vunpack.c.h.b16 %v9307
      %v10180 = vunpack.c.l.b16 %v9308
      %v10181 = vunpack.c.h.b16 %v9308
      %v10182 = vunpack.c.l.b16 %v9309
      %v10183 = vunpack.c.h.b16 %v9309
      %v10184 = vunpack.c.l.b16 %v9310
      %v10185 = vunpack.c.h.b16 %v9310
      %v10186 = vunpack.c.l.b16 %v9311
      %v10187 = vunpack.c.h.b16 %v9311
      %v10188 = vunpack.c.l.b16 %v9312
      %v10189 = vunpack.c.h.b16 %v9312
      %v10190 = vunpack.c.l.b16 %v9313
      %v10191 = vunpack.c.h.b16 %v9313
      %v10192 = vunpack.c.l.b16 %v9314
      %v10193 = vunpack.c.h.b16 %v9314
      %v10194 = vunpack.c.l.b16 %v9315
      %v10195 = vunpack.c.h.b16 %v9315
      %v10196 = vunpack.c.l.b16 %v9316
      %v10197 = vunpack.c.h.b16 %v9316
      %v10198 = vunpack.c.l.b16 %v9317
      %v10199 = vunpack.c.h.b16 %v9317
      %v10200 = vunpack.c.l.b16 %v9318
      %v10201 = vunpack.c.h.b16 %v9318
      %v10202 = vunpack.c.l.b16 %v9319
      %v10203 = vunpack.c.h.b16 %v9319
      %v10204 = vunpack.c.l.b16 %v9320
      %v10205 = vunpack.c.h.b16 %v9320
      %v10206 = vunpack.c.l.b16 %v9321
      %v10207 = vunpack.c.h.b16 %v9321
      %v10208 = vunpack.c.l.b16 %v9322
      %v10209 = vunpack.c.h.b16 %v9322
      %v10210 = vunpack.c.l.b16 %v9323
      %v10211 = vunpack.c.h.b16 %v9323
      %v10212 = vunpack.c.l.b16 %v9324
      %v10213 = vunpack.c.h.b16 %v9324
      %v10214 = vunpack.c.l.b16 %v9325
      %v10215 = vunpack.c.h.b16 %v9325
      %v10216 = vunpack.c.l.b16 %v9326
      %v10217 = vunpack.c.h.b16 %v9326
      %v10218 = vunpack.c.l.b16 %v9327
      %v10219 = vunpack.c.h.b16 %v9327
      %v10220 = vunpack.c.l.b16 %v9328
      %v10221 = vunpack.c.h.b16 %v9328
      %v10222 = vunpack.c.l.b16 %v9329
      %v10223 = vunpack.c.h.b16 %v9329
      %v10224 = vunpack.c.l.b16 %v9330
      %v10225 = vunpack.c.h.b16 %v9330
      %v10226 = vunpack.c.l.b16 %v9331
      %v10227 = vunpack.c.h.b16 %v9331
      %v10228 = vunpack.c.l.b16 %v9332
      %v10229 = vunpack.c.h.b16 %v9332
      %v10230 = vunpack.c.l.b16 %v9333
      %v10231 = vunpack.c.h.b16 %v9333
      %v10232 = vunpack.c.l.b16 %v9334
      %v10233 = vunpack.c.h.b16 %v9334
      %v10234 = vunpack.c.l.b16 %v9335
      %v10235 = vunpack.c.h.b16 %v9335
      %v10236 = vunpack.c.l.b16 %v9336
      %v10237 = vunpack.c.h.b16 %v9336
      %v10238 = vunpack.c.l.b16 %v9337
      %v10239 = vunpack.c.h.b16 %v9337
      %v10240 = vunpack.c.l.b16 %v9338
      %v10241 = vunpack.c.h.b16 %v9338
      %v10242 = vunpack.c.l.b16 %v9339
      %v10243 = vunpack.c.h.b16 %v9339
      %v10244 = vunpack.c.l.b16 %v9340
      %v10245 = vunpack.c.h.b16 %v9340
      %v10246 = vunpack.c.l.b16 %v9341
      %v10247 = vunpack.c.h.b16 %v9341
      %v10248 = vunpack.c.l.b16 %v9342
      %v10249 = vunpack.c.h.b16 %v9342
      %v10250 = vunpack.c.l.b16 %v9343
      %v10251 = vunpack.c.h.b16 %v9343
      %v10252 = vunpack.c.l.b16 %v9344
      %v10253 = vunpack.c.h.b16 %v9344
      %v10254 = vunpack.c.l.b16 %v9345
      %v10255 = vunpack.c.h.b16 %v9345
      %v10256 = vunpack.c.l.b16 %v9346
      %v10257 = vunpack.c.h.b16 %v9346
      %v10258 = vunpack.c.l.b16 %v9347
      %v10259 = vunpack.c.h.b16 %v9347
      %v10260 = vunpack.c.l.b16 %v9348
      %v10261 = vunpack.c.h.b16 %v9348
      %v10262 = vunpack.c.l.b16 %v9349
      %v10263 = vunpack.c.h.b16 %v9349
      %v10264 = vunpack.c.l.b16 %v9350
      %v10265 = vunpack.c.h.b16 %v9350
      %v10266 = vunpack.c.l.b16 %v9351
      %v10267 = vunpack.c.h.b16 %v9351
      %v10268 = vunpack.c.l.b16 %v9352
      %v10269 = vunpack.c.h.b16 %v9352
      %v10270 = vunpack.c.l.b16 %v9353
      %v10271 = vunpack.c.h.b16 %v9353
      %v10272 = vunpack.c.l.b16 %v9354
      %v10273 = vunpack.c.h.b16 %v9354
      %v10274 = vunpack.c.l.b16 %v9355
      %v10275 = vunpack.c.h.b16 %v9355
      %v10276 = vunpack.c.l.b16 %v9356
      %v10277 = vunpack.c.h.b16 %v9356
      %v10278 = vunpack.c.l.b16 %v9357
      %v10279 = vunpack.c.h.b16 %v9357
      %v10280 = vunpack.c.l.b16 %v9358
      %v10281 = vunpack.c.h.b16 %v9358
      %v10282 = vunpack.c.l.b16 %v9359
      %v10283 = vunpack.c.h.b16 %v9359
      %v10284 = vunpack.c.l.b16 %v9360
      %v10285 = vunpack.c.h.b16 %v9360
      %v10286 = vunpack.c.l.b16 %v9361
      %v10287 = vunpack.c.h.b16 %v9361
      %v10288 = vunpack.c.l.b16 %v9362
      %v10289 = vunpack.c.h.b16 %v9362
      %v10290 = vunpack.c.l.b16 %v9363
      %v10291 = vunpack.c.h.b16 %v9363
      %v10292 = vunpack.c.l.b16 %v9364
      %v10293 = vunpack.c.h.b16 %v9364
      %v10294 = vunpack.c.l.b16 %v9365
      %v10295 = vunpack.c.h.b16 %v9365
      %v10296 = vunpack.c.l.b16 %v9366
      %v10297 = vunpack.c.h.b16 %v9366
      %v10298 = vunpack.c.l.b16 %v9367
      %v10299 = vunpack.c.h.b16 %v9367
      %v10300 = vunpack.c.l.b16 %v9368
      %v10301 = vunpack.c.h.b16 %v9368
      %v10302 = vunpack.c.l.b16 %v9369
      %v10303 = vunpack.c.h.b16 %v9369
      %v10304 = vunpack.c.l.b16 %v9370
      %v10305 = vunpack.c.h.b16 %v9370
      %v10306 = vunpack.c.l.b16 %v9371
      %v10307 = vunpack.c.h.b16 %v9371
      %v10308 = vunpack.c.l.b16 %v9372
      %v10309 = vunpack.c.h.b16 %v9372
      %v10310 = vunpack.c.l.b16 %v9373
      %v10311 = vunpack.c.h.b16 %v9373
      %v10312 = vunpack.c.l.b16 %v9374
      %v10313 = vunpack.c.h.b16 %v9374
      %v10314 = vunpack.c.l.b16 %v9375
      %v10315 = vunpack.c.h.b16 %v9375
      %v10316 = vunpack.c.l.b16 %v9376
      %v10317 = vunpack.c.h.b16 %v9376
      %v10318 = vunpack.c.l.b16 %v9377
      %v10319 = vunpack.c.h.b16 %v9377
      %v10320 = vunpack.c.l.b16 %v9378
      %v10321 = vunpack.c.h.b16 %v9378
      %v10322 = vunpack.c.l.b16 %v9379
      %v10323 = vunpack.c.h.b16 %v9379
      %v10324 = vunpack.c.l.b16 %v9380
      %v10325 = vunpack.c.h.b16 %v9380
      %v10326 = vunpack.c.l.b16 %v9381
      %v10327 = vunpack.c.h.b16 %v9381
      %v10328 = vunpack.c.l.b16 %v9382
      %v10329 = vunpack.c.h.b16 %v9382
      %v10330 = vunpack.c.l.b16 %v9383
      %v10331 = vunpack.c.h.b16 %v9383
      %v10332 = vunpack.c.l.b16 %v9384
      %v10333 = vunpack.c.h.b16 %v9384
      %v10334 = vunpack.c.l.b16 %v9385
      %v10335 = vunpack.c.h.b16 %v9385
      %v10336 = vunpack.c.l.b16 %v9386
      %v10337 = vunpack.c.h.b16 %v9386
      %v10338 = vunpack.c.l.b16 %v9387
      %v10339 = vunpack.c.h.b16 %v9387
      %v10340 = vunpack.c.l.b16 %v9388
      %v10341 = vunpack.c.h.b16 %v9388
      %v10342 = vunpack.c.l.b16 %v9389
      %v10343 = vunpack.c.h.b16 %v9389
      %v10344 = vunpack.c.l.b16 %v9390
      %v10345 = vunpack.c.h.b16 %v9390
      %v10346 = vunpack.c.l.b16 %v9391
      %v10347 = vunpack.c.h.b16 %v9391
      %v10348 = vunpack.c.l.b16 %v9392
      %v10349 = vunpack.c.h.b16 %v9392
      %v10350 = vunpack.c.l.b16 %v9393
      %v10351 = vunpack.c.h.b16 %v9393
      %v10352 = vunpack.c.l.b16 %v9394
      %v10353 = vunpack.c.h.b16 %v9394
      %v10354 = vunpack.c.l.b16 %v9395
      %v10355 = vunpack.c.h.b16 %v9395
      %v10356 = vunpack.c.l.b16 %v9396
      %v10357 = vunpack.c.h.b16 %v9396
      %v10358 = vunpack.c.l.b16 %v9397
      %v10359 = vunpack.c.h.b16 %v9397
      %v10360 = vunpack.c.l.b16 %v9398
      %v10361 = vunpack.c.h.b16 %v9398
      %v10362 = vunpack.c.l.b16 %v9399
      %v10363 = vunpack.c.h.b16 %v9399
      %v10364 = vunpack.c.l.b16 %v9400
      %v10365 = vunpack.c.h.b16 %v9400
      %v10366 = vunpack.c.l.b16 %v9401
      %v10367 = vunpack.c.h.b16 %v9401
      %v10368 = vunpack.c.l.b16 %v9402
      %v10369 = vunpack.c.h.b16 %v9402
      %v10370 = vunpack.c.l.b16 %v9403
      %v10371 = vunpack.c.h.b16 %v9403
      %v10372 = vunpack.c.l.b16 %v9404
      %v10373 = vunpack.c.h.b16 %v9404
      %v10374 = vunpack.c.l.b16 %v9405
      %v10375 = vunpack.c.h.b16 %v9405
      %v10376 = vunpack.c.l.b16 %v9406
      %v10377 = vunpack.c.h.b16 %v9406
      %v10378 = vunpack.c.l.b16 %v9407
      %v10379 = vunpack.c.h.b16 %v9407
      %v10380 = vunpack.c.l.b16 %v9408
      %v10381 = vunpack.c.h.b16 %v9408
      %v10382 = vunpack.c.l.b16 %v9409
      %v10383 = vunpack.c.h.b16 %v9409
      %v10384 = vunpack.c.l.b16 %v9410
      %v10385 = vunpack.c.h.b16 %v9410
      %v10386 = vunpack.c.l.b16 %v9411
      %v10387 = vunpack.c.h.b16 %v9411
      %v10388 = vunpack.c.l.b16 %v9412
      %v10389 = vunpack.c.h.b16 %v9412
      %v10390 = vunpack.c.l.b16 %v9413
      %v10391 = vunpack.c.h.b16 %v9413
      %v10392 = vunpack.c.l.b16 %v9414
      %v10393 = vunpack.c.h.b16 %v9414
      %v10394 = vunpack.c.l.b16 %v9415
      %v10395 = vunpack.c.h.b16 %v9415
      %v10396 = vunpack.c.l.b16 %v9416
      %v10397 = vunpack.c.h.b16 %v9416
      %v10398 = vunpack.c.l.b16 %v9417
      %v10399 = vunpack.c.h.b16 %v9417
      %v10400 = vunpack.c.l.b16 %v9418
      %v10401 = vunpack.c.h.b16 %v9418
      %v10402 = vunpack.c.l.b16 %v9419
      %v10403 = vunpack.c.h.b16 %v9419
      %v10404 = vunpack.c.l.b16 %v9420
      %v10405 = vunpack.c.h.b16 %v9420
      %v10406 = vunpack.c.l.b16 %v9421
      %v10407 = vunpack.c.h.b16 %v9421
      %v10408 = vunpack.c.l.b16 %v9422
      %v10409 = vunpack.c.h.b16 %v9422
      %v10410 = vunpack.c.l.b16 %v9423
      %v10411 = vunpack.c.h.b16 %v9423
      %v10412 = vunpack.c.l.b16 %v9424
      %v10413 = vunpack.c.h.b16 %v9424
      %v10414 = vunpack.c.l.b16 %v9425
      %v10415 = vunpack.c.h.b16 %v9425
      %v10416 = vunpack.c.l.b16 %v9426
      %v10417 = vunpack.c.h.b16 %v9426
      %v10418 = vunpack.c.l.b16 %v9427
      %v10419 = vunpack.c.h.b16 %v9427
      %v10420 = vunpack.c.l.b16 %v9428
      %v10421 = vunpack.c.h.b16 %v9428
      %v10422 = vunpack.c.l.b16 %v9429
      %v10423 = vunpack.c.h.b16 %v9429
      %v10424 = vunpack.c.l.b16 %v9430
      %v10425 = vunpack.c.h.b16 %v9430
      %v10426 = vunpack.c.l.b16 %v9431
      %v10427 = vunpack.c.h.b16 %v9431
      %v10428 = vunpack.c.l.b16 %v9432
      %v10429 = vunpack.c.h.b16 %v9432
      %v10430 = vunpack.c.l.b16 %v9433
      %v10431 = vunpack.c.h.b16 %v9433
      %v10432 = vunpack.c.l.b16 %v9434
      %v10433 = vunpack.c.h.b16 %v9434
      %v10434 = vunpack.c.l.b16 %v9435
      %v10435 = vunpack.c.h.b16 %v9435
      %v10436 = vunpack.c.l.b16 %v9436
      %v10437 = vunpack.c.h.b16 %v9436
      %v10438 = vunpack.c.l.b16 %v9437
      %v10439 = vunpack.c.h.b16 %v9437
      %v10440 = vunpack.c.l.b16 %v9438
      %v10441 = vunpack.c.h.b16 %v9438
      %v10442 = vunpack.c.l.b16 %v9439
      %v10443 = vunpack.c.h.b16 %v9439
      %v10444 = vunpack.c.l.b16 %v9440
      %v10445 = vunpack.c.h.b16 %v9440
      %v10446 = vunpack.c.l.b16 %v9441
      %v10447 = vunpack.c.h.b16 %v9441
      %v10448 = vunpack.c.l.b16 %v9442
      %v10449 = vunpack.c.h.b16 %v9442
      %v10450 = vunpack.c.l.b16 %v9443
      %v10451 = vunpack.c.h.b16 %v9443
      %v10452 = vunpack.c.l.b16 %v9444
      %v10453 = vunpack.c.h.b16 %v9444
      %v10454 = vunpack.c.l.b16 %v9445
      %v10455 = vunpack.c.h.b16 %v9445
      %v10456 = vunpack.c.l.b16 %v9446
      %v10457 = vunpack.c.h.b16 %v9446
      %v10458 = vunpack.c.l.b16 %v9447
      %v10459 = vunpack.c.h.b16 %v9447
      %v10460 = vunpack.c.l.b16 %v9448
      %v10461 = vunpack.c.h.b16 %v9448
      %v10462 = vunpack.c.l.b16 %v9449
      %v10463 = vunpack.c.h.b16 %v9449
      %v10464 = vunpack.c.l.b16 %v9450
      %v10465 = vunpack.c.h.b16 %v9450
      %v10466 = vunpack.c.l.b16 %v9451
      %v10467 = vunpack.c.h.b16 %v9451
      %v10468 = vunpack.c.l.b16 %v9452
      %v10469 = vunpack.c.h.b16 %v9452
      %v10470 = vunpack.c.l.b16 %v9453
      %v10471 = vunpack.c.h.b16 %v9453
      %v10472 = vunpack.c.l.b16 %v9454
      %v10473 = vunpack.c.h.b16 %v9454
      %v10474 = vunpack.c.l.b16 %v9455
      %v10475 = vunpack.c.h.b16 %v9455
      %v10476 = vunpack.c.l.b16 %v9456
      %v10477 = vunpack.c.h.b16 %v9456
      %v10478 = vunpack.c.l.b16 %v9457
      %v10479 = vunpack.c.h.b16 %v9457
      %v10480 = vunpack.c.l.b16 %v9458
      %v10481 = vunpack.c.h.b16 %v9458
      %v10482 = vunpack.c.l.b16 %v9459
      %v10483 = vunpack.c.h.b16 %v9459
      %v10484 = vunpack.c.l.b16 %v9460
      %v10485 = vunpack.c.h.b16 %v9460
      %v10486 = vunpack.c.l.b16 %v9461
      %v10487 = vunpack.c.h.b16 %v9461
      %v10488 = vunpack.c.l.b16 %v9462
      %v10489 = vunpack.c.h.b16 %v9462
      %v10490 = vunpack.c.l.b16 %v9463
      %v10491 = vunpack.c.h.b16 %v9463
      %v10492 = vunpack.c.l.b16 %v9464
      %v10493 = vunpack.c.h.b16 %v9464
      %v10494 = vunpack.c.l.b16 %v9465
      %v10495 = vunpack.c.h.b16 %v9465
      %v10496 = vunpack.c.l.b16 %v9466
      %v10497 = vunpack.c.h.b16 %v9466
      %v10498 = vunpack.c.l.b16 %v9467
      %v10499 = vunpack.c.h.b16 %v9467
      %v10500 = vunpack.c.l.b16 %v9468
      %v10501 = vunpack.c.h.b16 %v9468
      %v10502 = vunpack.c.l.b16 %v9469
      %v10503 = vunpack.c.h.b16 %v9469
      %v10504 = vunpack.c.l.b16 %v9470
      %v10505 = vunpack.c.h.b16 %v9470
      %v10506 = vunpack.c.l.b16 %v9471
      %v10507 = vunpack.c.h.b16 %v9471
      %v10508 = vunpack.c.l.b16 %v9472
      %v10509 = vunpack.c.h.b16 %v9472
      %v10510 = vunpack.c.l.b16 %v9473
      %v10511 = vunpack.c.h.b16 %v9473
      %v10512 = vunpack.c.l.b16 %v9474
      %v10513 = vunpack.c.h.b16 %v9474
      %v10514 = vunpack.c.l.b16 %v9475
      %v10515 = vunpack.c.h.b16 %v9475
      %v10516 = vunpack.c.l.b16 %v9476
      %v10517 = vunpack.c.h.b16 %v9476
      %v10518 = vunpack.c.l.b16 %v9477
      %v10519 = vunpack.c.h.b16 %v9477
      %v10520 = vunpack.c.l.b16 %v9478
      %v10521 = vunpack.c.h.b16 %v9478
      %v10522 = vunpack.c.l.b16 %v9479
      %v10523 = vunpack.c.h.b16 %v9479
      %v10524 = vunpack.c.l.b16 %v9480
      %v10525 = vunpack.c.h.b16 %v9480
      %v10526 = vunpack.c.l.b16 %v9481
      %v10527 = vunpack.c.h.b16 %v9481
      %v10528 = vunpack.c.l.b16 %v9482
      %v10529 = vunpack.c.h.b16 %v9482
      %v10530 = vunpack.c.l.b16 %v9483
      %v10531 = vunpack.c.h.b16 %v9483
      %v10532 = vunpack.c.l.b16 %v9484
      %v10533 = vunpack.c.h.b16 %v9484
      %v10534 = vunpack.c.l.b16 %v9485
      %v10535 = vunpack.c.h.b16 %v9485
      %v10536 = vunpack.c.l.b16 %v9486
      %v10537 = vunpack.c.h.b16 %v9486
      %v10538 = vunpack.c.l.b16 %v9487
      %v10539 = vunpack.c.h.b16 %v9487
      %v10540 = vunpack.c.l.b16 %v9488
      %v10541 = vunpack.c.h.b16 %v9488
      %v10542 = vunpack.c.l.b16 %v9489
      %v10543 = vunpack.c.h.b16 %v9489
      %v10544 = vunpack.c.l.b16 %v9490
      %v10545 = vunpack.c.h.b16 %v9490
      %v10546 = vunpack.c.l.b16 %v9491
      %v10547 = vunpack.c.h.b16 %v9491
      %v10548 = vunpack.c.l.b16 %v9492
      %v10549 = vunpack.c.h.b16 %v9492
      %v10550 = vunpack.c.l.b16 %v9493
      %v10551 = vunpack.c.h.b16 %v9493
      %v10552 = vunpack.c.l.b16 %v9494
      %v10553 = vunpack.c.h.b16 %v9494
      %v10554 = vunpack.c.l.b16 %v9495
      %v10555 = vunpack.c.h.b16 %v9495
      %v10556 = vunpack.c.l.b16 %v9496
      %v10557 = vunpack.c.h.b16 %v9496
      %v10558 = vunpack.c.l.b16 %v9497
      %v10559 = vunpack.c.h.b16 %v9497
      %v10560 = vunpack.c.l.b16 %v9498
      %v10561 = vunpack.c.h.b16 %v9498
      %v10562 = vunpack.c.l.b16 %v9499
      %v10563 = vunpack.c.h.b16 %v9499
      %v10564 = vunpack.c.l.b16 %v9500
      %v10565 = vunpack.c.h.b16 %v9500
      %v10566 = vunpack.c.l.b16 %v9501
      %v10567 = vunpack.c.h.b16 %v9501
      %v10568 = vunpack.c.l.b16 %v9502
      %v10569 = vunpack.c.h.b16 %v9502
      %v10570 = vunpack.c.l.b16 %v9503
      %v10571 = vunpack.c.h.b16 %v9503
      %v10572 = vunpack.c.l.b16 %v9504
      %v10573 = vunpack.c.h.b16 %v9504
      %v10574 = vunpack.c.l.b16 %v9505
      %v10575 = vunpack.c.h.b16 %v9505
      %v10576 = vunpack.c.l.b16 %v9506
      %v10577 = vunpack.c.h.b16 %v9506
      %v10578 = vunpack.c.l.b16 %v9507
      %v10579 = vunpack.c.h.b16 %v9507
      %v10580 = vunpack.c.l.b16 %v9508
      %v10581 = vunpack.c.h.b16 %v9508
      %v10582 = vunpack.c.l.b16 %v9509
      %v10583 = vunpack.c.h.b16 %v9509
      %v10584 = vunpack.c.l.b16 %v9510
      %v10585 = vunpack.c.h.b16 %v9510
      %v10586 = vunpack.c.l.b16 %v9511
      %v10587 = vunpack.c.h.b16 %v9511
      %v10588 = vunpack.c.l.b16 %v9512
      %v10589 = vunpack.c.h.b16 %v9512
      %v10590 = vunpack.c.l.b16 %v9513
      %v10591 = vunpack.c.h.b16 %v9513
      %v10592 = vunpack.c.l.b16 %v9514
      %v10593 = vunpack.c.h.b16 %v9514
      %v10594 = vunpack.c.l.b16 %v9515
      %v10595 = vunpack.c.h.b16 %v9515
      %v10596 = vunpack.c.l.b16 %v9516
      %v10597 = vunpack.c.h.b16 %v9516
      %v10598 = vunpack.c.l.b16 %v9517
      %v10599 = vunpack.c.h.b16 %v9517
      %v10600 = vunpack.c.l.b16 %v9518
      %v10601 = vunpack.c.h.b16 %v9518
      %v10602 = vunpack.c.l.b16 %v9519
      %v10603 = vunpack.c.h.b16 %v9519
      %v10604 = vunpack.c.l.b16 %v9520
      %v10605 = vunpack.c.h.b16 %v9520
      %v10606 = vunpack.c.l.b16 %v9521
      %v10607 = vunpack.c.h.b16 %v9521
      %v10608 = vunpack.c.l.b16 %v9522
      %v10609 = vunpack.c.h.b16 %v9522
      %v10610 = vunpack.c.l.b16 %v9523
      %v10611 = vunpack.c.h.b16 %v9523
      %v10612 = vunpack.c.l.b16 %v9524
      %v10613 = vunpack.c.h.b16 %v9524
      %v10614 = vunpack.c.l.b16 %v9525
      %v10615 = vunpack.c.h.b16 %v9525
      %v10616 = vunpack.c.l.b16 %v9526
      %v10617 = vunpack.c.h.b16 %v9526
      %v10618 = vunpack.c.l.b16 %v9527
      %v10619 = vunpack.c.h.b16 %v9527
      %v10620 = vunpack.c.l.b16 %v9528
      %v10621 = vunpack.c.h.b16 %v9528
      %v10622 = vunpack.c.l.b16 %v9529
      %v10623 = vunpack.c.h.b16 %v9529
      %v10624 = vunpack.c.l.b16 %v9530
      %v10625 = vunpack.c.h.b16 %v9530
      %v10626 = vunpack.c.l.b16 %v9531
      %v10627 = vunpack.c.h.b16 %v9531
      %v10628 = vunpack.c.l.b16 %v9532
      %v10629 = vunpack.c.h.b16 %v9532
      %v10630 = vunpack.c.l.b16 %v9533
      %v10631 = vunpack.c.h.b16 %v9533
      %v10632 = vunpack.c.l.b16 %v9534
      %v10633 = vunpack.c.h.b16 %v9534
      %v10634 = vunpack.c.l.b16 %v9535
      %v10635 = vunpack.c.h.b16 %v9535
      %v10636 = vunpack.c.l.b16 %v9536
      %v10637 = vunpack.c.h.b16 %v9536
      %v10638 = vunpack.c.l.b16 %v9537
      %v10639 = vunpack.c.h.b16 %v9537
      %v10640 = vunpack.c.l.b16 %v9538
      %v10641 = vunpack.c.h.b16 %v9538
      %v10642 = vunpack.c.l.b16 %v9539
      %v10643 = vunpack.c.h.b16 %v9539
      %v10644 = vunpack.c.l.b16 %v9540
      %v10645 = vunpack.c.h.b16 %v9540
      %v10646 = vunpack.c.l.b16 %v9541
      %v10647 = vunpack.c.h.b16 %v9541
      %v10648 = vunpack.c.l.b16 %v9542
      %v10649 = vunpack.c.h.b16 %v9542
      %v10650 = vunpack.c.l.b16 %v9543
      %v10651 = vunpack.c.h.b16 %v9543
      %v10652 = vunpack.c.l.b16 %v9544
      %v10653 = vunpack.c.h.b16 %v9544
      %v10654 = vunpack.c.l.b16 %v9545
      %v10655 = vunpack.c.h.b16 %v9545
      %v10656 = vunpack.c.l.b16 %v9546
      %v10657 = vunpack.c.h.b16 %v9546
      %v10658 = vunpack.c.l.b16 %v9547
      %v10659 = vunpack.c.h.b16 %v9547
      %v10660 = vunpack.c.l.b16 %v9548
      %v10661 = vunpack.c.h.b16 %v9548
      %v10662 = vunpack.c.l.b16 %v9549
      %v10663 = vunpack.c.h.b16 %v9549
      %v10664 = vunpack.c.l.b16 %v9550
      %v10665 = vunpack.c.h.b16 %v9550
      %v10666 = vunpack.c.l.b16 %v9551
      %v10667 = vunpack.c.h.b16 %v9551
      %v10668 = vunpack.c.l.b16 %v9552
      %v10669 = vunpack.c.h.b16 %v9552
      %v10670 = vunpack.c.l.b16 %v9553
      %v10671 = vunpack.c.h.b16 %v9553
      %v10672 = vunpack.c.l.b16 %v9554
      %v10673 = vunpack.c.h.b16 %v9554
      %v10674 = vunpack.c.l.b16 %v9555
      %v10675 = vunpack.c.h.b16 %v9555
      %v10676 = vunpack.c.l.b16 %v9556
      %v10677 = vunpack.c.h.b16 %v9556
      %v10678 = vunpack.c.l.b16 %v9557
      %v10679 = vunpack.c.h.b16 %v9557
      %v10680 = vunpack.c.l.b16 %v9558
      %v10681 = vunpack.c.h.b16 %v9558
      %v10682 = vunpack.c.l.b16 %v9559
      %v10683 = vunpack.c.h.b16 %v9559
      %v10684 = vunpack.c.l.b16 %v9560
      %v10685 = vunpack.c.h.b16 %v9560
      %v10686 = vunpack.c.l.b16 %v9561
      %v10687 = vunpack.c.h.b16 %v9561
      %v10688 = vunpack.c.l.b16 %v9562
      %v10689 = vunpack.c.h.b16 %v9562
      %v10690 = vunpack.c.l.b16 %v9563
      %v10691 = vunpack.c.h.b16 %v9563
      %v10692 = vunpack.c.l.b16 %v9564
      %v10693 = vunpack.c.h.b16 %v9564
      %v10694 = vunpack.c.l.b16 %v9565
      %v10695 = vunpack.c.h.b16 %v9565
      %v10696 = vunpack.c.l.b16 %v9566
      %v10697 = vunpack.c.h.b16 %v9566
      %v10698 = vunpack.c.l.b16 %v9567
      %v10699 = vunpack.c.h.b16 %v9567
      %v10700 = vunpack.c.l.b16 %v9568
      %v10701 = vunpack.c.h.b16 %v9568
      %v10702 = vunpack.c.l.b16 %v9569
      %v10703 = vunpack.c.h.b16 %v9569
      %v10704 = vunpack.c.l.b16 %v9570
      %v10705 = vunpack.c.h.b16 %v9570
      %v10706 = vunpack.c.l.b16 %v9571
      %v10707 = vunpack.c.h.b16 %v9571
      %v10708 = vunpack.c.l.b16 %v9572
      %v10709 = vunpack.c.h.b16 %v9572
      %v10710 = vunpack.c.l.b16 %v9573
      %v10711 = vunpack.c.h.b16 %v9573
      %v10712 = vunpack.c.l.b16 %v9574
      %v10713 = vunpack.c.h.b16 %v9574
      %v10714 = vunpack.c.l.b16 %v9575
      %v10715 = vunpack.c.h.b16 %v9575
      %v10716 = vunpack.c.l.b16 %v9576
      %v10717 = vunpack.c.h.b16 %v9576
      %v10718 = vunpack.c.l.b16 %v9577
      %v10719 = vunpack.c.h.b16 %v9577
      %v10720 = vunpack.c.l.b16 %v9578
      %v10721 = vunpack.c.h.b16 %v9578
      %v10722 = vunpack.c.l.b16 %v9579
      %v10723 = vunpack.c.h.b16 %v9579
      %v10724 = vunpack.c.l.b16 %v9580
      %v10725 = vunpack.c.h.b16 %v9580
      %v10726 = vunpack.c.l.b16 %v9581
      %v10727 = vunpack.c.h.b16 %v9581
      %v10728 = vunpack.c.l.b16 %v9582
      %v10729 = vunpack.c.h.b16 %v9582
      %v10730 = vunpack.c.l.b16 %v9583
      %v10731 = vunpack.c.h.b16 %v9583
      %v10732 = vunpack.c.l.b16 %v9584
      %v10733 = vunpack.c.h.b16 %v9584
      %v10734 = vunpack.c.l.b16 %v9585
      %v10735 = vunpack.c.h.b16 %v9585
      %v10736 = vunpack.c.l.b16 %v9586
      %v10737 = vunpack.c.h.b16 %v9586
      %v10738 = vunpack.c.l.b16 %v9587
      %v10739 = vunpack.c.h.b16 %v9587
      %v10740 = vunpack.c.l.b16 %v9588
      %v10741 = vunpack.c.h.b16 %v9588
      %v10742 = vunpack.c.l.b16 %v9589
      %v10743 = vunpack.c.h.b16 %v9589
      %v10744 = vunpack.c.l.b16 %v9590
      %v10745 = vunpack.c.h.b16 %v9590
      %v10746 = vunpack.c.l.b16 %v9591
      %v10747 = vunpack.c.h.b16 %v9591
      %v10748 = vunpack.c.l.b16 %v9592
      %v10749 = vunpack.c.h.b16 %v9592
      %v10750 = vunpack.c.l.b16 %v9593
      %v10751 = vunpack.c.h.b16 %v9593
      %v10752 = vunpack.c.l.b16 %v9594
      %v10753 = vunpack.c.h.b16 %v9594
      %v10754 = vunpack.c.l.b16 %v9595
      %v10755 = vunpack.c.h.b16 %v9595
      %v10756 = vunpack.c.l.b16 %v9596
      %v10757 = vunpack.c.h.b16 %v9596
      %v10758 = vunpack.c.l.b16 %v9597
      %v10759 = vunpack.c.h.b16 %v9597
      %v10760 = vunpack.c.l.b16 %v9598
      %v10761 = vunpack.c.h.b16 %v9598
      %v10762 = vunpack.c.l.b16 %v9599
      %v10763 = vunpack.c.h.b16 %v9599
      %v10764 = vunpack.c.l.b16 %v9600
      %v10765 = vunpack.c.h.b16 %v9600
      %v10766 = vunpack.c.l.b16 %v9601
      %v10767 = vunpack.c.h.b16 %v9601
      %v10768 = vunpack.c.l.b16 %v9602
      %v10769 = vunpack.c.h.b16 %v9602
      %v10770 = vunpack.c.l.b16 %v9603
      %v10771 = vunpack.c.h.b16 %v9603
      %v10772 = vunpack.c.l.b16 %v9604
      %v10773 = vunpack.c.h.b16 %v9604
      %v10774 = vunpack.c.l.b16 %v9605
      %v10775 = vunpack.c.h.b16 %v9605
      %v10776 = vunpack.c.l.b16 %v9606
      %v10777 = vunpack.c.h.b16 %v9606
      %v10778 = vunpack.c.l.b16 %v9607
      %v10779 = vunpack.c.h.b16 %v9607
      %v10780 = vunpack.c.l.b16 %v9608
      %v10781 = vunpack.c.h.b16 %v9608
      %v10782 = vunpack.c.l.b16 %v9609
      %v10783 = vunpack.c.h.b16 %v9609
      %v10784 = vunpack.c.l.b16 %v9610
      %v10785 = vunpack.c.h.b16 %v9610
      %v10786 = vunpack.c.l.b16 %v9611
      %v10787 = vunpack.c.h.b16 %v9611
      %v10788 = vunpack.c.l.b16 %v9612
      %v10789 = vunpack.c.h.b16 %v9612
      %v10790 = vunpack.c.l.b16 %v9613
      %v10791 = vunpack.c.h.b16 %v9613
      %v10792 = vunpack.c.l.b16 %v9614
      %v10793 = vunpack.c.h.b16 %v9614
      %v10794 = vunpack.c.l.b16 %v9615
      %v10795 = vunpack.c.h.b16 %v9615
      %v10796 = vunpack.c.l.b16 %v9616
      %v10797 = vunpack.c.h.b16 %v9616
      %v10798 = vunpack.c.l.b16 %v9617
      %v10799 = vunpack.c.h.b16 %v9617
      %v10800 = vunpack.c.l.b16 %v9618
      %v10801 = vunpack.c.h.b16 %v9618
      %v10802 = vunpack.c.l.b16 %v9619
      %v10803 = vunpack.c.h.b16 %v9619
      %v10804 = vunpack.c.l.b16 %v9620
      %v10805 = vunpack.c.h.b16 %v9620
      %v10806 = vunpack.c.l.b16 %v9621
      %v10807 = vunpack.c.h.b16 %v9621
      %v10808 = vunpack.c.l.b16 %v9622
      %v10809 = vunpack.c.h.b16 %v9622
      %v10810 = vunpack.c.l.b16 %v9623
      %v10811 = vunpack.c.h.b16 %v9623
      %v10812 = vunpack.c.l.b16 %v9624
      %v10813 = vunpack.c.h.b16 %v9624
      %v10814 = vunpack.c.l.b16 %v9625
      %v10815 = vunpack.c.h.b16 %v9625
      %v10816 = vunpack.c.l.b16 %v9626
      %v10817 = vunpack.c.h.b16 %v9626
      %v10818 = vunpack.c.l.b16 %v9627
      %v10819 = vunpack.c.h.b16 %v9627
      %v10820 = vunpack.c.l.b16 %v9628
      %v10821 = vunpack.c.h.b16 %v9628
      %v10822 = vunpack.c.l.b16 %v9629
      %v10823 = vunpack.c.h.b16 %v9629
      %v10824 = vunpack.c.l.b16 %v9630
      %v10825 = vunpack.c.h.b16 %v9630
      %v10826 = vunpack.c.l.b16 %v9631
      %v10827 = vunpack.c.h.b16 %v9631
      %v10828 = vunpack.c.l.b16 %v9632
      %v10829 = vunpack.c.h.b16 %v9632
      %v10830 = vunpack.c.l.b16 %v9633
      %v10831 = vunpack.c.h.b16 %v9633
      %v10832 = vunpack.c.l.b16 %v9634
      %v10833 = vunpack.c.h.b16 %v9634
      %v10834 = vunpack.c.l.b16 %v9635
      %v10835 = vunpack.c.h.b16 %v9635
      %v10836 = vunpack.c.l.b16 %v9636
      %v10837 = vunpack.c.h.b16 %v9636
      %v10838 = vunpack.c.l.b16 %v9637
      %v10839 = vunpack.c.h.b16 %v9637
      %v10840 = vunpack.c.l.b16 %v9638
      %v10841 = vunpack.c.h.b16 %v9638
      %v10842 = vunpack.c.l.b16 %v9639
      %v10843 = vunpack.c.h.b16 %v9639
      %v10844 = vunpack.c.l.b16 %v9640
      %v10845 = vunpack.c.h.b16 %v9640
      %v10846 = vunpack.c.l.b16 %v9641
      %v10847 = vunpack.c.h.b16 %v9641
      %v10848 = vunpack.c.l.b16 %v9642
      %v10849 = vunpack.c.h.b16 %v9642
      %v10850 = vunpack.c.l.b16 %v9643
      %v10851 = vunpack.c.h.b16 %v9643
      %v10852 = vunpack.c.l.b16 %v9644
      %v10853 = vunpack.c.h.b16 %v9644
      %v10854 = vunpack.c.l.b16 %v9645
      %v10855 = vunpack.c.h.b16 %v9645
      %v10856 = vunpack.c.l.b16 %v9646
      %v10857 = vunpack.c.h.b16 %v9646
      %v10858 = vunpack.c.l.b16 %v9647
      %v10859 = vunpack.c.h.b16 %v9647
      %v10860 = vpack.c.b16 %v10062, %v10060
      %v10861 = vpack.c.b16 %v10063, %v10061
      %v10862 = vpack.c.b16 %v10066, %v10064
      %v10863 = vpack.c.b16 %v10067, %v10065
      %v10864 = vpack.c.b16 %v10070, %v10068
      %v10865 = vpack.c.b16 %v10071, %v10069
      %v10866 = vpack.c.b16 %v10074, %v10072
      %v10867 = vpack.c.b16 %v10075, %v10073
      %v10868 = vpack.c.b16 %v10078, %v10076
      %v10869 = vpack.c.b16 %v10079, %v10077
      %v10870 = vpack.c.b16 %v10082, %v10080
      %v10871 = vpack.c.b16 %v10083, %v10081
      %v10872 = vpack.c.b16 %v10086, %v10084
      %v10873 = vpack.c.b16 %v10087, %v10085
      %v10874 = vpack.c.b16 %v10090, %v10088
      %v10875 = vpack.c.b16 %v10091, %v10089
      %v10876 = vpack.c.b16 %v10094, %v10092
      %v10877 = vpack.c.b16 %v10095, %v10093
      %v10878 = vpack.c.b16 %v10098, %v10096
      %v10879 = vpack.c.b16 %v10099, %v10097
      %v10880 = vpack.c.b16 %v10102, %v10100
      %v10881 = vpack.c.b16 %v10103, %v10101
      %v10882 = vpack.c.b16 %v10106, %v10104
      %v10883 = vpack.c.b16 %v10107, %v10105
      %v10884 = vpack.c.b16 %v10110, %v10108
      %v10885 = vpack.c.b16 %v10111, %v10109
      %v10886 = vpack.c.b16 %v10114, %v10112
      %v10887 = vpack.c.b16 %v10115, %v10113
      %v10888 = vpack.c.b16 %v10118, %v10116
      %v10889 = vpack.c.b16 %v10119, %v10117
      %v10890 = vpack.c.b16 %v10122, %v10120
      %v10891 = vpack.c.b16 %v10123, %v10121
      %v10892 = vpack.c.b16 %v10126, %v10124
      %v10893 = vpack.c.b16 %v10127, %v10125
      %v10894 = vpack.c.b16 %v10130, %v10128
      %v10895 = vpack.c.b16 %v10131, %v10129
      %v10896 = vpack.c.b16 %v10134, %v10132
      %v10897 = vpack.c.b16 %v10135, %v10133
      %v10898 = vpack.c.b16 %v10138, %v10136
      %v10899 = vpack.c.b16 %v10139, %v10137
      %v10900 = vpack.c.b16 %v10142, %v10140
      %v10901 = vpack.c.b16 %v10143, %v10141
      %v10902 = vpack.c.b16 %v10146, %v10144
      %v10903 = vpack.c.b16 %v10147, %v10145
      %v10904 = vpack.c.b16 %v10150, %v10148
      %v10905 = vpack.c.b16 %v10151, %v10149
      %v10906 = vpack.c.b16 %v10154, %v10152
      %v10907 = vpack.c.b16 %v10155, %v10153
      %v10908 = vpack.c.b16 %v10158, %v10156
      %v10909 = vpack.c.b16 %v10159, %v10157
      %v10910 = vpack.c.b16 %v10162, %v10160
      %v10911 = vpack.c.b16 %v10163, %v10161
      %v10912 = vpack.c.b16 %v10166, %v10164
      %v10913 = vpack.c.b16 %v10167, %v10165
      %v10914 = vpack.c.b16 %v10170, %v10168
      %v10915 = vpack.c.b16 %v10171, %v10169
      %v10916 = vpack.c.b16 %v10174, %v10172
      %v10917 = vpack.c.b16 %v10175, %v10173
      %v10918 = vpack.c.b16 %v10178, %v10176
      %v10919 = vpack.c.b16 %v10179, %v10177
      %v10920 = vpack.c.b16 %v10182, %v10180
      %v10921 = vpack.c.b16 %v10183, %v10181
      %v10922 = vpack.c.b16 %v10186, %v10184
      %v10923 = vpack.c.b16 %v10187, %v10185
      %v10924 = vpack.c.b16 %v10190, %v10188
      %v10925 = vpack.c.b16 %v10191, %v10189
      %v10926 = vpack.c.b16 %v10194, %v10192
      %v10927 = vpack.c.b16 %v10195, %v10193
      %v10928 = vpack.c.b16 %v10198, %v10196
      %v10929 = vpack.c.b16 %v10199, %v10197
      %v10930 = vpack.c.b16 %v10202, %v10200
      %v10931 = vpack.c.b16 %v10203, %v10201
      %v10932 = vpack.c.b16 %v10206, %v10204
      %v10933 = vpack.c.b16 %v10207, %v10205
      %v10934 = vpack.c.b16 %v10210, %v10208
      %v10935 = vpack.c.b16 %v10211, %v10209
      %v10936 = vpack.c.b16 %v10214, %v10212
      %v10937 = vpack.c.b16 %v10215, %v10213
      %v10938 = vpack.c.b16 %v10218, %v10216
      %v10939 = vpack.c.b16 %v10219, %v10217
      %v10940 = vpack.c.b16 %v10222, %v10220
      %v10941 = vpack.c.b16 %v10223, %v10221
      %v10942 = vpack.c.b16 %v10226, %v10224
      %v10943 = vpack.c.b16 %v10227, %v10225
      %v10944 = vpack.c.b16 %v10230, %v10228
      %v10945 = vpack.c.b16 %v10231, %v10229
      %v10946 = vpack.c.b16 %v10234, %v10232
      %v10947 = vpack.c.b16 %v10235, %v10233
      %v10948 = vpack.c.b16 %v10238, %v10236
      %v10949 = vpack.c.b16 %v10239, %v10237
      %v10950 = vpack.c.b16 %v10242, %v10240
      %v10951 = vpack.c.b16 %v10243, %v10241
      %v10952 = vpack.c.b16 %v10246, %v10244
      %v10953 = vpack.c.b16 %v10247, %v10245
      %v10954 = vpack.c.b16 %v10250, %v10248
      %v10955 = vpack.c.b16 %v10251, %v10249
      %v10956 = vpack.c.b16 %v10254, %v10252
      %v10957 = vpack.c.b16 %v10255, %v10253
      %v10958 = vpack.c.b16 %v10258, %v10256
      %v10959 = vpack.c.b16 %v10259, %v10257
      %v10960 = vpack.c.b16 %v10262, %v10260
      %v10961 = vpack.c.b16 %v10263, %v10261
      %v10962 = vpack.c.b16 %v10266, %v10264
      %v10963 = vpack.c.b16 %v10267, %v10265
      %v10964 = vpack.c.b16 %v10270, %v10268
      %v10965 = vpack.c.b16 %v10271, %v10269
      %v10966 = vpack.c.b16 %v10274, %v10272
      %v10967 = vpack.c.b16 %v10275, %v10273
      %v10968 = vpack.c.b16 %v10278, %v10276
      %v10969 = vpack.c.b16 %v10279, %v10277
      %v10970 = vpack.c.b16 %v10282, %v10280
      %v10971 = vpack.c.b16 %v10283, %v10281
      %v10972 = vpack.c.b16 %v10286, %v10284
      %v10973 = vpack.c.b16 %v10287, %v10285
      %v10974 = vpack.c.b16 %v10290, %v10288
      %v10975 = vpack.c.b16 %v10291, %v10289
      %v10976 = vpack.c.b16 %v10294, %v10292
      %v10977 = vpack.c.b16 %v10295, %v10293
      %v10978 = vpack.c.b16 %v10298, %v10296
      %v10979 = vpack.c.b16 %v10299, %v10297
      %v10980 = vpack.c.b16 %v10302, %v10300
      %v10981 = vpack.c.b16 %v10303, %v10301
      %v10982 = vpack.c.b16 %v10306, %v10304
      %v10983 = vpack.c.b16 %v10307, %v10305
      %v10984 = vpack.c.b16 %v10310, %v10308
      %v10985 = vpack.c.b16 %v10311, %v10309
      %v10986 = vpack.c.b16 %v10314, %v10312
      %v10987 = vpack.c.b16 %v10315, %v10313
      %v10988 = vpack.c.b16 %v10318, %v10316
      %v10989 = vpack.c.b16 %v10319, %v10317
      %v10990 = vpack.c.b16 %v10322, %v10320
      %v10991 = vpack.c.b16 %v10323, %v10321
      %v10992 = vpack.c.b16 %v10326, %v10324
      %v10993 = vpack.c.b16 %v10327, %v10325
      %v10994 = vpack.c.b16 %v10330, %v10328
      %v10995 = vpack.c.b16 %v10331, %v10329
      %v10996 = vpack.c.b16 %v10334, %v10332
      %v10997 = vpack.c.b16 %v10335, %v10333
      %v10998 = vpack.c.b16 %v10338, %v10336
      %v10999 = vpack.c.b16 %v10339, %v10337
      %v11000 = vpack.c.b16 %v10342, %v10340
      %v11001 = vpack.c.b16 %v10343, %v10341
      %v11002 = vpack.c.b16 %v10346, %v10344
      %v11003 = vpack.c.b16 %v10347, %v10345
      %v11004 = vpack.c.b16 %v10350, %v10348
      %v11005 = vpack.c.b16 %v10351, %v10349
      %v11006 = vpack.c.b16 %v10354, %v10352
      %v11007 = vpack.c.b16 %v10355, %v10353
      %v11008 = vpack.c.b16 %v10358, %v10356
      %v11009 = vpack.c.b16 %v10359, %v10357
      %v11010 = vpack.c.b16 %v10362, %v10360
      %v11011 = vpack.c.b16 %v10363, %v10361
      %v11012 = vpack.c.b16 %v10366, %v10364
      %v11013 = vpack.c.b16 %v10367, %v10365
      %v11014 = vpack.c.b16 %v10370, %v10368
      %v11015 = vpack.c.b16 %v10371, %v10369
      %v11016 = vpack.c.b16 %v10374, %v10372
      %v11017 = vpack.c.b16 %v10375, %v10373
      %v11018 = vpack.c.b16 %v10378, %v10376
      %v11019 = vpack.c.b16 %v10379, %v10377
      %v11020 = vpack.c.b16 %v10382, %v10380
      %v11021 = vpack.c.b16 %v10383, %v10381
      %v11022 = vpack.c.b16 %v10386, %v10384
      %v11023 = vpack.c.b16 %v10387, %v10385
      %v11024 = vpack.c.b16 %v10390, %v10388
      %v11025 = vpack.c.b16 %v10391, %v10389
      %v11026 = vpack.c.b16 %v10394, %v10392
      %v11027 = vpack.c.b16 %v10395, %v10393
      %v11028 = vpack.c.b16 %v10398, %v10396
      %v11029 = vpack.c.b16 %v10399, %v10397
      %v11030 = vpack.c.b16 %v10402, %v10400
      %v11031 = vpack.c.b16 %v10403, %v10401
      %v11032 = vpack.c.b16 %v10406, %v10404
      %v11033 = vpack.c.b16 %v10407, %v10405
      %v11034 = vpack.c.b16 %v10410, %v10408
      %v11035 = vpack.c.b16 %v10411, %v10409
      %v11036 = vpack.c.b16 %v10414, %v10412
      %v11037 = vpack.c.b16 %v10415, %v10413
      %v11038 = vpack.c.b16 %v10418, %v10416
      %v11039 = vpack.c.b16 %v10419, %v10417
      %v11040 = vpack.c.b16 %v10422, %v10420
      %v11041 = vpack.c.b16 %v10423, %v10421
      %v11042 = vpack.c.b16 %v10426, %v10424
      %v11043 = vpack.c.b16 %v10427, %v10425
      %v11044 = vpack.c.b16 %v10430, %v10428
      %v11045 = vpack.c.b16 %v10431, %v10429
      %v11046 = vpack.c.b16 %v10434, %v10432
      %v11047 = vpack.c.b16 %v10435, %v10433
      %v11048 = vpack.c.b16 %v10438, %v10436
      %v11049 = vpack.c.b16 %v10439, %v10437
      %v11050 = vpack.c.b16 %v10442, %v10440
      %v11051 = vpack.c.b16 %v10443, %v10441
      %v11052 = vpack.c.b16 %v10446, %v10444
      %v11053 = vpack.c.b16 %v10447, %v10445
      %v11054 = vpack.c.b16 %v10450, %v10448
      %v11055 = vpack.c.b16 %v10451, %v10449
      %v11056 = vpack.c.b16 %v10454, %v10452
      %v11057 = vpack.c.b16 %v10455, %v10453
      %v11058 = vpack.c.b16 %v10458, %v10456
      %v11059 = vpack.c.b16 %v10459, %v10457
      %v11060 = vpack.c.b16 %v10462, %v10460
      %v11061 = vpack.c.b16 %v10463, %v10461
      %v11062 = vpack.c.b16 %v10466, %v10464
      %v11063 = vpack.c.b16 %v10467, %v10465
      %v11064 = vpack.c.b16 %v10470, %v10468
      %v11065 = vpack.c.b16 %v10471, %v10469
      %v11066 = vpack.c.b16 %v10474, %v10472
      %v11067 = vpack.c.b16 %v10475, %v10473
      %v11068 = vpack.c.b16 %v10478, %v10476
      %v11069 = vpack.c.b16 %v10479, %v10477
      %v11070 = vpack.c.b16 %v10482, %v10480
      %v11071 = vpack.c.b16 %v10483, %v10481
      %v11072 = vpack.c.b16 %v10486, %v10484
      %v11073 = vpack.c.b16 %v10487, %v10485
      %v11074 = vpack.c.b16 %v10490, %v10488
      %v11075 = vpack.c.b16 %v10491, %v10489
      %v11076 = vpack.c.b16 %v10494, %v10492
      %v11077 = vpack.c.b16 %v10495, %v10493
      %v11078 = vpack.c.b16 %v10498, %v10496
      %v11079 = vpack.c.b16 %v10499, %v10497
      %v11080 = vpack.c.b16 %v10502, %v10500
      %v11081 = vpack.c.b16 %v10503, %v10501
      %v11082 = vpack.c.b16 %v10506, %v10504
      %v11083 = vpack.c.b16 %v10507, %v10505
      %v11084 = vpack.c.b16 %v10510, %v10508
      %v11085 = vpack.c.b16 %v10511, %v10509
      %v11086 = vpack.c.b16 %v10514, %v10512
      %v11087 = vpack.c.b16 %v10515, %v10513
      %v11088 = vpack.c.b16 %v10518, %v10516
      %v11089 = vpack.c.b16 %v10519, %v10517
      %v11090 = vpack.c.b16 %v10522, %v10520
      %v11091 = vpack.c.b16 %v10523, %v10521
      %v11092 = vpack.c.b16 %v10526, %v10524
      %v11093 = vpack.c.b16 %v10527, %v10525
      %v11094 = vpack.c.b16 %v10530, %v10528
      %v11095 = vpack.c.b16 %v10531, %v10529
      %v11096 = vpack.c.b16 %v10534, %v10532
      %v11097 = vpack.c.b16 %v10535, %v10533
      %v11098 = vpack.c.b16 %v10538, %v10536
      %v11099 = vpack.c.b16 %v10539, %v10537
      %v11100 = vpack.c.b16 %v10542, %v10540
      %v11101 = vpack.c.b16 %v10543, %v10541
      %v11102 = vpack.c.b16 %v10546, %v10544
      %v11103 = vpack.c.b16 %v10547, %v10545
      %v11104 = vpack.c.b16 %v10550, %v10548
      %v11105 = vpack.c.b16 %v10551, %v10549
      %v11106 = vpack.c.b16 %v10554, %v10552
      %v11107 = vpack.c.b16 %v10555, %v10553
      %v11108 = vpack.c.b16 %v10558, %v10556
      %v11109 = vpack.c.b16 %v10559, %v10557
      %v11110 = vpack.c.b16 %v10562, %v10560
      %v11111 = vpack.c.b16 %v10563, %v10561
      %v11112 = vpack.c.b16 %v10566, %v10564
      %v11113 = vpack.c.b16 %v10567, %v10565
      %v11114 = vpack.c.b16 %v10570, %v10568
      %v11115 = vpack.c.b16 %v10571, %v10569
      %v11116 = vpack.c.b16 %v10574, %v10572
      %v11117 = vpack.c.b16 %v10575, %v10573
      %v11118 = vpack.c.b16 %v10578, %v10576
      %v11119 = vpack.c.b16 %v10579, %v10577
      %v11120 = vpack.c.b16 %v10582, %v10580
      %v11121 = vpack.c.b16 %v10583, %v10581
      %v11122 = vpack.c.b16 %v10586, %v10584
      %v11123 = vpack.c.b16 %v10587, %v10585
      %v11124 = vpack.c.b16 %v10590, %v10588
      %v11125 = vpack.c.b16 %v10591, %v10589
      %v11126 = vpack.c.b16 %v10594, %v10592
      %v11127 = vpack.c.b16 %v10595, %v10593
      %v11128 = vpack.c.b16 %v10598, %v10596
      %v11129 = vpack.c.b16 %v10599, %v10597
      %v11130 = vpack.c.b16 %v10602, %v10600
      %v11131 = vpack.c.b16 %v10603, %v10601
      %v11132 = vpack.c.b16 %v10606, %v10604
      %v11133 = vpack.c.b16 %v10607, %v10605
      %v11134 = vpack.c.b16 %v10610, %v10608
      %v11135 = vpack.c.b16 %v10611, %v10609
      %v11136 = vpack.c.b16 %v10614, %v10612
      %v11137 = vpack.c.b16 %v10615, %v10613
      %v11138 = vpack.c.b16 %v10618, %v10616
      %v11139 = vpack.c.b16 %v10619, %v10617
      %v11140 = vpack.c.b16 %v10622, %v10620
      %v11141 = vpack.c.b16 %v10623, %v10621
      %v11142 = vpack.c.b16 %v10626, %v10624
      %v11143 = vpack.c.b16 %v10627, %v10625
      %v11144 = vpack.c.b16 %v10630, %v10628
      %v11145 = vpack.c.b16 %v10631, %v10629
      %v11146 = vpack.c.b16 %v10634, %v10632
      %v11147 = vpack.c.b16 %v10635, %v10633
      %v11148 = vpack.c.b16 %v10638, %v10636
      %v11149 = vpack.c.b16 %v10639, %v10637
      %v11150 = vpack.c.b16 %v10642, %v10640
      %v11151 = vpack.c.b16 %v10643, %v10641
      %v11152 = vpack.c.b16 %v10646, %v10644
      %v11153 = vpack.c.b16 %v10647, %v10645
      %v11154 = vpack.c.b16 %v10650, %v10648
      %v11155 = vpack.c.b16 %v10651, %v10649
      %v11156 = vpack.c.b16 %v10654, %v10652
      %v11157 = vpack.c.b16 %v10655, %v10653
      %v11158 = vpack.c.b16 %v10658, %v10656
      %v11159 = vpack.c.b16 %v10659, %v10657
      %v11160 = vpack.c.b16 %v10662, %v10660
      %v11161 = vpack.c.b16 %v10663, %v10661
      %v11162 = vpack.c.b16 %v10666, %v10664
      %v11163 = vpack.c.b16 %v10667, %v10665
      %v11164 = vpack.c.b16 %v10670, %v10668
      %v11165 = vpack.c.b16 %v10671, %v10669
      %v11166 = vpack.c.b16 %v10674, %v10672
      %v11167 = vpack.c.b16 %v10675, %v10673
      %v11168 = vpack.c.b16 %v10678, %v10676
      %v11169 = vpack.c.b16 %v10679, %v10677
      %v11170 = vpack.c.b16 %v10682, %v10680
      %v11171 = vpack.c.b16 %v10683, %v10681
      %v11172 = vpack.c.b16 %v10686, %v10684
      %v11173 = vpack.c.b16 %v10687, %v10685
      %v11174 = vpack.c.b16 %v10690, %v10688
      %v11175 = vpack.c.b16 %v10691, %v10689
      %v11176 = vpack.c.b16 %v10694, %v10692
      %v11177 = vpack.c.b16 %v10695, %v10693
      %v11178 = vpack.c.b16 %v10698, %v10696
      %v11179 = vpack.c.b16 %v10699, %v10697
      %v11180 = vpack.c.b16 %v10702, %v10700
      %v11181 = vpack.c.b16 %v10703, %v10701
      %v11182 = vpack.c.b16 %v10706, %v10704
      %v11183 = vpack.c.b16 %v10707, %v10705
      %v11184 = vpack.c.b16 %v10710, %v10708
      %v11185 = vpack.c.b16 %v10711, %v10709
      %v11186 = vpack.c.b16 %v10714, %v10712
      %v11187 = vpack.c.b16 %v10715, %v10713
      %v11188 = vpack.c.b16 %v10718, %v10716
      %v11189 = vpack.c.b16 %v10719, %v10717
      %v11190 = vpack.c.b16 %v10722, %v10720
      %v11191 = vpack.c.b16 %v10723, %v10721
      %v11192 = vpack.c.b16 %v10726, %v10724
      %v11193 = vpack.c.b16 %v10727, %v10725
      %v11194 = vpack.c.b16 %v10730, %v10728
      %v11195 = vpack.c.b16 %v10731, %v10729
      %v11196 = vpack.c.b16 %v10734, %v10732
      %v11197 = vpack.c.b16 %v10735, %v10733
      %v11198 = vpack.c.b16 %v10738, %v10736
      %v11199 = vpack.c.b16 %v10739, %v10737
      %v11200 = vpack.c.b16 %v10742, %v10740
      %v11201 = vpack.c.b16 %v10743, %v10741
      %v11202 = vpack.c.b16 %v10746, %v10744
      %v11203 = vpack.c.b16 %v10747, %v10745
      %v11204 = vpack.c.b16 %v10750, %v10748
      %v11205 = vpack.c.b16 %v10751, %v10749
      %v11206 = vpack.c.b16 %v10754, %v10752
      %v11207 = vpack.c.b16 %v10755, %v10753
      %v11208 = vpack.c.b16 %v10758, %v10756
      %v11209 = vpack.c.b16 %v10759, %v10757
      %v11210 = vpack.c.b16 %v10762, %v10760
      %v11211 = vpack.c.b16 %v10763, %v10761
      %v11212 = vpack.c.b16 %v10766, %v10764
      %v11213 = vpack.c.b16 %v10767, %v10765
      %v11214 = vpack.c.b16 %v10770, %v10768
      %v11215 = vpack.c.b16 %v10771, %v10769
      %v11216 = vpack.c.b16 %v10774, %v10772
      %v11217 = vpack.c.b16 %v10775, %v10773
      %v11218 = vpack.c.b16 %v10778, %v10776
      %v11219 = vpack.c.b16 %v10779, %v10777
      %v11220 = vpack.c.b16 %v10782, %v10780
      %v11221 = vpack.c.b16 %v10783, %v10781
      %v11222 = vpack.c.b16 %v10786, %v10784
      %v11223 = vpack.c.b16 %v10787, %v10785
      %v11224 = vpack.c.b16 %v10790, %v10788
      %v11225 = vpack.c.b16 %v10791, %v10789
      %v11226 = vpack.c.b16 %v10794, %v10792
      %v11227 = vpack.c.b16 %v10795, %v10793
      %v11228 = vpack.c.b16 %v10798, %v10796
      %v11229 = vpack.c.b16 %v10799, %v10797
      %v11230 = vpack.c.b16 %v10802, %v10800
      %v11231 = vpack.c.b16 %v10803, %v10801
      %v11232 = vpack.c.b16 %v10806, %v10804
      %v11233 = vpack.c.b16 %v10807, %v10805
      %v11234 = vpack.c.b16 %v10810, %v10808
      %v11235 = vpack.c.b16 %v10811, %v10809
      %v11236 = vpack.c.b16 %v10814, %v10812
      %v11237 = vpack.c.b16 %v10815, %v10813
      %v11238 = vpack.c.b16 %v10818, %v10816
      %v11239 = vpack.c.b16 %v10819, %v10817
      %v11240 = vpack.c.b16 %v10822, %v10820
      %v11241 = vpack.c.b16 %v10823, %v10821
      %v11242 = vpack.c.b16 %v10826, %v10824
      %v11243 = vpack.c.b16 %v10827, %v10825
      %v11244 = vpack.c.b16 %v10830, %v10828
      %v11245 = vpack.c.b16 %v10831, %v10829
      %v11246 = vpack.c.b16 %v10834, %v10832
      %v11247 = vpack.c.b16 %v10835, %v10833
      %v11248 = vpack.c.b16 %v10838, %v10836
      %v11249 = vpack.c.b16 %v10839, %v10837
      %v11250 = vpack.c.b16 %v10842, %v10840
      %v11251 = vpack.c.b16 %v10843, %v10841
      %v11252 = vpack.c.b16 %v10846, %v10844
      %v11253 = vpack.c.b16 %v10847, %v10845
      %v11254 = vpack.c.b16 %v10850, %v10848
      %v11255 = vpack.c.b16 %v10851, %v10849
      %v11256 = vpack.c.b16 %v10854, %v10852
      %v11257 = vpack.c.b16 %v10855, %v10853
      %v11258 = vpack.c.b16 %v10858, %v10856
      %v11259 = vpack.c.b16 %v10859, %v10857
      %11660 = vmatprep.subr.bf16.mxu0 %v10861
      %11661 = vmatpush1.bf16.msra.mxu0 %v10860
      %11662 = vmatprep.subr.bf16.mxu0 %v10863
      %11663 = vmatpush1.bf16.msra.mxu0 %v10862
      %11664 = vmatprep.subr.bf16.mxu0 %v10865
      %11665 = vmatpush1.bf16.msra.mxu0 %v10864
      %11666 = vmatprep.subr.bf16.mxu0 %v10867
      %11667 = vmatpush1.bf16.msra.mxu0 %v10866
      %11668 = vmatprep.subr.bf16.mxu0 %v10869
      %11669 = vmatpush1.bf16.msra.mxu0 %v10868
      %11670 = vmatprep.subr.bf16.mxu0 %v10871
      %11671 = vmatpush1.bf16.msra.mxu0 %v10870
      %11672 = vmatprep.subr.bf16.mxu0 %v10873
      %11673 = vmatpush1.bf16.msra.mxu0 %v10872
      %11674 = vmatprep.subr.bf16.mxu0 %v10875
      %11675 = vmatpush1.bf16.msra.mxu0 %v10874
      %11676 = vmatprep.subr.bf16.mxu0 %v10877
      %11677 = vmatpush1.bf16.msra.mxu0 %v10876
      %11678 = vmatprep.subr.bf16.mxu0 %v10879
      %11679 = vmatpush1.bf16.msra.mxu0 %v10878
      %11680 = vmatprep.subr.bf16.mxu0 %v10881
      %11681 = vmatpush1.bf16.msra.mxu0 %v10880
      %11682 = vmatprep.subr.bf16.mxu0 %v10883
      %11683 = vmatpush1.bf16.msra.mxu0 %v10882
      %11684 = vmatprep.subr.bf16.mxu0 %v10885
      %11685 = vmatpush1.bf16.msra.mxu0 %v10884
      %11686 = vmatprep.subr.bf16.mxu0 %v10887
      %11687 = vmatpush1.bf16.msra.mxu0 %v10886
      %11688 = vmatprep.subr.bf16.mxu0 %v10889
      %11689 = vmatpush1.bf16.msra.mxu0 %v10888
      %11690 = vmatprep.subr.bf16.mxu0 %v10891
      %11691 = vmatpush1.bf16.msra.mxu0 %v10890
      %11692 = vmatprep.mubr.bf16.mxu0 %v9224
      %11693 = vmatmul.mubr.bf16.gmra.mrb[0].mxu0 %v9223
      %v11694 = vpop.f32.mrb[0].mxu0
      %v11695 = vadd.f32 %v9653, %v11694
      %v11696 = vpop.f32.mrb[0].mxu0
      %v11697 = vadd.f32 %v9657, %v11696
      %v11698 = vpop.f32.mrb[0].mxu0
      %v11699 = vadd.f32 %v9653, %v11698
      %v11700 = vpop.f32.mrb[0].mxu0
      %v11701 = vadd.f32 %v9657, %v11700
      %11702 = vdwg.mxu0
      %11703 = vmatprep.subr.bf16.mxu0 %v10893
      %11704 = vmatpush1.bf16.msra.mxu0 %v10892
      %11705 = vmatprep.subr.bf16.mxu0 %v10895
      %11706 = vmatpush1.bf16.msra.mxu0 %v10894
      %11707 = vmatprep.subr.bf16.mxu0 %v10897
      %11708 = vmatpush1.bf16.msra.mxu0 %v10896
      %11709 = vmatprep.subr.bf16.mxu0 %v10899
      %11710 = vmatpush1.bf16.msra.mxu0 %v10898
      %11711 = vmatprep.subr.bf16.mxu0 %v10901
      %11712 = vmatpush1.bf16.msra.mxu0 %v10900
      %11713 = vmatprep.subr.bf16.mxu0 %v10903
      %11714 = vmatpush1.bf16.msra.mxu0 %v10902
      %11715 = vmatprep.subr.bf16.mxu0 %v10905
      %11716 = vmatpush1.bf16.msra.mxu0 %v10904
      %11717 = vmatprep.subr.bf16.mxu0 %v10907
      %11718 = vmatpush1.bf16.msra.mxu0 %v10906
      %11719 = vmatprep.subr.bf16.mxu0 %v10909
      %11720 = vmatpush1.bf16.msra.mxu0 %v10908
      %11721 = vmatprep.subr.bf16.mxu0 %v10911
      %11722 = vmatpush1.bf16.msra.mxu0 %v10910
      %11723 = vmatprep.subr.bf16.mxu0 %v10913
      %11724 = vmatpush1.bf16.msra.mxu0 %v10912
      %11725 = vmatprep.subr.bf16.mxu0 %v10915
      %11726 = vmatpush1.bf16.msra.mxu0 %v10914
      %11727 = vmatprep.subr.bf16.mxu0 %v10917
      %11728 = vmatpush1.bf16.msra.mxu0 %v10916
      %11729 = vmatprep.subr.bf16.mxu0 %v10919
      %11730 = vmatpush1.bf16.msra.mxu0 %v10918
      %11731 = vmatprep.subr.bf16.mxu0 %v10921
      %11732 = vmatpush1.bf16.msra.mxu0 %v10920
      %11733 = vmatprep.subr.bf16.mxu0 %v10923
      %11734 = vmatpush1.bf16.msra.mxu0 %v10922
      %11735 = vmatprep.mubr.bf16.mxu0 %v9226
      %11736 = vmatmul.mubr.bf16.gmra.mrb[0].mxu0 %v9225
      %v11737 = vpop.f32.mrb[0].mxu0
      %v11738 = vadd.f32 %v11695, %v11737
      %v11739 = vpop.f32.mrb[0].mxu0
      %v11740 = vadd.f32 %v11697, %v11739
      %v11741 = vpop.f32.mrb[0].mxu0
      %v11742 = vadd.f32 %v11699, %v11741
      %v11743 = vpop.f32.mrb[0].mxu0
      %v11744 = vadd.f32 %v11701, %v11743
      %11745 = vdwg.mxu0
      %11746 = vmatprep.subr.bf16.mxu0 %v10925
      %11747 = vmatpush1.bf16.msra.mxu0 %v10924
      %11748 = vmatprep.subr.bf16.mxu0 %v10927
      %11749 = vmatpush1.bf16.msra.mxu0 %v10926
      %11750 = vmatprep.subr.bf16.mxu0 %v10929
      %11751 = vmatpush1.bf16.msra.mxu0 %v10928
      %11752 = vmatprep.subr.bf16.mxu0 %v10931
      %11753 = vmatpush1.bf16.msra.mxu0 %v10930
      %11754 = vmatprep.subr.bf16.mxu0 %v10933
      %11755 = vmatpush1.bf16.msra.mxu0 %v10932
      %11756 = vmatprep.subr.bf16.mxu0 %v10935
      %11757 = vmatpush1.bf16.msra.mxu0 %v10934
      %11758 = vmatprep.subr.bf16.mxu0 %v10937
      %11759 = vmatpush1.bf16.msra.mxu0 %v10936
      %11760 = vmatprep.subr.bf16.mxu0 %v10939
      %11761 = vmatpush1.bf16.msra.mxu0 %v10938
      %11762 = vmatprep.subr.bf16.mxu0 %v10941
      %11763 = vmatpush1.bf16.msra.mxu0 %v10940
      %11764 = vmatprep.subr.bf16.mxu0 %v10943
      %11765 = vmatpush1.bf16.msra.mxu0 %v10942
      %11766 = vmatprep.subr.bf16.mxu0 %v10945
      %11767 = vmatpush1.bf16.msra.mxu0 %v10944
      %11768 = vmatprep.subr.bf16.mxu0 %v10947
      %11769 = vmatpush1.bf16.msra.mxu0 %v10946
      %11770 = vmatprep.subr.bf16.mxu0 %v10949
      %11771 = vmatpush1.bf16.msra.mxu0 %v10948
      %11772 = vmatprep.subr.bf16.mxu0 %v10951
      %11773 = vmatpush1.bf16.msra.mxu0 %v10950
      %11774 = vmatprep.subr.bf16.mxu0 %v10953
      %11775 = vmatpush1.bf16.msra.mxu0 %v10952
      %11776 = vmatprep.subr.bf16.mxu0 %v10955
      %11777 = vmatpush1.bf16.msra.mxu0 %v10954
      %11778 = vmatprep.mubr.bf16.mxu0 %v9228
      %11779 = vmatmul.mubr.bf16.gmra.mrb[0].mxu0 %v9227
      %v11780 = vpop.f32.mrb[0].mxu0
      %v11781 = vadd.f32 %v11738, %v11780
      %v11782 = vpop.f32.mrb[0].mxu0
      %v11783 = vadd.f32 %v11740, %v11782
      %v11784 = vpop.f32.mrb[0].mxu0
      %v11785 = vadd.f32 %v11742, %v11784
      %v11786 = vpop.f32.mrb[0].mxu0
      %v11787 = vadd.f32 %v11744, %v11786
      %11788 = vdwg.mxu0
      %11789 = vmatprep.subr.bf16.mxu0 %v10957
      %11790 = vmatpush1.bf16.msra.mxu0 %v10956
      %11791 = vmatprep.subr.bf16.mxu0 %v10959
      %11792 = vmatpush1.bf16.msra.mxu0 %v10958
      %11793 = vmatprep.subr.bf16.mxu0 %v10961
      %11794 = vmatpush1.bf16.msra.mxu0 %v10960
      %11795 = vmatprep.subr.bf16.mxu0 %v10963
      %11796 = vmatpush1.bf16.msra.mxu0 %v10962
      %11797 = vmatprep.subr.bf16.mxu0 %v10965
      %11798 = vmatpush1.bf16.msra.mxu0 %v10964
      %11799 = vmatprep.subr.bf16.mxu0 %v10967
      %11800 = vmatpush1.bf16.msra.mxu0 %v10966
      %11801 = vmatprep.subr.bf16.mxu0 %v10969
      %11802 = vmatpush1.bf16.msra.mxu0 %v10968
      %11803 = vmatprep.subr.bf16.mxu0 %v10971
      %11804 = vmatpush1.bf16.msra.mxu0 %v10970
      %11805 = vmatprep.subr.bf16.mxu0 %v10973
      %11806 = vmatpush1.bf16.msra.mxu0 %v10972
      %11807 = vmatprep.subr.bf16.mxu0 %v10975
      %11808 = vmatpush1.bf16.msra.mxu0 %v10974
      %11809 = vmatprep.subr.bf16.mxu0 %v10977
      %11810 = vmatpush1.bf16.msra.mxu0 %v10976
      %11811 = vmatprep.subr.bf16.mxu0 %v10979
      %11812 = vmatpush1.bf16.msra.mxu0 %v10978
      %11813 = vmatprep.subr.bf16.mxu0 %v10981
      %11814 = vmatpush1.bf16.msra.mxu0 %v10980
      %11815 = vmatprep.subr.bf16.mxu0 %v10983
      %11816 = vmatpush1.bf16.msra.mxu0 %v10982
      %11817 = vmatprep.subr.bf16.mxu0 %v10985
      %11818 = vmatpush1.bf16.msra.mxu0 %v10984
      %11819 = vmatprep.subr.bf16.mxu0 %v10987
      %11820 = vmatpush1.bf16.msra.mxu0 %v10986
      %11821 = vmatprep.mubr.bf16.mxu0 %v9230
      %11822 = vmatmul.mubr.bf16.gmra.mrb[0].mxu0 %v9229
      %v11823 = vpop.f32.mrb[0].mxu0
      %v11824 = vadd.f32 %v11781, %v11823
      %v11825 = vpop.f32.mrb[0].mxu0
      %v11826 = vadd.f32 %v11783, %v11825
      %v11827 = vpop.f32.mrb[0].mxu0
      %v11828 = vadd.f32 %v11785, %v11827
      %v11829 = vpop.f32.mrb[0].mxu0
      %v11830 = vadd.f32 %v11787, %v11829
      %11831 = vdwg.mxu0
      %11832 = vmatprep.subr.bf16.mxu0 %v10989
      %11833 = vmatpush1.bf16.msra.mxu0 %v10988
      %11834 = vmatprep.subr.bf16.mxu0 %v10991
      %11835 = vmatpush1.bf16.msra.mxu0 %v10990
      %11836 = vmatprep.subr.bf16.mxu0 %v10993
      %11837 = vmatpush1.bf16.msra.mxu0 %v10992
      %11838 = vmatprep.subr.bf16.mxu0 %v10995
      %11839 = vmatpush1.bf16.msra.mxu0 %v10994
      %11840 = vmatprep.subr.bf16.mxu0 %v10997
      %11841 = vmatpush1.bf16.msra.mxu0 %v10996
      %11842 = vmatprep.subr.bf16.mxu0 %v10999
      %11843 = vmatpush1.bf16.msra.mxu0 %v10998
      %11844 = vmatprep.subr.bf16.mxu0 %v11001
      %11845 = vmatpush1.bf16.msra.mxu0 %v11000
      %11846 = vmatprep.subr.bf16.mxu0 %v11003
      %11847 = vmatpush1.bf16.msra.mxu0 %v11002
      %11848 = vmatprep.subr.bf16.mxu0 %v11005
      %11849 = vmatpush1.bf16.msra.mxu0 %v11004
      %11850 = vmatprep.subr.bf16.mxu0 %v11007
      %11851 = vmatpush1.bf16.msra.mxu0 %v11006
      %11852 = vmatprep.subr.bf16.mxu0 %v11009
      %11853 = vmatpush1.bf16.msra.mxu0 %v11008
      %11854 = vmatprep.subr.bf16.mxu0 %v11011
      %11855 = vmatpush1.bf16.msra.mxu0 %v11010
      %11856 = vmatprep.subr.bf16.mxu0 %v11013
      %11857 = vmatpush1.bf16.msra.mxu0 %v11012
      %11858 = vmatprep.subr.bf16.mxu0 %v11015
      %11859 = vmatpush1.bf16.msra.mxu0 %v11014
      %11860 = vmatprep.subr.bf16.mxu0 %v11017
      %11861 = vmatpush1.bf16.msra.mxu0 %v11016
      %11862 = vmatprep.subr.bf16.mxu0 %v11019
      %11863 = vmatpush1.bf16.msra.mxu0 %v11018
      %11864 = vmatprep.mubr.bf16.mxu0 %v9232
      %11865 = vmatmul.mubr.bf16.gmra.mrb[0].mxu0 %v9231
      %v11866 = vpop.f32.mrb[0].mxu0
      %v11867 = vadd.f32 %v11824, %v11866
      %v11868 = vpop.f32.mrb[0].mxu0
      %v11869 = vadd.f32 %v11826, %v11868
      %v11870 = vpop.f32.mrb[0].mxu0
      %v11871 = vadd.f32 %v11828, %v11870
      %v11872 = vpop.f32.mrb[0].mxu0
      %v11873 = vadd.f32 %v11830, %v11872
      %11874 = vdwg.mxu0
      %11875 = vmatprep.subr.bf16.mxu0 %v11021
      %11876 = vmatpush1.bf16.msra.mxu0 %v11020
      %11877 = vmatprep.subr.bf16.mxu0 %v11023
      %11878 = vmatpush1.bf16.msra.mxu0 %v11022
      %11879 = vmatprep.subr.bf16.mxu0 %v11025
      %11880 = vmatpush1.bf16.msra.mxu0 %v11024
      %11881 = vmatprep.subr.bf16.mxu0 %v11027
      %11882 = vmatpush1.bf16.msra.mxu0 %v11026
      %11883 = vmatprep.subr.bf16.mxu0 %v11029
      %11884 = vmatpush1.bf16.msra.mxu0 %v11028
      %11885 = vmatprep.subr.bf16.mxu0 %v11031
      %11886 = vmatpush1.bf16.msra.mxu0 %v11030
      %11887 = vmatprep.subr.bf16.mxu0 %v11033
      %11888 = vmatpush1.bf16.msra.mxu0 %v11032
      %11889 = vmatprep.subr.bf16.mxu0 %v11035
      %11890 = vmatpush1.bf16.msra.mxu0 %v11034
      %11891 = vmatprep.subr.bf16.mxu0 %v11037
      %11892 = vmatpush1.bf16.msra.mxu0 %v11036
      %11893 = vmatprep.subr.bf16.mxu0 %v11039
      %11894 = vmatpush1.bf16.msra.mxu0 %v11038
      %11895 = vmatprep.subr.bf16.mxu0 %v11041
      %11896 = vmatpush1.bf16.msra.mxu0 %v11040
      %11897 = vmatprep.subr.bf16.mxu0 %v11043
      %11898 = vmatpush1.bf16.msra.mxu0 %v11042
      %11899 = vmatprep.subr.bf16.mxu0 %v11045
      %11900 = vmatpush1.bf16.msra.mxu0 %v11044
      %11901 = vmatprep.subr.bf16.mxu0 %v11047
      %11902 = vmatpush1.bf16.msra.mxu0 %v11046
      %11903 = vmatprep.subr.bf16.mxu0 %v11049
      %11904 = vmatpush1.bf16.msra.mxu0 %v11048
      %11905 = vmatprep.subr.bf16.mxu0 %v11051
      %11906 = vmatpush1.bf16.msra.mxu0 %v11050
      %11907 = vmatprep.mubr.bf16.mxu0 %v9234
      %11908 = vmatmul.mubr.bf16.gmra.mrb[0].mxu0 %v9233
      %v11909 = vpop.f32.mrb[0].mxu0
      %v11910 = vadd.f32 %v11867, %v11909
      %v11911 = vpop.f32.mrb[0].mxu0
      %v11912 = vadd.f32 %v11869, %v11911
      %v11913 = vpop.f32.mrb[0].mxu0
      %v11914 = vadd.f32 %v11871, %v11913
      %v11915 = vpop.f32.mrb[0].mxu0
      %v11916 = vadd.f32 %v11873, %v11915
      %11917 = vdwg.mxu0
      %11918 = vmatprep.subr.bf16.mxu0 %v11053
      %11919 = vmatpush1.bf16.msra.mxu0 %v11052
      %11920 = vmatprep.subr.bf16.mxu0 %v11055
      %11921 = vmatpush1.bf16.msra.mxu0 %v11054
      %11922 = vmatprep.subr.bf16.mxu0 %v11057
      %11923 = vmatpush1.bf16.msra.mxu0 %v11056
      %11924 = vmatprep.subr.bf16.mxu0 %v11059
      %11925 = vmatpush1.bf16.msra.mxu0 %v11058
      %11926 = vmatprep.subr.bf16.mxu0 %v11061
      %11927 = vmatpush1.bf16.msra.mxu0 %v11060
      %11928 = vmatprep.subr.bf16.mxu0 %v11063
      %11929 = vmatpush1.bf16.msra.mxu0 %v11062
      %11930 = vmatprep.subr.bf16.mxu0 %v11065
      %11931 = vmatpush1.bf16.msra.mxu0 %v11064
      %11932 = vmatprep.subr.bf16.mxu0 %v11067
      %11933 = vmatpush1.bf16.msra.mxu0 %v11066
      %11934 = vmatprep.subr.bf16.mxu0 %v11069
      %11935 = vmatpush1.bf16.msra.mxu0 %v11068
      %11936 = vmatprep.subr.bf16.mxu0 %v11071
      %11937 = vmatpush1.bf16.msra.mxu0 %v11070
      %11938 = vmatprep.subr.bf16.mxu0 %v11073
      %11939 = vmatpush1.bf16.msra.mxu0 %v11072
      %11940 = vmatprep.subr.bf16.mxu0 %v11075
      %11941 = vmatpush1.bf16.msra.mxu0 %v11074
      %11942 = vmatprep.subr.bf16.mxu0 %v11077
      %11943 = vmatpush1.bf16.msra.mxu0 %v11076
      %11944 = vmatprep.subr.bf16.mxu0 %v11079
      %11945 = vmatpush1.bf16.msra.mxu0 %v11078
      %11946 = vmatprep.subr.bf16.mxu0 %v11081
      %11947 = vmatpush1.bf16.msra.mxu0 %v11080
      %11948 = vmatprep.subr.bf16.mxu0 %v11083
      %11949 = vmatpush1.bf16.msra.mxu0 %v11082
      %11950 = vmatprep.mubr.bf16.mxu0 %v9236
      %11951 = vmatmul.mubr.bf16.gmra.mrb[0].mxu0 %v9235
      %v11952 = vpop.f32.mrb[0].mxu0
      %v11953 = vadd.f32 %v11910, %v11952
      %v11954 = vpop.f32.mrb[0].mxu0
      %v11955 = vadd.f32 %v11912, %v11954
      %v11956 = vpop.f32.mrb[0].mxu0
      %v11957 = vadd.f32 %v11914, %v11956
      %v11958 = vpop.f32.mrb[0].mxu0
      %v11959 = vadd.f32 %v11916, %v11958
      %11960 = vdwg.mxu0
      %11961 = vmatprep.subr.bf16.mxu0 %v11085
      %11962 = vmatpush1.bf16.msra.mxu0 %v11084
      %11963 = vmatprep.subr.bf16.mxu0 %v11087
      %11964 = vmatpush1.bf16.msra.mxu0 %v11086
      %11965 = vmatprep.subr.bf16.mxu0 %v11089
      %11966 = vmatpush1.bf16.msra.mxu0 %v11088
      %11967 = vmatprep.subr.bf16.mxu0 %v11091
      %11968 = vmatpush1.bf16.msra.mxu0 %v11090
      %11969 = vmatprep.subr.bf16.mxu0 %v11093
      %11970 = vmatpush1.bf16.msra.mxu0 %v11092
      %11971 = vmatprep.subr.bf16.mxu0 %v11095
      %11972 = vmatpush1.bf16.msra.mxu0 %v11094
      %11973 = vmatprep.subr.bf16.mxu0 %v11097
      %11974 = vmatpush1.bf16.msra.mxu0 %v11096
      %11975 = vmatprep.subr.bf16.mxu0 %v11099
      %11976 = vmatpush1.bf16.msra.mxu0 %v11098
      %11977 = vmatprep.subr.bf16.mxu0 %v11101
      %11978 = vmatpush1.bf16.msra.mxu0 %v11100
      %11979 = vmatprep.subr.bf16.mxu0 %v11103
      %11980 = vmatpush1.bf16.msra.mxu0 %v11102
      %11981 = vmatprep.subr.bf16.mxu0 %v11105
      %11982 = vmatpush1.bf16.msra.mxu0 %v11104
      %11983 = vmatprep.subr.bf16.mxu0 %v11107
      %11984 = vmatpush1.bf16.msra.mxu0 %v11106
      %11985 = vmatprep.subr.bf16.mxu0 %v11109
      %11986 = vmatpush1.bf16.msra.mxu0 %v11108
      %11987 = vmatprep.subr.bf16.mxu0 %v11111
      %11988 = vmatpush1.bf16.msra.mxu0 %v11110
      %11989 = vmatprep.subr.bf16.mxu0 %v11113
      %11990 = vmatpush1.bf16.msra.mxu0 %v11112
      %11991 = vmatprep.subr.bf16.mxu0 %v11115
      %11992 = vmatpush1.bf16.msra.mxu0 %v11114
      %11993 = vmatprep.mubr.bf16.mxu0 %v9238
      %11994 = vmatmul.mubr.bf16.gmra.mrb[0].mxu0 %v9237
      %v11995 = vpop.f32.mrb[0].mxu0
      %v11996 = vadd.f32 %v11953, %v11995
      %v11997 = vpop.f32.mrb[0].mxu0
      %v11998 = vadd.f32 %v11955, %v11997
      %v11999 = vpop.f32.mrb[0].mxu0
      %v12000 = vadd.f32 %v11957, %v11999
      %v12001 = vpop.f32.mrb[0].mxu0
      %v12002 = vadd.f32 %v11959, %v12001
      %12003 = vdwg.mxu0
      %12004 = vmatprep.subr.bf16.mxu0 %v11117
      %12005 = vmatpush1.bf16.msra.mxu0 %v11116
      %12006 = vmatprep.subr.bf16.mxu0 %v11119
      %12007 = vmatpush1.bf16.msra.mxu0 %v11118
      %12008 = vmatprep.subr.bf16.mxu0 %v11121
      %12009 = vmatpush1.bf16.msra.mxu0 %v11120
      %12010 = vmatprep.subr.bf16.mxu0 %v11123
      %12011 = vmatpush1.bf16.msra.mxu0 %v11122
      %12012 = vmatprep.subr.bf16.mxu0 %v11125
      %12013 = vmatpush1.bf16.msra.mxu0 %v11124
      %12014 = vmatprep.subr.bf16.mxu0 %v11127
      %12015 = vmatpush1.bf16.msra.mxu0 %v11126
      %12016 = vmatprep.subr.bf16.mxu0 %v11129
      %12017 = vmatpush1.bf16.msra.mxu0 %v11128
      %12018 = vmatprep.subr.bf16.mxu0 %v11131
      %12019 = vmatpush1.bf16.msra.mxu0 %v11130
      %12020 = vmatprep.subr.bf16.mxu0 %v11133
      %12021 = vmatpush1.bf16.msra.mxu0 %v11132
      %12022 = vmatprep.subr.bf16.mxu0 %v11135
      %12023 = vmatpush1.bf16.msra.mxu0 %v11134
      %12024 = vmatprep.subr.bf16.mxu0 %v11137
      %12025 = vmatpush1.bf16.msra.mxu0 %v11136
      %12026 = vmatprep.subr.bf16.mxu0 %v11139
      %12027 = vmatpush1.bf16.msra.mxu0 %v11138
      %12028 = vmatprep.subr.bf16.mxu0 %v11141
      %12029 = vmatpush1.bf16.msra.mxu0 %v11140
      %12030 = vmatprep.subr.bf16.mxu0 %v11143
      %12031 = vmatpush1.bf16.msra.mxu0 %v11142
      %12032 = vmatprep.subr.bf16.mxu0 %v11145
      %12033 = vmatpush1.bf16.msra.mxu0 %v11144
      %12034 = vmatprep.subr.bf16.mxu0 %v11147
      %12035 = vmatpush1.bf16.msra.mxu0 %v11146
      %12036 = vmatprep.mubr.bf16.mxu0 %v9240
      %12037 = vmatmul.mubr.bf16.gmra.mrb[0].mxu0 %v9239
      %v12038 = vpop.f32.mrb[0].mxu0
      %v12039 = vadd.f32 %v11996, %v12038
      %v12040 = vpop.f32.mrb[0].mxu0
      %v12041 = vadd.f32 %v11998, %v12040
      %v12042 = vpop.f32.mrb[0].mxu0
      %v12043 = vadd.f32 %v12000, %v12042
      %v12044 = vpop.f32.mrb[0].mxu0
      %v12045 = vadd.f32 %v12002, %v12044
      %12046 = vdwg.mxu0
      %12047 = vmatprep.subr.bf16.mxu0 %v11149
      %12048 = vmatpush1.bf16.msra.mxu0 %v11148
      %12049 = vmatprep.subr.bf16.mxu0 %v11151
      %12050 = vmatpush1.bf16.msra.mxu0 %v11150
      %12051 = vmatprep.subr.bf16.mxu0 %v11153
      %12052 = vmatpush1.bf16.msra.mxu0 %v11152
      %12053 = vmatprep.subr.bf16.mxu0 %v11155
      %12054 = vmatpush1.bf16.msra.mxu0 %v11154
      %12055 = vmatprep.subr.bf16.mxu0 %v11157
      %12056 = vmatpush1.bf16.msra.mxu0 %v11156
      %12057 = vmatprep.subr.bf16.mxu0 %v11159
      %12058 = vmatpush1.bf16.msra.mxu0 %v11158
      %12059 = vmatprep.subr.bf16.mxu0 %v11161
      %12060 = vmatpush1.bf16.msra.mxu0 %v11160
      %12061 = vmatprep.subr.bf16.mxu0 %v11163
      %12062 = vmatpush1.bf16.msra.mxu0 %v11162
      %12063 = vmatprep.subr.bf16.mxu0 %v11165
      %12064 = vmatpush1.bf16.msra.mxu0 %v11164
      %12065 = vmatprep.subr.bf16.mxu0 %v11167
      %12066 = vmatpush1.bf16.msra.mxu0 %v11166
      %12067 = vmatprep.subr.bf16.mxu0 %v11169
      %12068 = vmatpush1.bf16.msra.mxu0 %v11168
      %12069 = vmatprep.subr.bf16.mxu0 %v11171
      %12070 = vmatpush1.bf16.msra.mxu0 %v11170
      %12071 = vmatprep.subr.bf16.mxu0 %v11173
      %12072 = vmatpush1.bf16.msra.mxu0 %v11172
      %12073 = vmatprep.subr.bf16.mxu0 %v11175
      %12074 = vmatpush1.bf16.msra.mxu0 %v11174
      %12075 = vmatprep.subr.bf16.mxu0 %v11177
      %12076 = vmatpush1.bf16.msra.mxu0 %v11176
      %12077 = vmatprep.subr.bf16.mxu0 %v11179
      %12078 = vmatpush1.bf16.msra.mxu0 %v11178
      %12079 = vmatprep.mubr.bf16.mxu0 %v9242
      %12080 = vmatmul.mubr.bf16.gmra.mrb[0].mxu0 %v9241
      %v12081 = vpop.f32.mrb[0].mxu0
      %v12082 = vadd.f32 %v12039, %v12081
      %v12083 = vpop.f32.mrb[0].mxu0
      %v12084 = vadd.f32 %v12041, %v12083
      %v12085 = vpop.f32.mrb[0].mxu0
      %v12086 = vadd.f32 %v12043, %v12085
      %v12087 = vpop.f32.mrb[0].mxu0
      %v12088 = vadd.f32 %v12045, %v12087
      %12089 = vdwg.mxu0
      %12090 = vmatprep.subr.bf16.mxu0 %v11181
      %12091 = vmatpush1.bf16.msra.mxu0 %v11180
      %12092 = vmatprep.subr.bf16.mxu0 %v11183
      %12093 = vmatpush1.bf16.msra.mxu0 %v11182
      %12094 = vmatprep.subr.bf16.mxu0 %v11185
      %12095 = vmatpush1.bf16.msra.mxu0 %v11184
      %12096 = vmatprep.subr.bf16.mxu0 %v11187
      %12097 = vmatpush1.bf16.msra.mxu0 %v11186
      %12098 = vmatprep.subr.bf16.mxu0 %v11189
      %12099 = vmatpush1.bf16.msra.mxu0 %v11188
      %12100 = vmatprep.subr.bf16.mxu0 %v11191
      %12101 = vmatpush1.bf16.msra.mxu0 %v11190
      %12102 = vmatprep.subr.bf16.mxu0 %v11193
      %12103 = vmatpush1.bf16.msra.mxu0 %v11192
      %12104 = vmatprep.subr.bf16.mxu0 %v11195
      %12105 = vmatpush1.bf16.msra.mxu0 %v11194
      %12106 = vmatprep.subr.bf16.mxu0 %v11197
      %12107 = vmatpush1.bf16.msra.mxu0 %v11196
      %12108 = vmatprep.subr.bf16.mxu0 %v11199
      %12109 = vmatpush1.bf16.msra.mxu0 %v11198
      %12110 = vmatprep.subr.bf16.mxu0 %v11201
      %12111 = vmatpush1.bf16.msra.mxu0 %v11200
      %12112 = vmatprep.subr.bf16.mxu0 %v11203
      %12113 = vmatpush1.bf16.msra.mxu0 %v11202
      %12114 = vmatprep.subr.bf16.mxu0 %v11205
      %12115 = vmatpush1.bf16.msra.mxu0 %v11204
      %12116 = vmatprep.subr.bf16.mxu0 %v11207
      %12117 = vmatpush1.bf16.msra.mxu0 %v11206
      %12118 = vmatprep.subr.bf16.mxu0 %v11209
      %12119 = vmatpush1.bf16.msra.mxu0 %v11208
      %12120 = vmatprep.subr.bf16.mxu0 %v11211
      %12121 = vmatpush1.bf16.msra.mxu0 %v11210
      %12122 = vmatprep.mubr.bf16.mxu0 %v9244
      %12123 = vmatmul.mubr.bf16.gmra.mrb[0].mxu0 %v9243
      %v12124 = vpop.f32.mrb[0].mxu0
      %v12125 = vadd.f32 %v12082, %v12124
      %v12126 = vpop.f32.mrb[0].mxu0
      %v12127 = vadd.f32 %v12084, %v12126
      %v12128 = vpop.f32.mrb[0].mxu0
      %v12129 = vadd.f32 %v12086, %v12128
      %v12130 = vpop.f32.mrb[0].mxu0
      %v12131 = vadd.f32 %v12088, %v12130
      %12132 = vdwg.mxu0
      %12133 = vmatprep.subr.bf16.mxu0 %v11213
      %12134 = vmatpush1.bf16.msra.mxu0 %v11212
      %12135 = vmatprep.subr.bf16.mxu0 %v11215
      %12136 = vmatpush1.bf16.msra.mxu0 %v11214
      %12137 = vmatprep.subr.bf16.mxu0 %v11217
      %12138 = vmatpush1.bf16.msra.mxu0 %v11216
      %12139 = vmatprep.subr.bf16.mxu0 %v11219
      %12140 = vmatpush1.bf16.msra.mxu0 %v11218
      %12141 = vmatprep.subr.bf16.mxu0 %v11221
      %12142 = vmatpush1.bf16.msra.mxu0 %v11220
      %12143 = vmatprep.subr.bf16.mxu0 %v11223
      %12144 = vmatpush1.bf16.msra.mxu0 %v11222
      %12145 = vmatprep.subr.bf16.mxu0 %v11225
      %12146 = vmatpush1.bf16.msra.mxu0 %v11224
      %12147 = vmatprep.subr.bf16.mxu0 %v11227
      %12148 = vmatpush1.bf16.msra.mxu0 %v11226
      %12149 = vmatprep.subr.bf16.mxu0 %v11229
      %12150 = vmatpush1.bf16.msra.mxu0 %v11228
      %12151 = vmatprep.subr.bf16.mxu0 %v11231
      %12152 = vmatpush1.bf16.msra.mxu0 %v11230
      %12153 = vmatprep.subr.bf16.mxu0 %v11233
      %12154 = vmatpush1.bf16.msra.mxu0 %v11232
      %12155 = vmatprep.subr.bf16.mxu0 %v11235
      %12156 = vmatpush1.bf16.msra.mxu0 %v11234
      %12157 = vmatprep.subr.bf16.mxu0 %v11237
      %12158 = vmatpush1.bf16.msra.mxu0 %v11236
      %12159 = vmatprep.subr.bf16.mxu0 %v11239
      %12160 = vmatpush1.bf16.msra.mxu0 %v11238
      %12161 = vmatprep.subr.bf16.mxu0 %v11241
      %12162 = vmatpush1.bf16.msra.mxu0 %v11240
      %12163 = vmatprep.subr.bf16.mxu0 %v11243
      %12164 = vmatpush1.bf16.msra.mxu0 %v11242
      %12165 = vmatprep.mubr.bf16.mxu0 %v9246
      %12166 = vmatmul.mubr.bf16.gmra.mrb[0].mxu0 %v9245
      %v12167 = vpop.f32.mrb[0].mxu0
      %v12168 = vadd.f32 %v12125, %v12167
      %v12169 = vpop.f32.mrb[0].mxu0
      %v12170 = vadd.f32 %v12127, %v12169
      %v12171 = vpop.f32.mrb[0].mxu0
      %v12172 = vadd.f32 %v12129, %v12171
      %v12173 = vpop.f32.mrb[0].mxu0
      %v12174 = vadd.f32 %v12131, %v12173
      %12175 = vdwg.mxu0
      %12176 = vmatprep.subr.bf16.mxu0 %v11245
      %12177 = vmatpush1.bf16.msra.mxu0 %v11244
      %12178 = vmatprep.subr.bf16.mxu0 %v11247
      %12179 = vmatpush1.bf16.msra.mxu0 %v11246
      %12180 = vmatprep.subr.bf16.mxu0 %v11249
      %12181 = vmatpush1.bf16.msra.mxu0 %v11248
      %12182 = vmatprep.subr.bf16.mxu0 %v11251
      %12183 = vmatpush1.bf16.msra.mxu0 %v11250
      %12184 = vmatprep.subr.bf16.mxu0 %v11253
      %12185 = vmatpush1.bf16.msra.mxu0 %v11252
      %12186 = vmatprep.subr.bf16.mxu0 %v11255
      %12187 = vmatpush1.bf16.msra.mxu0 %v11254
      %12188 = vmatprep.subr.bf16.mxu0 %v11257
      %12189 = vmatpush1.bf16.msra.mxu0 %v11256
      %12190 = vmatprep.subr.bf16.mxu0 %v11259
      %12191 = vmatpush1.bf16.msra.mxu0 %v11258
      %12192 = vmatprep.subr.bf16.mxu0 0
      %12193 = vmatpush1.bf16.msra.mxu0 0
      %12194 = vmatprep.subr.bf16.mxu0 0
      %12195 = vmatpush1.bf16.msra.mxu0 0
      %12196 = vmatprep.subr.bf16.mxu0 0
      %12197 = vmatpush1.bf16.msra.mxu0 0
      %12198 = vmatprep.subr.bf16.mxu0 0
      %12199 = vmatpush1.bf16.msra.mxu0 0
      %12200 = vmatprep.subr.bf16.mxu0 0
      %12201 = vmatpush1.bf16.msra.mxu0 0
      %12202 = vmatprep.subr.bf16.mxu0 0
      %12203 = vmatpush1.bf16.msra.mxu0 0
      %12204 = vmatprep.subr.bf16.mxu0 0
      %12205 = vmatpush1.bf16.msra.mxu0 0
      %12206 = vmatprep.subr.bf16.mxu0 0
      %12207 = vmatpush1.bf16.msra.mxu0 0
      %12208 = vmatprep.mubr.bf16.mxu0 0
      %12209 = vmatmul.mubr.bf16.gmra.mrb[0].mxu0 %v9247
      %v12210 = vpop.f32.mrb[0].mxu0
      %v12211 = vadd.f32 %v12168, %v12210
      %v12212 = vpop.f32.mrb[0].mxu0
      %v12213 = vadd.f32 %v12170, %v12212
      %v12214 = vpop.f32.mrb[0].mxu0
      %v12215 = vadd.f32 %v12172, %v12214
      %v12216 = vpop.f32.mrb[0].mxu0
      %v12217 = vadd.f32 %v12174, %v12216
      %12218 = vdwg.mxu0
      %v12223 = vcombine.low %v12211, %v12213
      %v12224 = vcombine.high %v12211, %v12213
      %v12226 = vunpack.c.l.s4 1983009808
      %v12227 = vunpack.c.0.s8 %v12226
      %v12228 = vlaneseq
      %v12229 = vshrl.u32 %v12228, 7
      %v12230 = vsub.s32 %v12227, %v12229
      %v12231 = vrot.slane %v12223, %v12230
      %v12233 = vunpack.c.l.s4 1983009808
      %v12234 = vunpack.c.0.s8 %v12233
      %v12235 = vlaneseq
      %v12236 = vshrl.u32 %v12235, 7
      %v12237 = vsub.s32 %v12234, %v12236
      %v12238 = vrot.slane %v12224, %v12237
      %v12239 = vcombine.high %v12231, %v12231
      %v12240 = vcombine.high %v12238, %v12238
      %v12241 = vcombine.low %v12215, %v12217
      %v12242 = vcombine.high %v12215, %v12217
      %v12244 = vunpack.c.l.s4 1983009808
      %v12245 = vunpack.c.0.s8 %v12244
      %v12246 = vlaneseq
      %v12247 = vshrl.u32 %v12246, 7
      %v12248 = vsub.s32 %v12245, %v12247
      %v12249 = vrot.slane %v12241, %v12248
      %v12251 = vunpack.c.l.s4 1983009808
      %v12252 = vunpack.c.0.s8 %v12251
      %v12253 = vlaneseq
      %v12254 = vshrl.u32 %v12253, 7
      %v12255 = vsub.s32 %v12252, %v12254
      %v12256 = vrot.slane %v12242, %v12255
      %v12257 = vcombine.high %v12249, %v12249
      %v12258 = vcombine.high %v12256, %v12256
      %v12267 = vrot.slane %v12231, 7
      %v12268 = vrot.slane %v12267, 2
      %v12269 = vrot.slane %v12239, 7
      %v12270 = vrot.slane %v12269, 2
      %v12271 = vrot.slane %v12238, 7
      %v12272 = vrot.slane %v12271, 2
      %v12273 = vrot.slane %v12240, 7
      %v12274 = vrot.slane %v12273, 2
      %v12275 = vrot.slane %v12249, 7
      %v12276 = vrot.slane %v12275, 2
      %v12277 = vrot.slane %v12257, 7
      %v12278 = vrot.slane %v12277, 2
      %v12279 = vrot.slane %v12256, 7
      %v12280 = vrot.slane %v12279, 2
      %v12281 = vrot.slane %v12258, 7
      %v12282 = vrot.slane %v12281, 2
      %v12291 = vmax.f32 %v12231, %v12268
      %v12292 = vmax.f32 %v12239, %v12270
      %v12293 = vmax.f32 %v12238, %v12272
      %v12294 = vmax.f32 %v12240, %v12274
      %v12295 = vmax.f32 %v12249, %v12276
      %v12296 = vmax.f32 %v12257, %v12278
      %v12297 = vmax.f32 %v12256, %v12280
      %v12298 = vmax.f32 %v12258, %v12282
      %v12299 = vmax.f32 %v12291, %v12293
      %v12300 = vmax.f32 %v12292, %v12294
      %v12301 = vmax.f32 %v12295, %v12297
      %v12302 = vmax.f32 %v12296, %v12298
      %v12303 = vmul.f32 %v12299, 0.2
      %v12304 = vmul.f32 %v12300, 0.2
      %v12305 = vmul.f32 %v12301, 0.2
      %v12306 = vmul.f32 %v12302, 0.2
      %v12307 = vmax.f32 %v12299, %v12303
      %v12308 = vmax.f32 %v12300, %v12304
      %v12309 = vmax.f32 %v12301, %v12305
      %v12310 = vmax.f32 %v12302, %v12306
      %v12315 = vlaneseq
      %v12316 = vshrl.u32 %v12315, 7
      %v12317 = vsub.s32 0, %v12316
      %v12318 = vrot.slane %v12307, %v12317
      %v12319 = vlaneseq
      %v12320 = vshrl.u32 %v12319, 7
      %v12321 = vsub.s32 2, %v12320
      %v12322 = vrot.slane %v12307, %v12321
      %v12323 = vlaneseq
      %v12324 = vshrl.u32 %v12323, 7
      %v12325 = vsub.s32 0, %v12324
      %v12326 = vrot.slane %v12308, %v12325
      %v12327 = vlaneseq
      %v12328 = vshrl.u32 %v12327, 7
      %v12329 = vsub.s32 2, %v12328
      %v12330 = vrot.slane %v12308, %v12329
      %v12331 = vlaneseq
      %v12332 = vshrl.u32 %v12331, 7
      %v12333 = vsub.s32 0, %v12332
      %v12334 = vrot.slane %v12309, %v12333
      %v12335 = vlaneseq
      %v12336 = vshrl.u32 %v12335, 7
      %v12337 = vsub.s32 2, %v12336
      %v12338 = vrot.slane %v12309, %v12337
      %v12339 = vlaneseq
      %v12340 = vshrl.u32 %v12339, 7
      %v12341 = vsub.s32 0, %v12340
      %v12342 = vrot.slane %v12310, %v12341
      %v12343 = vlaneseq
      %v12344 = vshrl.u32 %v12343, 7
      %v12345 = vsub.s32 2, %v12344
      %v12346 = vrot.slane %v12310, %v12345
      %v12355 = vpack.c.bf16 %v12318, %v12318
      %v12356 = vpack.c.bf16 %v12322, %v12322
      %v12357 = vpack.c.bf16 %v12326, %v12326
      %v12358 = vpack.c.bf16 %v12330, %v12330
      %v12359 = vpack.c.bf16 %v12334, %v12334
      %v12360 = vpack.c.bf16 %v12338, %v12338
      %v12361 = vpack.c.bf16 %v12342, %v12342
      %v12362 = vpack.c.bf16 %v12346, %v12346
      %v12363 = vld [vmem:[%s7] sm:$0xf]
      %v12364 = vld [vmem:[%s7 + $0x4] sm:$0xf]
      %v12365 = vld [vmem:[%s7 + $0x8] sm:$0xf]
      %v12366 = vld [vmem:[%s7 + $0xc] sm:$0xf]
      %v12367 = vld [vmem:[%s7 + $0x10] sm:$0xf]
      %v12368 = vld [vmem:[%s7 + $0x14] sm:$0xf]
      %v12369 = vld [vmem:[%s7 + $0x18] sm:$0xf]
      %v12370 = vld [vmem:[%s7 + $0x1c] sm:$0xf]
      %v12371 = vld [vmem:[%s7 + $0x20] sm:$0xf]
      %v12372 = vld [vmem:[%s7 + $0x24] sm:$0xf]
      %v12373 = vld [vmem:[%s7 + $0x28] sm:$0xf]
      %v12374 = vld [vmem:[%s7 + $0x2c] sm:$0xf]
      %v12375 = vld [vmem:[%s7 + $0x30] sm:$0xf]
      %v12376 = vld [vmem:[%s7 + $0x34] sm:$0xf]
      %v12377 = vld [vmem:[%s7 + $0x38] sm:$0xf]
      %v12378 = vld [vmem:[%s7 + $0x3c] sm:$0xf]
      %v12379 = vld [vmem:[%s7 + $0x40] sm:$0xf]
      %v12380 = vld [vmem:[%s7 + $0x44] sm:$0xf]
      %v12381 = vld [vmem:[%s7 + $0x48] sm:$0xf]
      %v12382 = vld [vmem:[%s7 + $0x4c] sm:$0xf]
      %v12383 = vld [vmem:[%s7 + $0x50] sm:$0xf]
      %v12384 = vld [vmem:[%s7 + $0x54] sm:$0xf]
      %v12385 = vld [vmem:[%s7 + $0x58] sm:$0xf]
      %v12386 = vld [vmem:[%s7 + $0x5c] sm:$0xf]
      %v12387 = vld [vmem:[%s7 + $0x60] sm:$0xf]
      %v12388 = vld [vmem:[%s7 + $0x64] sm:$0xf]
      %v12389 = vld [vmem:[%s7 + $0x68] sm:$0xf]
      %v12390 = vld [vmem:[%s7 + $0x6c] sm:$0xf]
      %v12391 = vld [vmem:[%s7 + $0x70] sm:$0xf]
      %v12392 = vld [vmem:[%s7 + $0x74] sm:$0xf]
      %v12393 = vld [vmem:[%s7 + $0x78] sm:$0xf]
      %v12394 = vld [vmem:[%s7 + $0x7c] sm:$0xf]
      %s12395 = scalar_lea.vmem %s7, 128
      %v12396 = vld [vmem:[%s12395] sm:$0xf]
      %v12397 = vld [vmem:[%s12395 + $0x4] sm:$0xf]
      %v12398 = vld [vmem:[%s12395 + $0x8] sm:$0xf]
      %v12399 = vld [vmem:[%s12395 + $0xc] sm:$0xf]
      %v12400 = vld [vmem:[%s12395 + $0x10] sm:$0xf]
      %v12401 = vld [vmem:[%s12395 + $0x14] sm:$0xf]
      %v12402 = vld [vmem:[%s12395 + $0x18] sm:$0xf]
      %v12403 = vld [vmem:[%s12395 + $0x1c] sm:$0xf]
      %v12404 = vld [vmem:[%s12395 + $0x20] sm:$0xf]
      %v12405 = vld [vmem:[%s12395 + $0x24] sm:$0xf]
      %v12406 = vld [vmem:[%s12395 + $0x28] sm:$0xf]
      %v12407 = vld [vmem:[%s12395 + $0x2c] sm:$0xf]
      %v12408 = vld [vmem:[%s12395 + $0x30] sm:$0xf]
      %v12409 = vld [vmem:[%s12395 + $0x34] sm:$0xf]
      %v12410 = vld [vmem:[%s12395 + $0x38] sm:$0xf]
      %v12411 = vld [vmem:[%s12395 + $0x3c] sm:$0xf]
      %v12412 = vld [vmem:[%s12395 + $0x40] sm:$0xf]
      %v12413 = vld [vmem:[%s12395 + $0x44] sm:$0xf]
      %v12414 = vld [vmem:[%s12395 + $0x48] sm:$0xf]
      %v12415 = vld [vmem:[%s12395 + $0x4c] sm:$0xf]
      %v12416 = vld [vmem:[%s12395 + $0x50] sm:$0xf]
      %v12417 = vld [vmem:[%s12395 + $0x54] sm:$0xf]
      %v12418 = vld [vmem:[%s12395 + $0x58] sm:$0xf]
      %v12419 = vld [vmem:[%s12395 + $0x5c] sm:$0xf]
      %v12420 = vld [vmem:[%s12395 + $0x60] sm:$0xf]
      %v12421 = vld [vmem:[%s12395 + $0x64] sm:$0xf]
      %v12422 = vld [vmem:[%s12395 + $0x68] sm:$0xf]
      %v12423 = vld [vmem:[%s12395 + $0x6c] sm:$0xf]
      %v12424 = vld [vmem:[%s12395 + $0x70] sm:$0xf]
      %v12425 = vld [vmem:[%s12395 + $0x74] sm:$0xf]
      %v12426 = vld [vmem:[%s12395 + $0x78] sm:$0xf]
      %v12427 = vld [vmem:[%s12395 + $0x7c] sm:$0xf]
      %v12460 = vunpack.c.l.b16 %v12396
      %v12461 = vunpack.c.l.b16 %v12397
      %v12462 = vunpack.c.l.b16 %v12398
      %v12463 = vunpack.c.l.b16 %v12399
      %v12464 = vunpack.c.l.b16 %v12400
      %v12465 = vunpack.c.l.b16 %v12401
      %v12466 = vunpack.c.l.b16 %v12402
      %v12467 = vunpack.c.l.b16 %v12403
      %v12468 = vunpack.c.l.b16 %v12404
      %v12469 = vunpack.c.l.b16 %v12405
      %v12470 = vunpack.c.l.b16 %v12406
      %v12471 = vunpack.c.l.b16 %v12407
      %v12472 = vunpack.c.l.b16 %v12408
      %v12473 = vunpack.c.l.b16 %v12409
      %v12474 = vunpack.c.l.b16 %v12410
      %v12475 = vunpack.c.l.b16 %v12411
      %v12476 = vunpack.c.l.b16 %v12412
      %v12477 = vunpack.c.l.b16 %v12413
      %v12478 = vunpack.c.l.b16 %v12414
      %v12479 = vunpack.c.l.b16 %v12415
      %v12480 = vunpack.c.l.b16 %v12416
      %v12481 = vunpack.c.l.b16 %v12417
      %v12482 = vunpack.c.l.b16 %v12418
      %v12483 = vunpack.c.l.b16 %v12419
      %v12484 = vunpack.c.l.b16 %v12420
      %v12485 = vunpack.c.l.b16 %v12421
      %v12486 = vunpack.c.l.b16 %v12422
      %v12487 = vunpack.c.l.b16 %v12423
      %v12488 = vunpack.c.l.b16 %v12424
      %v12489 = vunpack.c.l.b16 %v12425
      %v12490 = vunpack.c.l.b16 %v12426
      %v12491 = vunpack.c.l.b16 %v12427
      %v12492 = vpack.c.b16 %v12461, %v12460
      %v12493 = vpack.c.b16 %v12463, %v12462
      %v12494 = vpack.c.b16 %v12465, %v12464
      %v12495 = vpack.c.b16 %v12467, %v12466
      %v12496 = vpack.c.b16 %v12469, %v12468
      %v12497 = vpack.c.b16 %v12471, %v12470
      %v12498 = vpack.c.b16 %v12473, %v12472
      %v12499 = vpack.c.b16 %v12475, %v12474
      %v12500 = vpack.c.b16 %v12477, %v12476
      %v12501 = vpack.c.b16 %v12479, %v12478
      %v12502 = vpack.c.b16 %v12481, %v12480
      %v12503 = vpack.c.b16 %v12483, %v12482
      %v12504 = vpack.c.b16 %v12485, %v12484
      %v12505 = vpack.c.b16 %v12487, %v12486
      %v12506 = vpack.c.b16 %v12489, %v12488
      %v12507 = vpack.c.b16 %v12491, %v12490
      %12524 = vmatprep.subr.bf16.mxu0 0
      %12525 = vmatpush1.bf16.msra.mxu0 %v12492
      %12526 = vmatprep.subr.bf16.mxu0 0
      %12527 = vmatpush1.bf16.msra.mxu0 %v12493
      %12528 = vmatprep.subr.bf16.mxu0 0
      %12529 = vmatpush1.bf16.msra.mxu0 %v12494
      %12530 = vmatprep.subr.bf16.mxu0 0
      %12531 = vmatpush1.bf16.msra.mxu0 %v12495
      %12532 = vmatprep.subr.bf16.mxu0 0
      %12533 = vmatpush1.bf16.msra.mxu0 %v12496
      %12534 = vmatprep.subr.bf16.mxu0 0
      %12535 = vmatpush1.bf16.msra.mxu0 %v12497
      %12536 = vmatprep.subr.bf16.mxu0 0
      %12537 = vmatpush1.bf16.msra.mxu0 %v12498
      %12538 = vmatprep.subr.bf16.mxu0 0
      %12539 = vmatpush1.bf16.msra.mxu0 %v12499
      %12540 = vmatprep.subr.bf16.mxu0 0
      %12541 = vmatpush1.bf16.msra.mxu0 %v12500
      %12542 = vmatprep.subr.bf16.mxu0 0
      %12543 = vmatpush1.bf16.msra.mxu0 %v12501
      %12544 = vmatprep.subr.bf16.mxu0 0
      %12545 = vmatpush1.bf16.msra.mxu0 %v12502
      %12546 = vmatprep.subr.bf16.mxu0 0
      %12547 = vmatpush1.bf16.msra.mxu0 %v12503
      %12548 = vmatprep.subr.bf16.mxu0 0
      %12549 = vmatpush1.bf16.msra.mxu0 %v12504
      %12550 = vmatprep.subr.bf16.mxu0 0
      %12551 = vmatpush1.bf16.msra.mxu0 %v12505
      %12552 = vmatprep.subr.bf16.mxu0 0
      %12553 = vmatpush1.bf16.msra.mxu0 %v12506
      %12554 = vmatprep.subr.bf16.mxu0 0
      %12555 = vmatpush1.bf16.msra.mxu0 %v12507
      %12556 = vmatprep.mubr.bf16.mxu0 %v12358
      %12557 = vmatmul.mubr.bf16.gmra.mrb[0].mxu0 %v12357
      %v12558 = vpop.f32.mrb[0].mxu0
      %v12559 = vadd.f32 0.0, %v12558
      %v12560 = vpop.f32.mrb[0].mxu0
      %v12561 = vpop.f32.mrb[0].mxu0
      %v12562 = vpop.f32.mrb[0].mxu0
      %12563 = vdwg.mxu0
      %v12596 = vunpack.c.l.b16 %v12363
      %v12597 = vunpack.c.l.b16 %v12364
      %v12598 = vunpack.c.l.b16 %v12365
      %v12599 = vunpack.c.l.b16 %v12366
      %v12600 = vunpack.c.l.b16 %v12367
      %v12601 = vunpack.c.l.b16 %v12368
      %v12602 = vunpack.c.l.b16 %v12369
      %v12603 = vunpack.c.l.b16 %v12370
      %v12604 = vunpack.c.l.b16 %v12371
      %v12605 = vunpack.c.l.b16 %v12372
      %v12606 = vunpack.c.l.b16 %v12373
      %v12607 = vunpack.c.l.b16 %v12374
      %v12608 = vunpack.c.l.b16 %v12375
      %v12609 = vunpack.c.l.b16 %v12376
      %v12610 = vunpack.c.l.b16 %v12377
      %v12611 = vunpack.c.l.b16 %v12378
      %v12612 = vunpack.c.l.b16 %v12379
      %v12613 = vunpack.c.l.b16 %v12380
      %v12614 = vunpack.c.l.b16 %v12381
      %v12615 = vunpack.c.l.b16 %v12382
      %v12616 = vunpack.c.l.b16 %v12383
      %v12617 = vunpack.c.l.b16 %v12384
      %v12618 = vunpack.c.l.b16 %v12385
      %v12619 = vunpack.c.l.b16 %v12386
      %v12620 = vunpack.c.l.b16 %v12387
      %v12621 = vunpack.c.l.b16 %v12388
      %v12622 = vunpack.c.l.b16 %v12389
      %v12623 = vunpack.c.l.b16 %v12390
      %v12624 = vunpack.c.l.b16 %v12391
      %v12625 = vunpack.c.l.b16 %v12392
      %v12626 = vunpack.c.l.b16 %v12393
      %v12627 = vunpack.c.l.b16 %v12394
      %v12628 = vpack.c.b16 %v12597, %v12596
      %v12629 = vpack.c.b16 %v12599, %v12598
      %v12630 = vpack.c.b16 %v12601, %v12600
      %v12631 = vpack.c.b16 %v12603, %v12602
      %v12632 = vpack.c.b16 %v12605, %v12604
      %v12633 = vpack.c.b16 %v12607, %v12606
      %v12634 = vpack.c.b16 %v12609, %v12608
      %v12635 = vpack.c.b16 %v12611, %v12610
      %v12636 = vpack.c.b16 %v12613, %v12612
      %v12637 = vpack.c.b16 %v12615, %v12614
      %v12638 = vpack.c.b16 %v12617, %v12616
      %v12639 = vpack.c.b16 %v12619, %v12618
      %v12640 = vpack.c.b16 %v12621, %v12620
      %v12641 = vpack.c.b16 %v12623, %v12622
      %v12642 = vpack.c.b16 %v12625, %v12624
      %v12643 = vpack.c.b16 %v12627, %v12626
      %12660 = vmatprep.subr.bf16.mxu0 0
      %12661 = vmatpush1.bf16.msra.mxu0 %v12628
      %12662 = vmatprep.subr.bf16.mxu0 0
      %12663 = vmatpush1.bf16.msra.mxu0 %v12629
      %12664 = vmatprep.subr.bf16.mxu0 0
      %12665 = vmatpush1.bf16.msra.mxu0 %v12630
      %12666 = vmatprep.subr.bf16.mxu0 0
      %12667 = vmatpush1.bf16.msra.mxu0 %v12631
      %12668 = vmatprep.subr.bf16.mxu0 0
      %12669 = vmatpush1.bf16.msra.mxu0 %v12632
      %12670 = vmatprep.subr.bf16.mxu0 0
      %12671 = vmatpush1.bf16.msra.mxu0 %v12633
      %12672 = vmatprep.subr.bf16.mxu0 0
      %12673 = vmatpush1.bf16.msra.mxu0 %v12634
      %12674 = vmatprep.subr.bf16.mxu0 0
      %12675 = vmatpush1.bf16.msra.mxu0 %v12635
      %12676 = vmatprep.subr.bf16.mxu0 0
      %12677 = vmatpush1.bf16.msra.mxu0 %v12636
      %12678 = vmatprep.subr.bf16.mxu0 0
      %12679 = vmatpush1.bf16.msra.mxu0 %v12637
      %12680 = vmatprep.subr.bf16.mxu0 0
      %12681 = vmatpush1.bf16.msra.mxu0 %v12638
      %12682 = vmatprep.subr.bf16.mxu0 0
      %12683 = vmatpush1.bf16.msra.mxu0 %v12639
      %12684 = vmatprep.subr.bf16.mxu0 0
      %12685 = vmatpush1.bf16.msra.mxu0 %v12640
      %12686 = vmatprep.subr.bf16.mxu0 0
      %12687 = vmatpush1.bf16.msra.mxu0 %v12641
      %12688 = vmatprep.subr.bf16.mxu0 0
      %12689 = vmatpush1.bf16.msra.mxu0 %v12642
      %12690 = vmatprep.subr.bf16.mxu0 0
      %12691 = vmatpush1.bf16.msra.mxu0 %v12643
      %12692 = vmatprep.mubr.bf16.mxu0 %v12356
      %12693 = vmatmul.mubr.bf16.gmra.mrb[0].mxu0 %v12355
      %v12694 = vpop.f32.mrb[0].mxu0
      %v12695 = vadd.f32 %v12559, %v12694
      %v12696 = vpop.f32.mrb[0].mxu0
      %v12697 = vpop.f32.mrb[0].mxu0
      %v12698 = vpop.f32.mrb[0].mxu0
      %12699 = vdwg.mxu0
      %s12700 = scalar_lea.vmem %s7, 256
      %v12701 = vld [vmem:[%s12700] sm:$0xf]
      %v12702 = vld [vmem:[%s12700 + $0x4] sm:$0xf]
      %v12703 = vld [vmem:[%s12700 + $0x8] sm:$0xf]
      %v12704 = vld [vmem:[%s12700 + $0xc] sm:$0xf]
      %v12705 = vld [vmem:[%s12700 + $0x10] sm:$0xf]
      %v12706 = vld [vmem:[%s12700 + $0x14] sm:$0xf]
      %v12707 = vld [vmem:[%s12700 + $0x18] sm:$0xf]
      %v12708 = vld [vmem:[%s12700 + $0x1c] sm:$0xf]
      %v12709 = vld [vmem:[%s12700 + $0x20] sm:$0xf]
      %v12710 = vld [vmem:[%s12700 + $0x24] sm:$0xf]
      %v12711 = vld [vmem:[%s12700 + $0x28] sm:$0xf]
      %v12712 = vld [vmem:[%s12700 + $0x2c] sm:$0xf]
      %v12713 = vld [vmem:[%s12700 + $0x30] sm:$0xf]
      %v12714 = vld [vmem:[%s12700 + $0x34] sm:$0xf]
      %v12715 = vld [vmem:[%s12700 + $0x38] sm:$0xf]
      %v12716 = vld [vmem:[%s12700 + $0x3c] sm:$0xf]
      %v12717 = vld [vmem:[%s12700 + $0x40] sm:$0xf]
      %v12718 = vld [vmem:[%s12700 + $0x44] sm:$0xf]
      %v12719 = vld [vmem:[%s12700 + $0x48] sm:$0xf]
      %v12720 = vld [vmem:[%s12700 + $0x4c] sm:$0xf]
      %v12721 = vld [vmem:[%s12700 + $0x50] sm:$0xf]
      %v12722 = vld [vmem:[%s12700 + $0x54] sm:$0xf]
      %v12723 = vld [vmem:[%s12700 + $0x58] sm:$0xf]
      %v12724 = vld [vmem:[%s12700 + $0x5c] sm:$0xf]
      %v12725 = vld [vmem:[%s12700 + $0x60] sm:$0xf]
      %v12726 = vld [vmem:[%s12700 + $0x64] sm:$0xf]
      %v12727 = vld [vmem:[%s12700 + $0x68] sm:$0xf]
      %v12728 = vld [vmem:[%s12700 + $0x6c] sm:$0xf]
      %v12729 = vld [vmem:[%s12700 + $0x70] sm:$0xf]
      %v12730 = vld [vmem:[%s12700 + $0x74] sm:$0xf]
      %v12731 = vld [vmem:[%s12700 + $0x78] sm:$0xf]
      %v12732 = vld [vmem:[%s12700 + $0x7c] sm:$0xf]
      %v12765 = vunpack.c.l.b16 %v12701
      %v12766 = vunpack.c.l.b16 %v12702
      %v12767 = vunpack.c.l.b16 %v12703
      %v12768 = vunpack.c.l.b16 %v12704
      %v12769 = vunpack.c.l.b16 %v12705
      %v12770 = vunpack.c.l.b16 %v12706
      %v12771 = vunpack.c.l.b16 %v12707
      %v12772 = vunpack.c.l.b16 %v12708
      %v12773 = vunpack.c.l.b16 %v12709
      %v12774 = vunpack.c.l.b16 %v12710
      %v12775 = vunpack.c.l.b16 %v12711
      %v12776 = vunpack.c.l.b16 %v12712
      %v12777 = vunpack.c.l.b16 %v12713
      %v12778 = vunpack.c.l.b16 %v12714
      %v12779 = vunpack.c.l.b16 %v12715
      %v12780 = vunpack.c.l.b16 %v12716
      %v12781 = vunpack.c.l.b16 %v12717
      %v12782 = vunpack.c.l.b16 %v12718
      %v12783 = vunpack.c.l.b16 %v12719
      %v12784 = vunpack.c.l.b16 %v12720
      %v12785 = vunpack.c.l.b16 %v12721
      %v12786 = vunpack.c.l.b16 %v12722
      %v12787 = vunpack.c.l.b16 %v12723
      %v12788 = vunpack.c.l.b16 %v12724
      %v12789 = vunpack.c.l.b16 %v12725
      %v12790 = vunpack.c.l.b16 %v12726
      %v12791 = vunpack.c.l.b16 %v12727
      %v12792 = vunpack.c.l.b16 %v12728
      %v12793 = vunpack.c.l.b16 %v12729
      %v12794 = vunpack.c.l.b16 %v12730
      %v12795 = vunpack.c.l.b16 %v12731
      %v12796 = vunpack.c.l.b16 %v12732
      %v12797 = vpack.c.b16 %v12766, %v12765
      %v12798 = vpack.c.b16 %v12768, %v12767
      %v12799 = vpack.c.b16 %v12770, %v12769
      %v12800 = vpack.c.b16 %v12772, %v12771
      %v12801 = vpack.c.b16 %v12774, %v12773
      %v12802 = vpack.c.b16 %v12776, %v12775
      %v12803 = vpack.c.b16 %v12778, %v12777
      %v12804 = vpack.c.b16 %v12780, %v12779
      %v12805 = vpack.c.b16 %v12782, %v12781
      %v12806 = vpack.c.b16 %v12784, %v12783
      %v12807 = vpack.c.b16 %v12786, %v12785
      %v12808 = vpack.c.b16 %v12788, %v12787
      %v12809 = vpack.c.b16 %v12790, %v12789
      %v12810 = vpack.c.b16 %v12792, %v12791
      %v12811 = vpack.c.b16 %v12794, %v12793
      %v12812 = vpack.c.b16 %v12796, %v12795
      %12829 = vmatprep.subr.bf16.mxu0 0
      %12830 = vmatpush1.bf16.msra.mxu0 %v12797
      %12831 = vmatprep.subr.bf16.mxu0 0
      %12832 = vmatpush1.bf16.msra.mxu0 %v12798
      %12833 = vmatprep.subr.bf16.mxu0 0
      %12834 = vmatpush1.bf16.msra.mxu0 %v12799
      %12835 = vmatprep.subr.bf16.mxu0 0
      %12836 = vmatpush1.bf16.msra.mxu0 %v12800
      %12837 = vmatprep.subr.bf16.mxu0 0
      %12838 = vmatpush1.bf16.msra.mxu0 %v12801
      %12839 = vmatprep.subr.bf16.mxu0 0
      %12840 = vmatpush1.bf16.msra.mxu0 %v12802
      %12841 = vmatprep.subr.bf16.mxu0 0
      %12842 = vmatpush1.bf16.msra.mxu0 %v12803
      %12843 = vmatprep.subr.bf16.mxu0 0
      %12844 = vmatpush1.bf16.msra.mxu0 %v12804
      %12845 = vmatprep.subr.bf16.mxu0 0
      %12846 = vmatpush1.bf16.msra.mxu0 %v12805
      %12847 = vmatprep.subr.bf16.mxu0 0
      %12848 = vmatpush1.bf16.msra.mxu0 %v12806
      %12849 = vmatprep.subr.bf16.mxu0 0
      %12850 = vmatpush1.bf16.msra.mxu0 %v12807
      %12851 = vmatprep.subr.bf16.mxu0 0
      %12852 = vmatpush1.bf16.msra.mxu0 %v12808
      %12853 = vmatprep.subr.bf16.mxu0 0
      %12854 = vmatpush1.bf16.msra.mxu0 %v12809
      %12855 = vmatprep.subr.bf16.mxu0 0
      %12856 = vmatpush1.bf16.msra.mxu0 %v12810
      %12857 = vmatprep.subr.bf16.mxu0 0
      %12858 = vmatpush1.bf16.msra.mxu0 %v12811
      %12859 = vmatprep.subr.bf16.mxu0 0
      %12860 = vmatpush1.bf16.msra.mxu0 %v12812
      %12861 = vmatprep.mubr.bf16.mxu0 %v12360
      %12862 = vmatmul.mubr.bf16.gmra.mrb[0].mxu0 %v12359
      %v12863 = vpop.f32.mrb[0].mxu0
      %v12864 = vadd.f32 0.0, %v12863
      %v12865 = vpop.f32.mrb[0].mxu0
      %v12866 = vpop.f32.mrb[0].mxu0
      %v12867 = vpop.f32.mrb[0].mxu0
      %12868 = vdwg.mxu0
      %v12869 = vadd.f32 %v12695, %v12864
      %s12870 = scalar_lea.vmem %s7, 384
      %v12871 = vld [vmem:[%s12870] sm:$0xf]
      %v12872 = vld [vmem:[%s12870 + $0x4] sm:$0xf]
      %v12873 = vld [vmem:[%s12870 + $0x8] sm:$0xf]
      %v12874 = vld [vmem:[%s12870 + $0xc] sm:$0xf]
      %v12875 = vld [vmem:[%s12870 + $0x10] sm:$0xf]
      %v12876 = vld [vmem:[%s12870 + $0x14] sm:$0xf]
      %v12877 = vld [vmem:[%s12870 + $0x18] sm:$0xf]
      %v12878 = vld [vmem:[%s12870 + $0x1c] sm:$0xf]
      %v12879 = vld [vmem:[%s12870 + $0x20] sm:$0xf]
      %v12880 = vld [vmem:[%s12870 + $0x24] sm:$0xf]
      %v12881 = vld [vmem:[%s12870 + $0x28] sm:$0xf]
      %v12882 = vld [vmem:[%s12870 + $0x2c] sm:$0xf]
      %v12883 = vld [vmem:[%s12870 + $0x30] sm:$0xf]
      %v12884 = vld [vmem:[%s12870 + $0x34] sm:$0xf]
      %v12885 = vld [vmem:[%s12870 + $0x38] sm:$0xf]
      %v12886 = vld [vmem:[%s12870 + $0x3c] sm:$0xf]
      %v12887 = vld [vmem:[%s12870 + $0x40] sm:$0xf]
      %v12888 = vld [vmem:[%s12870 + $0x44] sm:$0xf]
      %v12889 = vld [vmem:[%s12870 + $0x48] sm:$0xf]
      %v12890 = vld [vmem:[%s12870 + $0x4c] sm:$0xf]
      %v12891 = vld [vmem:[%s12870 + $0x50] sm:$0xf]
      %v12892 = vld [vmem:[%s12870 + $0x54] sm:$0xf]
      %v12893 = vld [vmem:[%s12870 + $0x58] sm:$0xf]
      %v12894 = vld [vmem:[%s12870 + $0x5c] sm:$0xf]
      %v12895 = vld [vmem:[%s12870 + $0x60] sm:$0xf]
      %v12896 = vld [vmem:[%s12870 + $0x64] sm:$0xf]
      %v12897 = vld [vmem:[%s12870 + $0x68] sm:$0xf]
      %v12898 = vld [vmem:[%s12870 + $0x6c] sm:$0xf]
      %v12899 = vld [vmem:[%s12870 + $0x70] sm:$0xf]
      %v12900 = vld [vmem:[%s12870 + $0x74] sm:$0xf]
      %v12901 = vld [vmem:[%s12870 + $0x78] sm:$0xf]
      %v12902 = vld [vmem:[%s12870 + $0x7c] sm:$0xf]
      %v12935 = vunpack.c.l.b16 %v12871
      %v12936 = vunpack.c.l.b16 %v12872
      %v12937 = vunpack.c.l.b16 %v12873
      %v12938 = vunpack.c.l.b16 %v12874
      %v12939 = vunpack.c.l.b16 %v12875
      %v12940 = vunpack.c.l.b16 %v12876
      %v12941 = vunpack.c.l.b16 %v12877
      %v12942 = vunpack.c.l.b16 %v12878
      %v12943 = vunpack.c.l.b16 %v12879
      %v12944 = vunpack.c.l.b16 %v12880
      %v12945 = vunpack.c.l.b16 %v12881
      %v12946 = vunpack.c.l.b16 %v12882
      %v12947 = vunpack.c.l.b16 %v12883
      %v12948 = vunpack.c.l.b16 %v12884
      %v12949 = vunpack.c.l.b16 %v12885
      %v12950 = vunpack.c.l.b16 %v12886
      %v12951 = vunpack.c.l.b16 %v12887
      %v12952 = vunpack.c.l.b16 %v12888
      %v12953 = vunpack.c.l.b16 %v12889
      %v12954 = vunpack.c.l.b16 %v12890
      %v12955 = vunpack.c.l.b16 %v12891
      %v12956 = vunpack.c.l.b16 %v12892
      %v12957 = vunpack.c.l.b16 %v12893
      %v12958 = vunpack.c.l.b16 %v12894
      %v12959 = vunpack.c.l.b16 %v12895
      %v12960 = vunpack.c.l.b16 %v12896
      %v12961 = vunpack.c.l.b16 %v12897
      %v12962 = vunpack.c.l.b16 %v12898
      %v12963 = vunpack.c.l.b16 %v12899
      %v12964 = vunpack.c.l.b16 %v12900
      %v12965 = vunpack.c.l.b16 %v12901
      %v12966 = vunpack.c.l.b16 %v12902
      %v12967 = vpack.c.b16 %v12936, %v12935
      %v12968 = vpack.c.b16 %v12938, %v12937
      %v12969 = vpack.c.b16 %v12940, %v12939
      %v12970 = vpack.c.b16 %v12942, %v12941
      %v12971 = vpack.c.b16 %v12944, %v12943
      %v12972 = vpack.c.b16 %v12946, %v12945
      %v12973 = vpack.c.b16 %v12948, %v12947
      %v12974 = vpack.c.b16 %v12950, %v12949
      %v12975 = vpack.c.b16 %v12952, %v12951
      %v12976 = vpack.c.b16 %v12954, %v12953
      %v12977 = vpack.c.b16 %v12956, %v12955
      %v12978 = vpack.c.b16 %v12958, %v12957
      %v12979 = vpack.c.b16 %v12960, %v12959
      %v12980 = vpack.c.b16 %v12962, %v12961
      %v12981 = vpack.c.b16 %v12964, %v12963
      %v12982 = vpack.c.b16 %v12966, %v12965
      %12999 = vmatprep.subr.bf16.mxu0 0
      %13000 = vmatpush1.bf16.msra.mxu0 %v12967
      %13001 = vmatprep.subr.bf16.mxu0 0
      %13002 = vmatpush1.bf16.msra.mxu0 %v12968
      %13003 = vmatprep.subr.bf16.mxu0 0
      %13004 = vmatpush1.bf16.msra.mxu0 %v12969
      %13005 = vmatprep.subr.bf16.mxu0 0
      %13006 = vmatpush1.bf16.msra.mxu0 %v12970
      %13007 = vmatprep.subr.bf16.mxu0 0
      %13008 = vmatpush1.bf16.msra.mxu0 %v12971
      %13009 = vmatprep.subr.bf16.mxu0 0
      %13010 = vmatpush1.bf16.msra.mxu0 %v12972
      %13011 = vmatprep.subr.bf16.mxu0 0
      %13012 = vmatpush1.bf16.msra.mxu0 %v12973
      %13013 = vmatprep.subr.bf16.mxu0 0
      %13014 = vmatpush1.bf16.msra.mxu0 %v12974
      %13015 = vmatprep.subr.bf16.mxu0 0
      %13016 = vmatpush1.bf16.msra.mxu0 %v12975
      %13017 = vmatprep.subr.bf16.mxu0 0
      %13018 = vmatpush1.bf16.msra.mxu0 %v12976
      %13019 = vmatprep.subr.bf16.mxu0 0
      %13020 = vmatpush1.bf16.msra.mxu0 %v12977
      %13021 = vmatprep.subr.bf16.mxu0 0
      %13022 = vmatpush1.bf16.msra.mxu0 %v12978
      %13023 = vmatprep.subr.bf16.mxu0 0
      %13024 = vmatpush1.bf16.msra.mxu0 %v12979
      %13025 = vmatprep.subr.bf16.mxu0 0
      %13026 = vmatpush1.bf16.msra.mxu0 %v12980
      %13027 = vmatprep.subr.bf16.mxu0 0
      %13028 = vmatpush1.bf16.msra.mxu0 %v12981
      %13029 = vmatprep.subr.bf16.mxu0 0
      %13030 = vmatpush1.bf16.msra.mxu0 %v12982
      %13031 = vmatprep.mubr.bf16.mxu0 %v12362
      %13032 = vmatmul.mubr.bf16.gmra.mrb[0].mxu0 %v12361
      %v13033 = vpop.f32.mrb[0].mxu0
      %v13034 = vadd.f32 0.0, %v13033
      %v13035 = vpop.f32.mrb[0].mxu0
      %v13036 = vpop.f32.mrb[0].mxu0
      %v13037 = vpop.f32.mrb[0].mxu0
      %13038 = vdwg.mxu0
      %v13039 = vadd.f32 %v12869, %v13034
      %v13040 = vld [vmem:[%s8] sm:$0x1]
      %v13041 = vadd.f32 %v13039, %v13040
      %v13042 = vmax.f32 %v13041, 0.0
      %v13043 = vpack.c.bf16 %v13042, %v13042
      %v13044 = vld [vmem:[%s9] sm:$0xf]
      %v13045 = vld [vmem:[%s9 + $0x4] sm:$0xf]
      %v13046 = vld [vmem:[%s9 + $0x8] sm:$0xf]
      %v13047 = vld [vmem:[%s9 + $0xc] sm:$0xf]
      %v13048 = vld [vmem:[%s9 + $0x10] sm:$0xf]
      %v13049 = vld [vmem:[%s9 + $0x14] sm:$0xf]
      %v13050 = vld [vmem:[%s9 + $0x18] sm:$0xf]
      %v13051 = vld [vmem:[%s9 + $0x1c] sm:$0xf]
      %v13052 = vld [vmem:[%s9 + $0x20] sm:$0xf]
      %v13053 = vld [vmem:[%s9 + $0x24] sm:$0xf]
      %v13054 = vld [vmem:[%s9 + $0x28] sm:$0xf]
      %v13055 = vld [vmem:[%s9 + $0x2c] sm:$0xf]
      %v13056 = vld [vmem:[%s9 + $0x30] sm:$0xf]
      %v13057 = vld [vmem:[%s9 + $0x34] sm:$0xf]
      %v13058 = vld [vmem:[%s9 + $0x38] sm:$0xf]
      %v13059 = vld [vmem:[%s9 + $0x3c] sm:$0xf]
      %v13060 = vld [vmem:[%s10] sm:$0x1]
      %v13077 = vunpack.c.l.b16 %v13044
      %v13078 = vunpack.c.l.b16 %v13045
      %v13079 = vunpack.c.l.b16 %v13046
      %v13080 = vunpack.c.l.b16 %v13047
      %v13081 = vunpack.c.l.b16 %v13048
      %v13082 = vunpack.c.l.b16 %v13049
      %v13083 = vunpack.c.l.b16 %v13050
      %v13084 = vunpack.c.l.b16 %v13051
      %v13085 = vunpack.c.l.b16 %v13052
      %v13086 = vunpack.c.l.b16 %v13053
      %v13087 = vunpack.c.l.b16 %v13054
      %v13088 = vunpack.c.l.b16 %v13055
      %v13089 = vunpack.c.l.b16 %v13056
      %v13090 = vunpack.c.l.b16 %v13057
      %v13091 = vunpack.c.l.b16 %v13058
      %v13092 = vunpack.c.l.b16 %v13059
      %v13093 = vpack.c.b16 %v13078, %v13077
      %v13094 = vpack.c.b16 %v13080, %v13079
      %v13095 = vpack.c.b16 %v13082, %v13081
      %v13096 = vpack.c.b16 %v13084, %v13083
      %v13097 = vpack.c.b16 %v13086, %v13085
      %v13098 = vpack.c.b16 %v13088, %v13087
      %v13099 = vpack.c.b16 %v13090, %v13089
      %v13100 = vpack.c.b16 %v13092, %v13091
      %13109 = vmatprep.subr.bf16.mxu0 0
      %13110 = vmatpush1.bf16.msra.mxu0 %v13093
      %13111 = vmatprep.subr.bf16.mxu0 0
      %13112 = vmatpush1.bf16.msra.mxu0 %v13094
      %13113 = vmatprep.subr.bf16.mxu0 0
      %13114 = vmatpush1.bf16.msra.mxu0 %v13095
      %13115 = vmatprep.subr.bf16.mxu0 0
      %13116 = vmatpush1.bf16.msra.mxu0 %v13096
      %13117 = vmatprep.subr.bf16.mxu0 0
      %13118 = vmatpush1.bf16.msra.mxu0 %v13097
      %13119 = vmatprep.subr.bf16.mxu0 0
      %13120 = vmatpush1.bf16.msra.mxu0 %v13098
      %13121 = vmatprep.subr.bf16.mxu0 0
      %13122 = vmatpush1.bf16.msra.mxu0 %v13099
      %13123 = vmatprep.subr.bf16.mxu0 0
      %13124 = vmatpush1.bf16.msra.mxu0 %v13100
      %13125 = vmatprep.subr.bf16.mxu0 0
      %13126 = vmatpush1.bf16.msra.mxu0 0
      %13127 = vmatprep.subr.bf16.mxu0 0
      %13128 = vmatpush1.bf16.msra.mxu0 0
      %13129 = vmatprep.subr.bf16.mxu0 0
      %13130 = vmatpush1.bf16.msra.mxu0 0
      %13131 = vmatprep.subr.bf16.mxu0 0
      %13132 = vmatpush1.bf16.msra.mxu0 0
      %13133 = vmatprep.subr.bf16.mxu0 0
      %13134 = vmatpush1.bf16.msra.mxu0 0
      %13135 = vmatprep.subr.bf16.mxu0 0
      %13136 = vmatpush1.bf16.msra.mxu0 0
      %13137 = vmatprep.subr.bf16.mxu0 0
      %13138 = vmatpush1.bf16.msra.mxu0 0
      %13139 = vmatprep.subr.bf16.mxu0 0
      %13140 = vmatpush1.bf16.msra.mxu0 0
      %13141 = vmatprep.mubr.bf16.mxu0 0
      %13142 = vmatmul.mubr.bf16.gmra.mrb[0].mxu0 %v13043
      %v13143 = vpop.f32.mrb[0].mxu0
      %v13144 = vadd.f32 %v13060, %v13143
      %v13145 = vpop.f32.mrb[0].mxu0
      %v13146 = vpop.f32.mrb[0].mxu0
      %v13147 = vpop.f32.mrb[0].mxu0
      %13148 = vdwg.mxu0
      %13149 = vst [vmem:[%s382] sm:$0x1] %v13144
      %p13150 = scmp.lt.s32.totalorder %s22, 1
      %s13151 = scalar_select %p13150, %s22, 1
      %s13152 = scalar_lea.vmem %s11, %s13151
      // Predicated region
      $region65: #{discriminator_forward.1} parent=63 // pred_check
        %p13153 = pneg %p276
      $region66: #{discriminator_forward.1} parent=63 // pred_check_branch
        %13155 = sbr.rel (%p13153) target = $region68
      $region67: #{discriminator_forward.1} parent=63 // pred_region
        _
      $region68: #{discriminator_forward.1} parent=63 // pred_fallthru
        _
    $region64: #{discriminator_forward.1} parent=5 // pred_fallthru
      _
    %p13156 = scmp.le.s32.totalorder 2, %s17
    // Predicated region
    $region69: #{discriminator_forward.1} parent=5 // pred_check
      %p13157 = pneg %p13156
    $region70: #{discriminator_forward.1} parent=5 // pred_check_branch
      %13159 = sbr.rel (%p13157) target = $region72
    $region71: #{discriminator_forward.1} parent=5 // pred_region
      %s13160 = ssub.s32 %s17, 2
      // Predicated region
      $region73: #{discriminator_forward.1} parent=71 // pred_check
        %p13161 = pneg %p282
      $region74: #{discriminator_forward.1} parent=71 // pred_check_branch
        %13163 = sbr.rel (%p13161) target = $region76
      $region75: #{discriminator_forward.1} parent=71 // pred_region
        %p13164 = scmp.lt.s32.totalorder %s23, 1
        %s13165 = scalar_select %p13164, %s23, 1
        %s13166 = scalar_lea.vmem %s11, %s13165
      $region76: #{discriminator_forward.1} parent=71 // pred_fallthru
        _
    $region72: #{discriminator_forward.1} parent=5 // pred_fallthru
      _
  $region6: #{discriminator_forward.1} parent=0 // loop_footer
    %s21 = sadd.s32 1, %s17
  $region7: #{discriminator_forward.1} parent=0 // loop_footer_branch
    %16 = sbr.rel target = $region3
  $region8: #{discriminator_forward.1} parent=0 // loop_exit
    _

</llo_original>
